<compile_context>
chip_gen: v6e
topology: v6e:2x2x1
jax: 0.10.0
libtpu: 0.0.40
codegen_flags: <defaults>
</compile_context>

<pallas_src>
import functools

import jax
import jax.numpy as jnp
from jax.experimental import pallas as pl
from jax.experimental.pallas import tpu as pltpu

_VMEM_LIMIT = 32 * 1024 * 1024   # scoped-VMEM budget safe on v5e / v6e / v7x
_M_MAX_TILE = 256                # row tile (multiple of 16 for bf16 packing)
_N_MAX_TILE = 512                # output-channel tile (OC<=512 stays unpadded)
_K_MAX_TILE = 2048               # contraction tile


def _round_up(x, m):
    return (x + m - 1) // m * m


def _m_tiling(M):
    Mp = _round_up(M, 16)
    if Mp <= _M_MAX_TILE:
        return Mp, Mp
    return _round_up(M, _M_MAX_TILE), _M_MAX_TILE


def _tk_from_kp(Kp):
    if Kp <= _K_MAX_TILE:
        return Kp
    nk = Kp // 128                      # Kp is 128-aligned by construction
    best = 1
    for c in range(1, _K_MAX_TILE // 128 + 1):
        if nk % c == 0:
            best = c
    return best * 128


# ----------------------------- Pallas kernels -----------------------------

def _matmul_bias_kernel(x_ref, w_ref, b_ref, o_ref, acc_ref, *, apply_softplus):
    @pl.when(pl.program_id(2) == 0)
    def _():
        acc_ref[...] = jnp.zeros_like(acc_ref)

    acc_ref[...] += jnp.dot(x_ref[...], w_ref[...],
                            preferred_element_type=jnp.float32)

    @pl.when(pl.program_id(2) == pl.num_programs(2) - 1)
    def _():
        out = acc_ref[...] + b_ref[...]
        if apply_softplus:
            # torch.nn.Softplus(beta=1, threshold=20)
            out = jnp.where(out > 20.0, out,
                            jnp.log1p(jnp.exp(jnp.minimum(out, 20.0))))
        o_ref[...] = out.astype(o_ref.dtype)


def matmul_bias_act(x, wp, b_row, *, apply_softplus, out_dtype=jnp.bfloat16,
                    n_out=None):
    """(M,K) @ pre-padded (Kp,Np) + bias (+Softplus), tiled bf16 MXU matmul."""
    M, K = x.shape
    Kp, Np = wp.shape
    if n_out is None:
        n_out = Np
    Mp, TM = _m_tiling(M)
    TK = _tk_from_kp(Kp)
    TN = Np if Np <= _N_MAX_TILE else 256
    xp = x.astype(jnp.bfloat16)
    if (Mp, Kp) != (M, K):
        xp = jnp.pad(xp, ((0, Mp - M), (0, Kp - K)))
    out = pl.pallas_call(
        functools.partial(_matmul_bias_kernel, apply_softplus=apply_softplus),
        out_shape=jax.ShapeDtypeStruct((Mp, Np), out_dtype),
        grid_spec=pltpu.PrefetchScalarGridSpec(
            num_scalar_prefetch=0,
            grid=(Mp // TM, Np // TN, Kp // TK),
            in_specs=[pl.BlockSpec((TM, TK), lambda i, j, k: (i, k)),
                      pl.BlockSpec((TK, TN), lambda i, j, k: (k, j)),
                      pl.BlockSpec((1, TN), lambda i, j, k: (0, j))],
            out_specs=pl.BlockSpec((TM, TN), lambda i, j, k: (i, j)),
            scratch_shapes=[pltpu.VMEM((TM, TN), jnp.float32)]),
        compiler_params=pltpu.CompilerParams(
            dimension_semantics=("parallel", "parallel", "arbitrary"),
            vmem_limit_bytes=_VMEM_LIMIT),
    )(xp, wp, b_row)
    if (Mp, Np) != (M, n_out):
        out = out[:M, :n_out]
    return out


def _maxpool_taps_kernel(x_ref, o_ref, *, kk):
    acc = x_ref[0]
    for t in range(1, kk):
        acc = jnp.maximum(acc, x_ref[t])
    o_ref[...] = acc


def maxpool2d_nhwc(x, k, stride):
    """Channel-last max-pool; reduction over the k*k taps, lanes = channels."""
    N, H, W, C = x.shape
    if k == 1:
        # kernel_size=1 max-pool is just a strided spatial subsample.
        return x[:, ::stride, ::stride, :]
    OH = (H - k) // stride + 1
    OW = (W - k) // stride + 1
    taps = [x[:, i:i + stride * (OH - 1) + 1:stride,
               j:j + stride * (OW - 1) + 1:stride, :]
            for i in range(k) for j in range(k)]
    stacked = jnp.stack(taps, axis=0).reshape(k * k, N * OH * OW, C)
    M = N * OH * OW
    Mp, TM = _m_tiling(M)
    if Mp != M:
        stacked = jnp.pad(stacked, ((0, 0), (0, Mp - M), (0, 0)))
    out = pl.pallas_call(
        functools.partial(_maxpool_taps_kernel, kk=k * k),
        out_shape=jax.ShapeDtypeStruct((Mp, C), x.dtype),
        grid_spec=pltpu.PrefetchScalarGridSpec(
            num_scalar_prefetch=0,
            grid=(Mp // TM,),
            in_specs=[pl.BlockSpec((k * k, TM, C), lambda i: (0, i, 0))],
            out_specs=pl.BlockSpec((TM, C), lambda i: (i, 0))),
        compiler_params=pltpu.CompilerParams(
            dimension_semantics=("parallel",),
            vmem_limit_bytes=_VMEM_LIMIT),
    )(stacked)
    return out[:M].reshape(N, OH, OW, C)


def _tail_kernel(x_ref, w1_ref, b1_ref, w2_ref, b2_ref, emb_ref, out_ref):
    x = x_ref[...].astype(jnp.float32)
    emb = jnp.dot(x, w1_ref[...], preferred_element_type=jnp.float32) + b1_ref[...]
    emb_ref[...] = emb
    out_ref[...] = jnp.dot(emb, w2_ref[...],
                           preferred_element_type=jnp.float32) + b2_ref[...]


def fused_tail(x, fc, cls):
    """Flattened activation -> fc -> classifier in one pallas_call."""
    M, K = x.shape
    N1 = fc["w"].shape[1]
    N2 = cls["w"].shape[1]
    Mp, TM = _m_tiling(M)
    xp = x.astype(jnp.bfloat16)
    if Mp != M:
        xp = jnp.pad(xp, ((0, Mp - M), (0, 0)))
    emb, out = pl.pallas_call(
        _tail_kernel,
        out_shape=(jax.ShapeDtypeStruct((Mp, N1), jnp.float32),
                   jax.ShapeDtypeStruct((Mp, N2), jnp.float32)),
        grid_spec=pltpu.PrefetchScalarGridSpec(
            num_scalar_prefetch=0,
            grid=(Mp // TM,),
            in_specs=[pl.BlockSpec((TM, K), lambda i: (i, 0)),
                      pl.BlockSpec((K, N1), lambda i: (0, 0)),
                      pl.BlockSpec((1, N1), lambda i: (0, 0)),
                      pl.BlockSpec((N1, N2), lambda i: (0, 0)),
                      pl.BlockSpec((1, N2), lambda i: (0, 0))],
            out_specs=[pl.BlockSpec((TM, N1), lambda i: (i, 0)),
                       pl.BlockSpec((TM, N2), lambda i: (i, 0))]),
        compiler_params=pltpu.CompilerParams(
            dimension_semantics=("parallel",),
            vmem_limit_bytes=_VMEM_LIMIT),
    )(xp, fc["w"], fc["b"], cls["w"], cls["b"])
    return emb[:M], out[:M]


# ----------------------------- glue (im2col) -----------------------------

def _im2col_nhwc(x, k, stride, pad):
    N, H, W, C = x.shape
    xp = jnp.pad(x, ((0, 0), (pad, pad), (pad, pad), (0, 0)))
    Hp, Wp = H + 2 * pad, W + 2 * pad
    OH = (Hp - k) // stride + 1
    OW = (Wp - k) // stride + 1
    taps = [xp[:, i:i + stride * (OH - 1) + 1:stride,
               j:j + stride * (OW - 1) + 1:stride, :]
            for i in range(k) for j in range(k)]
    p = jnp.stack(taps, axis=3)            # (N, OH, OW, k*k, C) -- no transpose
    return p.reshape(N * OH * OW, k * k * C), OH, OW


def conv2d_bayes(x_nhwc, layer, ksz, stride, pad):
    # TODO(synk): fuse im2col into the matmul kernel (DMA NHWC rows, form the
    # k*k taps in VMEM) to avoid materializing the patch matrix in HBM.
    N = x_nhwc.shape[0]
    oc = layer["b"].shape[1]
    patches, OH, OW = _im2col_nhwc(x_nhwc, ksz, stride, pad)
    out = matmul_bias_act(patches, layer["wmat"], layer["b"],
                          apply_softplus=True, out_dtype=jnp.bfloat16,
                          n_out=oc)
    return out.reshape(N, OH, OW, oc)


# ----------------------------- parameters (deterministic) -----------------------------

def _bayes_sample(key, shape, rho_init=-5.0, scale=0.1):
    k_mu, k_eps = jax.random.split(key)
    mu = scale * jax.random.normal(k_mu, shape, jnp.float32)
    sigma = jnp.log1p(jnp.exp(jnp.full(shape, rho_init, jnp.float32)))
    eps = jax.random.normal(k_eps, shape, jnp.float32)
    return mu + sigma * eps


def init_params(key, inputs, outputs, image_size=32):
    conv_cfgs = [
        (inputs, 64, 11, 4, 2),
        (64, 192, 5, 1, 2),
        (192, 384, 3, 1, 1),
        (384, 256, 3, 1, 1),
        (256, 256, 3, 1, 1),
    ]
    # mirrors the PyTorch module's output-size formulas (== 1 for image_size=32)
    out1 = ((image_size - 11 + 2 * 2) // 4 + 1) // 2
    out2 = ((out1 - 5 + 2 * 2) // 1 + 1) // 2
    out3 = ((out2 - 3 + 2 * 2) // 1 + 1) // 2
    fc_in = out3 * out3 * 256

    params = {"convs": []}
    keys = jax.random.split(key, 2 * len(conv_cfgs) + 4)
    ki = 0
    for (cin, cout, ksz, stride, pad) in conv_cfgs:
        w = _bayes_sample(keys[ki], (cout, cin, ksz, ksz)); ki += 1
        b = _bayes_sample(keys[ki], (cout,)); ki += 1
        K = ksz * ksz * cin
        Kp = _round_up(K, 128)
        # (OC, C, KH, KW) -> (KH, KW, C, OC) -> (K, OC): matches the NHWC
        # im2col column order (kh, kw, c).  Pad K and cast to bf16 once here.
        wmat = jnp.transpose(w, (2, 3, 1, 0)).reshape(K, cout)
        wmat = jnp.pad(wmat, ((0, Kp - K), (0, 0))).astype(jnp.bfloat16)
        params["convs"].append({
            "wmat": wmat,
            "b": b.reshape(1, cout).astype(jnp.float32),
        })

    fc_w = _bayes_sample(keys[ki], (16, fc_in)); ki += 1
    fc_b = _bayes_sample(keys[ki], (16,)); ki += 1
    cls_w = _bayes_sample(keys[ki], (outputs, 16)); ki += 1
    cls_b = _bayes_sample(keys[ki], (outputs,)); ki += 1
    params["fc"] = {"w": fc_w.T, "b": fc_b.reshape(1, 16)}
    params["classifier"] = {"w": cls_w.T, "b": cls_b.reshape(1, outputs)}
    return params


# ----------------------------- forward (matches BBBAlexNet.forward, de=False) -----------------------------

def bbb_alexnet_forward(params, x, get_emb=False):
    # NCHW -> NHWC once at entry; keep activations bf16 between layers.
    x = jnp.transpose(x, (0, 2, 3, 1)).astype(jnp.bfloat16)
    c = params["convs"]
    x = conv2d_bayes(x, c[0], 11, 4, 2)
    x = maxpool2d_nhwc(x, 3, 2)
    x = conv2d_bayes(x, c[1], 5, 1, 2)
    x = maxpool2d_nhwc(x, 3, 2)
    x = conv2d_bayes(x, c[2], 3, 1, 1)
    x = conv2d_bayes(x, c[3], 3, 1, 1)
    x = conv2d_bayes(x, c[4], 3, 1, 1)
    x = maxpool2d_nhwc(x, 1, 2)            # kernel_size=1 pool == strided view
    N, OH, OW, C = x.shape
    if OH * OW > 1:
        x = jnp.transpose(x, (0, 3, 1, 2))  # match torch NCHW flatten order
    x = x.reshape(N, -1)                    # FlattenLayer
    emb, out = fused_tail(x, params["fc"], params["classifier"])
    if get_emb:
        return emb
    # TODO(synk): de=True branch (extra fc_sig head) and kl_loss() are not part
    # of the default forward path and are omitted here.
    return out


if __name__ == "__main__":
    key = jax.random.PRNGKey(0)
    k_x, k_p = jax.random.split(key)
    batch, inputs, outputs, image_size = 2, 3, 10, 32
    x = jax.random.normal(k_x, (batch, inputs, image_size, image_size),
                          jnp.float32)
    params = init_params(k_p, inputs, outputs, image_size)
    fwd = jax.jit(bbb_alexnet_forward, static_argnames=("get_emb",))
    out = fwd(params, x)
    jax.block_until_ready(out)
    assert out.shape == (batch, outputs) and out.dtype == jnp.float32
    print("KERNEL_OK")
</pallas_src>

<mosaic_0001>
module attributes {stable_mosaic.version = 11 : i64} {
  func.func @_matmul_bias_kernel(%arg0: i32, %arg1: i32, %arg2: i32, %arg3: memref<112x384xbf16, #tpu.memory_space<vmem>>, %arg4: memref<384x64xbf16, #tpu.memory_space<vmem>>, %arg5: memref<1x64xf32, #tpu.memory_space<vmem>>, %arg6: memref<112x64xbf16, #tpu.memory_space<vmem>>, %arg7: memref<112x64xf32, #tpu.memory_space<vmem>>) attributes {dimension_semantics = [#tpu.dimension_semantics<parallel>, #tpu.dimension_semantics<parallel>, #tpu.dimension_semantics<arbitrary>], iteration_bounds = array<i64: 1, 1, 1>, scalar_prefetch = 0 : i64, scratch_operands = 1 : i64, tpu.core_type = #tpu.core_type<tc>, window_params = [{transform_indices = @transform_0, window_bounds = array<i64: 112, 384>}, {transform_indices = @transform_1, window_bounds = array<i64: 384, 64>}, {transform_indices = @transform_2, window_bounds = array<i64: 1, 64>}, {transform_indices = @transform_3, window_bounds = array<i64: 112, 64>}]} {
    %c0_i32 = arith.constant 0 : i32
    %0 = arith.cmpi eq, %arg2, %c0_i32 : i32
    %1 = arith.extui %0 : i1 to i32
    %c0_i32_0 = arith.constant 0 : i32
    %2 = arith.cmpi ne, %1, %c0_i32_0 : i32
    scf.if %2 {
      %cst_10 = arith.constant 0.000000e+00 : f32
      %12 = vector.broadcast %cst_10 : f32 to vector<112x64xf32>
      %c0_11 = arith.constant 0 : index
      %c0_12 = arith.constant 0 : index
      %13 = vector.load %arg7[%c0_11, %c0_12] : memref<112x64xf32, #tpu.memory_space<vmem>>, vector<112x64xf32>
      tpu.vector_store %arg7[%c0_11, %c0_12], %12 {strides = array<i32>} : memref<112x64xf32, #tpu.memory_space<vmem>>, vector<112x64xf32>,
    } else {
    }
    %c0 = arith.constant 0 : index
    %c0_1 = arith.constant 0 : index
    %3 = vector.load %arg7[%c0, %c0_1] : memref<112x64xf32, #tpu.memory_space<vmem>>, vector<112x64xf32>
    %c0_2 = arith.constant 0 : index
    %c0_3 = arith.constant 0 : index
    %4 = vector.load %arg3[%c0_2, %c0_3] : memref<112x384xbf16, #tpu.memory_space<vmem>>, vector<112x384xbf16>
    %c0_4 = arith.constant 0 : index
    %c0_5 = arith.constant 0 : index
    %5 = vector.load %arg4[%c0_4, %c0_5] : memref<384x64xbf16, #tpu.memory_space<vmem>>, vector<384x64xbf16>
    %cst = arith.constant dense<0.000000e+00> : vector<112x64xf32>
    %6 = tpu.matmul %4, %5, %cst {dimension_numbers = #tpu.dot_dimension_numbers<[1], [0], [0], [1], [0, 0, 1, 1], [], []>} : vector<112x384xbf16>, vector<384x64xbf16>, vector<112x64xf32> -> vector<112x64xf32>
    %7 = arith.addf %3, %6 : vector<112x64xf32>
    %c0_6 = arith.constant 0 : index
    %c0_7 = arith.constant 0 : index
    %8 = vector.load %arg7[%c0_6, %c0_7] : memref<112x64xf32, #tpu.memory_space<vmem>>, vector<112x64xf32>
    tpu.vector_store %arg7[%c0_6, %c0_7], %7 {strides = array<i32>} : memref<112x64xf32, #tpu.memory_space<vmem>>, vector<112x64xf32>,
    %c0_i32_8 = arith.constant 0 : i32
    %9 = arith.cmpi eq, %arg2, %c0_i32_8 : i32
    %10 = arith.extui %9 : i1 to i32
    %c0_i32_9 = arith.constant 0 : i32
    %11 = arith.cmpi ne, %10, %c0_i32_9 : i32
    scf.if %11 {
      %c0_10 = arith.constant 0 : index
      %c0_11 = arith.constant 0 : index
      %12 = vector.load %arg7[%c0_10, %c0_11] : memref<112x64xf32, #tpu.memory_space<vmem>>, vector<112x64xf32>
      %c0_12 = arith.constant 0 : index
      %c0_13 = arith.constant 0 : index
      %13 = vector.load %arg5[%c0_12, %c0_13] : memref<1x64xf32, #tpu.memory_space<vmem>>, vector<1x64xf32>
      %14 = vector.broadcast %13 : vector<1x64xf32> to vector<112x64xf32>
      %15 = arith.addf %12, %14 : vector<112x64xf32>
      %cst_14 = arith.constant 2.000000e+01 : f32
      %16 = vector.broadcast %cst_14 : f32 to vector<112x64xf32>
      %17 = arith.cmpf ogt, %15, %16 : vector<112x64xf32>
      %cst_15 = arith.constant 2.000000e+01 : f32
      %18 = vector.broadcast %cst_15 : f32 to vector<112x64xf32>
      %19 = arith.minimumf %15, %18 : vector<112x64xf32>
      %20 = math.exp %19 : vector<112x64xf32>
      %21 = math.log1p %20 : vector<112x64xf32>
      %22 = arith.select %17, %15, %21 : vector<112x64xi1>, vector<112x64xf32>
      %23 = arith.truncf %22 : vector<112x64xf32> to vector<112x64xbf16>
      %c0_16 = arith.constant 0 : index
      %c0_17 = arith.constant 0 : index
      %24 = vector.load %arg6[%c0_16, %c0_17] : memref<112x64xbf16, #tpu.memory_space<vmem>>, vector<112x64xbf16>
      tpu.vector_store %arg6[%c0_16, %c0_17], %23 {strides = array<i32>} : memref<112x64xbf16, #tpu.memory_space<vmem>>, vector<112x64xbf16>,
    } else {
    }
    return
  }
  func.func @transform_0(%arg0: i32, %arg1: i32, %arg2: i32) -> (i32, i32) {
    %c0_i32 = arith.constant 0 : i32
    return %arg0, %arg2 : i32, i32
  }
  func.func @transform_1(%arg0: i32, %arg1: i32, %arg2: i32) -> (i32, i32) {
    %c0_i32 = arith.constant 0 : i32
    return %arg2, %arg1 : i32, i32
  }
  func.func @transform_2(%arg0: i32, %arg1: i32, %arg2: i32) -> (i32, i32) {
    %c0_i32 = arith.constant 0 : i32
    %c0_i32_0 = arith.constant 0 : i32
    return %c0_i32, %arg1 : i32, i32
  }
  func.func @transform_3(%arg0: i32, %arg1: i32, %arg2: i32) -> (i32, i32) {
    %c0_i32 = arith.constant 0 : i32
    return %arg0, %arg1 : i32, i32
  }
}

module attributes {stable_mosaic.version = 11 : i64} {
  func.func @_maxpool_taps_kernel(%arg0: i32, %arg1: memref<9x32x64xbf16, #tpu.memory_space<vmem>>, %arg2: memref<32x64xbf16, #tpu.memory_space<vmem>>) attributes {dimension_semantics = [#tpu.dimension_semantics<parallel>], iteration_bounds = array<i64: 1>, scalar_prefetch = 0 : i64, scratch_operands = 0 : i64, tpu.core_type = #tpu.core_type<tc>, window_params = [{transform_indices = @transform_0, window_bounds = array<i64: 9, 32, 64>}, {transform_indices = @transform_1, window_bounds = array<i64: 32, 64>}]} {
    %c0 = arith.constant 0 : index
    %c0_0 = arith.constant 0 : index
    %c0_1 = arith.constant 0 : index
    %0 = vector.load %arg1[%c0, %c0_0, %c0_1] : memref<9x32x64xbf16, #tpu.memory_space<vmem>>, vector<1x32x64xbf16>
    %1 = vector.shape_cast %0 : vector<1x32x64xbf16> to vector<32x64xbf16>
    %c1 = arith.constant 1 : index
    %c0_2 = arith.constant 0 : index
    %c0_3 = arith.constant 0 : index
    %2 = vector.load %arg1[%c1, %c0_2, %c0_3] : memref<9x32x64xbf16, #tpu.memory_space<vmem>>, vector<1x32x64xbf16>
    %3 = vector.shape_cast %2 : vector<1x32x64xbf16> to vector<32x64xbf16>
    %4 = arith.maximumf %1, %3 : vector<32x64xbf16>
    %c2 = arith.constant 2 : index
    %c0_4 = arith.constant 0 : index
    %c0_5 = arith.constant 0 : index
    %5 = vector.load %arg1[%c2, %c0_4, %c0_5] : memref<9x32x64xbf16, #tpu.memory_space<vmem>>, vector<1x32x64xbf16>
    %6 = vector.shape_cast %5 : vector<1x32x64xbf16> to vector<32x64xbf16>
    %7 = arith.maximumf %4, %6 : vector<32x64xbf16>
    %c3 = arith.constant 3 : index
    %c0_6 = arith.constant 0 : index
    %c0_7 = arith.constant 0 : index
    %8 = vector.load %arg1[%c3, %c0_6, %c0_7] : memref<9x32x64xbf16, #tpu.memory_space<vmem>>, vector<1x32x64xbf16>
    %9 = vector.shape_cast %8 : vector<1x32x64xbf16> to vector<32x64xbf16>
    %10 = arith.maximumf %7, %9 : vector<32x64xbf16>
    %c4 = arith.constant 4 : index
    %c0_8 = arith.constant 0 : index
    %c0_9 = arith.constant 0 : index
    %11 = vector.load %arg1[%c4, %c0_8, %c0_9] : memref<9x32x64xbf16, #tpu.memory_space<vmem>>, vector<1x32x64xbf16>
    %12 = vector.shape_cast %11 : vector<1x32x64xbf16> to vector<32x64xbf16>
    %13 = arith.maximumf %10, %12 : vector<32x64xbf16>
    %c5 = arith.constant 5 : index
    %c0_10 = arith.constant 0 : index
    %c0_11 = arith.constant 0 : index
    %14 = vector.load %arg1[%c5, %c0_10, %c0_11] : memref<9x32x64xbf16, #tpu.memory_space<vmem>>, vector<1x32x64xbf16>
    %15 = vector.shape_cast %14 : vector<1x32x64xbf16> to vector<32x64xbf16>
    %16 = arith.maximumf %13, %15 : vector<32x64xbf16>
    %c6 = arith.constant 6 : index
    %c0_12 = arith.constant 0 : index
    %c0_13 = arith.constant 0 : index
    %17 = vector.load %arg1[%c6, %c0_12, %c0_13] : memref<9x32x64xbf16, #tpu.memory_space<vmem>>, vector<1x32x64xbf16>
    %18 = vector.shape_cast %17 : vector<1x32x64xbf16> to vector<32x64xbf16>
    %19 = arith.maximumf %16, %18 : vector<32x64xbf16>
    %c7 = arith.constant 7 : index
    %c0_14 = arith.constant 0 : index
    %c0_15 = arith.constant 0 : index
    %20 = vector.load %arg1[%c7, %c0_14, %c0_15] : memref<9x32x64xbf16, #tpu.memory_space<vmem>>, vector<1x32x64xbf16>
    %21 = vector.shape_cast %20 : vector<1x32x64xbf16> to vector<32x64xbf16>
    %22 = arith.maximumf %19, %21 : vector<32x64xbf16>
    %c8 = arith.constant 8 : index
    %c0_16 = arith.constant 0 : index
    %c0_17 = arith.constant 0 : index
    %23 = vector.load %arg1[%c8, %c0_16, %c0_17] : memref<9x32x64xbf16, #tpu.memory_space<vmem>>, vector<1x32x64xbf16>
    %24 = vector.shape_cast %23 : vector<1x32x64xbf16> to vector<32x64xbf16>
    %25 = arith.maximumf %22, %24 : vector<32x64xbf16>
    %c0_18 = arith.constant 0 : index
    %c0_19 = arith.constant 0 : index
    %26 = vector.load %arg2[%c0_18, %c0_19] : memref<32x64xbf16, #tpu.memory_space<vmem>>, vector<32x64xbf16>
    tpu.vector_store %arg2[%c0_18, %c0_19], %25 {strides = array<i32>} : memref<32x64xbf16, #tpu.memory_space<vmem>>, vector<32x64xbf16>,
    return
  }
  func.func @transform_0(%arg0: i32) -> (i32, i32, i32) {
    %c0_i32 = arith.constant 0 : i32
    %c0_i32_0 = arith.constant 0 : i32
    %c0_i32_1 = arith.constant 0 : i32
    return %c0_i32, %arg0, %c0_i32_0 : i32, i32, i32
  }
  func.func @transform_1(%arg0: i32) -> (i32, i32) {
    %c0_i32 = arith.constant 0 : i32
    %c0_i32_0 = arith.constant 0 : i32
    return %arg0, %c0_i32 : i32, i32
  }
}

module attributes {stable_mosaic.version = 11 : i64} {
  func.func @_matmul_bias_kernel(%arg0: i32, %arg1: i32, %arg2: i32, %arg3: memref<32x1664xbf16, #tpu.memory_space<vmem>>, %arg4: memref<1664x192xbf16, #tpu.memory_space<vmem>>, %arg5: memref<1x192xf32, #tpu.memory_space<vmem>>, %arg6: memref<32x192xbf16, #tpu.memory_space<vmem>>, %arg7: memref<32x192xf32, #tpu.memory_space<vmem>>) attributes {dimension_semantics = [#tpu.dimension_semantics<parallel>, #tpu.dimension_semantics<parallel>, #tpu.dimension_semantics<arbitrary>], iteration_bounds = array<i64: 1, 1, 1>, scalar_prefetch = 0 : i64, scratch_operands = 1 : i64, tpu.core_type = #tpu.core_type<tc>, window_params = [{transform_indices = @transform_0, window_bounds = array<i64: 32, 1664>}, {transform_indices = @transform_1, window_bounds = array<i64: 1664, 192>}, {transform_indices = @transform_2, window_bounds = array<i64: 1, 192>}, {transform_indices = @transform_3, window_bounds = array<i64: 32, 192>}]} {
    %c0_i32 = arith.constant 0 : i32
    %0 = arith.cmpi eq, %arg2, %c0_i32 : i32
    %1 = arith.extui %0 : i1 to i32
    %c0_i32_0 = arith.constant 0 : i32
    %2 = arith.cmpi ne, %1, %c0_i32_0 : i32
    scf.if %2 {
      %cst_10 = arith.constant 0.000000e+00 : f32
      %12 = vector.broadcast %cst_10 : f32 to vector<32x192xf32>
      %c0_11 = arith.constant 0 : index
      %c0_12 = arith.constant 0 : index
      %13 = vector.load %arg7[%c0_11, %c0_12] : memref<32x192xf32, #tpu.memory_space<vmem>>, vector<32x192xf32>
      tpu.vector_store %arg7[%c0_11, %c0_12], %12 {strides = array<i32>} : memref<32x192xf32, #tpu.memory_space<vmem>>, vector<32x192xf32>,
    } else {
    }
    %c0 = arith.constant 0 : index
    %c0_1 = arith.constant 0 : index
    %3 = vector.load %arg7[%c0, %c0_1] : memref<32x192xf32, #tpu.memory_space<vmem>>, vector<32x192xf32>
    %c0_2 = arith.constant 0 : index
    %c0_3 = arith.constant 0 : index
    %4 = vector.load %arg3[%c0_2, %c0_3] : memref<32x1664xbf16, #tpu.memory_space<vmem>>, vector<32x1664xbf16>
    %c0_4 = arith.constant 0 : index
    %c0_5 = arith.constant 0 : index
    %5 = vector.load %arg4[%c0_4, %c0_5] : memref<1664x192xbf16, #tpu.memory_space<vmem>>, vector<1664x192xbf16>
    %cst = arith.constant dense<0.000000e+00> : vector<32x192xf32>
    %6 = tpu.matmul %4, %5, %cst {dimension_numbers = #tpu.dot_dimension_numbers<[1], [0], [0], [1], [0, 0, 1, 1], [], []>} : vector<32x1664xbf16>, vector<1664x192xbf16>, vector<32x192xf32> -> vector<32x192xf32>
    %7 = arith.addf %3, %6 : vector<32x192xf32>
    %c0_6 = arith.constant 0 : index
    %c0_7 = arith.constant 0 : index
    %8 = vector.load %arg7[%c0_6, %c0_7] : memref<32x192xf32, #tpu.memory_space<vmem>>, vector<32x192xf32>
    tpu.vector_store %arg7[%c0_6, %c0_7], %7 {strides = array<i32>} : memref<32x192xf32, #tpu.memory_space<vmem>>, vector<32x192xf32>,
    %c0_i32_8 = arith.constant 0 : i32
    %9 = arith.cmpi eq, %arg2, %c0_i32_8 : i32
    %10 = arith.extui %9 : i1 to i32
    %c0_i32_9 = arith.constant 0 : i32
    %11 = arith.cmpi ne, %10, %c0_i32_9 : i32
    scf.if %11 {
      %c0_10 = arith.constant 0 : index
      %c0_11 = arith.constant 0 : index
      %12 = vector.load %arg7[%c0_10, %c0_11] : memref<32x192xf32, #tpu.memory_space<vmem>>, vector<32x192xf32>
      %c0_12 = arith.constant 0 : index
      %c0_13 = arith.constant 0 : index
      %13 = vector.load %arg5[%c0_12, %c0_13] : memref<1x192xf32, #tpu.memory_space<vmem>>, vector<1x192xf32>
      %14 = vector.broadcast %13 : vector<1x192xf32> to vector<32x192xf32>
      %15 = arith.addf %12, %14 : vector<32x192xf32>
      %cst_14 = arith.constant 2.000000e+01 : f32
      %16 = vector.broadcast %cst_14 : f32 to vector<32x192xf32>
      %17 = arith.cmpf ogt, %15, %16 : vector<32x192xf32>
      %cst_15 = arith.constant 2.000000e+01 : f32
      %18 = vector.broadcast %cst_15 : f32 to vector<32x192xf32>
      %19 = arith.minimumf %15, %18 : vector<32x192xf32>
      %20 = math.exp %19 : vector<32x192xf32>
      %21 = math.log1p %20 : vector<32x192xf32>
      %22 = arith.select %17, %15, %21 : vector<32x192xi1>, vector<32x192xf32>
      %23 = arith.truncf %22 : vector<32x192xf32> to vector<32x192xbf16>
      %c0_16 = arith.constant 0 : index
      %c0_17 = arith.constant 0 : index
      %24 = vector.load %arg6[%c0_16, %c0_17] : memref<32x192xbf16, #tpu.memory_space<vmem>>, vector<32x192xbf16>
      tpu.vector_store %arg6[%c0_16, %c0_17], %23 {strides = array<i32>} : memref<32x192xbf16, #tpu.memory_space<vmem>>, vector<32x192xbf16>,
    } else {
    }
    return
  }
  func.func @transform_0(%arg0: i32, %arg1: i32, %arg2: i32) -> (i32, i32) {
    %c0_i32 = arith.constant 0 : i32
    return %arg0, %arg2 : i32, i32
  }
  func.func @transform_1(%arg0: i32, %arg1: i32, %arg2: i32) -> (i32, i32) {
    %c0_i32 = arith.constant 0 : i32
    return %arg2, %arg1 : i32, i32
  }
  func.func @transform_2(%arg0: i32, %arg1: i32, %arg2: i32) -> (i32, i32) {
    %c0_i32 = arith.constant 0 : i32
    %c0_i32_0 = arith.constant 0 : i32
    return %c0_i32, %arg1 : i32, i32
  }
  func.func @transform_3(%arg0: i32, %arg1: i32, %arg2: i32) -> (i32, i32) {
    %c0_i32 = arith.constant 0 : i32
    return %arg0, %arg1 : i32, i32
  }
}

module attributes {stable_mosaic.version = 11 : i64} {
  func.func @_maxpool_taps_kernel(%arg0: i32, %arg1: memref<9x16x192xbf16, #tpu.memory_space<vmem>>, %arg2: memref<16x192xbf16, #tpu.memory_space<vmem>>) attributes {dimension_semantics = [#tpu.dimension_semantics<parallel>], iteration_bounds = array<i64: 1>, scalar_prefetch = 0 : i64, scratch_operands = 0 : i64, tpu.core_type = #tpu.core_type<tc>, window_params = [{transform_indices = @transform_0, window_bounds = array<i64: 9, 16, 192>}, {transform_indices = @transform_1, window_bounds = array<i64: 16, 192>}]} {
    %c0 = arith.constant 0 : index
    %c0_0 = arith.constant 0 : index
    %c0_1 = arith.constant 0 : index
    %0 = vector.load %arg1[%c0, %c0_0, %c0_1] : memref<9x16x192xbf16, #tpu.memory_space<vmem>>, vector<1x16x192xbf16>
    %1 = vector.shape_cast %0 : vector<1x16x192xbf16> to vector<16x192xbf16>
    %c1 = arith.constant 1 : index
    %c0_2 = arith.constant 0 : index
    %c0_3 = arith.constant 0 : index
    %2 = vector.load %arg1[%c1, %c0_2, %c0_3] : memref<9x16x192xbf16, #tpu.memory_space<vmem>>, vector<1x16x192xbf16>
    %3 = vector.shape_cast %2 : vector<1x16x192xbf16> to vector<16x192xbf16>
    %4 = arith.maximumf %1, %3 : vector<16x192xbf16>
    %c2 = arith.constant 2 : index
    %c0_4 = arith.constant 0 : index
    %c0_5 = arith.constant 0 : index
    %5 = vector.load %arg1[%c2, %c0_4, %c0_5] : memref<9x16x192xbf16, #tpu.memory_space<vmem>>, vector<1x16x192xbf16>
    %6 = vector.shape_cast %5 : vector<1x16x192xbf16> to vector<16x192xbf16>
    %7 = arith.maximumf %4, %6 : vector<16x192xbf16>
    %c3 = arith.constant 3 : index
    %c0_6 = arith.constant 0 : index
    %c0_7 = arith.constant 0 : index
    %8 = vector.load %arg1[%c3, %c0_6, %c0_7] : memref<9x16x192xbf16, #tpu.memory_space<vmem>>, vector<1x16x192xbf16>
    %9 = vector.shape_cast %8 : vector<1x16x192xbf16> to vector<16x192xbf16>
    %10 = arith.maximumf %7, %9 : vector<16x192xbf16>
    %c4 = arith.constant 4 : index
    %c0_8 = arith.constant 0 : index
    %c0_9 = arith.constant 0 : index
    %11 = vector.load %arg1[%c4, %c0_8, %c0_9] : memref<9x16x192xbf16, #tpu.memory_space<vmem>>, vector<1x16x192xbf16>
    %12 = vector.shape_cast %11 : vector<1x16x192xbf16> to vector<16x192xbf16>
    %13 = arith.maximumf %10, %12 : vector<16x192xbf16>
    %c5 = arith.constant 5 : index
    %c0_10 = arith.constant 0 : index
    %c0_11 = arith.constant 0 : index
    %14 = vector.load %arg1[%c5, %c0_10, %c0_11] : memref<9x16x192xbf16, #tpu.memory_space<vmem>>, vector<1x16x192xbf16>
    %15 = vector.shape_cast %14 : vector<1x16x192xbf16> to vector<16x192xbf16>
    %16 = arith.maximumf %13, %15 : vector<16x192xbf16>
    %c6 = arith.constant 6 : index
    %c0_12 = arith.constant 0 : index
    %c0_13 = arith.constant 0 : index
    %17 = vector.load %arg1[%c6, %c0_12, %c0_13] : memref<9x16x192xbf16, #tpu.memory_space<vmem>>, vector<1x16x192xbf16>
    %18 = vector.shape_cast %17 : vector<1x16x192xbf16> to vector<16x192xbf16>
    %19 = arith.maximumf %16, %18 : vector<16x192xbf16>
    %c7 = arith.constant 7 : index
    %c0_14 = arith.constant 0 : index
    %c0_15 = arith.constant 0 : index
    %20 = vector.load %arg1[%c7, %c0_14, %c0_15] : memref<9x16x192xbf16, #tpu.memory_space<vmem>>, vector<1x16x192xbf16>
    %21 = vector.shape_cast %20 : vector<1x16x192xbf16> to vector<16x192xbf16>
    %22 = arith.maximumf %19, %21 : vector<16x192xbf16>
    %c8 = arith.constant 8 : index
    %c0_16 = arith.constant 0 : index
    %c0_17 = arith.constant 0 : index
    %23 = vector.load %arg1[%c8, %c0_16, %c0_17] : memref<9x16x192xbf16, #tpu.memory_space<vmem>>, vector<1x16x192xbf16>
    %24 = vector.shape_cast %23 : vector<1x16x192xbf16> to vector<16x192xbf16>
    %25 = arith.maximumf %22, %24 : vector<16x192xbf16>
    %c0_18 = arith.constant 0 : index
    %c0_19 = arith.constant 0 : index
    %26 = vector.load %arg2[%c0_18, %c0_19] : memref<16x192xbf16, #tpu.memory_space<vmem>>, vector<16x192xbf16>
    tpu.vector_store %arg2[%c0_18, %c0_19], %25 {strides = array<i32>} : memref<16x192xbf16, #tpu.memory_space<vmem>>, vector<16x192xbf16>,
    return
  }
  func.func @transform_0(%arg0: i32) -> (i32, i32, i32) {
    %c0_i32 = arith.constant 0 : i32
    %c0_i32_0 = arith.constant 0 : i32
    %c0_i32_1 = arith.constant 0 : i32
    return %c0_i32, %arg0, %c0_i32_0 : i32, i32, i32
  }
  func.func @transform_1(%arg0: i32) -> (i32, i32) {
    %c0_i32 = arith.constant 0 : i32
    %c0_i32_0 = arith.constant 0 : i32
    return %arg0, %c0_i32 : i32, i32
  }
}

module attributes {stable_mosaic.version = 11 : i64} {
  func.func @_matmul_bias_kernel(%arg0: i32, %arg1: i32, %arg2: i32, %arg3: memref<16x1792xbf16, #tpu.memory_space<vmem>>, %arg4: memref<1792x384xbf16, #tpu.memory_space<vmem>>, %arg5: memref<1x384xf32, #tpu.memory_space<vmem>>, %arg6: memref<16x384xbf16, #tpu.memory_space<vmem>>, %arg7: memref<16x384xf32, #tpu.memory_space<vmem>>) attributes {dimension_semantics = [#tpu.dimension_semantics<parallel>, #tpu.dimension_semantics<parallel>, #tpu.dimension_semantics<arbitrary>], iteration_bounds = array<i64: 1, 1, 1>, scalar_prefetch = 0 : i64, scratch_operands = 1 : i64, tpu.core_type = #tpu.core_type<tc>, window_params = [{transform_indices = @transform_0, window_bounds = array<i64: 16, 1792>}, {transform_indices = @transform_1, window_bounds = array<i64: 1792, 384>}, {transform_indices = @transform_2, window_bounds = array<i64: 1, 384>}, {transform_indices = @transform_3, window_bounds = array<i64: 16, 384>}]} {
    %c0_i32 = arith.constant 0 : i32
    %0 = arith.cmpi eq, %arg2, %c0_i32 : i32
    %1 = arith.extui %0 : i1 to i32
    %c0_i32_0 = arith.constant 0 : i32
    %2 = arith.cmpi ne, %1, %c0_i32_0 : i32
    scf.if %2 {
      %cst_10 = arith.constant 0.000000e+00 : f32
      %12 = vector.broadcast %cst_10 : f32 to vector<16x384xf32>
      %c0_11 = arith.constant 0 : index
      %c0_12 = arith.constant 0 : index
      %13 = vector.load %arg7[%c0_11, %c0_12] : memref<16x384xf32, #tpu.memory_space<vmem>>, vector<16x384xf32>
      tpu.vector_store %arg7[%c0_11, %c0_12], %12 {strides = array<i32>} : memref<16x384xf32, #tpu.memory_space<vmem>>, vector<16x384xf32>,
    } else {
    }
    %c0 = arith.constant 0 : index
    %c0_1 = arith.constant 0 : index
    %3 = vector.load %arg7[%c0, %c0_1] : memref<16x384xf32, #tpu.memory_space<vmem>>, vector<16x384xf32>
    %c0_2 = arith.constant 0 : index
    %c0_3 = arith.constant 0 : index
    %4 = vector.load %arg3[%c0_2, %c0_3] : memref<16x1792xbf16, #tpu.memory_space<vmem>>, vector<16x1792xbf16>
    %c0_4 = arith.constant 0 : index
    %c0_5 = arith.constant 0 : index
    %5 = vector.load %arg4[%c0_4, %c0_5] : memref<1792x384xbf16, #tpu.memory_space<vmem>>, vector<1792x384xbf16>
    %cst = arith.constant dense<0.000000e+00> : vector<16x384xf32>
    %6 = tpu.matmul %4, %5, %cst {dimension_numbers = #tpu.dot_dimension_numbers<[1], [0], [0], [1], [0, 0, 1, 1], [], []>} : vector<16x1792xbf16>, vector<1792x384xbf16>, vector<16x384xf32> -> vector<16x384xf32>
    %7 = arith.addf %3, %6 : vector<16x384xf32>
    %c0_6 = arith.constant 0 : index
    %c0_7 = arith.constant 0 : index
    %8 = vector.load %arg7[%c0_6, %c0_7] : memref<16x384xf32, #tpu.memory_space<vmem>>, vector<16x384xf32>
    tpu.vector_store %arg7[%c0_6, %c0_7], %7 {strides = array<i32>} : memref<16x384xf32, #tpu.memory_space<vmem>>, vector<16x384xf32>,
    %c0_i32_8 = arith.constant 0 : i32
    %9 = arith.cmpi eq, %arg2, %c0_i32_8 : i32
    %10 = arith.extui %9 : i1 to i32
    %c0_i32_9 = arith.constant 0 : i32
    %11 = arith.cmpi ne, %10, %c0_i32_9 : i32
    scf.if %11 {
      %c0_10 = arith.constant 0 : index
      %c0_11 = arith.constant 0 : index
      %12 = vector.load %arg7[%c0_10, %c0_11] : memref<16x384xf32, #tpu.memory_space<vmem>>, vector<16x384xf32>
      %c0_12 = arith.constant 0 : index
      %c0_13 = arith.constant 0 : index
      %13 = vector.load %arg5[%c0_12, %c0_13] : memref<1x384xf32, #tpu.memory_space<vmem>>, vector<1x384xf32>
      %14 = vector.broadcast %13 : vector<1x384xf32> to vector<16x384xf32>
      %15 = arith.addf %12, %14 : vector<16x384xf32>
      %cst_14 = arith.constant 2.000000e+01 : f32
      %16 = vector.broadcast %cst_14 : f32 to vector<16x384xf32>
      %17 = arith.cmpf ogt, %15, %16 : vector<16x384xf32>
      %cst_15 = arith.constant 2.000000e+01 : f32
      %18 = vector.broadcast %cst_15 : f32 to vector<16x384xf32>
      %19 = arith.minimumf %15, %18 : vector<16x384xf32>
      %20 = math.exp %19 : vector<16x384xf32>
      %21 = math.log1p %20 : vector<16x384xf32>
      %22 = arith.select %17, %15, %21 : vector<16x384xi1>, vector<16x384xf32>
      %23 = arith.truncf %22 : vector<16x384xf32> to vector<16x384xbf16>
      %c0_16 = arith.constant 0 : index
      %c0_17 = arith.constant 0 : index
      %24 = vector.load %arg6[%c0_16, %c0_17] : memref<16x384xbf16, #tpu.memory_space<vmem>>, vector<16x384xbf16>
      tpu.vector_store %arg6[%c0_16, %c0_17], %23 {strides = array<i32>} : memref<16x384xbf16, #tpu.memory_space<vmem>>, vector<16x384xbf16>,
    } else {
    }
    return
  }
  func.func @transform_0(%arg0: i32, %arg1: i32, %arg2: i32) -> (i32, i32) {
    %c0_i32 = arith.constant 0 : i32
    return %arg0, %arg2 : i32, i32
  }
  func.func @transform_1(%arg0: i32, %arg1: i32, %arg2: i32) -> (i32, i32) {
    %c0_i32 = arith.constant 0 : i32
    return %arg2, %arg1 : i32, i32
  }
  func.func @transform_2(%arg0: i32, %arg1: i32, %arg2: i32) -> (i32, i32) {
    %c0_i32 = arith.constant 0 : i32
    %c0_i32_0 = arith.constant 0 : i32
    return %c0_i32, %arg1 : i32, i32
  }
  func.func @transform_3(%arg0: i32, %arg1: i32, %arg2: i32) -> (i32, i32) {
    %c0_i32 = arith.constant 0 : i32
    return %arg0, %arg1 : i32, i32
  }
}

module attributes {stable_mosaic.version = 11 : i64} {
  func.func @_matmul_bias_kernel(%arg0: i32, %arg1: i32, %arg2: i32, %arg3: memref<16x1152xbf16, #tpu.memory_space<vmem>>, %arg4: memref<1152x256xbf16, #tpu.memory_space<vmem>>, %arg5: memref<1x256xf32, #tpu.memory_space<vmem>>, %arg6: memref<16x256xbf16, #tpu.memory_space<vmem>>, %arg7: memref<16x256xf32, #tpu.memory_space<vmem>>) attributes {dimension_semantics = [#tpu.dimension_semantics<parallel>, #tpu.dimension_semantics<parallel>, #tpu.dimension_semantics<arbitrary>], iteration_bounds = array<i64: 1, 1, 3>, scalar_prefetch = 0 : i64, scratch_operands = 1 : i64, tpu.core_type = #tpu.core_type<tc>, window_params = [{transform_indices = @transform_0, window_bounds = array<i64: 16, 1152>}, {transform_indices = @transform_1, window_bounds = array<i64: 1152, 256>}, {transform_indices = @transform_2, window_bounds = array<i64: 1, 256>}, {transform_indices = @transform_3, window_bounds = array<i64: 16, 256>}]} {
    %c0_i32 = arith.constant 0 : i32
    %0 = arith.cmpi eq, %arg2, %c0_i32 : i32
    %1 = arith.extui %0 : i1 to i32
    %c0_i32_0 = arith.constant 0 : i32
    %2 = arith.cmpi ne, %1, %c0_i32_0 : i32
    scf.if %2 {
      %cst_9 = arith.constant 0.000000e+00 : f32
      %12 = vector.broadcast %cst_9 : f32 to vector<16x256xf32>
      %c0_10 = arith.constant 0 : index
      %c0_11 = arith.constant 0 : index
      %13 = vector.load %arg7[%c0_10, %c0_11] : memref<16x256xf32, #tpu.memory_space<vmem>>, vector<16x256xf32>
      tpu.vector_store %arg7[%c0_10, %c0_11], %12 {strides = array<i32>} : memref<16x256xf32, #tpu.memory_space<vmem>>, vector<16x256xf32>,
    } else {
    }
    %c0 = arith.constant 0 : index
    %c0_1 = arith.constant 0 : index
    %3 = vector.load %arg7[%c0, %c0_1] : memref<16x256xf32, #tpu.memory_space<vmem>>, vector<16x256xf32>
    %c0_2 = arith.constant 0 : index
    %c0_3 = arith.constant 0 : index
    %4 = vector.load %arg3[%c0_2, %c0_3] : memref<16x1152xbf16, #tpu.memory_space<vmem>>, vector<16x1152xbf16>
    %c0_4 = arith.constant 0 : index
    %c0_5 = arith.constant 0 : index
    %5 = vector.load %arg4[%c0_4, %c0_5] : memref<1152x256xbf16, #tpu.memory_space<vmem>>, vector<1152x256xbf16>
    %cst = arith.constant dense<0.000000e+00> : vector<16x256xf32>
    %6 = tpu.matmul %4, %5, %cst {dimension_numbers = #tpu.dot_dimension_numbers<[1], [0], [0], [1], [0, 0, 1, 1], [], []>} : vector<16x1152xbf16>, vector<1152x256xbf16>, vector<16x256xf32> -> vector<16x256xf32>
    %7 = arith.addf %3, %6 : vector<16x256xf32>
    %c0_6 = arith.constant 0 : index
    %c0_7 = arith.constant 0 : index
    %8 = vector.load %arg7[%c0_6, %c0_7] : memref<16x256xf32, #tpu.memory_space<vmem>>, vector<16x256xf32>
    tpu.vector_store %arg7[%c0_6, %c0_7], %7 {strides = array<i32>} : memref<16x256xf32, #tpu.memory_space<vmem>>, vector<16x256xf32>,
    %c2_i32 = arith.constant 2 : i32
    %9 = arith.cmpi eq, %arg2, %c2_i32 : i32
    %10 = arith.extui %9 : i1 to i32
    %c0_i32_8 = arith.constant 0 : i32
    %11 = arith.cmpi ne, %10, %c0_i32_8 : i32
    scf.if %11 {
      %c0_9 = arith.constant 0 : index
      %c0_10 = arith.constant 0 : index
      %12 = vector.load %arg7[%c0_9, %c0_10] : memref<16x256xf32, #tpu.memory_space<vmem>>, vector<16x256xf32>
      %c0_11 = arith.constant 0 : index
      %c0_12 = arith.constant 0 : index
      %13 = vector.load %arg5[%c0_11, %c0_12] : memref<1x256xf32, #tpu.memory_space<vmem>>, vector<1x256xf32>
      %14 = vector.broadcast %13 : vector<1x256xf32> to vector<16x256xf32>
      %15 = arith.addf %12, %14 : vector<16x256xf32>
      %cst_13 = arith.constant 2.000000e+01 : f32
      %16 = vector.broadcast %cst_13 : f32 to vector<16x256xf32>
      %17 = arith.cmpf ogt, %15, %16 : vector<16x256xf32>
      %cst_14 = arith.constant 2.000000e+01 : f32
      %18 = vector.broadcast %cst_14 : f32 to vector<16x256xf32>
      %19 = arith.minimumf %15, %18 : vector<16x256xf32>
      %20 = math.exp %19 : vector<16x256xf32>
      %21 = math.log1p %20 : vector<16x256xf32>
      %22 = arith.select %17, %15, %21 : vector<16x256xi1>, vector<16x256xf32>
      %23 = arith.truncf %22 : vector<16x256xf32> to vector<16x256xbf16>
      %c0_15 = arith.constant 0 : index
      %c0_16 = arith.constant 0 : index
      %24 = vector.load %arg6[%c0_15, %c0_16] : memref<16x256xbf16, #tpu.memory_space<vmem>>, vector<16x256xbf16>
      tpu.vector_store %arg6[%c0_15, %c0_16], %23 {strides = array<i32>} : memref<16x256xbf16, #tpu.memory_space<vmem>>, vector<16x256xbf16>,
    } else {
    }
    return
  }
  func.func @transform_0(%arg0: i32, %arg1: i32, %arg2: i32) -> (i32, i32) {
    %c0_i32 = arith.constant 0 : i32
    return %arg0, %arg2 : i32, i32
  }
  func.func @transform_1(%arg0: i32, %arg1: i32, %arg2: i32) -> (i32, i32) {
    %c0_i32 = arith.constant 0 : i32
    return %arg2, %arg1 : i32, i32
  }
  func.func @transform_2(%arg0: i32, %arg1: i32, %arg2: i32) -> (i32, i32) {
    %c0_i32 = arith.constant 0 : i32
    %c0_i32_0 = arith.constant 0 : i32
    return %c0_i32, %arg1 : i32, i32
  }
  func.func @transform_3(%arg0: i32, %arg1: i32, %arg2: i32) -> (i32, i32) {
    %c0_i32 = arith.constant 0 : i32
    return %arg0, %arg1 : i32, i32
  }
}

module attributes {stable_mosaic.version = 11 : i64} {
  func.func @_matmul_bias_kernel(%arg0: i32, %arg1: i32, %arg2: i32, %arg3: memref<16x1152xbf16, #tpu.memory_space<vmem>>, %arg4: memref<1152x256xbf16, #tpu.memory_space<vmem>>, %arg5: memref<1x256xf32, #tpu.memory_space<vmem>>, %arg6: memref<16x256xbf16, #tpu.memory_space<vmem>>, %arg7: memref<16x256xf32, #tpu.memory_space<vmem>>) attributes {dimension_semantics = [#tpu.dimension_semantics<parallel>, #tpu.dimension_semantics<parallel>, #tpu.dimension_semantics<arbitrary>], iteration_bounds = array<i64: 1, 1, 2>, scalar_prefetch = 0 : i64, scratch_operands = 1 : i64, tpu.core_type = #tpu.core_type<tc>, window_params = [{transform_indices = @transform_0, window_bounds = array<i64: 16, 1152>}, {transform_indices = @transform_1, window_bounds = array<i64: 1152, 256>}, {transform_indices = @transform_2, window_bounds = array<i64: 1, 256>}, {transform_indices = @transform_3, window_bounds = array<i64: 16, 256>}]} {
    %c0_i32 = arith.constant 0 : i32
    %0 = arith.cmpi eq, %arg2, %c0_i32 : i32
    %1 = arith.extui %0 : i1 to i32
    %c0_i32_0 = arith.constant 0 : i32
    %2 = arith.cmpi ne, %1, %c0_i32_0 : i32
    scf.if %2 {
      %cst_9 = arith.constant 0.000000e+00 : f32
      %12 = vector.broadcast %cst_9 : f32 to vector<16x256xf32>
      %c0_10 = arith.constant 0 : index
      %c0_11 = arith.constant 0 : index
      %13 = vector.load %arg7[%c0_10, %c0_11] : memref<16x256xf32, #tpu.memory_space<vmem>>, vector<16x256xf32>
      tpu.vector_store %arg7[%c0_10, %c0_11], %12 {strides = array<i32>} : memref<16x256xf32, #tpu.memory_space<vmem>>, vector<16x256xf32>,
    } else {
    }
    %c0 = arith.constant 0 : index
    %c0_1 = arith.constant 0 : index
    %3 = vector.load %arg7[%c0, %c0_1] : memref<16x256xf32, #tpu.memory_space<vmem>>, vector<16x256xf32>
    %c0_2 = arith.constant 0 : index
    %c0_3 = arith.constant 0 : index
    %4 = vector.load %arg3[%c0_2, %c0_3] : memref<16x1152xbf16, #tpu.memory_space<vmem>>, vector<16x1152xbf16>
    %c0_4 = arith.constant 0 : index
    %c0_5 = arith.constant 0 : index
    %5 = vector.load %arg4[%c0_4, %c0_5] : memref<1152x256xbf16, #tpu.memory_space<vmem>>, vector<1152x256xbf16>
    %cst = arith.constant dense<0.000000e+00> : vector<16x256xf32>
    %6 = tpu.matmul %4, %5, %cst {dimension_numbers = #tpu.dot_dimension_numbers<[1], [0], [0], [1], [0, 0, 1, 1], [], []>} : vector<16x1152xbf16>, vector<1152x256xbf16>, vector<16x256xf32> -> vector<16x256xf32>
    %7 = arith.addf %3, %6 : vector<16x256xf32>
    %c0_6 = arith.constant 0 : index
    %c0_7 = arith.constant 0 : index
    %8 = vector.load %arg7[%c0_6, %c0_7] : memref<16x256xf32, #tpu.memory_space<vmem>>, vector<16x256xf32>
    tpu.vector_store %arg7[%c0_6, %c0_7], %7 {strides = array<i32>} : memref<16x256xf32, #tpu.memory_space<vmem>>, vector<16x256xf32>,
    %c1_i32 = arith.constant 1 : i32
    %9 = arith.cmpi eq, %arg2, %c1_i32 : i32
    %10 = arith.extui %9 : i1 to i32
    %c0_i32_8 = arith.constant 0 : i32
    %11 = arith.cmpi ne, %10, %c0_i32_8 : i32
    scf.if %11 {
      %c0_9 = arith.constant 0 : index
      %c0_10 = arith.constant 0 : index
      %12 = vector.load %arg7[%c0_9, %c0_10] : memref<16x256xf32, #tpu.memory_space<vmem>>, vector<16x256xf32>
      %c0_11 = arith.constant 0 : index
      %c0_12 = arith.constant 0 : index
      %13 = vector.load %arg5[%c0_11, %c0_12] : memref<1x256xf32, #tpu.memory_space<vmem>>, vector<1x256xf32>
      %14 = vector.broadcast %13 : vector<1x256xf32> to vector<16x256xf32>
      %15 = arith.addf %12, %14 : vector<16x256xf32>
      %cst_13 = arith.constant 2.000000e+01 : f32
      %16 = vector.broadcast %cst_13 : f32 to vector<16x256xf32>
      %17 = arith.cmpf ogt, %15, %16 : vector<16x256xf32>
      %cst_14 = arith.constant 2.000000e+01 : f32
      %18 = vector.broadcast %cst_14 : f32 to vector<16x256xf32>
      %19 = arith.minimumf %15, %18 : vector<16x256xf32>
      %20 = math.exp %19 : vector<16x256xf32>
      %21 = math.log1p %20 : vector<16x256xf32>
      %22 = arith.select %17, %15, %21 : vector<16x256xi1>, vector<16x256xf32>
      %23 = arith.truncf %22 : vector<16x256xf32> to vector<16x256xbf16>
      %c0_15 = arith.constant 0 : index
      %c0_16 = arith.constant 0 : index
      %24 = vector.load %arg6[%c0_15, %c0_16] : memref<16x256xbf16, #tpu.memory_space<vmem>>, vector<16x256xbf16>
      tpu.vector_store %arg6[%c0_15, %c0_16], %23 {strides = array<i32>} : memref<16x256xbf16, #tpu.memory_space<vmem>>, vector<16x256xbf16>,
    } else {
    }
    return
  }
  func.func @transform_0(%arg0: i32, %arg1: i32, %arg2: i32) -> (i32, i32) {
    %c0_i32 = arith.constant 0 : i32
    return %arg0, %arg2 : i32, i32
  }
  func.func @transform_1(%arg0: i32, %arg1: i32, %arg2: i32) -> (i32, i32) {
    %c0_i32 = arith.constant 0 : i32
    return %arg2, %arg1 : i32, i32
  }
  func.func @transform_2(%arg0: i32, %arg1: i32, %arg2: i32) -> (i32, i32) {
    %c0_i32 = arith.constant 0 : i32
    %c0_i32_0 = arith.constant 0 : i32
    return %c0_i32, %arg1 : i32, i32
  }
  func.func @transform_3(%arg0: i32, %arg1: i32, %arg2: i32) -> (i32, i32) {
    %c0_i32 = arith.constant 0 : i32
    return %arg0, %arg1 : i32, i32
  }
}

module attributes {stable_mosaic.version = 11 : i64} {
  func.func @_tail_kernel(%arg0: i32, %arg1: memref<16x256xbf16, #tpu.memory_space<vmem>>, %arg2: memref<256x16xf32, #tpu.memory_space<vmem>>, %arg3: memref<1x16xf32, #tpu.memory_space<vmem>>, %arg4: memref<16x10xf32, #tpu.memory_space<vmem>>, %arg5: memref<1x10xf32, #tpu.memory_space<vmem>>, %arg6: memref<16x16xf32, #tpu.memory_space<vmem>>, %arg7: memref<16x10xf32, #tpu.memory_space<vmem>>) attributes {dimension_semantics = [#tpu.dimension_semantics<parallel>], iteration_bounds = array<i64: 1>, scalar_prefetch = 0 : i64, scratch_operands = 0 : i64, tpu.core_type = #tpu.core_type<tc>, window_params = [{transform_indices = @transform_0, window_bounds = array<i64: 16, 256>}, {pipeline_mode = #tpu.pipeline_mode<synchronous>, transform_indices = @transform_1, window_bounds = array<i64: 256, 16>}, {pipeline_mode = #tpu.pipeline_mode<synchronous>, transform_indices = @transform_2, window_bounds = array<i64: 1, 16>}, {pipeline_mode = #tpu.pipeline_mode<synchronous>, transform_indices = @transform_3, window_bounds = array<i64: 16, 10>}, {pipeline_mode = #tpu.pipeline_mode<synchronous>, transform_indices = @transform_4, window_bounds = array<i64: 1, 10>}, {transform_indices = @transform_5, window_bounds = array<i64: 16, 16>}, {transform_indices = @transform_6, window_bounds = array<i64: 16, 10>}]} {
    %c0 = arith.constant 0 : index
    %c0_0 = arith.constant 0 : index
    %0 = vector.load %arg1[%c0, %c0_0] : memref<16x256xbf16, #tpu.memory_space<vmem>>, vector<16x256xbf16>
    %1 = arith.extf %0 : vector<16x256xbf16> to vector<16x256xf32>
    %c0_1 = arith.constant 0 : index
    %c0_2 = arith.constant 0 : index
    %2 = vector.load %arg2[%c0_1, %c0_2] : memref<256x16xf32, #tpu.memory_space<vmem>>, vector<256x16xf32>
    %cst = arith.constant dense<0.000000e+00> : vector<16x16xf32>
    %3 = tpu.matmul %1, %2, %cst {dimension_numbers = #tpu.dot_dimension_numbers<[1], [0], [0], [1], [0, 0, 1, 1], [], []>} : vector<16x256xf32>, vector<256x16xf32>, vector<16x16xf32> -> vector<16x16xf32>
    %c0_3 = arith.constant 0 : index
    %c0_4 = arith.constant 0 : index
    %4 = vector.load %arg3[%c0_3, %c0_4] : memref<1x16xf32, #tpu.memory_space<vmem>>, vector<1x16xf32>
    %5 = vector.broadcast %4 : vector<1x16xf32> to vector<16x16xf32>
    %6 = arith.addf %3, %5 : vector<16x16xf32>
    %c0_5 = arith.constant 0 : index
    %c0_6 = arith.constant 0 : index
    %7 = vector.load %arg6[%c0_5, %c0_6] : memref<16x16xf32, #tpu.memory_space<vmem>>, vector<16x16xf32>
    tpu.vector_store %arg6[%c0_5, %c0_6], %6 {strides = array<i32>} : memref<16x16xf32, #tpu.memory_space<vmem>>, vector<16x16xf32>,
    %c0_7 = arith.constant 0 : index
    %c0_8 = arith.constant 0 : index
    %8 = vector.load %arg4[%c0_7, %c0_8] : memref<16x10xf32, #tpu.memory_space<vmem>>, vector<16x10xf32>
    %cst_9 = arith.constant dense<0.000000e+00> : vector<16x10xf32>
    %9 = tpu.matmul %6, %8, %cst_9 {dimension_numbers = #tpu.dot_dimension_numbers<[1], [0], [0], [1], [0, 0, 1, 1], [], []>} : vector<16x16xf32>, vector<16x10xf32>, vector<16x10xf32> -> vector<16x10xf32>
    %c0_10 = arith.constant 0 : index
    %c0_11 = arith.constant 0 : index
    %10 = vector.load %arg5[%c0_10, %c0_11] : memref<1x10xf32, #tpu.memory_space<vmem>>, vector<1x10xf32>
    %11 = vector.broadcast %10 : vector<1x10xf32> to vector<16x10xf32>
    %12 = arith.addf %9, %11 : vector<16x10xf32>
    %c0_12 = arith.constant 0 : index
    %c0_13 = arith.constant 0 : index
    %13 = vector.load %arg7[%c0_12, %c0_13] : memref<16x10xf32, #tpu.memory_space<vmem>>, vector<16x10xf32>
    tpu.vector_store %arg7[%c0_12, %c0_13], %12 {strides = array<i32>} : memref<16x10xf32, #tpu.memory_space<vmem>>, vector<16x10xf32>,
    return
  }
  func.func @transform_0(%arg0: i32) -> (i32, i32) {
    %c0_i32 = arith.constant 0 : i32
    %c0_i32_0 = arith.constant 0 : i32
    return %arg0, %c0_i32 : i32, i32
  }
  func.func @transform_1(%arg0: i32) -> (i32, i32) {
    %c0_i32 = arith.constant 0 : i32
    %c0_i32_0 = arith.constant 0 : i32
    %c0_i32_1 = arith.constant 0 : i32
    return %c0_i32, %c0_i32_0 : i32, i32
  }
  func.func @transform_2(%arg0: i32) -> (i32, i32) {
    %c0_i32 = arith.constant 0 : i32
    %c0_i32_0 = arith.constant 0 : i32
    %c0_i32_1 = arith.constant 0 : i32
    return %c0_i32, %c0_i32_0 : i32, i32
  }
  func.func @transform_3(%arg0: i32) -> (i32, i32) {
    %c0_i32 = arith.constant 0 : i32
    %c0_i32_0 = arith.constant 0 : i32
    %c0_i32_1 = arith.constant 0 : i32
    return %c0_i32, %c0_i32_0 : i32, i32
  }
  func.func @transform_4(%arg0: i32) -> (i32, i32) {
    %c0_i32 = arith.constant 0 : i32
    %c0_i32_0 = arith.constant 0 : i32
    %c0_i32_1 = arith.constant 0 : i32
    return %c0_i32, %c0_i32_0 : i32, i32
  }
  func.func @transform_5(%arg0: i32) -> (i32, i32) {
    %c0_i32 = arith.constant 0 : i32
    %c0_i32_0 = arith.constant 0 : i32
    return %arg0, %c0_i32 : i32, i32
  }
  func.func @transform_6(%arg0: i32) -> (i32, i32) {
    %c0_i32 = arith.constant 0 : i32
    %c0_i32_0 = arith.constant 0 : i32
    return %arg0, %c0_i32 : i32, i32
  }
}

</mosaic_0001>

<llo_original>
// kernel: bbb_alexnet_forward.8
$region0: #{bbb_alexnet_forward.8}
  #allocation0 [shape = 'u32[]', space=smem, size = 0x4, offset = 0x4, fixed_abs, tag = 'smem constant byte address 0x4 - core index']
  #allocation1 [shape = 'u32[144,128]{1,0:T(1,128)}', space=vmem, size = 0x12000, scoped, tag = 'internal scratch']
  #allocation2 [shape = 'f32[112,64]{1,0:T(8,128)}', space=vmem, size = 0xe000, scoped, tag = 'scratch operand']
  %s0 = inlined_call_operand.vmem [shape: bf16[112,384], index: 0, kind: input, shape index: {}]
  %s1 = inlined_call_operand.vmem [shape: bf16[384,64], index: 1, kind: input, shape index: {}]
  %s2 = inlined_call_operand.vmem [shape: f32[1,64], index: 2, kind: input, shape index: {}]
  %s3 = inlined_call_operand.vmem [shape: bf16[112,64], index: 3, kind: output, shape index: {}]
  %s4 = sld [smem:[#allocation0]]
  $region30: #{bbb_alexnet_forward.8} parent=0
    _
  %s6 = ssub.s32 1, %s4
  %s7 = scalar_select 0, %s6, %s4
  // Predicated region
  $region2: #{bbb_alexnet_forward.8} parent=0 // pred_check
    _
  $region3: #{bbb_alexnet_forward.8} parent=0 // pred_check_branch
    %9 = sbr.rel (0) target = $region5
  $region4: #{bbb_alexnet_forward.8} parent=0 // pred_region
    _
  $region5: #{bbb_alexnet_forward.8} parent=0 // pred_fallthru
    _
  // Predicated region
  $region6: #{bbb_alexnet_forward.8} parent=0 // pred_check
    _
  $region7: #{bbb_alexnet_forward.8} parent=0 // pred_check_branch
    %11 = sbr.rel (0) target = $region9
  $region8: #{bbb_alexnet_forward.8} parent=0 // pred_region
    _
  $region9: #{bbb_alexnet_forward.8} parent=0 // pred_fallthru
    _
  // Predicated region
  $region10: #{bbb_alexnet_forward.8} parent=0 // pred_check
    _
  $region11: #{bbb_alexnet_forward.8} parent=0 // pred_check_branch
    %13 = sbr.rel (0) target = $region13
  $region12: #{bbb_alexnet_forward.8} parent=0 // pred_region
    _
  $region13: #{bbb_alexnet_forward.8} parent=0 // pred_fallthru
    _
  %p15 = scmp.eq.s32.totalorder 0, 0
  // Predicated region
  $region14: #{bbb_alexnet_forward.8} parent=0 // pred_check
    %p16 = pneg %p15
  $region15: #{bbb_alexnet_forward.8} parent=0 // pred_check_branch
    %18 = sbr.rel (%p16) target = $region17
  $region16: #{bbb_alexnet_forward.8} parent=0 // pred_region
    %vm19 = vcmask 523264
    %20 = vst.msk [vmem:[#allocation2] sm:$0xff] %vm19, 0.0
    %21 = vst.msk [vmem:[#allocation2 + $0x8] sm:$0xff] %vm19, 0.0
    %22 = vst.msk [vmem:[#allocation2 + $0x10] sm:$0xff] %vm19, 0.0
    %23 = vst.msk [vmem:[#allocation2 + $0x18] sm:$0xff] %vm19, 0.0
    %24 = vst.msk [vmem:[#allocation2 + $0x20] sm:$0xff] %vm19, 0.0
    %25 = vst.msk [vmem:[#allocation2 + $0x28] sm:$0xff] %vm19, 0.0
    %26 = vst.msk [vmem:[#allocation2 + $0x30] sm:$0xff] %vm19, 0.0
    %27 = vst.msk [vmem:[#allocation2 + $0x38] sm:$0xff] %vm19, 0.0
    %28 = vst.msk [vmem:[#allocation2 + $0x40] sm:$0xff] %vm19, 0.0
    %29 = vst.msk [vmem:[#allocation2 + $0x48] sm:$0xff] %vm19, 0.0
    %30 = vst.msk [vmem:[#allocation2 + $0x50] sm:$0xff] %vm19, 0.0
    %31 = vst.msk [vmem:[#allocation2 + $0x58] sm:$0xff] %vm19, 0.0
    %32 = vst.msk [vmem:[#allocation2 + $0x60] sm:$0xff] %vm19, 0.0
    %33 = vst.msk [vmem:[#allocation2 + $0x68] sm:$0xff] %vm19, 0.0
  $region17: #{bbb_alexnet_forward.8} parent=0 // pred_fallthru
    _
  %v34 = vld [vmem:[#allocation2] sm:$0xff]
  %v35 = vld [vmem:[#allocation2 + $0x8] sm:$0xff]
  %v36 = vld [vmem:[#allocation2 + $0x10] sm:$0xff]
  %v37 = vld [vmem:[#allocation2 + $0x18] sm:$0xff]
  %v38 = vld [vmem:[#allocation2 + $0x20] sm:$0xff]
  %v39 = vld [vmem:[#allocation2 + $0x28] sm:$0xff]
  %v40 = vld [vmem:[#allocation2 + $0x30] sm:$0xff]
  %v41 = vld [vmem:[#allocation2 + $0x38] sm:$0xff]
  %v42 = vld [vmem:[#allocation2 + $0x40] sm:$0xff]
  %v43 = vld [vmem:[#allocation2 + $0x48] sm:$0xff]
  %v44 = vld [vmem:[#allocation2 + $0x50] sm:$0xff]
  %v45 = vld [vmem:[#allocation2 + $0x58] sm:$0xff]
  %v46 = vld [vmem:[#allocation2 + $0x60] sm:$0xff]
  %v47 = vld [vmem:[#allocation2 + $0x68] sm:$0xff]
  %v48 = vld [vmem:[%s0] sm:$0xff]
  %v49 = vld [vmem:[%s0 + $0x8] sm:$0xf]
  %v50 = vld [vmem:[%s0 + $0xc] sm:$0xff]
  %v51 = vld [vmem:[%s0 + $0x14] sm:$0xf]
  %v52 = vld [vmem:[%s0 + $0x18] sm:$0xff]
  %v53 = vld [vmem:[%s0 + $0x20] sm:$0xf]
  %v54 = vld [vmem:[%s0 + $0x24] sm:$0xff]
  %v55 = vld [vmem:[%s0 + $0x2c] sm:$0xf]
  %v56 = vld [vmem:[%s0 + $0x30] sm:$0xff]
  %v57 = vld [vmem:[%s0 + $0x38] sm:$0xf]
  %v58 = vld [vmem:[%s0 + $0x3c] sm:$0xff]
  %v59 = vld [vmem:[%s0 + $0x44] sm:$0xf]
  %v60 = vld [vmem:[%s0 + $0x48] sm:$0xff]
  %v61 = vld [vmem:[%s0 + $0x50] sm:$0xf]
  %v62 = vld [vmem:[%s0 + $0x54] sm:$0xff]
  %v63 = vld [vmem:[%s0 + $0x5c] sm:$0xf]
  %v64 = vld [vmem:[%s0 + $0x60] sm:$0xff]
  %v65 = vld [vmem:[%s0 + $0x68] sm:$0xf]
  %v66 = vld [vmem:[%s0 + $0x6c] sm:$0xff]
  %v67 = vld [vmem:[%s0 + $0x74] sm:$0xf]
  %v68 = vld [vmem:[%s0 + $0x78] sm:$0xff]
  %v69 = vld [vmem:[%s0 + $0x80] sm:$0xf]
  %v70 = vld [vmem:[%s0 + $0x84] sm:$0xff]
  %v71 = vld [vmem:[%s0 + $0x8c] sm:$0xf]
  %v72 = vld [vmem:[%s0 + $0x90] sm:$0xff]
  %v73 = vld [vmem:[%s0 + $0x98] sm:$0xf]
  %v74 = vld [vmem:[%s0 + $0x9c] sm:$0xff]
  %v75 = vld [vmem:[%s0 + $0xa4] sm:$0xf]
  %v76 = vld [vmem:[%s1] sm:$0xf]
  %v77 = vld [vmem:[%s1 + $0x4] sm:$0xf]
  %v78 = vld [vmem:[%s1 + $0x8] sm:$0xf]
  %v79 = vld [vmem:[%s1 + $0xc] sm:$0xf]
  %v80 = vld [vmem:[%s1 + $0x10] sm:$0xf]
  %v81 = vld [vmem:[%s1 + $0x14] sm:$0xf]
  %v82 = vld [vmem:[%s1 + $0x18] sm:$0xf]
  %v83 = vld [vmem:[%s1 + $0x1c] sm:$0xf]
  %v84 = vld [vmem:[%s1 + $0x20] sm:$0xf]
  %v85 = vld [vmem:[%s1 + $0x24] sm:$0xf]
  %v86 = vld [vmem:[%s1 + $0x28] sm:$0xf]
  %v87 = vld [vmem:[%s1 + $0x2c] sm:$0xf]
  %v88 = vld [vmem:[%s1 + $0x30] sm:$0xf]
  %v89 = vld [vmem:[%s1 + $0x34] sm:$0xf]
  %v90 = vld [vmem:[%s1 + $0x38] sm:$0xf]
  %v91 = vld [vmem:[%s1 + $0x3c] sm:$0xf]
  %v92 = vld [vmem:[%s1 + $0x40] sm:$0xf]
  %v93 = vld [vmem:[%s1 + $0x44] sm:$0xf]
  %v94 = vld [vmem:[%s1 + $0x48] sm:$0xf]
  %v95 = vld [vmem:[%s1 + $0x4c] sm:$0xf]
  %v96 = vld [vmem:[%s1 + $0x50] sm:$0xf]
  %v97 = vld [vmem:[%s1 + $0x54] sm:$0xf]
  %v98 = vld [vmem:[%s1 + $0x58] sm:$0xf]
  %v99 = vld [vmem:[%s1 + $0x5c] sm:$0xf]
  %v100 = vld [vmem:[%s1 + $0x60] sm:$0xf]
  %v101 = vld [vmem:[%s1 + $0x64] sm:$0xf]
  %v102 = vld [vmem:[%s1 + $0x68] sm:$0xf]
  %v103 = vld [vmem:[%s1 + $0x6c] sm:$0xf]
  %v104 = vld [vmem:[%s1 + $0x70] sm:$0xf]
  %v105 = vld [vmem:[%s1 + $0x74] sm:$0xf]
  %v106 = vld [vmem:[%s1 + $0x78] sm:$0xf]
  %v107 = vld [vmem:[%s1 + $0x7c] sm:$0xf]
  %v108 = vld [vmem:[%s1 + $0x80] sm:$0xf]
  %v109 = vld [vmem:[%s1 + $0x84] sm:$0xf]
  %v110 = vld [vmem:[%s1 + $0x88] sm:$0xf]
  %v111 = vld [vmem:[%s1 + $0x8c] sm:$0xf]
  %v112 = vld [vmem:[%s1 + $0x90] sm:$0xf]
  %v113 = vld [vmem:[%s1 + $0x94] sm:$0xf]
  %v114 = vld [vmem:[%s1 + $0x98] sm:$0xf]
  %v115 = vld [vmem:[%s1 + $0x9c] sm:$0xf]
  %v116 = vld [vmem:[%s1 + $0xa0] sm:$0xf]
  %v117 = vld [vmem:[%s1 + $0xa4] sm:$0xf]
  %v118 = vld [vmem:[%s1 + $0xa8] sm:$0xf]
  %v119 = vld [vmem:[%s1 + $0xac] sm:$0xf]
  %v120 = vld [vmem:[%s1 + $0xb0] sm:$0xf]
  %v121 = vld [vmem:[%s1 + $0xb4] sm:$0xf]
  %v122 = vld [vmem:[%s1 + $0xb8] sm:$0xf]
  %v123 = vld [vmem:[%s1 + $0xbc] sm:$0xf]
  %v152 = vunpack.c.l.b16 %v48
  %v153 = vunpack.c.h.b16 %v48
  %v154 = vunpack.c.l.b16 %v49
  %v155 = vunpack.c.l.b16 %v50
  %v156 = vunpack.c.h.b16 %v50
  %v157 = vunpack.c.l.b16 %v51
  %v158 = vunpack.c.l.b16 %v52
  %v159 = vunpack.c.h.b16 %v52
  %v160 = vunpack.c.l.b16 %v53
  %v161 = vunpack.c.l.b16 %v54
  %v162 = vunpack.c.h.b16 %v54
  %v163 = vunpack.c.l.b16 %v55
  %v164 = vunpack.c.l.b16 %v56
  %v165 = vunpack.c.h.b16 %v56
  %v166 = vunpack.c.l.b16 %v57
  %v167 = vunpack.c.l.b16 %v58
  %v168 = vunpack.c.h.b16 %v58
  %v169 = vunpack.c.l.b16 %v59
  %v170 = vunpack.c.l.b16 %v60
  %v171 = vunpack.c.h.b16 %v60
  %v172 = vunpack.c.l.b16 %v61
  %v173 = vunpack.c.l.b16 %v62
  %v174 = vunpack.c.h.b16 %v62
  %v175 = vunpack.c.l.b16 %v63
  %v176 = vunpack.c.l.b16 %v64
  %v177 = vunpack.c.h.b16 %v64
  %v178 = vunpack.c.l.b16 %v65
  %v179 = vunpack.c.l.b16 %v66
  %v180 = vunpack.c.h.b16 %v66
  %v181 = vunpack.c.l.b16 %v67
  %v182 = vunpack.c.l.b16 %v68
  %v183 = vunpack.c.h.b16 %v68
  %v184 = vunpack.c.l.b16 %v69
  %v185 = vunpack.c.l.b16 %v70
  %v186 = vunpack.c.h.b16 %v70
  %v187 = vunpack.c.l.b16 %v71
  %v188 = vunpack.c.l.b16 %v72
  %v189 = vunpack.c.h.b16 %v72
  %v190 = vunpack.c.l.b16 %v73
  %v191 = vunpack.c.l.b16 %v74
  %v192 = vunpack.c.h.b16 %v74
  %v193 = vunpack.c.l.b16 %v75
  %v194 = vpack.c.b16 %v155, %v152
  %v195 = vpack.c.b16 %v156, %v153
  %v196 = vpack.c.b16 %v157, %v154
  %v197 = vpack.c.b16 %v161, %v158
  %v198 = vpack.c.b16 %v162, %v159
  %v199 = vpack.c.b16 %v163, %v160
  %v200 = vpack.c.b16 %v167, %v164
  %v201 = vpack.c.b16 %v168, %v165
  %v202 = vpack.c.b16 %v169, %v166
  %v203 = vpack.c.b16 %v173, %v170
  %v204 = vpack.c.b16 %v174, %v171
  %v205 = vpack.c.b16 %v175, %v172
  %v206 = vpack.c.b16 %v179, %v176
  %v207 = vpack.c.b16 %v180, %v177
  %v208 = vpack.c.b16 %v181, %v178
  %v209 = vpack.c.b16 %v185, %v182
  %v210 = vpack.c.b16 %v186, %v183
  %v211 = vpack.c.b16 %v187, %v184
  %v212 = vpack.c.b16 %v191, %v188
  %v213 = vpack.c.b16 %v192, %v189
  %v214 = vpack.c.b16 %v193, %v190
  %v284 = vunpack.c.l.b16 %v76
  %v285 = vunpack.c.l.b16 %v77
  %v286 = vunpack.c.l.b16 %v78
  %v287 = vunpack.c.l.b16 %v79
  %v288 = vunpack.c.l.b16 %v80
  %v289 = vunpack.c.l.b16 %v81
  %v290 = vunpack.c.l.b16 %v82
  %v291 = vunpack.c.l.b16 %v83
  %v292 = vunpack.c.l.b16 %v84
  %v293 = vunpack.c.l.b16 %v85
  %v294 = vunpack.c.l.b16 %v86
  %v295 = vunpack.c.l.b16 %v87
  %v296 = vunpack.c.l.b16 %v88
  %v297 = vunpack.c.l.b16 %v89
  %v298 = vunpack.c.l.b16 %v90
  %v299 = vunpack.c.l.b16 %v91
  %v300 = vunpack.c.l.b16 %v92
  %v301 = vunpack.c.l.b16 %v93
  %v302 = vunpack.c.l.b16 %v94
  %v303 = vunpack.c.l.b16 %v95
  %v304 = vunpack.c.l.b16 %v96
  %v305 = vunpack.c.l.b16 %v97
  %v306 = vunpack.c.l.b16 %v98
  %v307 = vunpack.c.l.b16 %v99
  %v308 = vunpack.c.l.b16 %v100
  %v309 = vunpack.c.l.b16 %v101
  %v310 = vunpack.c.l.b16 %v102
  %v311 = vunpack.c.l.b16 %v103
  %v312 = vunpack.c.l.b16 %v104
  %v313 = vunpack.c.l.b16 %v105
  %v314 = vunpack.c.l.b16 %v106
  %v315 = vunpack.c.l.b16 %v107
  %v316 = vunpack.c.l.b16 %v108
  %v317 = vunpack.c.l.b16 %v109
  %v318 = vunpack.c.l.b16 %v110
  %v319 = vunpack.c.l.b16 %v111
  %v320 = vunpack.c.l.b16 %v112
  %v321 = vunpack.c.l.b16 %v113
  %v322 = vunpack.c.l.b16 %v114
  %v323 = vunpack.c.l.b16 %v115
  %v324 = vunpack.c.l.b16 %v116
  %v325 = vunpack.c.l.b16 %v117
  %v326 = vunpack.c.l.b16 %v118
  %v327 = vunpack.c.l.b16 %v119
  %v328 = vunpack.c.l.b16 %v120
  %v329 = vunpack.c.l.b16 %v121
  %v330 = vunpack.c.l.b16 %v122
  %v331 = vunpack.c.l.b16 %v123
  %v332 = vpack.c.b16 %v285, %v284
  %v333 = vpack.c.b16 %v287, %v286
  %v334 = vpack.c.b16 %v289, %v288
  %v335 = vpack.c.b16 %v291, %v290
  %v336 = vpack.c.b16 %v293, %v292
  %v337 = vpack.c.b16 %v295, %v294
  %v338 = vpack.c.b16 %v297, %v296
  %v339 = vpack.c.b16 %v299, %v298
  %v340 = vpack.c.b16 %v301, %v300
  %v341 = vpack.c.b16 %v303, %v302
  %v342 = vpack.c.b16 %v305, %v304
  %v343 = vpack.c.b16 %v307, %v306
  %v344 = vpack.c.b16 %v309, %v308
  %v345 = vpack.c.b16 %v311, %v310
  %v346 = vpack.c.b16 %v313, %v312
  %v347 = vpack.c.b16 %v315, %v314
  %v348 = vpack.c.b16 %v317, %v316
  %v349 = vpack.c.b16 %v319, %v318
  %v350 = vpack.c.b16 %v321, %v320
  %v351 = vpack.c.b16 %v323, %v322
  %v352 = vpack.c.b16 %v325, %v324
  %v353 = vpack.c.b16 %v327, %v326
  %v354 = vpack.c.b16 %v329, %v328
  %v355 = vpack.c.b16 %v331, %v330
  %380 = vmatprep.subr.bf16.mxu0 0
  %381 = vmatpush1.bf16.msra.mxu0 %v339
  %382 = vmatprep.subr.bf16.mxu0 0
  %383 = vmatpush1.bf16.msra.mxu0 %v338
  %384 = vmatprep.subr.bf16.mxu0 0
  %385 = vmatpush1.bf16.msra.mxu0 %v337
  %386 = vmatprep.subr.bf16.mxu0 0
  %387 = vmatpush1.bf16.msra.mxu0 %v336
  %388 = vmatprep.subr.bf16.mxu0 0
  %389 = vmatpush1.bf16.msra.mxu0 %v335
  %390 = vmatprep.subr.bf16.mxu0 0
  %391 = vmatpush1.bf16.msra.mxu0 %v334
  %392 = vmatprep.subr.bf16.mxu0 0
  %393 = vmatpush1.bf16.msra.mxu0 %v333
  %394 = vmatprep.subr.bf16.mxu0 0
  %395 = vmatpush1.bf16.msra.mxu0 %v332
  %396 = vmatprep.subr.bf16.mxu0 0
  %397 = vmatpush2.bf16.msra.mxu0 %v347
  %398 = vmatprep.subr.bf16.mxu0 0
  %399 = vmatpush2.bf16.msra.mxu0 %v346
  %400 = vmatprep.subr.bf16.mxu0 0
  %401 = vmatpush2.bf16.msra.mxu0 %v345
  %402 = vmatprep.subr.bf16.mxu0 0
  %403 = vmatpush2.bf16.msra.mxu0 %v344
  %404 = vmatprep.subr.bf16.mxu0 0
  %405 = vmatpush2.bf16.msra.mxu0 %v343
  %406 = vmatprep.subr.bf16.mxu0 0
  %407 = vmatpush2.bf16.msra.mxu0 %v342
  %408 = vmatprep.subr.bf16.mxu0 0
  %409 = vmatpush2.bf16.msra.mxu0 %v341
  %410 = vmatprep.subr.bf16.mxu0 0
  %411 = vmatpush2.bf16.msra.mxu0 %v340
  %412 = vmatprep.mubr.bf16.mxu0 %v195
  %413 = vmatmul.mubr.bf16.gmra.mxu0 %v194
  %v414 = vpop.f32.mrf.mxu0
  %v415 = vadd.f32 0.0, %v414
  %v416 = vpop.f32.mrf.mxu0
  %v417 = vpop.f32.mrf.mxu0
  %v418 = vadd.f32 0.0, %v417
  %v419 = vpop.f32.mrf.mxu0
  %420 = vmatprep.mubr.bf16.mxu0 %v198
  %421 = vmatmul.mubr.bf16.gmra.mxu0 %v197
  %v422 = vpop.f32.mrf.mxu0
  %v423 = vadd.f32 0.0, %v422
  %v424 = vpop.f32.mrf.mxu0
  %v425 = vpop.f32.mrf.mxu0
  %v426 = vadd.f32 0.0, %v425
  %v427 = vpop.f32.mrf.mxu0
  %428 = vmatprep.mubr.bf16.mxu0 %v201
  %429 = vmatmul.mubr.bf16.gmra.mxu0 %v200
  %v430 = vpop.f32.mrf.mxu0
  %v431 = vadd.f32 0.0, %v430
  %v432 = vpop.f32.mrf.mxu0
  %v433 = vpop.f32.mrf.mxu0
  %v434 = vadd.f32 0.0, %v433
  %v435 = vpop.f32.mrf.mxu0
  %436 = vmatprep.mubr.bf16.mxu0 %v204
  %437 = vmatmul.mubr.bf16.gmra.mxu0 %v203
  %v438 = vpop.f32.mrf.mxu0
  %v439 = vadd.f32 0.0, %v438
  %v440 = vpop.f32.mrf.mxu0
  %v441 = vpop.f32.mrf.mxu0
  %v442 = vadd.f32 0.0, %v441
  %v443 = vpop.f32.mrf.mxu0
  %444 = vmatprep.mubr.bf16.mxu0 %v207
  %445 = vmatmul.mubr.bf16.gmra.mxu0 %v206
  %v446 = vpop.f32.mrf.mxu0
  %v447 = vadd.f32 0.0, %v446
  %v448 = vpop.f32.mrf.mxu0
  %v449 = vpop.f32.mrf.mxu0
  %v450 = vadd.f32 0.0, %v449
  %v451 = vpop.f32.mrf.mxu0
  %452 = vmatprep.mubr.bf16.mxu0 %v210
  %453 = vmatmul.mubr.bf16.gmra.mxu0 %v209
  %v454 = vpop.f32.mrf.mxu0
  %v455 = vadd.f32 0.0, %v454
  %v456 = vpop.f32.mrf.mxu0
  %v457 = vpop.f32.mrf.mxu0
  %v458 = vadd.f32 0.0, %v457
  %v459 = vpop.f32.mrf.mxu0
  %460 = vmatprep.mubr.bf16.mxu0 %v213
  %461 = vmatmul.mubr.bf16.gmra.mxu0 %v212
  %v462 = vpop.f32.mrf.mxu0
  %v463 = vadd.f32 0.0, %v462
  %v464 = vpop.f32.mrf.mxu0
  %v465 = vpop.f32.mrf.mxu0
  %v466 = vadd.f32 0.0, %v465
  %v467 = vpop.f32.mrf.mxu0
  %468 = vdwg.mxu0
  %469 = vmatprep.subr.bf16.mxu0 0
  %470 = vmatpush1.bf16.msra.mxu0 %v355
  %471 = vmatprep.subr.bf16.mxu0 0
  %472 = vmatpush1.bf16.msra.mxu0 %v354
  %473 = vmatprep.subr.bf16.mxu0 0
  %474 = vmatpush1.bf16.msra.mxu0 %v353
  %475 = vmatprep.subr.bf16.mxu0 0
  %476 = vmatpush1.bf16.msra.mxu0 %v352
  %477 = vmatprep.subr.bf16.mxu0 0
  %478 = vmatpush1.bf16.msra.mxu0 %v351
  %479 = vmatprep.subr.bf16.mxu0 0
  %480 = vmatpush1.bf16.msra.mxu0 %v350
  %481 = vmatprep.subr.bf16.mxu0 0
  %482 = vmatpush1.bf16.msra.mxu0 %v349
  %483 = vmatprep.subr.bf16.mxu0 0
  %484 = vmatpush1.bf16.msra.mxu0 %v348
  %485 = vmatprep.subr.bf16.mxu0 0
  %486 = vmatpush2.bf16.msra.mxu0 0
  %487 = vmatprep.subr.bf16.mxu0 0
  %488 = vmatpush2.bf16.msra.mxu0 0
  %489 = vmatprep.subr.bf16.mxu0 0
  %490 = vmatpush2.bf16.msra.mxu0 0
  %491 = vmatprep.subr.bf16.mxu0 0
  %492 = vmatpush2.bf16.msra.mxu0 0
  %493 = vmatprep.subr.bf16.mxu0 0
  %494 = vmatpush2.bf16.msra.mxu0 0
  %495 = vmatprep.subr.bf16.mxu0 0
  %496 = vmatpush2.bf16.msra.mxu0 0
  %497 = vmatprep.subr.bf16.mxu0 0
  %498 = vmatpush2.bf16.msra.mxu0 0
  %499 = vmatprep.subr.bf16.mxu0 0
  %500 = vmatpush2.bf16.msra.mxu0 0
  %501 = vmatprep.mubr.bf16.mxu0 0
  %502 = vmatmul.mubr.bf16.gmra.mxu0 %v196
  %v503 = vpop.f32.mrf.mxu0
  %v504 = vadd.f32 %v415, %v503
  %v505 = vpop.f32.mrf.mxu0
  %v506 = vpop.f32.mrf.mxu0
  %v507 = vadd.f32 %v418, %v506
  %v508 = vpop.f32.mrf.mxu0
  %509 = vmatprep.mubr.bf16.mxu0 0
  %510 = vmatmul.mubr.bf16.gmra.mxu0 %v199
  %v511 = vpop.f32.mrf.mxu0
  %v512 = vadd.f32 %v423, %v511
  %v513 = vpop.f32.mrf.mxu0
  %v514 = vpop.f32.mrf.mxu0
  %v515 = vadd.f32 %v426, %v514
  %v516 = vpop.f32.mrf.mxu0
  %517 = vmatprep.mubr.bf16.mxu0 0
  %518 = vmatmul.mubr.bf16.gmra.mxu0 %v202
  %v519 = vpop.f32.mrf.mxu0
  %v520 = vadd.f32 %v431, %v519
  %v521 = vpop.f32.mrf.mxu0
  %v522 = vpop.f32.mrf.mxu0
  %v523 = vadd.f32 %v434, %v522
  %v524 = vpop.f32.mrf.mxu0
  %525 = vmatprep.mubr.bf16.mxu0 0
  %526 = vmatmul.mubr.bf16.gmra.mxu0 %v205
  %v527 = vpop.f32.mrf.mxu0
  %v528 = vadd.f32 %v439, %v527
  %v529 = vpop.f32.mrf.mxu0
  %v530 = vpop.f32.mrf.mxu0
  %v531 = vadd.f32 %v442, %v530
  %v532 = vpop.f32.mrf.mxu0
  %533 = vmatprep.mubr.bf16.mxu0 0
  %534 = vmatmul.mubr.bf16.gmra.mxu0 %v208
  %v535 = vpop.f32.mrf.mxu0
  %v536 = vadd.f32 %v447, %v535
  %v537 = vpop.f32.mrf.mxu0
  %v538 = vpop.f32.mrf.mxu0
  %v539 = vadd.f32 %v450, %v538
  %v540 = vpop.f32.mrf.mxu0
  %541 = vmatprep.mubr.bf16.mxu0 0
  %542 = vmatmul.mubr.bf16.gmra.mxu0 %v211
  %v543 = vpop.f32.mrf.mxu0
  %v544 = vadd.f32 %v455, %v543
  %v545 = vpop.f32.mrf.mxu0
  %v546 = vpop.f32.mrf.mxu0
  %v547 = vadd.f32 %v458, %v546
  %v548 = vpop.f32.mrf.mxu0
  %549 = vmatprep.mubr.bf16.mxu0 0
  %550 = vmatmul.mubr.bf16.gmra.mxu0 %v214
  %v551 = vpop.f32.mrf.mxu0
  %v552 = vadd.f32 %v463, %v551
  %v553 = vpop.f32.mrf.mxu0
  %v554 = vpop.f32.mrf.mxu0
  %v555 = vadd.f32 %v466, %v554
  %v556 = vpop.f32.mrf.mxu0
  %557 = vdwg.mxu0
  %v558 = vadd.f32 %v34, %v504
  %v559 = vadd.f32 %v35, %v507
  %v560 = vadd.f32 %v36, %v512
  %v561 = vadd.f32 %v37, %v515
  %v562 = vadd.f32 %v38, %v520
  %v563 = vadd.f32 %v39, %v523
  %v564 = vadd.f32 %v40, %v528
  %v565 = vadd.f32 %v41, %v531
  %v566 = vadd.f32 %v42, %v536
  %v567 = vadd.f32 %v43, %v539
  %v568 = vadd.f32 %v44, %v544
  %v569 = vadd.f32 %v45, %v547
  %v570 = vadd.f32 %v46, %v552
  %v571 = vadd.f32 %v47, %v555
  %vm572 = vcmask 523264
  %573 = vst.msk [vmem:[#allocation2] sm:$0xff] %vm572, %v558
  %574 = vst.msk [vmem:[#allocation2 + $0x8] sm:$0xff] %vm572, %v559
  %575 = vst.msk [vmem:[#allocation2 + $0x10] sm:$0xff] %vm572, %v560
  %576 = vst.msk [vmem:[#allocation2 + $0x18] sm:$0xff] %vm572, %v561
  %577 = vst.msk [vmem:[#allocation2 + $0x20] sm:$0xff] %vm572, %v562
  %578 = vst.msk [vmem:[#allocation2 + $0x28] sm:$0xff] %vm572, %v563
  %579 = vst.msk [vmem:[#allocation2 + $0x30] sm:$0xff] %vm572, %v564
  %580 = vst.msk [vmem:[#allocation2 + $0x38] sm:$0xff] %vm572, %v565
  %581 = vst.msk [vmem:[#allocation2 + $0x40] sm:$0xff] %vm572, %v566
  %582 = vst.msk [vmem:[#allocation2 + $0x48] sm:$0xff] %vm572, %v567
  %583 = vst.msk [vmem:[#allocation2 + $0x50] sm:$0xff] %vm572, %v568
  %584 = vst.msk [vmem:[#allocation2 + $0x58] sm:$0xff] %vm572, %v569
  %585 = vst.msk [vmem:[#allocation2 + $0x60] sm:$0xff] %vm572, %v570
  %586 = vst.msk [vmem:[#allocation2 + $0x68] sm:$0xff] %vm572, %v571
  // Predicated region
  $region18: #{bbb_alexnet_forward.8} parent=0 // pred_check
    %p587 = pneg %p15
  $region19: #{bbb_alexnet_forward.8} parent=0 // pred_check_branch
    %589 = sbr.rel (%p587) target = $region21
  $region20: #{bbb_alexnet_forward.8} parent=0 // pred_region
    %v590 = vld [vmem:[#allocation2] sm:$0xff]
    %v591 = vld [vmem:[#allocation2 + $0x8] sm:$0xff]
    %v592 = vld [vmem:[#allocation2 + $0x10] sm:$0xff]
    %v593 = vld [vmem:[#allocation2 + $0x18] sm:$0xff]
    %v594 = vld [vmem:[#allocation2 + $0x20] sm:$0xff]
    %v595 = vld [vmem:[#allocation2 + $0x28] sm:$0xff]
    %v596 = vld [vmem:[#allocation2 + $0x30] sm:$0xff]
    %v597 = vld [vmem:[#allocation2 + $0x38] sm:$0xff]
    %v598 = vld [vmem:[#allocation2 + $0x40] sm:$0xff]
    %v599 = vld [vmem:[#allocation2 + $0x48] sm:$0xff]
    %v600 = vld [vmem:[#allocation2 + $0x50] sm:$0xff]
    %v601 = vld [vmem:[#allocation2 + $0x58] sm:$0xff]
    %v602 = vld [vmem:[#allocation2 + $0x60] sm:$0xff]
    %v603 = vld [vmem:[#allocation2 + $0x68] sm:$0xff]
    %v604 = vld [vmem:[%s2] sm:$0x1]
    %v606 = vlaneseq
    %v607 = vshrl.u32 %v606, 7
    %v608 = vsub.s32 0, %v607
    %v609 = vrot.slane %v604, %v608
    %v611 = vadd.f32 %v590, %v609
    %v612 = vadd.f32 %v591, %v609
    %v613 = vadd.f32 %v592, %v609
    %v614 = vadd.f32 %v593, %v609
    %v615 = vadd.f32 %v594, %v609
    %v616 = vadd.f32 %v595, %v609
    %v617 = vadd.f32 %v596, %v609
    %v618 = vadd.f32 %v597, %v609
    %v619 = vadd.f32 %v598, %v609
    %v620 = vadd.f32 %v599, %v609
    %v621 = vadd.f32 %v600, %v609
    %v622 = vadd.f32 %v601, %v609
    %v623 = vadd.f32 %v602, %v609
    %v624 = vadd.f32 %v603, %v609
    %vm625 = vcmp.gt.f32.partialorder %v611, 20.0
    %vm626 = vcmp.gt.f32.partialorder %v612, 20.0
    %vm627 = vcmp.gt.f32.partialorder %v613, 20.0
    %vm628 = vcmp.gt.f32.partialorder %v614, 20.0
    %vm629 = vcmp.gt.f32.partialorder %v615, 20.0
    %vm630 = vcmp.gt.f32.partialorder %v616, 20.0
    %vm631 = vcmp.gt.f32.partialorder %v617, 20.0
    %vm632 = vcmp.gt.f32.partialorder %v618, 20.0
    %vm633 = vcmp.gt.f32.partialorder %v619, 20.0
    %vm634 = vcmp.gt.f32.partialorder %v620, 20.0
    %vm635 = vcmp.gt.f32.partialorder %v621, 20.0
    %vm636 = vcmp.gt.f32.partialorder %v622, 20.0
    %vm637 = vcmp.gt.f32.partialorder %v623, 20.0
    %vm638 = vcmp.gt.f32.partialorder %v624, 20.0
    %v639 = vmin.f32 %v611, 20.0
    %v640 = vmin.f32 %v612, 20.0
    %v641 = vmin.f32 %v613, 20.0
    %v642 = vmin.f32 %v614, 20.0
    %v643 = vmin.f32 %v615, 20.0
    %v644 = vmin.f32 %v616, 20.0
    %v645 = vmin.f32 %v617, 20.0
    %v646 = vmin.f32 %v618, 20.0
    %v647 = vmin.f32 %v619, 20.0
    %v648 = vmin.f32 %v620, 20.0
    %v649 = vmin.f32 %v621, 20.0
    %v650 = vmin.f32 %v622, 20.0
    %v651 = vmin.f32 %v623, 20.0
    %v652 = vmin.f32 %v624, 20.0
    %v653 = vmul.f32 %v639, 1.442695
    %v654 = vpow.pop %v653
    %v655 = vmul.f32 %v640, 1.442695
    %v656 = vpow.pop %v655
    %v657 = vmul.f32 %v641, 1.442695
    %v658 = vpow.pop %v657
    %v659 = vmul.f32 %v642, 1.442695
    %v660 = vpow.pop %v659
    %v661 = vmul.f32 %v643, 1.442695
    %v662 = vpow.pop %v661
    %v663 = vmul.f32 %v644, 1.442695
    %v664 = vpow.pop %v663
    %v665 = vmul.f32 %v645, 1.442695
    %v666 = vpow.pop %v665
    %v667 = vmul.f32 %v646, 1.442695
    %v668 = vpow.pop %v667
    %v669 = vmul.f32 %v647, 1.442695
    %v670 = vpow.pop %v669
    %v671 = vmul.f32 %v648, 1.442695
    %v672 = vpow.pop %v671
    %v673 = vmul.f32 %v649, 1.442695
    %v674 = vpow.pop %v673
    %v675 = vmul.f32 %v650, 1.442695
    %v676 = vpow.pop %v675
    %v677 = vmul.f32 %v651, 1.442695
    %v678 = vpow.pop %v677
    %v679 = vmul.f32 %v652, 1.442695
    %v680 = vpow.pop %v679
    %v681 = vadd.f32 %v654, 1.0
    %v682 = vlog2.pop %v681
    %v683 = vmul.f32 %v682, 0.6931472
    %v684 = vmul.f32 -0.5, %v654
    %v685 = vadd.f32 %v684, 1.0
    %v686 = vmul.f32 %v685, %v654
    %v687 = vand.u32 2147483647, %v654
    %vm688 = vcmp.lt.f32.partialorder %v687, 0.0004427343
    %v689 = vsel %vm688, %v686, %v683
    %v690 = vadd.f32 %v656, 1.0
    %v691 = vlog2.pop %v690
    %v692 = vmul.f32 %v691, 0.6931472
    %v693 = vmul.f32 -0.5, %v656
    %v694 = vadd.f32 %v693, 1.0
    %v695 = vmul.f32 %v694, %v656
    %v696 = vand.u32 2147483647, %v656
    %vm697 = vcmp.lt.f32.partialorder %v696, 0.0004427343
    %v698 = vsel %vm697, %v695, %v692
    %v699 = vadd.f32 %v658, 1.0
    %v700 = vlog2.pop %v699
    %v701 = vmul.f32 %v700, 0.6931472
    %v702 = vmul.f32 -0.5, %v658
    %v703 = vadd.f32 %v702, 1.0
    %v704 = vmul.f32 %v703, %v658
    %v705 = vand.u32 2147483647, %v658
    %vm706 = vcmp.lt.f32.partialorder %v705, 0.0004427343
    %v707 = vsel %vm706, %v704, %v701
    %v708 = vadd.f32 %v660, 1.0
    %v709 = vlog2.pop %v708
    %v710 = vmul.f32 %v709, 0.6931472
    %v711 = vmul.f32 -0.5, %v660
    %v712 = vadd.f32 %v711, 1.0
    %v713 = vmul.f32 %v712, %v660
    %v714 = vand.u32 2147483647, %v660
    %vm715 = vcmp.lt.f32.partialorder %v714, 0.0004427343
    %v716 = vsel %vm715, %v713, %v710
    %v717 = vadd.f32 %v662, 1.0
    %v718 = vlog2.pop %v717
    %v719 = vmul.f32 %v718, 0.6931472
    %v720 = vmul.f32 -0.5, %v662
    %v721 = vadd.f32 %v720, 1.0
    %v722 = vmul.f32 %v721, %v662
    %v723 = vand.u32 2147483647, %v662
    %vm724 = vcmp.lt.f32.partialorder %v723, 0.0004427343
    %v725 = vsel %vm724, %v722, %v719
    %v726 = vadd.f32 %v664, 1.0
    %v727 = vlog2.pop %v726
    %v728 = vmul.f32 %v727, 0.6931472
    %v729 = vmul.f32 -0.5, %v664
    %v730 = vadd.f32 %v729, 1.0
    %v731 = vmul.f32 %v730, %v664
    %v732 = vand.u32 2147483647, %v664
    %vm733 = vcmp.lt.f32.partialorder %v732, 0.0004427343
    %v734 = vsel %vm733, %v731, %v728
    %v735 = vadd.f32 %v666, 1.0
    %v736 = vlog2.pop %v735
    %v737 = vmul.f32 %v736, 0.6931472
    %v738 = vmul.f32 -0.5, %v666
    %v739 = vadd.f32 %v738, 1.0
    %v740 = vmul.f32 %v739, %v666
    %v741 = vand.u32 2147483647, %v666
    %vm742 = vcmp.lt.f32.partialorder %v741, 0.0004427343
    %v743 = vsel %vm742, %v740, %v737
    %v744 = vadd.f32 %v668, 1.0
    %v745 = vlog2.pop %v744
    %v746 = vmul.f32 %v745, 0.6931472
    %v747 = vmul.f32 -0.5, %v668
    %v748 = vadd.f32 %v747, 1.0
    %v749 = vmul.f32 %v748, %v668
    %v750 = vand.u32 2147483647, %v668
    %vm751 = vcmp.lt.f32.partialorder %v750, 0.0004427343
    %v752 = vsel %vm751, %v749, %v746
    %v753 = vadd.f32 %v670, 1.0
    %v754 = vlog2.pop %v753
    %v755 = vmul.f32 %v754, 0.6931472
    %v756 = vmul.f32 -0.5, %v670
    %v757 = vadd.f32 %v756, 1.0
    %v758 = vmul.f32 %v757, %v670
    %v759 = vand.u32 2147483647, %v670
    %vm760 = vcmp.lt.f32.partialorder %v759, 0.0004427343
    %v761 = vsel %vm760, %v758, %v755
    %v762 = vadd.f32 %v672, 1.0
    %v763 = vlog2.pop %v762
    %v764 = vmul.f32 %v763, 0.6931472
    %v765 = vmul.f32 -0.5, %v672
    %v766 = vadd.f32 %v765, 1.0
    %v767 = vmul.f32 %v766, %v672
    %v768 = vand.u32 2147483647, %v672
    %vm769 = vcmp.lt.f32.partialorder %v768, 0.0004427343
    %v770 = vsel %vm769, %v767, %v764
    %v771 = vadd.f32 %v674, 1.0
    %v772 = vlog2.pop %v771
    %v773 = vmul.f32 %v772, 0.6931472
    %v774 = vmul.f32 -0.5, %v674
    %v775 = vadd.f32 %v774, 1.0
    %v776 = vmul.f32 %v775, %v674
    %v777 = vand.u32 2147483647, %v674
    %vm778 = vcmp.lt.f32.partialorder %v777, 0.0004427343
    %v779 = vsel %vm778, %v776, %v773
    %v780 = vadd.f32 %v676, 1.0
    %v781 = vlog2.pop %v780
    %v782 = vmul.f32 %v781, 0.6931472
    %v783 = vmul.f32 -0.5, %v676
    %v784 = vadd.f32 %v783, 1.0
    %v785 = vmul.f32 %v784, %v676
    %v786 = vand.u32 2147483647, %v676
    %vm787 = vcmp.lt.f32.partialorder %v786, 0.0004427343
    %v788 = vsel %vm787, %v785, %v782
    %v789 = vadd.f32 %v678, 1.0
    %v790 = vlog2.pop %v789
    %v791 = vmul.f32 %v790, 0.6931472
    %v792 = vmul.f32 -0.5, %v678
    %v793 = vadd.f32 %v792, 1.0
    %v794 = vmul.f32 %v793, %v678
    %v795 = vand.u32 2147483647, %v678
    %vm796 = vcmp.lt.f32.partialorder %v795, 0.0004427343
    %v797 = vsel %vm796, %v794, %v791
    %v798 = vadd.f32 %v680, 1.0
    %v799 = vlog2.pop %v798
    %v800 = vmul.f32 %v799, 0.6931472
    %v801 = vmul.f32 -0.5, %v680
    %v802 = vadd.f32 %v801, 1.0
    %v803 = vmul.f32 %v802, %v680
    %v804 = vand.u32 2147483647, %v680
    %vm805 = vcmp.lt.f32.partialorder %v804, 0.0004427343
    %v806 = vsel %vm805, %v803, %v800
    %v807 = vsel %vm625, %v611, %v689
    %v808 = vsel %vm626, %v612, %v698
    %v809 = vsel %vm627, %v613, %v707
    %v810 = vsel %vm628, %v614, %v716
    %v811 = vsel %vm629, %v615, %v725
    %v812 = vsel %vm630, %v616, %v734
    %v813 = vsel %vm631, %v617, %v743
    %v814 = vsel %vm632, %v618, %v752
    %v815 = vsel %vm633, %v619, %v761
    %v816 = vsel %vm634, %v620, %v770
    %v817 = vsel %vm635, %v621, %v779
    %v818 = vsel %vm636, %v622, %v788
    %v819 = vsel %vm637, %v623, %v797
    %v820 = vsel %vm638, %v624, %v806
    %v821 = vpack.c.bf16 %v808, %v807
    %v822 = vpack.c.bf16 %v810, %v809
    %v823 = vpack.c.bf16 %v812, %v811
    %v824 = vpack.c.bf16 %v814, %v813
    %v825 = vpack.c.bf16 %v816, %v815
    %v826 = vpack.c.bf16 %v818, %v817
    %v827 = vpack.c.bf16 %v820, %v819
    %v835 = vunpack.c.l.b16 %v821
    %v836 = vunpack.c.h.b16 %v821
    %v837 = vunpack.c.l.b16 %v822
    %v838 = vunpack.c.h.b16 %v822
    %v839 = vunpack.c.l.b16 %v823
    %v840 = vunpack.c.h.b16 %v823
    %v841 = vunpack.c.l.b16 %v824
    %v842 = vunpack.c.h.b16 %v824
    %v843 = vunpack.c.l.b16 %v825
    %v844 = vunpack.c.h.b16 %v825
    %v845 = vunpack.c.l.b16 %v826
    %v846 = vunpack.c.h.b16 %v826
    %v847 = vunpack.c.l.b16 %v827
    %v848 = vunpack.c.h.b16 %v827
    %v849 = vpack.c.b16 %v835, %v835
    %v850 = vpack.c.b16 %v836, %v836
    %v851 = vpack.c.b16 %v837, %v837
    %v852 = vpack.c.b16 %v838, %v838
    %v853 = vpack.c.b16 %v839, %v839
    %v854 = vpack.c.b16 %v840, %v840
    %v855 = vpack.c.b16 %v841, %v841
    %v856 = vpack.c.b16 %v842, %v842
    %v857 = vpack.c.b16 %v843, %v843
    %v858 = vpack.c.b16 %v844, %v844
    %v859 = vpack.c.b16 %v845, %v845
    %v860 = vpack.c.b16 %v846, %v846
    %v861 = vpack.c.b16 %v847, %v847
    %v862 = vpack.c.b16 %v848, %v848
    %vm877 = vcmask 519168
    %878 = vst.msk [vmem:[%s3] sm:$0xf] %vm877, %v849
    %879 = vst.msk [vmem:[%s3 + $0x4] sm:$0xf] %vm877, %v850
    %880 = vst.msk [vmem:[%s3 + $0x8] sm:$0xf] %vm877, %v851
    %881 = vst.msk [vmem:[%s3 + $0xc] sm:$0xf] %vm877, %v852
    %882 = vst.msk [vmem:[%s3 + $0x10] sm:$0xf] %vm877, %v853
    %883 = vst.msk [vmem:[%s3 + $0x14] sm:$0xf] %vm877, %v854
    %884 = vst.msk [vmem:[%s3 + $0x18] sm:$0xf] %vm877, %v855
    %885 = vst.msk [vmem:[%s3 + $0x1c] sm:$0xf] %vm877, %v856
    %886 = vst.msk [vmem:[%s3 + $0x20] sm:$0xf] %vm877, %v857
    %887 = vst.msk [vmem:[%s3 + $0x24] sm:$0xf] %vm877, %v858
    %888 = vst.msk [vmem:[%s3 + $0x28] sm:$0xf] %vm877, %v859
    %889 = vst.msk [vmem:[%s3 + $0x2c] sm:$0xf] %vm877, %v860
    %890 = vst.msk [vmem:[%s3 + $0x30] sm:$0xf] %vm877, %v861
    %891 = vst.msk [vmem:[%s3 + $0x34] sm:$0xf] %vm877, %v862
  $region21: #{bbb_alexnet_forward.8} parent=0 // pred_fallthru
    _
  // Predicated region
  $region22: #{bbb_alexnet_forward.8} parent=0 // pred_check
    _
  $region23: #{bbb_alexnet_forward.8} parent=0 // pred_check_branch
    %893 = sbr.rel (0) target = $region25
  $region24: #{bbb_alexnet_forward.8} parent=0 // pred_region
    _
  $region25: #{bbb_alexnet_forward.8} parent=0 // pred_fallthru
    _
  // Predicated region
  $region26: #{bbb_alexnet_forward.8} parent=0 // pred_check
    _
  $region27: #{bbb_alexnet_forward.8} parent=0 // pred_check_branch
    %895 = sbr.rel (0) target = $region29
  $region28: #{bbb_alexnet_forward.8} parent=0 // pred_region
    _
  $region29: #{bbb_alexnet_forward.8} parent=0 // pred_fallthru
    _

// kernel: bbb_alexnet_forward.9
$region0: #{bbb_alexnet_forward.9}
  #allocation0 [shape = 'u32[]', space=smem, size = 0x4, offset = 0x4, fixed_abs, tag = 'smem constant byte address 0x4 - core index']
  #allocation1 [shape = 'u32[144,128]{1,0:T(1,128)}', space=vmem, size = 0x12000, scoped, tag = 'internal scratch']
  %s0 = inlined_call_operand.vmem [shape: bf16[9,32,64], index: 0, kind: input, shape index: {}]
  %s1 = inlined_call_operand.vmem [shape: bf16[32,64], index: 1, kind: output, shape index: {}]
  %s2 = sld [smem:[#allocation0]]
  $region14: #{bbb_alexnet_forward.9} parent=0
    _
  %s4 = ssub.s32 1, %s2
  %s5 = scalar_select 0, %s4, %s2
  // Predicated region
  $region2: #{bbb_alexnet_forward.9} parent=0 // pred_check
    _
  $region3: #{bbb_alexnet_forward.9} parent=0 // pred_check_branch
    %7 = sbr.rel (0) target = $region5
  $region4: #{bbb_alexnet_forward.9} parent=0 // pred_region
    _
  $region5: #{bbb_alexnet_forward.9} parent=0 // pred_fallthru
    _
  %v8 = vld [vmem:[%s0] sm:$0xf]
  %v9 = vld [vmem:[%s0 + $0x4] sm:$0xf]
  %v10 = vld [vmem:[%s0 + $0x8] sm:$0xf]
  %v11 = vld [vmem:[%s0 + $0xc] sm:$0xf]
  %s12 = scalar_lea.vmem %s0, 16
  %v13 = vld [vmem:[%s12] sm:$0xf]
  %v14 = vld [vmem:[%s12 + $0x4] sm:$0xf]
  %v15 = vld [vmem:[%s12 + $0x8] sm:$0xf]
  %v16 = vld [vmem:[%s12 + $0xc] sm:$0xf]
  %v17 = vmax.bf16 %v8, %v13
  %v18 = vmax.bf16 %v9, %v14
  %v19 = vmax.bf16 %v10, %v15
  %v20 = vmax.bf16 %v11, %v16
  %s21 = scalar_lea.vmem %s0, 32
  %v22 = vld [vmem:[%s21] sm:$0xf]
  %v23 = vld [vmem:[%s21 + $0x4] sm:$0xf]
  %v24 = vld [vmem:[%s21 + $0x8] sm:$0xf]
  %v25 = vld [vmem:[%s21 + $0xc] sm:$0xf]
  %v26 = vmax.bf16 %v17, %v22
  %v27 = vmax.bf16 %v18, %v23
  %v28 = vmax.bf16 %v19, %v24
  %v29 = vmax.bf16 %v20, %v25
  %s30 = scalar_lea.vmem %s0, 48
  %v31 = vld [vmem:[%s30] sm:$0xf]
  %v32 = vld [vmem:[%s30 + $0x4] sm:$0xf]
  %v33 = vld [vmem:[%s30 + $0x8] sm:$0xf]
  %v34 = vld [vmem:[%s30 + $0xc] sm:$0xf]
  %v35 = vmax.bf16 %v26, %v31
  %v36 = vmax.bf16 %v27, %v32
  %v37 = vmax.bf16 %v28, %v33
  %v38 = vmax.bf16 %v29, %v34
  %s39 = scalar_lea.vmem %s0, 64
  %v40 = vld [vmem:[%s39] sm:$0xf]
  %v41 = vld [vmem:[%s39 + $0x4] sm:$0xf]
  %v42 = vld [vmem:[%s39 + $0x8] sm:$0xf]
  %v43 = vld [vmem:[%s39 + $0xc] sm:$0xf]
  %v44 = vmax.bf16 %v35, %v40
  %v45 = vmax.bf16 %v36, %v41
  %v46 = vmax.bf16 %v37, %v42
  %v47 = vmax.bf16 %v38, %v43
  %s48 = scalar_lea.vmem %s0, 80
  %v49 = vld [vmem:[%s48] sm:$0xf]
  %v50 = vld [vmem:[%s48 + $0x4] sm:$0xf]
  %v51 = vld [vmem:[%s48 + $0x8] sm:$0xf]
  %v52 = vld [vmem:[%s48 + $0xc] sm:$0xf]
  %v53 = vmax.bf16 %v44, %v49
  %v54 = vmax.bf16 %v45, %v50
  %v55 = vmax.bf16 %v46, %v51
  %v56 = vmax.bf16 %v47, %v52
  %s57 = scalar_lea.vmem %s0, 96
  %v58 = vld [vmem:[%s57] sm:$0xf]
  %v59 = vld [vmem:[%s57 + $0x4] sm:$0xf]
  %v60 = vld [vmem:[%s57 + $0x8] sm:$0xf]
  %v61 = vld [vmem:[%s57 + $0xc] sm:$0xf]
  %v62 = vmax.bf16 %v53, %v58
  %v63 = vmax.bf16 %v54, %v59
  %v64 = vmax.bf16 %v55, %v60
  %v65 = vmax.bf16 %v56, %v61
  %s66 = scalar_lea.vmem %s0, 112
  %v67 = vld [vmem:[%s66] sm:$0xf]
  %v68 = vld [vmem:[%s66 + $0x4] sm:$0xf]
  %v69 = vld [vmem:[%s66 + $0x8] sm:$0xf]
  %v70 = vld [vmem:[%s66 + $0xc] sm:$0xf]
  %v71 = vmax.bf16 %v62, %v67
  %v72 = vmax.bf16 %v63, %v68
  %v73 = vmax.bf16 %v64, %v69
  %v74 = vmax.bf16 %v65, %v70
  %s75 = scalar_lea.vmem %s0, 128
  %v76 = vld [vmem:[%s75] sm:$0xf]
  %v77 = vld [vmem:[%s75 + $0x4] sm:$0xf]
  %v78 = vld [vmem:[%s75 + $0x8] sm:$0xf]
  %v79 = vld [vmem:[%s75 + $0xc] sm:$0xf]
  %v80 = vmax.bf16 %v71, %v76
  %v81 = vmax.bf16 %v72, %v77
  %v82 = vmax.bf16 %v73, %v78
  %v83 = vmax.bf16 %v74, %v79
  %vm84 = vcmask 519168
  %85 = vst.msk [vmem:[%s1] sm:$0xf] %vm84, %v80
  %86 = vst.msk [vmem:[%s1 + $0x4] sm:$0xf] %vm84, %v81
  %87 = vst.msk [vmem:[%s1 + $0x8] sm:$0xf] %vm84, %v82
  %88 = vst.msk [vmem:[%s1 + $0xc] sm:$0xf] %vm84, %v83
  // Predicated region
  $region6: #{bbb_alexnet_forward.9} parent=0 // pred_check
    _
  $region7: #{bbb_alexnet_forward.9} parent=0 // pred_check_branch
    %90 = sbr.rel (0) target = $region9
  $region8: #{bbb_alexnet_forward.9} parent=0 // pred_region
    _
  $region9: #{bbb_alexnet_forward.9} parent=0 // pred_fallthru
    _
  // Predicated region
  $region10: #{bbb_alexnet_forward.9} parent=0 // pred_check
    _
  $region11: #{bbb_alexnet_forward.9} parent=0 // pred_check_branch
    %92 = sbr.rel (0) target = $region13
  $region12: #{bbb_alexnet_forward.9} parent=0 // pred_region
    _
  $region13: #{bbb_alexnet_forward.9} parent=0 // pred_fallthru
    _

// kernel: bbb_alexnet_forward.10
$region0: #{bbb_alexnet_forward.10}
  #allocation0 [shape = 'u32[]', space=smem, size = 0x4, offset = 0x4, fixed_abs, tag = 'smem constant byte address 0x4 - core index']
  #allocation1 [shape = 'u32[144,128]{1,0:T(1,128)}', space=vmem, size = 0x12000, scoped, tag = 'internal scratch']
  #allocation2 [shape = 'f32[32,192]{1,0:T(8,128)}', space=vmem, size = 0x8000, scoped, tag = 'scratch operand']
  %s0 = inlined_call_operand.vmem [shape: bf16[32,1664], index: 0, kind: input, shape index: {}]
  %s1 = inlined_call_operand.vmem [shape: bf16[1664,192], index: 1, kind: input, shape index: {}]
  %s2 = inlined_call_operand.vmem [shape: f32[1,192], index: 2, kind: input, shape index: {}]
  %s3 = inlined_call_operand.vmem [shape: bf16[32,192], index: 3, kind: output, shape index: {}]
  %s4 = sld [smem:[#allocation0]]
  $region30: #{bbb_alexnet_forward.10} parent=0
    _
  %s6 = ssub.s32 1, %s4
  %s7 = scalar_select 0, %s6, %s4
  // Predicated region
  $region2: #{bbb_alexnet_forward.10} parent=0 // pred_check
    _
  $region3: #{bbb_alexnet_forward.10} parent=0 // pred_check_branch
    %9 = sbr.rel (0) target = $region5
  $region4: #{bbb_alexnet_forward.10} parent=0 // pred_region
    _
  $region5: #{bbb_alexnet_forward.10} parent=0 // pred_fallthru
    _
  // Predicated region
  $region6: #{bbb_alexnet_forward.10} parent=0 // pred_check
    _
  $region7: #{bbb_alexnet_forward.10} parent=0 // pred_check_branch
    %11 = sbr.rel (0) target = $region9
  $region8: #{bbb_alexnet_forward.10} parent=0 // pred_region
    _
  $region9: #{bbb_alexnet_forward.10} parent=0 // pred_fallthru
    _
  // Predicated region
  $region10: #{bbb_alexnet_forward.10} parent=0 // pred_check
    _
  $region11: #{bbb_alexnet_forward.10} parent=0 // pred_check_branch
    %13 = sbr.rel (0) target = $region13
  $region12: #{bbb_alexnet_forward.10} parent=0 // pred_region
    _
  $region13: #{bbb_alexnet_forward.10} parent=0 // pred_fallthru
    _
  %p15 = scmp.eq.s32.totalorder 0, 0
  // Predicated region
  $region14: #{bbb_alexnet_forward.10} parent=0 // pred_check
    %p16 = pneg %p15
  $region15: #{bbb_alexnet_forward.10} parent=0 // pred_check_branch
    %18 = sbr.rel (%p16) target = $region17
  $region16: #{bbb_alexnet_forward.10} parent=0 // pred_region
    %19 = vst [vmem:[#allocation2] sm:$0xff] 0.0
    %vm20 = vcmask 523264
    %21 = vst.msk [vmem:[#allocation2 + $0x8] sm:$0xff] %vm20, 0.0
    %22 = vst [vmem:[#allocation2 + $0x10] sm:$0xff] 0.0
    %23 = vst.msk [vmem:[#allocation2 + $0x18] sm:$0xff] %vm20, 0.0
    %24 = vst [vmem:[#allocation2 + $0x20] sm:$0xff] 0.0
    %25 = vst.msk [vmem:[#allocation2 + $0x28] sm:$0xff] %vm20, 0.0
    %26 = vst [vmem:[#allocation2 + $0x30] sm:$0xff] 0.0
    %27 = vst.msk [vmem:[#allocation2 + $0x38] sm:$0xff] %vm20, 0.0
  $region17: #{bbb_alexnet_forward.10} parent=0 // pred_fallthru
    _
  %v28 = vld [vmem:[#allocation2] sm:$0xff]
  %v29 = vld [vmem:[#allocation2 + $0x8] sm:$0xff]
  %v30 = vld [vmem:[#allocation2 + $0x10] sm:$0xff]
  %v31 = vld [vmem:[#allocation2 + $0x18] sm:$0xff]
  %v32 = vld [vmem:[#allocation2 + $0x20] sm:$0xff]
  %v33 = vld [vmem:[#allocation2 + $0x28] sm:$0xff]
  %v34 = vld [vmem:[#allocation2 + $0x30] sm:$0xff]
  %v35 = vld [vmem:[#allocation2 + $0x38] sm:$0xff]
  %v36 = vld [vmem:[%s0] sm:$0xff]
  %v37 = vld [vmem:[%s0 + $0x8] sm:$0xff]
  %v38 = vld [vmem:[%s0 + $0x10] sm:$0xff]
  %v39 = vld [vmem:[%s0 + $0x18] sm:$0xff]
  %v40 = vld [vmem:[%s0 + $0x20] sm:$0xff]
  %v41 = vld [vmem:[%s0 + $0x28] sm:$0xff]
  %v42 = vld [vmem:[%s0 + $0x30] sm:$0xf]
  %v43 = vld [vmem:[%s0 + $0x34] sm:$0xff]
  %v44 = vld [vmem:[%s0 + $0x3c] sm:$0xff]
  %v45 = vld [vmem:[%s0 + $0x44] sm:$0xff]
  %v46 = vld [vmem:[%s0 + $0x4c] sm:$0xff]
  %v47 = vld [vmem:[%s0 + $0x54] sm:$0xff]
  %v48 = vld [vmem:[%s0 + $0x5c] sm:$0xff]
  %v49 = vld [vmem:[%s0 + $0x64] sm:$0xf]
  %v50 = vld [vmem:[%s0 + $0x68] sm:$0xff]
  %v51 = vld [vmem:[%s0 + $0x70] sm:$0xff]
  %v52 = vld [vmem:[%s0 + $0x78] sm:$0xff]
  %v53 = vld [vmem:[%s0 + $0x80] sm:$0xff]
  %v54 = vld [vmem:[%s0 + $0x88] sm:$0xff]
  %v55 = vld [vmem:[%s0 + $0x90] sm:$0xff]
  %v56 = vld [vmem:[%s0 + $0x98] sm:$0xf]
  %v57 = vld [vmem:[%s0 + $0x9c] sm:$0xff]
  %v58 = vld [vmem:[%s0 + $0xa4] sm:$0xff]
  %v59 = vld [vmem:[%s0 + $0xac] sm:$0xff]
  %v60 = vld [vmem:[%s0 + $0xb4] sm:$0xff]
  %v61 = vld [vmem:[%s0 + $0xbc] sm:$0xff]
  %v62 = vld [vmem:[%s0 + $0xc4] sm:$0xff]
  %v63 = vld [vmem:[%s0 + $0xcc] sm:$0xf]
  %v64 = vld [vmem:[%s1] sm:$0xff]
  %v65 = vld [vmem:[%s1 + $0x8] sm:$0xff]
  %v66 = vld [vmem:[%s1 + $0x10] sm:$0xff]
  %v67 = vld [vmem:[%s1 + $0x18] sm:$0xff]
  %v68 = vld [vmem:[%s1 + $0x20] sm:$0xff]
  %v69 = vld [vmem:[%s1 + $0x28] sm:$0xff]
  %v70 = vld [vmem:[%s1 + $0x30] sm:$0xff]
  %v71 = vld [vmem:[%s1 + $0x38] sm:$0xff]
  %v72 = vld [vmem:[%s1 + $0x40] sm:$0xff]
  %v73 = vld [vmem:[%s1 + $0x48] sm:$0xff]
  %v74 = vld [vmem:[%s1 + $0x50] sm:$0xff]
  %v75 = vld [vmem:[%s1 + $0x58] sm:$0xff]
  %v76 = vld [vmem:[%s1 + $0x60] sm:$0xff]
  %v77 = vld [vmem:[%s1 + $0x68] sm:$0xff]
  %v78 = vld [vmem:[%s1 + $0x70] sm:$0xff]
  %v79 = vld [vmem:[%s1 + $0x78] sm:$0xff]
  %v80 = vld [vmem:[%s1 + $0x80] sm:$0xff]
  %v81 = vld [vmem:[%s1 + $0x88] sm:$0xff]
  %v82 = vld [vmem:[%s1 + $0x90] sm:$0xff]
  %v83 = vld [vmem:[%s1 + $0x98] sm:$0xff]
  %v84 = vld [vmem:[%s1 + $0xa0] sm:$0xff]
  %v85 = vld [vmem:[%s1 + $0xa8] sm:$0xff]
  %v86 = vld [vmem:[%s1 + $0xb0] sm:$0xff]
  %v87 = vld [vmem:[%s1 + $0xb8] sm:$0xff]
  %v88 = vld [vmem:[%s1 + $0xc0] sm:$0xff]
  %v89 = vld [vmem:[%s1 + $0xc8] sm:$0xff]
  %v90 = vld [vmem:[%s1 + $0xd0] sm:$0xff]
  %v91 = vld [vmem:[%s1 + $0xd8] sm:$0xff]
  %v92 = vld [vmem:[%s1 + $0xe0] sm:$0xff]
  %v93 = vld [vmem:[%s1 + $0xe8] sm:$0xff]
  %v94 = vld [vmem:[%s1 + $0xf0] sm:$0xff]
  %v95 = vld [vmem:[%s1 + $0xf8] sm:$0xff]
  %v96 = vld [vmem:[%s1 + $0x100] sm:$0xff]
  %v97 = vld [vmem:[%s1 + $0x108] sm:$0xff]
  %v98 = vld [vmem:[%s1 + $0x110] sm:$0xff]
  %v99 = vld [vmem:[%s1 + $0x118] sm:$0xff]
  %v100 = vld [vmem:[%s1 + $0x120] sm:$0xff]
  %v101 = vld [vmem:[%s1 + $0x128] sm:$0xff]
  %v102 = vld [vmem:[%s1 + $0x130] sm:$0xff]
  %v103 = vld [vmem:[%s1 + $0x138] sm:$0xff]
  %v104 = vld [vmem:[%s1 + $0x140] sm:$0xff]
  %v105 = vld [vmem:[%s1 + $0x148] sm:$0xff]
  %v106 = vld [vmem:[%s1 + $0x150] sm:$0xff]
  %v107 = vld [vmem:[%s1 + $0x158] sm:$0xff]
  %v108 = vld [vmem:[%s1 + $0x160] sm:$0xff]
  %v109 = vld [vmem:[%s1 + $0x168] sm:$0xff]
  %v110 = vld [vmem:[%s1 + $0x170] sm:$0xff]
  %v111 = vld [vmem:[%s1 + $0x178] sm:$0xff]
  %v112 = vld [vmem:[%s1 + $0x180] sm:$0xff]
  %v113 = vld [vmem:[%s1 + $0x188] sm:$0xff]
  %v114 = vld [vmem:[%s1 + $0x190] sm:$0xff]
  %v115 = vld [vmem:[%s1 + $0x198] sm:$0xff]
  %v116 = vld [vmem:[%s1 + $0x1a0] sm:$0xff]
  %v117 = vld [vmem:[%s1 + $0x1a8] sm:$0xff]
  %v118 = vld [vmem:[%s1 + $0x1b0] sm:$0xff]
  %v119 = vld [vmem:[%s1 + $0x1b8] sm:$0xff]
  %v120 = vld [vmem:[%s1 + $0x1c0] sm:$0xff]
  %v121 = vld [vmem:[%s1 + $0x1c8] sm:$0xff]
  %v122 = vld [vmem:[%s1 + $0x1d0] sm:$0xff]
  %v123 = vld [vmem:[%s1 + $0x1d8] sm:$0xff]
  %v124 = vld [vmem:[%s1 + $0x1e0] sm:$0xff]
  %v125 = vld [vmem:[%s1 + $0x1e8] sm:$0xff]
  %v126 = vld [vmem:[%s1 + $0x1f0] sm:$0xff]
  %v127 = vld [vmem:[%s1 + $0x1f8] sm:$0xff]
  %v128 = vld [vmem:[%s1 + $0x200] sm:$0xff]
  %v129 = vld [vmem:[%s1 + $0x208] sm:$0xff]
  %v130 = vld [vmem:[%s1 + $0x210] sm:$0xff]
  %v131 = vld [vmem:[%s1 + $0x218] sm:$0xff]
  %v132 = vld [vmem:[%s1 + $0x220] sm:$0xff]
  %v133 = vld [vmem:[%s1 + $0x228] sm:$0xff]
  %v134 = vld [vmem:[%s1 + $0x230] sm:$0xff]
  %v135 = vld [vmem:[%s1 + $0x238] sm:$0xff]
  %v136 = vld [vmem:[%s1 + $0x240] sm:$0xff]
  %v137 = vld [vmem:[%s1 + $0x248] sm:$0xff]
  %v138 = vld [vmem:[%s1 + $0x250] sm:$0xff]
  %v139 = vld [vmem:[%s1 + $0x258] sm:$0xff]
  %v140 = vld [vmem:[%s1 + $0x260] sm:$0xff]
  %v141 = vld [vmem:[%s1 + $0x268] sm:$0xff]
  %v142 = vld [vmem:[%s1 + $0x270] sm:$0xff]
  %v143 = vld [vmem:[%s1 + $0x278] sm:$0xff]
  %v144 = vld [vmem:[%s1 + $0x280] sm:$0xff]
  %v145 = vld [vmem:[%s1 + $0x288] sm:$0xff]
  %v146 = vld [vmem:[%s1 + $0x290] sm:$0xff]
  %v147 = vld [vmem:[%s1 + $0x298] sm:$0xff]
  %v148 = vld [vmem:[%s1 + $0x2a0] sm:$0xff]
  %v149 = vld [vmem:[%s1 + $0x2a8] sm:$0xff]
  %v150 = vld [vmem:[%s1 + $0x2b0] sm:$0xff]
  %v151 = vld [vmem:[%s1 + $0x2b8] sm:$0xff]
  %v152 = vld [vmem:[%s1 + $0x2c0] sm:$0xff]
  %v153 = vld [vmem:[%s1 + $0x2c8] sm:$0xff]
  %v154 = vld [vmem:[%s1 + $0x2d0] sm:$0xff]
  %v155 = vld [vmem:[%s1 + $0x2d8] sm:$0xff]
  %v156 = vld [vmem:[%s1 + $0x2e0] sm:$0xff]
  %v157 = vld [vmem:[%s1 + $0x2e8] sm:$0xff]
  %v158 = vld [vmem:[%s1 + $0x2f0] sm:$0xff]
  %v159 = vld [vmem:[%s1 + $0x2f8] sm:$0xff]
  %v160 = vld [vmem:[%s1 + $0x300] sm:$0xff]
  %v161 = vld [vmem:[%s1 + $0x308] sm:$0xff]
  %v162 = vld [vmem:[%s1 + $0x310] sm:$0xff]
  %v163 = vld [vmem:[%s1 + $0x318] sm:$0xff]
  %v164 = vld [vmem:[%s1 + $0x320] sm:$0xff]
  %v165 = vld [vmem:[%s1 + $0x328] sm:$0xff]
  %v166 = vld [vmem:[%s1 + $0x330] sm:$0xff]
  %v167 = vld [vmem:[%s1 + $0x338] sm:$0xff]
  %v168 = vld [vmem:[%s1 + $0x340] sm:$0xff]
  %v169 = vld [vmem:[%s1 + $0x348] sm:$0xff]
  %v170 = vld [vmem:[%s1 + $0x350] sm:$0xff]
  %v171 = vld [vmem:[%s1 + $0x358] sm:$0xff]
  %v172 = vld [vmem:[%s1 + $0x360] sm:$0xff]
  %v173 = vld [vmem:[%s1 + $0x368] sm:$0xff]
  %v174 = vld [vmem:[%s1 + $0x370] sm:$0xff]
  %v175 = vld [vmem:[%s1 + $0x378] sm:$0xff]
  %v176 = vld [vmem:[%s1 + $0x380] sm:$0xff]
  %v177 = vld [vmem:[%s1 + $0x388] sm:$0xff]
  %v178 = vld [vmem:[%s1 + $0x390] sm:$0xff]
  %v179 = vld [vmem:[%s1 + $0x398] sm:$0xff]
  %v180 = vld [vmem:[%s1 + $0x3a0] sm:$0xff]
  %v181 = vld [vmem:[%s1 + $0x3a8] sm:$0xff]
  %v182 = vld [vmem:[%s1 + $0x3b0] sm:$0xff]
  %v183 = vld [vmem:[%s1 + $0x3b8] sm:$0xff]
  %v184 = vld [vmem:[%s1 + $0x3c0] sm:$0xff]
  %v185 = vld [vmem:[%s1 + $0x3c8] sm:$0xff]
  %v186 = vld [vmem:[%s1 + $0x3d0] sm:$0xff]
  %v187 = vld [vmem:[%s1 + $0x3d8] sm:$0xff]
  %v188 = vld [vmem:[%s1 + $0x3e0] sm:$0xff]
  %v189 = vld [vmem:[%s1 + $0x3e8] sm:$0xff]
  %v190 = vld [vmem:[%s1 + $0x3f0] sm:$0xff]
  %v191 = vld [vmem:[%s1 + $0x3f8] sm:$0xff]
  %v192 = vld [vmem:[%s1 + $0x400] sm:$0xff]
  %v193 = vld [vmem:[%s1 + $0x408] sm:$0xff]
  %v194 = vld [vmem:[%s1 + $0x410] sm:$0xff]
  %v195 = vld [vmem:[%s1 + $0x418] sm:$0xff]
  %v196 = vld [vmem:[%s1 + $0x420] sm:$0xff]
  %v197 = vld [vmem:[%s1 + $0x428] sm:$0xff]
  %v198 = vld [vmem:[%s1 + $0x430] sm:$0xff]
  %v199 = vld [vmem:[%s1 + $0x438] sm:$0xff]
  %v200 = vld [vmem:[%s1 + $0x440] sm:$0xff]
  %v201 = vld [vmem:[%s1 + $0x448] sm:$0xff]
  %v202 = vld [vmem:[%s1 + $0x450] sm:$0xff]
  %v203 = vld [vmem:[%s1 + $0x458] sm:$0xff]
  %v204 = vld [vmem:[%s1 + $0x460] sm:$0xff]
  %v205 = vld [vmem:[%s1 + $0x468] sm:$0xff]
  %v206 = vld [vmem:[%s1 + $0x470] sm:$0xff]
  %v207 = vld [vmem:[%s1 + $0x478] sm:$0xff]
  %v208 = vld [vmem:[%s1 + $0x480] sm:$0xff]
  %v209 = vld [vmem:[%s1 + $0x488] sm:$0xff]
  %v210 = vld [vmem:[%s1 + $0x490] sm:$0xff]
  %v211 = vld [vmem:[%s1 + $0x498] sm:$0xff]
  %v212 = vld [vmem:[%s1 + $0x4a0] sm:$0xff]
  %v213 = vld [vmem:[%s1 + $0x4a8] sm:$0xff]
  %v214 = vld [vmem:[%s1 + $0x4b0] sm:$0xff]
  %v215 = vld [vmem:[%s1 + $0x4b8] sm:$0xff]
  %v216 = vld [vmem:[%s1 + $0x4c0] sm:$0xff]
  %v217 = vld [vmem:[%s1 + $0x4c8] sm:$0xff]
  %v218 = vld [vmem:[%s1 + $0x4d0] sm:$0xff]
  %v219 = vld [vmem:[%s1 + $0x4d8] sm:$0xff]
  %v220 = vld [vmem:[%s1 + $0x4e0] sm:$0xff]
  %v221 = vld [vmem:[%s1 + $0x4e8] sm:$0xff]
  %v222 = vld [vmem:[%s1 + $0x4f0] sm:$0xff]
  %v223 = vld [vmem:[%s1 + $0x4f8] sm:$0xff]
  %v224 = vld [vmem:[%s1 + $0x500] sm:$0xff]
  %v225 = vld [vmem:[%s1 + $0x508] sm:$0xff]
  %v226 = vld [vmem:[%s1 + $0x510] sm:$0xff]
  %v227 = vld [vmem:[%s1 + $0x518] sm:$0xff]
  %v228 = vld [vmem:[%s1 + $0x520] sm:$0xff]
  %v229 = vld [vmem:[%s1 + $0x528] sm:$0xff]
  %v230 = vld [vmem:[%s1 + $0x530] sm:$0xff]
  %v231 = vld [vmem:[%s1 + $0x538] sm:$0xff]
  %v232 = vld [vmem:[%s1 + $0x540] sm:$0xff]
  %v233 = vld [vmem:[%s1 + $0x548] sm:$0xff]
  %v234 = vld [vmem:[%s1 + $0x550] sm:$0xff]
  %v235 = vld [vmem:[%s1 + $0x558] sm:$0xff]
  %v236 = vld [vmem:[%s1 + $0x560] sm:$0xff]
  %v237 = vld [vmem:[%s1 + $0x568] sm:$0xff]
  %v238 = vld [vmem:[%s1 + $0x570] sm:$0xff]
  %v239 = vld [vmem:[%s1 + $0x578] sm:$0xff]
  %v240 = vld [vmem:[%s1 + $0x580] sm:$0xff]
  %v241 = vld [vmem:[%s1 + $0x588] sm:$0xff]
  %v242 = vld [vmem:[%s1 + $0x590] sm:$0xff]
  %v243 = vld [vmem:[%s1 + $0x598] sm:$0xff]
  %v244 = vld [vmem:[%s1 + $0x5a0] sm:$0xff]
  %v245 = vld [vmem:[%s1 + $0x5a8] sm:$0xff]
  %v246 = vld [vmem:[%s1 + $0x5b0] sm:$0xff]
  %v247 = vld [vmem:[%s1 + $0x5b8] sm:$0xff]
  %v248 = vld [vmem:[%s1 + $0x5c0] sm:$0xff]
  %v249 = vld [vmem:[%s1 + $0x5c8] sm:$0xff]
  %v250 = vld [vmem:[%s1 + $0x5d0] sm:$0xff]
  %v251 = vld [vmem:[%s1 + $0x5d8] sm:$0xff]
  %v252 = vld [vmem:[%s1 + $0x5e0] sm:$0xff]
  %v253 = vld [vmem:[%s1 + $0x5e8] sm:$0xff]
  %v254 = vld [vmem:[%s1 + $0x5f0] sm:$0xff]
  %v255 = vld [vmem:[%s1 + $0x5f8] sm:$0xff]
  %v256 = vld [vmem:[%s1 + $0x600] sm:$0xff]
  %v257 = vld [vmem:[%s1 + $0x608] sm:$0xff]
  %v258 = vld [vmem:[%s1 + $0x610] sm:$0xff]
  %v259 = vld [vmem:[%s1 + $0x618] sm:$0xff]
  %v260 = vld [vmem:[%s1 + $0x620] sm:$0xff]
  %v261 = vld [vmem:[%s1 + $0x628] sm:$0xff]
  %v262 = vld [vmem:[%s1 + $0x630] sm:$0xff]
  %v263 = vld [vmem:[%s1 + $0x638] sm:$0xff]
  %v264 = vld [vmem:[%s1 + $0x640] sm:$0xff]
  %v265 = vld [vmem:[%s1 + $0x648] sm:$0xff]
  %v266 = vld [vmem:[%s1 + $0x650] sm:$0xff]
  %v267 = vld [vmem:[%s1 + $0x658] sm:$0xff]
  %v268 = vld [vmem:[%s1 + $0x660] sm:$0xff]
  %v269 = vld [vmem:[%s1 + $0x668] sm:$0xff]
  %v270 = vld [vmem:[%s1 + $0x670] sm:$0xff]
  %v271 = vld [vmem:[%s1 + $0x678] sm:$0xff]
  %v300 = vunpack.c.l.b16 %v36
  %v301 = vunpack.c.h.b16 %v36
  %v302 = vunpack.c.l.b16 %v37
  %v303 = vunpack.c.h.b16 %v37
  %v304 = vunpack.c.l.b16 %v38
  %v305 = vunpack.c.h.b16 %v38
  %v306 = vunpack.c.l.b16 %v39
  %v307 = vunpack.c.h.b16 %v39
  %v308 = vunpack.c.l.b16 %v40
  %v309 = vunpack.c.h.b16 %v40
  %v310 = vunpack.c.l.b16 %v41
  %v311 = vunpack.c.h.b16 %v41
  %v312 = vunpack.c.l.b16 %v42
  %v313 = vunpack.c.l.b16 %v43
  %v314 = vunpack.c.h.b16 %v43
  %v315 = vunpack.c.l.b16 %v44
  %v316 = vunpack.c.h.b16 %v44
  %v317 = vunpack.c.l.b16 %v45
  %v318 = vunpack.c.h.b16 %v45
  %v319 = vunpack.c.l.b16 %v46
  %v320 = vunpack.c.h.b16 %v46
  %v321 = vunpack.c.l.b16 %v47
  %v322 = vunpack.c.h.b16 %v47
  %v323 = vunpack.c.l.b16 %v48
  %v324 = vunpack.c.h.b16 %v48
  %v325 = vunpack.c.l.b16 %v49
  %v326 = vunpack.c.l.b16 %v50
  %v327 = vunpack.c.h.b16 %v50
  %v328 = vunpack.c.l.b16 %v51
  %v329 = vunpack.c.h.b16 %v51
  %v330 = vunpack.c.l.b16 %v52
  %v331 = vunpack.c.h.b16 %v52
  %v332 = vunpack.c.l.b16 %v53
  %v333 = vunpack.c.h.b16 %v53
  %v334 = vunpack.c.l.b16 %v54
  %v335 = vunpack.c.h.b16 %v54
  %v336 = vunpack.c.l.b16 %v55
  %v337 = vunpack.c.h.b16 %v55
  %v338 = vunpack.c.l.b16 %v56
  %v339 = vunpack.c.l.b16 %v57
  %v340 = vunpack.c.h.b16 %v57
  %v341 = vunpack.c.l.b16 %v58
  %v342 = vunpack.c.h.b16 %v58
  %v343 = vunpack.c.l.b16 %v59
  %v344 = vunpack.c.h.b16 %v59
  %v345 = vunpack.c.l.b16 %v60
  %v346 = vunpack.c.h.b16 %v60
  %v347 = vunpack.c.l.b16 %v61
  %v348 = vunpack.c.h.b16 %v61
  %v349 = vunpack.c.l.b16 %v62
  %v350 = vunpack.c.h.b16 %v62
  %v351 = vunpack.c.l.b16 %v63
  %v352 = vpack.c.b16 %v313, %v300
  %v353 = vpack.c.b16 %v314, %v301
  %v354 = vpack.c.b16 %v315, %v302
  %v355 = vpack.c.b16 %v316, %v303
  %v356 = vpack.c.b16 %v317, %v304
  %v357 = vpack.c.b16 %v318, %v305
  %v358 = vpack.c.b16 %v319, %v306
  %v359 = vpack.c.b16 %v320, %v307
  %v360 = vpack.c.b16 %v321, %v308
  %v361 = vpack.c.b16 %v322, %v309
  %v362 = vpack.c.b16 %v323, %v310
  %v363 = vpack.c.b16 %v324, %v311
  %v364 = vpack.c.b16 %v325, %v312
  %v365 = vpack.c.b16 %v339, %v326
  %v366 = vpack.c.b16 %v340, %v327
  %v367 = vpack.c.b16 %v341, %v328
  %v368 = vpack.c.b16 %v342, %v329
  %v369 = vpack.c.b16 %v343, %v330
  %v370 = vpack.c.b16 %v344, %v331
  %v371 = vpack.c.b16 %v345, %v332
  %v372 = vpack.c.b16 %v346, %v333
  %v373 = vpack.c.b16 %v347, %v334
  %v374 = vpack.c.b16 %v348, %v335
  %v375 = vpack.c.b16 %v349, %v336
  %v376 = vpack.c.b16 %v350, %v337
  %v377 = vpack.c.b16 %v351, %v338
  %v612 = vunpack.c.l.b16 %v64
  %v613 = vunpack.c.h.b16 %v64
  %v614 = vunpack.c.l.b16 %v65
  %v615 = vunpack.c.h.b16 %v65
  %v616 = vunpack.c.l.b16 %v66
  %v617 = vunpack.c.h.b16 %v66
  %v618 = vunpack.c.l.b16 %v67
  %v619 = vunpack.c.h.b16 %v67
  %v620 = vunpack.c.l.b16 %v68
  %v621 = vunpack.c.h.b16 %v68
  %v622 = vunpack.c.l.b16 %v69
  %v623 = vunpack.c.h.b16 %v69
  %v624 = vunpack.c.l.b16 %v70
  %v625 = vunpack.c.h.b16 %v70
  %v626 = vunpack.c.l.b16 %v71
  %v627 = vunpack.c.h.b16 %v71
  %v628 = vunpack.c.l.b16 %v72
  %v629 = vunpack.c.h.b16 %v72
  %v630 = vunpack.c.l.b16 %v73
  %v631 = vunpack.c.h.b16 %v73
  %v632 = vunpack.c.l.b16 %v74
  %v633 = vunpack.c.h.b16 %v74
  %v634 = vunpack.c.l.b16 %v75
  %v635 = vunpack.c.h.b16 %v75
  %v636 = vunpack.c.l.b16 %v76
  %v637 = vunpack.c.h.b16 %v76
  %v638 = vunpack.c.l.b16 %v77
  %v639 = vunpack.c.h.b16 %v77
  %v640 = vunpack.c.l.b16 %v78
  %v641 = vunpack.c.h.b16 %v78
  %v642 = vunpack.c.l.b16 %v79
  %v643 = vunpack.c.h.b16 %v79
  %v644 = vunpack.c.l.b16 %v80
  %v645 = vunpack.c.h.b16 %v80
  %v646 = vunpack.c.l.b16 %v81
  %v647 = vunpack.c.h.b16 %v81
  %v648 = vunpack.c.l.b16 %v82
  %v649 = vunpack.c.h.b16 %v82
  %v650 = vunpack.c.l.b16 %v83
  %v651 = vunpack.c.h.b16 %v83
  %v652 = vunpack.c.l.b16 %v84
  %v653 = vunpack.c.h.b16 %v84
  %v654 = vunpack.c.l.b16 %v85
  %v655 = vunpack.c.h.b16 %v85
  %v656 = vunpack.c.l.b16 %v86
  %v657 = vunpack.c.h.b16 %v86
  %v658 = vunpack.c.l.b16 %v87
  %v659 = vunpack.c.h.b16 %v87
  %v660 = vunpack.c.l.b16 %v88
  %v661 = vunpack.c.h.b16 %v88
  %v662 = vunpack.c.l.b16 %v89
  %v663 = vunpack.c.h.b16 %v89
  %v664 = vunpack.c.l.b16 %v90
  %v665 = vunpack.c.h.b16 %v90
  %v666 = vunpack.c.l.b16 %v91
  %v667 = vunpack.c.h.b16 %v91
  %v668 = vunpack.c.l.b16 %v92
  %v669 = vunpack.c.h.b16 %v92
  %v670 = vunpack.c.l.b16 %v93
  %v671 = vunpack.c.h.b16 %v93
  %v672 = vunpack.c.l.b16 %v94
  %v673 = vunpack.c.h.b16 %v94
  %v674 = vunpack.c.l.b16 %v95
  %v675 = vunpack.c.h.b16 %v95
  %v676 = vunpack.c.l.b16 %v96
  %v677 = vunpack.c.h.b16 %v96
  %v678 = vunpack.c.l.b16 %v97
  %v679 = vunpack.c.h.b16 %v97
  %v680 = vunpack.c.l.b16 %v98
  %v681 = vunpack.c.h.b16 %v98
  %v682 = vunpack.c.l.b16 %v99
  %v683 = vunpack.c.h.b16 %v99
  %v684 = vunpack.c.l.b16 %v100
  %v685 = vunpack.c.h.b16 %v100
  %v686 = vunpack.c.l.b16 %v101
  %v687 = vunpack.c.h.b16 %v101
  %v688 = vunpack.c.l.b16 %v102
  %v689 = vunpack.c.h.b16 %v102
  %v690 = vunpack.c.l.b16 %v103
  %v691 = vunpack.c.h.b16 %v103
  %v692 = vunpack.c.l.b16 %v104
  %v693 = vunpack.c.h.b16 %v104
  %v694 = vunpack.c.l.b16 %v105
  %v695 = vunpack.c.h.b16 %v105
  %v696 = vunpack.c.l.b16 %v106
  %v697 = vunpack.c.h.b16 %v106
  %v698 = vunpack.c.l.b16 %v107
  %v699 = vunpack.c.h.b16 %v107
  %v700 = vunpack.c.l.b16 %v108
  %v701 = vunpack.c.h.b16 %v108
  %v702 = vunpack.c.l.b16 %v109
  %v703 = vunpack.c.h.b16 %v109
  %v704 = vunpack.c.l.b16 %v110
  %v705 = vunpack.c.h.b16 %v110
  %v706 = vunpack.c.l.b16 %v111
  %v707 = vunpack.c.h.b16 %v111
  %v708 = vunpack.c.l.b16 %v112
  %v709 = vunpack.c.h.b16 %v112
  %v710 = vunpack.c.l.b16 %v113
  %v711 = vunpack.c.h.b16 %v113
  %v712 = vunpack.c.l.b16 %v114
  %v713 = vunpack.c.h.b16 %v114
  %v714 = vunpack.c.l.b16 %v115
  %v715 = vunpack.c.h.b16 %v115
  %v716 = vunpack.c.l.b16 %v116
  %v717 = vunpack.c.h.b16 %v116
  %v718 = vunpack.c.l.b16 %v117
  %v719 = vunpack.c.h.b16 %v117
  %v720 = vunpack.c.l.b16 %v118
  %v721 = vunpack.c.h.b16 %v118
  %v722 = vunpack.c.l.b16 %v119
  %v723 = vunpack.c.h.b16 %v119
  %v724 = vunpack.c.l.b16 %v120
  %v725 = vunpack.c.h.b16 %v120
  %v726 = vunpack.c.l.b16 %v121
  %v727 = vunpack.c.h.b16 %v121
  %v728 = vunpack.c.l.b16 %v122
  %v729 = vunpack.c.h.b16 %v122
  %v730 = vunpack.c.l.b16 %v123
  %v731 = vunpack.c.h.b16 %v123
  %v732 = vunpack.c.l.b16 %v124
  %v733 = vunpack.c.h.b16 %v124
  %v734 = vunpack.c.l.b16 %v125
  %v735 = vunpack.c.h.b16 %v125
  %v736 = vunpack.c.l.b16 %v126
  %v737 = vunpack.c.h.b16 %v126
  %v738 = vunpack.c.l.b16 %v127
  %v739 = vunpack.c.h.b16 %v127
  %v740 = vunpack.c.l.b16 %v128
  %v741 = vunpack.c.h.b16 %v128
  %v742 = vunpack.c.l.b16 %v129
  %v743 = vunpack.c.h.b16 %v129
  %v744 = vunpack.c.l.b16 %v130
  %v745 = vunpack.c.h.b16 %v130
  %v746 = vunpack.c.l.b16 %v131
  %v747 = vunpack.c.h.b16 %v131
  %v748 = vunpack.c.l.b16 %v132
  %v749 = vunpack.c.h.b16 %v132
  %v750 = vunpack.c.l.b16 %v133
  %v751 = vunpack.c.h.b16 %v133
  %v752 = vunpack.c.l.b16 %v134
  %v753 = vunpack.c.h.b16 %v134
  %v754 = vunpack.c.l.b16 %v135
  %v755 = vunpack.c.h.b16 %v135
  %v756 = vunpack.c.l.b16 %v136
  %v757 = vunpack.c.h.b16 %v136
  %v758 = vunpack.c.l.b16 %v137
  %v759 = vunpack.c.h.b16 %v137
  %v760 = vunpack.c.l.b16 %v138
  %v761 = vunpack.c.h.b16 %v138
  %v762 = vunpack.c.l.b16 %v139
  %v763 = vunpack.c.h.b16 %v139
  %v764 = vunpack.c.l.b16 %v140
  %v765 = vunpack.c.h.b16 %v140
  %v766 = vunpack.c.l.b16 %v141
  %v767 = vunpack.c.h.b16 %v141
  %v768 = vunpack.c.l.b16 %v142
  %v769 = vunpack.c.h.b16 %v142
  %v770 = vunpack.c.l.b16 %v143
  %v771 = vunpack.c.h.b16 %v143
  %v772 = vunpack.c.l.b16 %v144
  %v773 = vunpack.c.h.b16 %v144
  %v774 = vunpack.c.l.b16 %v145
  %v775 = vunpack.c.h.b16 %v145
  %v776 = vunpack.c.l.b16 %v146
  %v777 = vunpack.c.h.b16 %v146
  %v778 = vunpack.c.l.b16 %v147
  %v779 = vunpack.c.h.b16 %v147
  %v780 = vunpack.c.l.b16 %v148
  %v781 = vunpack.c.h.b16 %v148
  %v782 = vunpack.c.l.b16 %v149
  %v783 = vunpack.c.h.b16 %v149
  %v784 = vunpack.c.l.b16 %v150
  %v785 = vunpack.c.h.b16 %v150
  %v786 = vunpack.c.l.b16 %v151
  %v787 = vunpack.c.h.b16 %v151
  %v788 = vunpack.c.l.b16 %v152
  %v789 = vunpack.c.h.b16 %v152
  %v790 = vunpack.c.l.b16 %v153
  %v791 = vunpack.c.h.b16 %v153
  %v792 = vunpack.c.l.b16 %v154
  %v793 = vunpack.c.h.b16 %v154
  %v794 = vunpack.c.l.b16 %v155
  %v795 = vunpack.c.h.b16 %v155
  %v796 = vunpack.c.l.b16 %v156
  %v797 = vunpack.c.h.b16 %v156
  %v798 = vunpack.c.l.b16 %v157
  %v799 = vunpack.c.h.b16 %v157
  %v800 = vunpack.c.l.b16 %v158
  %v801 = vunpack.c.h.b16 %v158
  %v802 = vunpack.c.l.b16 %v159
  %v803 = vunpack.c.h.b16 %v159
  %v804 = vunpack.c.l.b16 %v160
  %v805 = vunpack.c.h.b16 %v160
  %v806 = vunpack.c.l.b16 %v161
  %v807 = vunpack.c.h.b16 %v161
  %v808 = vunpack.c.l.b16 %v162
  %v809 = vunpack.c.h.b16 %v162
  %v810 = vunpack.c.l.b16 %v163
  %v811 = vunpack.c.h.b16 %v163
  %v812 = vunpack.c.l.b16 %v164
  %v813 = vunpack.c.h.b16 %v164
  %v814 = vunpack.c.l.b16 %v165
  %v815 = vunpack.c.h.b16 %v165
  %v816 = vunpack.c.l.b16 %v166
  %v817 = vunpack.c.h.b16 %v166
  %v818 = vunpack.c.l.b16 %v167
  %v819 = vunpack.c.h.b16 %v167
  %v820 = vunpack.c.l.b16 %v168
  %v821 = vunpack.c.h.b16 %v168
  %v822 = vunpack.c.l.b16 %v169
  %v823 = vunpack.c.h.b16 %v169
  %v824 = vunpack.c.l.b16 %v170
  %v825 = vunpack.c.h.b16 %v170
  %v826 = vunpack.c.l.b16 %v171
  %v827 = vunpack.c.h.b16 %v171
  %v828 = vunpack.c.l.b16 %v172
  %v829 = vunpack.c.h.b16 %v172
  %v830 = vunpack.c.l.b16 %v173
  %v831 = vunpack.c.h.b16 %v173
  %v832 = vunpack.c.l.b16 %v174
  %v833 = vunpack.c.h.b16 %v174
  %v834 = vunpack.c.l.b16 %v175
  %v835 = vunpack.c.h.b16 %v175
  %v836 = vunpack.c.l.b16 %v176
  %v837 = vunpack.c.h.b16 %v176
  %v838 = vunpack.c.l.b16 %v177
  %v839 = vunpack.c.h.b16 %v177
  %v840 = vunpack.c.l.b16 %v178
  %v841 = vunpack.c.h.b16 %v178
  %v842 = vunpack.c.l.b16 %v179
  %v843 = vunpack.c.h.b16 %v179
  %v844 = vunpack.c.l.b16 %v180
  %v845 = vunpack.c.h.b16 %v180
  %v846 = vunpack.c.l.b16 %v181
  %v847 = vunpack.c.h.b16 %v181
  %v848 = vunpack.c.l.b16 %v182
  %v849 = vunpack.c.h.b16 %v182
  %v850 = vunpack.c.l.b16 %v183
  %v851 = vunpack.c.h.b16 %v183
  %v852 = vunpack.c.l.b16 %v184
  %v853 = vunpack.c.h.b16 %v184
  %v854 = vunpack.c.l.b16 %v185
  %v855 = vunpack.c.h.b16 %v185
  %v856 = vunpack.c.l.b16 %v186
  %v857 = vunpack.c.h.b16 %v186
  %v858 = vunpack.c.l.b16 %v187
  %v859 = vunpack.c.h.b16 %v187
  %v860 = vunpack.c.l.b16 %v188
  %v861 = vunpack.c.h.b16 %v188
  %v862 = vunpack.c.l.b16 %v189
  %v863 = vunpack.c.h.b16 %v189
  %v864 = vunpack.c.l.b16 %v190
  %v865 = vunpack.c.h.b16 %v190
  %v866 = vunpack.c.l.b16 %v191
  %v867 = vunpack.c.h.b16 %v191
  %v868 = vunpack.c.l.b16 %v192
  %v869 = vunpack.c.h.b16 %v192
  %v870 = vunpack.c.l.b16 %v193
  %v871 = vunpack.c.h.b16 %v193
  %v872 = vunpack.c.l.b16 %v194
  %v873 = vunpack.c.h.b16 %v194
  %v874 = vunpack.c.l.b16 %v195
  %v875 = vunpack.c.h.b16 %v195
  %v876 = vunpack.c.l.b16 %v196
  %v877 = vunpack.c.h.b16 %v196
  %v878 = vunpack.c.l.b16 %v197
  %v879 = vunpack.c.h.b16 %v197
  %v880 = vunpack.c.l.b16 %v198
  %v881 = vunpack.c.h.b16 %v198
  %v882 = vunpack.c.l.b16 %v199
  %v883 = vunpack.c.h.b16 %v199
  %v884 = vunpack.c.l.b16 %v200
  %v885 = vunpack.c.h.b16 %v200
  %v886 = vunpack.c.l.b16 %v201
  %v887 = vunpack.c.h.b16 %v201
  %v888 = vunpack.c.l.b16 %v202
  %v889 = vunpack.c.h.b16 %v202
  %v890 = vunpack.c.l.b16 %v203
  %v891 = vunpack.c.h.b16 %v203
  %v892 = vunpack.c.l.b16 %v204
  %v893 = vunpack.c.h.b16 %v204
  %v894 = vunpack.c.l.b16 %v205
  %v895 = vunpack.c.h.b16 %v205
  %v896 = vunpack.c.l.b16 %v206
  %v897 = vunpack.c.h.b16 %v206
  %v898 = vunpack.c.l.b16 %v207
  %v899 = vunpack.c.h.b16 %v207
  %v900 = vunpack.c.l.b16 %v208
  %v901 = vunpack.c.h.b16 %v208
  %v902 = vunpack.c.l.b16 %v209
  %v903 = vunpack.c.h.b16 %v209
  %v904 = vunpack.c.l.b16 %v210
  %v905 = vunpack.c.h.b16 %v210
  %v906 = vunpack.c.l.b16 %v211
  %v907 = vunpack.c.h.b16 %v211
  %v908 = vunpack.c.l.b16 %v212
  %v909 = vunpack.c.h.b16 %v212
  %v910 = vunpack.c.l.b16 %v213
  %v911 = vunpack.c.h.b16 %v213
  %v912 = vunpack.c.l.b16 %v214
  %v913 = vunpack.c.h.b16 %v214
  %v914 = vunpack.c.l.b16 %v215
  %v915 = vunpack.c.h.b16 %v215
  %v916 = vunpack.c.l.b16 %v216
  %v917 = vunpack.c.h.b16 %v216
  %v918 = vunpack.c.l.b16 %v217
  %v919 = vunpack.c.h.b16 %v217
  %v920 = vunpack.c.l.b16 %v218
  %v921 = vunpack.c.h.b16 %v218
  %v922 = vunpack.c.l.b16 %v219
  %v923 = vunpack.c.h.b16 %v219
  %v924 = vunpack.c.l.b16 %v220
  %v925 = vunpack.c.h.b16 %v220
  %v926 = vunpack.c.l.b16 %v221
  %v927 = vunpack.c.h.b16 %v221
  %v928 = vunpack.c.l.b16 %v222
  %v929 = vunpack.c.h.b16 %v222
  %v930 = vunpack.c.l.b16 %v223
  %v931 = vunpack.c.h.b16 %v223
  %v932 = vunpack.c.l.b16 %v224
  %v933 = vunpack.c.h.b16 %v224
  %v934 = vunpack.c.l.b16 %v225
  %v935 = vunpack.c.h.b16 %v225
  %v936 = vunpack.c.l.b16 %v226
  %v937 = vunpack.c.h.b16 %v226
  %v938 = vunpack.c.l.b16 %v227
  %v939 = vunpack.c.h.b16 %v227
  %v940 = vunpack.c.l.b16 %v228
  %v941 = vunpack.c.h.b16 %v228
  %v942 = vunpack.c.l.b16 %v229
  %v943 = vunpack.c.h.b16 %v229
  %v944 = vunpack.c.l.b16 %v230
  %v945 = vunpack.c.h.b16 %v230
  %v946 = vunpack.c.l.b16 %v231
  %v947 = vunpack.c.h.b16 %v231
  %v948 = vunpack.c.l.b16 %v232
  %v949 = vunpack.c.h.b16 %v232
  %v950 = vunpack.c.l.b16 %v233
  %v951 = vunpack.c.h.b16 %v233
  %v952 = vunpack.c.l.b16 %v234
  %v953 = vunpack.c.h.b16 %v234
  %v954 = vunpack.c.l.b16 %v235
  %v955 = vunpack.c.h.b16 %v235
  %v956 = vunpack.c.l.b16 %v236
  %v957 = vunpack.c.h.b16 %v236
  %v958 = vunpack.c.l.b16 %v237
  %v959 = vunpack.c.h.b16 %v237
  %v960 = vunpack.c.l.b16 %v238
  %v961 = vunpack.c.h.b16 %v238
  %v962 = vunpack.c.l.b16 %v239
  %v963 = vunpack.c.h.b16 %v239
  %v964 = vunpack.c.l.b16 %v240
  %v965 = vunpack.c.h.b16 %v240
  %v966 = vunpack.c.l.b16 %v241
  %v967 = vunpack.c.h.b16 %v241
  %v968 = vunpack.c.l.b16 %v242
  %v969 = vunpack.c.h.b16 %v242
  %v970 = vunpack.c.l.b16 %v243
  %v971 = vunpack.c.h.b16 %v243
  %v972 = vunpack.c.l.b16 %v244
  %v973 = vunpack.c.h.b16 %v244
  %v974 = vunpack.c.l.b16 %v245
  %v975 = vunpack.c.h.b16 %v245
  %v976 = vunpack.c.l.b16 %v246
  %v977 = vunpack.c.h.b16 %v246
  %v978 = vunpack.c.l.b16 %v247
  %v979 = vunpack.c.h.b16 %v247
  %v980 = vunpack.c.l.b16 %v248
  %v981 = vunpack.c.h.b16 %v248
  %v982 = vunpack.c.l.b16 %v249
  %v983 = vunpack.c.h.b16 %v249
  %v984 = vunpack.c.l.b16 %v250
  %v985 = vunpack.c.h.b16 %v250
  %v986 = vunpack.c.l.b16 %v251
  %v987 = vunpack.c.h.b16 %v251
  %v988 = vunpack.c.l.b16 %v252
  %v989 = vunpack.c.h.b16 %v252
  %v990 = vunpack.c.l.b16 %v253
  %v991 = vunpack.c.h.b16 %v253
  %v992 = vunpack.c.l.b16 %v254
  %v993 = vunpack.c.h.b16 %v254
  %v994 = vunpack.c.l.b16 %v255
  %v995 = vunpack.c.h.b16 %v255
  %v996 = vunpack.c.l.b16 %v256
  %v997 = vunpack.c.h.b16 %v256
  %v998 = vunpack.c.l.b16 %v257
  %v999 = vunpack.c.h.b16 %v257
  %v1000 = vunpack.c.l.b16 %v258
  %v1001 = vunpack.c.h.b16 %v258
  %v1002 = vunpack.c.l.b16 %v259
  %v1003 = vunpack.c.h.b16 %v259
  %v1004 = vunpack.c.l.b16 %v260
  %v1005 = vunpack.c.h.b16 %v260
  %v1006 = vunpack.c.l.b16 %v261
  %v1007 = vunpack.c.h.b16 %v261
  %v1008 = vunpack.c.l.b16 %v262
  %v1009 = vunpack.c.h.b16 %v262
  %v1010 = vunpack.c.l.b16 %v263
  %v1011 = vunpack.c.h.b16 %v263
  %v1012 = vunpack.c.l.b16 %v264
  %v1013 = vunpack.c.h.b16 %v264
  %v1014 = vunpack.c.l.b16 %v265
  %v1015 = vunpack.c.h.b16 %v265
  %v1016 = vunpack.c.l.b16 %v266
  %v1017 = vunpack.c.h.b16 %v266
  %v1018 = vunpack.c.l.b16 %v267
  %v1019 = vunpack.c.h.b16 %v267
  %v1020 = vunpack.c.l.b16 %v268
  %v1021 = vunpack.c.h.b16 %v268
  %v1022 = vunpack.c.l.b16 %v269
  %v1023 = vunpack.c.h.b16 %v269
  %v1024 = vunpack.c.l.b16 %v270
  %v1025 = vunpack.c.h.b16 %v270
  %v1026 = vunpack.c.l.b16 %v271
  %v1027 = vunpack.c.h.b16 %v271
  %v1028 = vpack.c.b16 %v614, %v612
  %v1029 = vpack.c.b16 %v615, %v613
  %v1030 = vpack.c.b16 %v618, %v616
  %v1031 = vpack.c.b16 %v619, %v617
  %v1032 = vpack.c.b16 %v622, %v620
  %v1033 = vpack.c.b16 %v623, %v621
  %v1034 = vpack.c.b16 %v626, %v624
  %v1035 = vpack.c.b16 %v627, %v625
  %v1036 = vpack.c.b16 %v630, %v628
  %v1037 = vpack.c.b16 %v631, %v629
  %v1038 = vpack.c.b16 %v634, %v632
  %v1039 = vpack.c.b16 %v635, %v633
  %v1040 = vpack.c.b16 %v638, %v636
  %v1041 = vpack.c.b16 %v639, %v637
  %v1042 = vpack.c.b16 %v642, %v640
  %v1043 = vpack.c.b16 %v643, %v641
  %v1044 = vpack.c.b16 %v646, %v644
  %v1045 = vpack.c.b16 %v647, %v645
  %v1046 = vpack.c.b16 %v650, %v648
  %v1047 = vpack.c.b16 %v651, %v649
  %v1048 = vpack.c.b16 %v654, %v652
  %v1049 = vpack.c.b16 %v655, %v653
  %v1050 = vpack.c.b16 %v658, %v656
  %v1051 = vpack.c.b16 %v659, %v657
  %v1052 = vpack.c.b16 %v662, %v660
  %v1053 = vpack.c.b16 %v663, %v661
  %v1054 = vpack.c.b16 %v666, %v664
  %v1055 = vpack.c.b16 %v667, %v665
  %v1056 = vpack.c.b16 %v670, %v668
  %v1057 = vpack.c.b16 %v671, %v669
  %v1058 = vpack.c.b16 %v674, %v672
  %v1059 = vpack.c.b16 %v675, %v673
  %v1060 = vpack.c.b16 %v678, %v676
  %v1061 = vpack.c.b16 %v679, %v677
  %v1062 = vpack.c.b16 %v682, %v680
  %v1063 = vpack.c.b16 %v683, %v681
  %v1064 = vpack.c.b16 %v686, %v684
  %v1065 = vpack.c.b16 %v687, %v685
  %v1066 = vpack.c.b16 %v690, %v688
  %v1067 = vpack.c.b16 %v691, %v689
  %v1068 = vpack.c.b16 %v694, %v692
  %v1069 = vpack.c.b16 %v695, %v693
  %v1070 = vpack.c.b16 %v698, %v696
  %v1071 = vpack.c.b16 %v699, %v697
  %v1072 = vpack.c.b16 %v702, %v700
  %v1073 = vpack.c.b16 %v703, %v701
  %v1074 = vpack.c.b16 %v706, %v704
  %v1075 = vpack.c.b16 %v707, %v705
  %v1076 = vpack.c.b16 %v710, %v708
  %v1077 = vpack.c.b16 %v711, %v709
  %v1078 = vpack.c.b16 %v714, %v712
  %v1079 = vpack.c.b16 %v715, %v713
  %v1080 = vpack.c.b16 %v718, %v716
  %v1081 = vpack.c.b16 %v719, %v717
  %v1082 = vpack.c.b16 %v722, %v720
  %v1083 = vpack.c.b16 %v723, %v721
  %v1084 = vpack.c.b16 %v726, %v724
  %v1085 = vpack.c.b16 %v727, %v725
  %v1086 = vpack.c.b16 %v730, %v728
  %v1087 = vpack.c.b16 %v731, %v729
  %v1088 = vpack.c.b16 %v734, %v732
  %v1089 = vpack.c.b16 %v735, %v733
  %v1090 = vpack.c.b16 %v738, %v736
  %v1091 = vpack.c.b16 %v739, %v737
  %v1092 = vpack.c.b16 %v742, %v740
  %v1093 = vpack.c.b16 %v743, %v741
  %v1094 = vpack.c.b16 %v746, %v744
  %v1095 = vpack.c.b16 %v747, %v745
  %v1096 = vpack.c.b16 %v750, %v748
  %v1097 = vpack.c.b16 %v751, %v749
  %v1098 = vpack.c.b16 %v754, %v752
  %v1099 = vpack.c.b16 %v755, %v753
  %v1100 = vpack.c.b16 %v758, %v756
  %v1101 = vpack.c.b16 %v759, %v757
  %v1102 = vpack.c.b16 %v762, %v760
  %v1103 = vpack.c.b16 %v763, %v761
  %v1104 = vpack.c.b16 %v766, %v764
  %v1105 = vpack.c.b16 %v767, %v765
  %v1106 = vpack.c.b16 %v770, %v768
  %v1107 = vpack.c.b16 %v771, %v769
  %v1108 = vpack.c.b16 %v774, %v772
  %v1109 = vpack.c.b16 %v775, %v773
  %v1110 = vpack.c.b16 %v778, %v776
  %v1111 = vpack.c.b16 %v779, %v777
  %v1112 = vpack.c.b16 %v782, %v780
  %v1113 = vpack.c.b16 %v783, %v781
  %v1114 = vpack.c.b16 %v786, %v784
  %v1115 = vpack.c.b16 %v787, %v785
  %v1116 = vpack.c.b16 %v790, %v788
  %v1117 = vpack.c.b16 %v791, %v789
  %v1118 = vpack.c.b16 %v794, %v792
  %v1119 = vpack.c.b16 %v795, %v793
  %v1120 = vpack.c.b16 %v798, %v796
  %v1121 = vpack.c.b16 %v799, %v797
  %v1122 = vpack.c.b16 %v802, %v800
  %v1123 = vpack.c.b16 %v803, %v801
  %v1124 = vpack.c.b16 %v806, %v804
  %v1125 = vpack.c.b16 %v807, %v805
  %v1126 = vpack.c.b16 %v810, %v808
  %v1127 = vpack.c.b16 %v811, %v809
  %v1128 = vpack.c.b16 %v814, %v812
  %v1129 = vpack.c.b16 %v815, %v813
  %v1130 = vpack.c.b16 %v818, %v816
  %v1131 = vpack.c.b16 %v819, %v817
  %v1132 = vpack.c.b16 %v822, %v820
  %v1133 = vpack.c.b16 %v823, %v821
  %v1134 = vpack.c.b16 %v826, %v824
  %v1135 = vpack.c.b16 %v827, %v825
  %v1136 = vpack.c.b16 %v830, %v828
  %v1137 = vpack.c.b16 %v831, %v829
  %v1138 = vpack.c.b16 %v834, %v832
  %v1139 = vpack.c.b16 %v835, %v833
  %v1140 = vpack.c.b16 %v838, %v836
  %v1141 = vpack.c.b16 %v839, %v837
  %v1142 = vpack.c.b16 %v842, %v840
  %v1143 = vpack.c.b16 %v843, %v841
  %v1144 = vpack.c.b16 %v846, %v844
  %v1145 = vpack.c.b16 %v847, %v845
  %v1146 = vpack.c.b16 %v850, %v848
  %v1147 = vpack.c.b16 %v851, %v849
  %v1148 = vpack.c.b16 %v854, %v852
  %v1149 = vpack.c.b16 %v855, %v853
  %v1150 = vpack.c.b16 %v858, %v856
  %v1151 = vpack.c.b16 %v859, %v857
  %v1152 = vpack.c.b16 %v862, %v860
  %v1153 = vpack.c.b16 %v863, %v861
  %v1154 = vpack.c.b16 %v866, %v864
  %v1155 = vpack.c.b16 %v867, %v865
  %v1156 = vpack.c.b16 %v870, %v868
  %v1157 = vpack.c.b16 %v871, %v869
  %v1158 = vpack.c.b16 %v874, %v872
  %v1159 = vpack.c.b16 %v875, %v873
  %v1160 = vpack.c.b16 %v878, %v876
  %v1161 = vpack.c.b16 %v879, %v877
  %v1162 = vpack.c.b16 %v882, %v880
  %v1163 = vpack.c.b16 %v883, %v881
  %v1164 = vpack.c.b16 %v886, %v884
  %v1165 = vpack.c.b16 %v887, %v885
  %v1166 = vpack.c.b16 %v890, %v888
  %v1167 = vpack.c.b16 %v891, %v889
  %v1168 = vpack.c.b16 %v894, %v892
  %v1169 = vpack.c.b16 %v895, %v893
  %v1170 = vpack.c.b16 %v898, %v896
  %v1171 = vpack.c.b16 %v899, %v897
  %v1172 = vpack.c.b16 %v902, %v900
  %v1173 = vpack.c.b16 %v903, %v901
  %v1174 = vpack.c.b16 %v906, %v904
  %v1175 = vpack.c.b16 %v907, %v905
  %v1176 = vpack.c.b16 %v910, %v908
  %v1177 = vpack.c.b16 %v911, %v909
  %v1178 = vpack.c.b16 %v914, %v912
  %v1179 = vpack.c.b16 %v915, %v913
  %v1180 = vpack.c.b16 %v918, %v916
  %v1181 = vpack.c.b16 %v919, %v917
  %v1182 = vpack.c.b16 %v922, %v920
  %v1183 = vpack.c.b16 %v923, %v921
  %v1184 = vpack.c.b16 %v926, %v924
  %v1185 = vpack.c.b16 %v927, %v925
  %v1186 = vpack.c.b16 %v930, %v928
  %v1187 = vpack.c.b16 %v931, %v929
  %v1188 = vpack.c.b16 %v934, %v932
  %v1189 = vpack.c.b16 %v935, %v933
  %v1190 = vpack.c.b16 %v938, %v936
  %v1191 = vpack.c.b16 %v939, %v937
  %v1192 = vpack.c.b16 %v942, %v940
  %v1193 = vpack.c.b16 %v943, %v941
  %v1194 = vpack.c.b16 %v946, %v944
  %v1195 = vpack.c.b16 %v947, %v945
  %v1196 = vpack.c.b16 %v950, %v948
  %v1197 = vpack.c.b16 %v951, %v949
  %v1198 = vpack.c.b16 %v954, %v952
  %v1199 = vpack.c.b16 %v955, %v953
  %v1200 = vpack.c.b16 %v958, %v956
  %v1201 = vpack.c.b16 %v959, %v957
  %v1202 = vpack.c.b16 %v962, %v960
  %v1203 = vpack.c.b16 %v963, %v961
  %v1204 = vpack.c.b16 %v966, %v964
  %v1205 = vpack.c.b16 %v967, %v965
  %v1206 = vpack.c.b16 %v970, %v968
  %v1207 = vpack.c.b16 %v971, %v969
  %v1208 = vpack.c.b16 %v974, %v972
  %v1209 = vpack.c.b16 %v975, %v973
  %v1210 = vpack.c.b16 %v978, %v976
  %v1211 = vpack.c.b16 %v979, %v977
  %v1212 = vpack.c.b16 %v982, %v980
  %v1213 = vpack.c.b16 %v983, %v981
  %v1214 = vpack.c.b16 %v986, %v984
  %v1215 = vpack.c.b16 %v987, %v985
  %v1216 = vpack.c.b16 %v990, %v988
  %v1217 = vpack.c.b16 %v991, %v989
  %v1218 = vpack.c.b16 %v994, %v992
  %v1219 = vpack.c.b16 %v995, %v993
  %v1220 = vpack.c.b16 %v998, %v996
  %v1221 = vpack.c.b16 %v999, %v997
  %v1222 = vpack.c.b16 %v1002, %v1000
  %v1223 = vpack.c.b16 %v1003, %v1001
  %v1224 = vpack.c.b16 %v1006, %v1004
  %v1225 = vpack.c.b16 %v1007, %v1005
  %v1226 = vpack.c.b16 %v1010, %v1008
  %v1227 = vpack.c.b16 %v1011, %v1009
  %v1228 = vpack.c.b16 %v1014, %v1012
  %v1229 = vpack.c.b16 %v1015, %v1013
  %v1230 = vpack.c.b16 %v1018, %v1016
  %v1231 = vpack.c.b16 %v1019, %v1017
  %v1232 = vpack.c.b16 %v1022, %v1020
  %v1233 = vpack.c.b16 %v1023, %v1021
  %v1234 = vpack.c.b16 %v1026, %v1024
  %v1235 = vpack.c.b16 %v1027, %v1025
  %1444 = vmatprep.subr.bf16.mxu0 %v1043
  %1445 = vmatpush1.bf16.msra.mxu0 %v1042
  %1446 = vmatprep.subr.bf16.mxu0 %v1041
  %1447 = vmatpush1.bf16.msra.mxu0 %v1040
  %1448 = vmatprep.subr.bf16.mxu0 %v1039
  %1449 = vmatpush1.bf16.msra.mxu0 %v1038
  %1450 = vmatprep.subr.bf16.mxu0 %v1037
  %1451 = vmatpush1.bf16.msra.mxu0 %v1036
  %1452 = vmatprep.subr.bf16.mxu0 %v1035
  %1453 = vmatpush1.bf16.msra.mxu0 %v1034
  %1454 = vmatprep.subr.bf16.mxu0 %v1033
  %1455 = vmatpush1.bf16.msra.mxu0 %v1032
  %1456 = vmatprep.subr.bf16.mxu0 %v1031
  %1457 = vmatpush1.bf16.msra.mxu0 %v1030
  %1458 = vmatprep.subr.bf16.mxu0 %v1029
  %1459 = vmatpush1.bf16.msra.mxu0 %v1028
  %1460 = vmatprep.subr.bf16.mxu0 %v1059
  %1461 = vmatpush2.bf16.msra.mxu0 %v1058
  %1462 = vmatprep.subr.bf16.mxu0 %v1057
  %1463 = vmatpush2.bf16.msra.mxu0 %v1056
  %1464 = vmatprep.subr.bf16.mxu0 %v1055
  %1465 = vmatpush2.bf16.msra.mxu0 %v1054
  %1466 = vmatprep.subr.bf16.mxu0 %v1053
  %1467 = vmatpush2.bf16.msra.mxu0 %v1052
  %1468 = vmatprep.subr.bf16.mxu0 %v1051
  %1469 = vmatpush2.bf16.msra.mxu0 %v1050
  %1470 = vmatprep.subr.bf16.mxu0 %v1049
  %1471 = vmatpush2.bf16.msra.mxu0 %v1048
  %1472 = vmatprep.subr.bf16.mxu0 %v1047
  %1473 = vmatpush2.bf16.msra.mxu0 %v1046
  %1474 = vmatprep.subr.bf16.mxu0 %v1045
  %1475 = vmatpush2.bf16.msra.mxu0 %v1044
  %1476 = vmatprep.mubr.bf16.mxu0 %v353
  %1477 = vmatmul.mubr.bf16.gmra.mxu0 %v352
  %v1478 = vpop.f32.mrf.mxu0
  %v1479 = vadd.f32 0.0, %v1478
  %v1480 = vpop.f32.mrf.mxu0
  %v1481 = vadd.f32 0.0, %v1480
  %v1482 = vpop.f32.mrf.mxu0
  %v1483 = vadd.f32 0.0, %v1482
  %v1484 = vpop.f32.mrf.mxu0
  %v1485 = vadd.f32 0.0, %v1484
  %1486 = vmatprep.mubr.bf16.mxu0 %v366
  %1487 = vmatmul.mubr.bf16.gmra.mxu0 %v365
  %v1488 = vpop.f32.mrf.mxu0
  %v1489 = vadd.f32 0.0, %v1488
  %v1490 = vpop.f32.mrf.mxu0
  %v1491 = vadd.f32 0.0, %v1490
  %v1492 = vpop.f32.mrf.mxu0
  %v1493 = vadd.f32 0.0, %v1492
  %v1494 = vpop.f32.mrf.mxu0
  %v1495 = vadd.f32 0.0, %v1494
  %1496 = vdwg.mxu0
  %1497 = vmatprep.subr.bf16.mxu0 %v1075
  %1498 = vmatpush1.bf16.msra.mxu0 %v1074
  %1499 = vmatprep.subr.bf16.mxu0 %v1073
  %1500 = vmatpush1.bf16.msra.mxu0 %v1072
  %1501 = vmatprep.subr.bf16.mxu0 %v1071
  %1502 = vmatpush1.bf16.msra.mxu0 %v1070
  %1503 = vmatprep.subr.bf16.mxu0 %v1069
  %1504 = vmatpush1.bf16.msra.mxu0 %v1068
  %1505 = vmatprep.subr.bf16.mxu0 %v1067
  %1506 = vmatpush1.bf16.msra.mxu0 %v1066
  %1507 = vmatprep.subr.bf16.mxu0 %v1065
  %1508 = vmatpush1.bf16.msra.mxu0 %v1064
  %1509 = vmatprep.subr.bf16.mxu0 %v1063
  %1510 = vmatpush1.bf16.msra.mxu0 %v1062
  %1511 = vmatprep.subr.bf16.mxu0 %v1061
  %1512 = vmatpush1.bf16.msra.mxu0 %v1060
  %1513 = vmatprep.subr.bf16.mxu0 %v1091
  %1514 = vmatpush2.bf16.msra.mxu0 %v1090
  %1515 = vmatprep.subr.bf16.mxu0 %v1089
  %1516 = vmatpush2.bf16.msra.mxu0 %v1088
  %1517 = vmatprep.subr.bf16.mxu0 %v1087
  %1518 = vmatpush2.bf16.msra.mxu0 %v1086
  %1519 = vmatprep.subr.bf16.mxu0 %v1085
  %1520 = vmatpush2.bf16.msra.mxu0 %v1084
  %1521 = vmatprep.subr.bf16.mxu0 %v1083
  %1522 = vmatpush2.bf16.msra.mxu0 %v1082
  %1523 = vmatprep.subr.bf16.mxu0 %v1081
  %1524 = vmatpush2.bf16.msra.mxu0 %v1080
  %1525 = vmatprep.subr.bf16.mxu0 %v1079
  %1526 = vmatpush2.bf16.msra.mxu0 %v1078
  %1527 = vmatprep.subr.bf16.mxu0 %v1077
  %1528 = vmatpush2.bf16.msra.mxu0 %v1076
  %1529 = vmatprep.mubr.bf16.mxu0 %v355
  %1530 = vmatmul.mubr.bf16.gmra.mxu0 %v354
  %v1531 = vpop.f32.mrf.mxu0
  %v1532 = vadd.f32 %v1479, %v1531
  %v1533 = vpop.f32.mrf.mxu0
  %v1534 = vadd.f32 %v1481, %v1533
  %v1535 = vpop.f32.mrf.mxu0
  %v1536 = vadd.f32 %v1483, %v1535
  %v1537 = vpop.f32.mrf.mxu0
  %v1538 = vadd.f32 %v1485, %v1537
  %1539 = vmatprep.mubr.bf16.mxu0 %v368
  %1540 = vmatmul.mubr.bf16.gmra.mxu0 %v367
  %v1541 = vpop.f32.mrf.mxu0
  %v1542 = vadd.f32 %v1489, %v1541
  %v1543 = vpop.f32.mrf.mxu0
  %v1544 = vadd.f32 %v1491, %v1543
  %v1545 = vpop.f32.mrf.mxu0
  %v1546 = vadd.f32 %v1493, %v1545
  %v1547 = vpop.f32.mrf.mxu0
  %v1548 = vadd.f32 %v1495, %v1547
  %1549 = vdwg.mxu0
  %1550 = vmatprep.subr.bf16.mxu0 %v1107
  %1551 = vmatpush1.bf16.msra.mxu0 %v1106
  %1552 = vmatprep.subr.bf16.mxu0 %v1105
  %1553 = vmatpush1.bf16.msra.mxu0 %v1104
  %1554 = vmatprep.subr.bf16.mxu0 %v1103
  %1555 = vmatpush1.bf16.msra.mxu0 %v1102
  %1556 = vmatprep.subr.bf16.mxu0 %v1101
  %1557 = vmatpush1.bf16.msra.mxu0 %v1100
  %1558 = vmatprep.subr.bf16.mxu0 %v1099
  %1559 = vmatpush1.bf16.msra.mxu0 %v1098
  %1560 = vmatprep.subr.bf16.mxu0 %v1097
  %1561 = vmatpush1.bf16.msra.mxu0 %v1096
  %1562 = vmatprep.subr.bf16.mxu0 %v1095
  %1563 = vmatpush1.bf16.msra.mxu0 %v1094
  %1564 = vmatprep.subr.bf16.mxu0 %v1093
  %1565 = vmatpush1.bf16.msra.mxu0 %v1092
  %1566 = vmatprep.subr.bf16.mxu0 %v1123
  %1567 = vmatpush2.bf16.msra.mxu0 %v1122
  %1568 = vmatprep.subr.bf16.mxu0 %v1121
  %1569 = vmatpush2.bf16.msra.mxu0 %v1120
  %1570 = vmatprep.subr.bf16.mxu0 %v1119
  %1571 = vmatpush2.bf16.msra.mxu0 %v1118
  %1572 = vmatprep.subr.bf16.mxu0 %v1117
  %1573 = vmatpush2.bf16.msra.mxu0 %v1116
  %1574 = vmatprep.subr.bf16.mxu0 %v1115
  %1575 = vmatpush2.bf16.msra.mxu0 %v1114
  %1576 = vmatprep.subr.bf16.mxu0 %v1113
  %1577 = vmatpush2.bf16.msra.mxu0 %v1112
  %1578 = vmatprep.subr.bf16.mxu0 %v1111
  %1579 = vmatpush2.bf16.msra.mxu0 %v1110
  %1580 = vmatprep.subr.bf16.mxu0 %v1109
  %1581 = vmatpush2.bf16.msra.mxu0 %v1108
  %1582 = vmatprep.mubr.bf16.mxu0 %v357
  %1583 = vmatmul.mubr.bf16.gmra.mxu0 %v356
  %v1584 = vpop.f32.mrf.mxu0
  %v1585 = vadd.f32 %v1532, %v1584
  %v1586 = vpop.f32.mrf.mxu0
  %v1587 = vadd.f32 %v1534, %v1586
  %v1588 = vpop.f32.mrf.mxu0
  %v1589 = vadd.f32 %v1536, %v1588
  %v1590 = vpop.f32.mrf.mxu0
  %v1591 = vadd.f32 %v1538, %v1590
  %1592 = vmatprep.mubr.bf16.mxu0 %v370
  %1593 = vmatmul.mubr.bf16.gmra.mxu0 %v369
  %v1594 = vpop.f32.mrf.mxu0
  %v1595 = vadd.f32 %v1542, %v1594
  %v1596 = vpop.f32.mrf.mxu0
  %v1597 = vadd.f32 %v1544, %v1596
  %v1598 = vpop.f32.mrf.mxu0
  %v1599 = vadd.f32 %v1546, %v1598
  %v1600 = vpop.f32.mrf.mxu0
  %v1601 = vadd.f32 %v1548, %v1600
  %1602 = vdwg.mxu0
  %1603 = vmatprep.subr.bf16.mxu0 %v1139
  %1604 = vmatpush1.bf16.msra.mxu0 %v1138
  %1605 = vmatprep.subr.bf16.mxu0 %v1137
  %1606 = vmatpush1.bf16.msra.mxu0 %v1136
  %1607 = vmatprep.subr.bf16.mxu0 %v1135
  %1608 = vmatpush1.bf16.msra.mxu0 %v1134
  %1609 = vmatprep.subr.bf16.mxu0 %v1133
  %1610 = vmatpush1.bf16.msra.mxu0 %v1132
  %1611 = vmatprep.subr.bf16.mxu0 %v1131
  %1612 = vmatpush1.bf16.msra.mxu0 %v1130
  %1613 = vmatprep.subr.bf16.mxu0 %v1129
  %1614 = vmatpush1.bf16.msra.mxu0 %v1128
  %1615 = vmatprep.subr.bf16.mxu0 %v1127
  %1616 = vmatpush1.bf16.msra.mxu0 %v1126
  %1617 = vmatprep.subr.bf16.mxu0 %v1125
  %1618 = vmatpush1.bf16.msra.mxu0 %v1124
  %1619 = vmatprep.subr.bf16.mxu0 %v1155
  %1620 = vmatpush2.bf16.msra.mxu0 %v1154
  %1621 = vmatprep.subr.bf16.mxu0 %v1153
  %1622 = vmatpush2.bf16.msra.mxu0 %v1152
  %1623 = vmatprep.subr.bf16.mxu0 %v1151
  %1624 = vmatpush2.bf16.msra.mxu0 %v1150
  %1625 = vmatprep.subr.bf16.mxu0 %v1149
  %1626 = vmatpush2.bf16.msra.mxu0 %v1148
  %1627 = vmatprep.subr.bf16.mxu0 %v1147
  %1628 = vmatpush2.bf16.msra.mxu0 %v1146
  %1629 = vmatprep.subr.bf16.mxu0 %v1145
  %1630 = vmatpush2.bf16.msra.mxu0 %v1144
  %1631 = vmatprep.subr.bf16.mxu0 %v1143
  %1632 = vmatpush2.bf16.msra.mxu0 %v1142
  %1633 = vmatprep.subr.bf16.mxu0 %v1141
  %1634 = vmatpush2.bf16.msra.mxu0 %v1140
  %1635 = vmatprep.mubr.bf16.mxu0 %v359
  %1636 = vmatmul.mubr.bf16.gmra.mxu0 %v358
  %v1637 = vpop.f32.mrf.mxu0
  %v1638 = vadd.f32 %v1585, %v1637
  %v1639 = vpop.f32.mrf.mxu0
  %v1640 = vadd.f32 %v1587, %v1639
  %v1641 = vpop.f32.mrf.mxu0
  %v1642 = vadd.f32 %v1589, %v1641
  %v1643 = vpop.f32.mrf.mxu0
  %v1644 = vadd.f32 %v1591, %v1643
  %1645 = vmatprep.mubr.bf16.mxu0 %v372
  %1646 = vmatmul.mubr.bf16.gmra.mxu0 %v371
  %v1647 = vpop.f32.mrf.mxu0
  %v1648 = vadd.f32 %v1595, %v1647
  %v1649 = vpop.f32.mrf.mxu0
  %v1650 = vadd.f32 %v1597, %v1649
  %v1651 = vpop.f32.mrf.mxu0
  %v1652 = vadd.f32 %v1599, %v1651
  %v1653 = vpop.f32.mrf.mxu0
  %v1654 = vadd.f32 %v1601, %v1653
  %1655 = vdwg.mxu0
  %1656 = vmatprep.subr.bf16.mxu0 %v1171
  %1657 = vmatpush1.bf16.msra.mxu0 %v1170
  %1658 = vmatprep.subr.bf16.mxu0 %v1169
  %1659 = vmatpush1.bf16.msra.mxu0 %v1168
  %1660 = vmatprep.subr.bf16.mxu0 %v1167
  %1661 = vmatpush1.bf16.msra.mxu0 %v1166
  %1662 = vmatprep.subr.bf16.mxu0 %v1165
  %1663 = vmatpush1.bf16.msra.mxu0 %v1164
  %1664 = vmatprep.subr.bf16.mxu0 %v1163
  %1665 = vmatpush1.bf16.msra.mxu0 %v1162
  %1666 = vmatprep.subr.bf16.mxu0 %v1161
  %1667 = vmatpush1.bf16.msra.mxu0 %v1160
  %1668 = vmatprep.subr.bf16.mxu0 %v1159
  %1669 = vmatpush1.bf16.msra.mxu0 %v1158
  %1670 = vmatprep.subr.bf16.mxu0 %v1157
  %1671 = vmatpush1.bf16.msra.mxu0 %v1156
  %1672 = vmatprep.subr.bf16.mxu0 %v1187
  %1673 = vmatpush2.bf16.msra.mxu0 %v1186
  %1674 = vmatprep.subr.bf16.mxu0 %v1185
  %1675 = vmatpush2.bf16.msra.mxu0 %v1184
  %1676 = vmatprep.subr.bf16.mxu0 %v1183
  %1677 = vmatpush2.bf16.msra.mxu0 %v1182
  %1678 = vmatprep.subr.bf16.mxu0 %v1181
  %1679 = vmatpush2.bf16.msra.mxu0 %v1180
  %1680 = vmatprep.subr.bf16.mxu0 %v1179
  %1681 = vmatpush2.bf16.msra.mxu0 %v1178
  %1682 = vmatprep.subr.bf16.mxu0 %v1177
  %1683 = vmatpush2.bf16.msra.mxu0 %v1176
  %1684 = vmatprep.subr.bf16.mxu0 %v1175
  %1685 = vmatpush2.bf16.msra.mxu0 %v1174
  %1686 = vmatprep.subr.bf16.mxu0 %v1173
  %1687 = vmatpush2.bf16.msra.mxu0 %v1172
  %1688 = vmatprep.mubr.bf16.mxu0 %v361
  %1689 = vmatmul.mubr.bf16.gmra.mxu0 %v360
  %v1690 = vpop.f32.mrf.mxu0
  %v1691 = vadd.f32 %v1638, %v1690
  %v1692 = vpop.f32.mrf.mxu0
  %v1693 = vadd.f32 %v1640, %v1692
  %v1694 = vpop.f32.mrf.mxu0
  %v1695 = vadd.f32 %v1642, %v1694
  %v1696 = vpop.f32.mrf.mxu0
  %v1697 = vadd.f32 %v1644, %v1696
  %1698 = vmatprep.mubr.bf16.mxu0 %v374
  %1699 = vmatmul.mubr.bf16.gmra.mxu0 %v373
  %v1700 = vpop.f32.mrf.mxu0
  %v1701 = vadd.f32 %v1648, %v1700
  %v1702 = vpop.f32.mrf.mxu0
  %v1703 = vadd.f32 %v1650, %v1702
  %v1704 = vpop.f32.mrf.mxu0
  %v1705 = vadd.f32 %v1652, %v1704
  %v1706 = vpop.f32.mrf.mxu0
  %v1707 = vadd.f32 %v1654, %v1706
  %1708 = vdwg.mxu0
  %1709 = vmatprep.subr.bf16.mxu0 %v1203
  %1710 = vmatpush1.bf16.msra.mxu0 %v1202
  %1711 = vmatprep.subr.bf16.mxu0 %v1201
  %1712 = vmatpush1.bf16.msra.mxu0 %v1200
  %1713 = vmatprep.subr.bf16.mxu0 %v1199
  %1714 = vmatpush1.bf16.msra.mxu0 %v1198
  %1715 = vmatprep.subr.bf16.mxu0 %v1197
  %1716 = vmatpush1.bf16.msra.mxu0 %v1196
  %1717 = vmatprep.subr.bf16.mxu0 %v1195
  %1718 = vmatpush1.bf16.msra.mxu0 %v1194
  %1719 = vmatprep.subr.bf16.mxu0 %v1193
  %1720 = vmatpush1.bf16.msra.mxu0 %v1192
  %1721 = vmatprep.subr.bf16.mxu0 %v1191
  %1722 = vmatpush1.bf16.msra.mxu0 %v1190
  %1723 = vmatprep.subr.bf16.mxu0 %v1189
  %1724 = vmatpush1.bf16.msra.mxu0 %v1188
  %1725 = vmatprep.subr.bf16.mxu0 %v1219
  %1726 = vmatpush2.bf16.msra.mxu0 %v1218
  %1727 = vmatprep.subr.bf16.mxu0 %v1217
  %1728 = vmatpush2.bf16.msra.mxu0 %v1216
  %1729 = vmatprep.subr.bf16.mxu0 %v1215
  %1730 = vmatpush2.bf16.msra.mxu0 %v1214
  %1731 = vmatprep.subr.bf16.mxu0 %v1213
  %1732 = vmatpush2.bf16.msra.mxu0 %v1212
  %1733 = vmatprep.subr.bf16.mxu0 %v1211
  %1734 = vmatpush2.bf16.msra.mxu0 %v1210
  %1735 = vmatprep.subr.bf16.mxu0 %v1209
  %1736 = vmatpush2.bf16.msra.mxu0 %v1208
  %1737 = vmatprep.subr.bf16.mxu0 %v1207
  %1738 = vmatpush2.bf16.msra.mxu0 %v1206
  %1739 = vmatprep.subr.bf16.mxu0 %v1205
  %1740 = vmatpush2.bf16.msra.mxu0 %v1204
  %1741 = vmatprep.mubr.bf16.mxu0 %v363
  %1742 = vmatmul.mubr.bf16.gmra.mxu0 %v362
  %v1743 = vpop.f32.mrf.mxu0
  %v1744 = vadd.f32 %v1691, %v1743
  %v1745 = vpop.f32.mrf.mxu0
  %v1746 = vadd.f32 %v1693, %v1745
  %v1747 = vpop.f32.mrf.mxu0
  %v1748 = vadd.f32 %v1695, %v1747
  %v1749 = vpop.f32.mrf.mxu0
  %v1750 = vadd.f32 %v1697, %v1749
  %1751 = vmatprep.mubr.bf16.mxu0 %v376
  %1752 = vmatmul.mubr.bf16.gmra.mxu0 %v375
  %v1753 = vpop.f32.mrf.mxu0
  %v1754 = vadd.f32 %v1701, %v1753
  %v1755 = vpop.f32.mrf.mxu0
  %v1756 = vadd.f32 %v1703, %v1755
  %v1757 = vpop.f32.mrf.mxu0
  %v1758 = vadd.f32 %v1705, %v1757
  %v1759 = vpop.f32.mrf.mxu0
  %v1760 = vadd.f32 %v1707, %v1759
  %1761 = vdwg.mxu0
  %1762 = vmatprep.subr.bf16.mxu0 %v1235
  %1763 = vmatpush1.bf16.msra.mxu0 %v1234
  %1764 = vmatprep.subr.bf16.mxu0 %v1233
  %1765 = vmatpush1.bf16.msra.mxu0 %v1232
  %1766 = vmatprep.subr.bf16.mxu0 %v1231
  %1767 = vmatpush1.bf16.msra.mxu0 %v1230
  %1768 = vmatprep.subr.bf16.mxu0 %v1229
  %1769 = vmatpush1.bf16.msra.mxu0 %v1228
  %1770 = vmatprep.subr.bf16.mxu0 %v1227
  %1771 = vmatpush1.bf16.msra.mxu0 %v1226
  %1772 = vmatprep.subr.bf16.mxu0 %v1225
  %1773 = vmatpush1.bf16.msra.mxu0 %v1224
  %1774 = vmatprep.subr.bf16.mxu0 %v1223
  %1775 = vmatpush1.bf16.msra.mxu0 %v1222
  %1776 = vmatprep.subr.bf16.mxu0 %v1221
  %1777 = vmatpush1.bf16.msra.mxu0 %v1220
  %1778 = vmatprep.subr.bf16.mxu0 0
  %1779 = vmatpush2.bf16.msra.mxu0 0
  %1780 = vmatprep.subr.bf16.mxu0 0
  %1781 = vmatpush2.bf16.msra.mxu0 0
  %1782 = vmatprep.subr.bf16.mxu0 0
  %1783 = vmatpush2.bf16.msra.mxu0 0
  %1784 = vmatprep.subr.bf16.mxu0 0
  %1785 = vmatpush2.bf16.msra.mxu0 0
  %1786 = vmatprep.subr.bf16.mxu0 0
  %1787 = vmatpush2.bf16.msra.mxu0 0
  %1788 = vmatprep.subr.bf16.mxu0 0
  %1789 = vmatpush2.bf16.msra.mxu0 0
  %1790 = vmatprep.subr.bf16.mxu0 0
  %1791 = vmatpush2.bf16.msra.mxu0 0
  %1792 = vmatprep.subr.bf16.mxu0 0
  %1793 = vmatpush2.bf16.msra.mxu0 0
  %1794 = vmatprep.mubr.bf16.mxu0 0
  %1795 = vmatmul.mubr.bf16.gmra.mxu0 %v364
  %v1796 = vpop.f32.mrf.mxu0
  %v1797 = vadd.f32 %v1744, %v1796
  %v1798 = vpop.f32.mrf.mxu0
  %v1799 = vadd.f32 %v1746, %v1798
  %v1800 = vpop.f32.mrf.mxu0
  %v1801 = vadd.f32 %v1748, %v1800
  %v1802 = vpop.f32.mrf.mxu0
  %v1803 = vadd.f32 %v1750, %v1802
  %1804 = vmatprep.mubr.bf16.mxu0 0
  %1805 = vmatmul.mubr.bf16.gmra.mxu0 %v377
  %v1806 = vpop.f32.mrf.mxu0
  %v1807 = vadd.f32 %v1754, %v1806
  %v1808 = vpop.f32.mrf.mxu0
  %v1809 = vadd.f32 %v1756, %v1808
  %v1810 = vpop.f32.mrf.mxu0
  %v1811 = vadd.f32 %v1758, %v1810
  %v1812 = vpop.f32.mrf.mxu0
  %v1813 = vadd.f32 %v1760, %v1812
  %1814 = vdwg.mxu0
  %v1815 = vadd.f32 %v28, %v1797
  %v1816 = vadd.f32 %v29, %v1799
  %v1817 = vadd.f32 %v30, %v1801
  %v1818 = vadd.f32 %v31, %v1803
  %v1819 = vadd.f32 %v32, %v1807
  %v1820 = vadd.f32 %v33, %v1809
  %v1821 = vadd.f32 %v34, %v1811
  %v1822 = vadd.f32 %v35, %v1813
  %1823 = vst [vmem:[#allocation2] sm:$0xff] %v1815
  %vm1824 = vcmask 523264
  %1825 = vst.msk [vmem:[#allocation2 + $0x8] sm:$0xff] %vm1824, %v1816
  %1826 = vst [vmem:[#allocation2 + $0x10] sm:$0xff] %v1817
  %1827 = vst.msk [vmem:[#allocation2 + $0x18] sm:$0xff] %vm1824, %v1818
  %1828 = vst [vmem:[#allocation2 + $0x20] sm:$0xff] %v1819
  %1829 = vst.msk [vmem:[#allocation2 + $0x28] sm:$0xff] %vm1824, %v1820
  %1830 = vst [vmem:[#allocation2 + $0x30] sm:$0xff] %v1821
  %1831 = vst.msk [vmem:[#allocation2 + $0x38] sm:$0xff] %vm1824, %v1822
  // Predicated region
  $region18: #{bbb_alexnet_forward.10} parent=0 // pred_check
    %p1832 = pneg %p15
  $region19: #{bbb_alexnet_forward.10} parent=0 // pred_check_branch
    %1834 = sbr.rel (%p1832) target = $region21
  $region20: #{bbb_alexnet_forward.10} parent=0 // pred_region
    %v1835 = vld [vmem:[#allocation2] sm:$0xff]
    %v1836 = vld [vmem:[#allocation2 + $0x8] sm:$0xff]
    %v1837 = vld [vmem:[#allocation2 + $0x10] sm:$0xff]
    %v1838 = vld [vmem:[#allocation2 + $0x18] sm:$0xff]
    %v1839 = vld [vmem:[#allocation2 + $0x20] sm:$0xff]
    %v1840 = vld [vmem:[#allocation2 + $0x28] sm:$0xff]
    %v1841 = vld [vmem:[#allocation2 + $0x30] sm:$0xff]
    %v1842 = vld [vmem:[#allocation2 + $0x38] sm:$0xff]
    %v1843 = vld [vmem:[%s2] sm:$0x3]
    %v1845 = vlaneseq
    %v1846 = vshrl.u32 %v1845, 7
    %v1847 = vsub.s32 0, %v1846
    %v1848 = vrot.slane %v1843, %v1847
    %v1849 = vlaneseq
    %v1850 = vshrl.u32 %v1849, 7
    %v1851 = vsub.s32 1, %v1850
    %v1852 = vrot.slane %v1843, %v1851
    %v1855 = vadd.f32 %v1835, %v1848
    %v1856 = vadd.f32 %v1836, %v1852
    %v1857 = vadd.f32 %v1837, %v1848
    %v1858 = vadd.f32 %v1838, %v1852
    %v1859 = vadd.f32 %v1839, %v1848
    %v1860 = vadd.f32 %v1840, %v1852
    %v1861 = vadd.f32 %v1841, %v1848
    %v1862 = vadd.f32 %v1842, %v1852
    %vm1863 = vcmp.gt.f32.partialorder %v1855, 20.0
    %vm1864 = vcmp.gt.f32.partialorder %v1856, 20.0
    %vm1865 = vcmp.gt.f32.partialorder %v1857, 20.0
    %vm1866 = vcmp.gt.f32.partialorder %v1858, 20.0
    %vm1867 = vcmp.gt.f32.partialorder %v1859, 20.0
    %vm1868 = vcmp.gt.f32.partialorder %v1860, 20.0
    %vm1869 = vcmp.gt.f32.partialorder %v1861, 20.0
    %vm1870 = vcmp.gt.f32.partialorder %v1862, 20.0
    %v1871 = vmin.f32 %v1855, 20.0
    %v1872 = vmin.f32 %v1856, 20.0
    %v1873 = vmin.f32 %v1857, 20.0
    %v1874 = vmin.f32 %v1858, 20.0
    %v1875 = vmin.f32 %v1859, 20.0
    %v1876 = vmin.f32 %v1860, 20.0
    %v1877 = vmin.f32 %v1861, 20.0
    %v1878 = vmin.f32 %v1862, 20.0
    %v1879 = vmul.f32 %v1871, 1.442695
    %v1880 = vpow.pop %v1879
    %v1881 = vmul.f32 %v1872, 1.442695
    %v1882 = vpow.pop %v1881
    %v1883 = vmul.f32 %v1873, 1.442695
    %v1884 = vpow.pop %v1883
    %v1885 = vmul.f32 %v1874, 1.442695
    %v1886 = vpow.pop %v1885
    %v1887 = vmul.f32 %v1875, 1.442695
    %v1888 = vpow.pop %v1887
    %v1889 = vmul.f32 %v1876, 1.442695
    %v1890 = vpow.pop %v1889
    %v1891 = vmul.f32 %v1877, 1.442695
    %v1892 = vpow.pop %v1891
    %v1893 = vmul.f32 %v1878, 1.442695
    %v1894 = vpow.pop %v1893
    %v1895 = vadd.f32 %v1880, 1.0
    %v1896 = vlog2.pop %v1895
    %v1897 = vmul.f32 %v1896, 0.6931472
    %v1898 = vmul.f32 -0.5, %v1880
    %v1899 = vadd.f32 %v1898, 1.0
    %v1900 = vmul.f32 %v1899, %v1880
    %v1901 = vand.u32 2147483647, %v1880
    %vm1902 = vcmp.lt.f32.partialorder %v1901, 0.0004427343
    %v1903 = vsel %vm1902, %v1900, %v1897
    %v1904 = vadd.f32 %v1882, 1.0
    %v1905 = vlog2.pop %v1904
    %v1906 = vmul.f32 %v1905, 0.6931472
    %v1907 = vmul.f32 -0.5, %v1882
    %v1908 = vadd.f32 %v1907, 1.0
    %v1909 = vmul.f32 %v1908, %v1882
    %v1910 = vand.u32 2147483647, %v1882
    %vm1911 = vcmp.lt.f32.partialorder %v1910, 0.0004427343
    %v1912 = vsel %vm1911, %v1909, %v1906
    %v1913 = vadd.f32 %v1884, 1.0
    %v1914 = vlog2.pop %v1913
    %v1915 = vmul.f32 %v1914, 0.6931472
    %v1916 = vmul.f32 -0.5, %v1884
    %v1917 = vadd.f32 %v1916, 1.0
    %v1918 = vmul.f32 %v1917, %v1884
    %v1919 = vand.u32 2147483647, %v1884
    %vm1920 = vcmp.lt.f32.partialorder %v1919, 0.0004427343
    %v1921 = vsel %vm1920, %v1918, %v1915
    %v1922 = vadd.f32 %v1886, 1.0
    %v1923 = vlog2.pop %v1922
    %v1924 = vmul.f32 %v1923, 0.6931472
    %v1925 = vmul.f32 -0.5, %v1886
    %v1926 = vadd.f32 %v1925, 1.0
    %v1927 = vmul.f32 %v1926, %v1886
    %v1928 = vand.u32 2147483647, %v1886
    %vm1929 = vcmp.lt.f32.partialorder %v1928, 0.0004427343
    %v1930 = vsel %vm1929, %v1927, %v1924
    %v1931 = vadd.f32 %v1888, 1.0
    %v1932 = vlog2.pop %v1931
    %v1933 = vmul.f32 %v1932, 0.6931472
    %v1934 = vmul.f32 -0.5, %v1888
    %v1935 = vadd.f32 %v1934, 1.0
    %v1936 = vmul.f32 %v1935, %v1888
    %v1937 = vand.u32 2147483647, %v1888
    %vm1938 = vcmp.lt.f32.partialorder %v1937, 0.0004427343
    %v1939 = vsel %vm1938, %v1936, %v1933
    %v1940 = vadd.f32 %v1890, 1.0
    %v1941 = vlog2.pop %v1940
    %v1942 = vmul.f32 %v1941, 0.6931472
    %v1943 = vmul.f32 -0.5, %v1890
    %v1944 = vadd.f32 %v1943, 1.0
    %v1945 = vmul.f32 %v1944, %v1890
    %v1946 = vand.u32 2147483647, %v1890
    %vm1947 = vcmp.lt.f32.partialorder %v1946, 0.0004427343
    %v1948 = vsel %vm1947, %v1945, %v1942
    %v1949 = vadd.f32 %v1892, 1.0
    %v1950 = vlog2.pop %v1949
    %v1951 = vmul.f32 %v1950, 0.6931472
    %v1952 = vmul.f32 -0.5, %v1892
    %v1953 = vadd.f32 %v1952, 1.0
    %v1954 = vmul.f32 %v1953, %v1892
    %v1955 = vand.u32 2147483647, %v1892
    %vm1956 = vcmp.lt.f32.partialorder %v1955, 0.0004427343
    %v1957 = vsel %vm1956, %v1954, %v1951
    %v1958 = vadd.f32 %v1894, 1.0
    %v1959 = vlog2.pop %v1958
    %v1960 = vmul.f32 %v1959, 0.6931472
    %v1961 = vmul.f32 -0.5, %v1894
    %v1962 = vadd.f32 %v1961, 1.0
    %v1963 = vmul.f32 %v1962, %v1894
    %v1964 = vand.u32 2147483647, %v1894
    %vm1965 = vcmp.lt.f32.partialorder %v1964, 0.0004427343
    %v1966 = vsel %vm1965, %v1963, %v1960
    %v1967 = vsel %vm1863, %v1855, %v1903
    %v1968 = vsel %vm1864, %v1856, %v1912
    %v1969 = vsel %vm1865, %v1857, %v1921
    %v1970 = vsel %vm1866, %v1858, %v1930
    %v1971 = vsel %vm1867, %v1859, %v1939
    %v1972 = vsel %vm1868, %v1860, %v1948
    %v1973 = vsel %vm1869, %v1861, %v1957
    %v1974 = vsel %vm1870, %v1862, %v1966
    %v1975 = vpack.c.bf16 %v1969, %v1967
    %v1976 = vpack.c.bf16 %v1970, %v1968
    %v1977 = vpack.c.bf16 %v1973, %v1971
    %v1978 = vpack.c.bf16 %v1974, %v1972
    %v1983 = vunpack.c.l.b16 %v1975
    %v1984 = vunpack.c.l.b16 %v1976
    %v1985 = vunpack.c.h.b16 %v1975
    %v1986 = vunpack.c.h.b16 %v1976
    %v1987 = vunpack.c.l.b16 %v1977
    %v1988 = vunpack.c.l.b16 %v1978
    %v1989 = vunpack.c.h.b16 %v1977
    %v1990 = vunpack.c.h.b16 %v1978
    %v1991 = vpack.c.b16 %v1984, %v1983
    %v1992 = vpack.c.b16 %v1986, %v1985
    %v1993 = vpack.c.b16 %v1988, %v1987
    %v1994 = vpack.c.b16 %v1990, %v1989
    %vm1999 = vcmask 1043456
    %vm2000 = vcmask 523268
    %vm2001 = vmor %vm2000, %vm1999
    %2002 = vst.msk [vmem:[%s3] sm:$0xff] %vm2001, %v1991
    %2003 = vst.msk [vmem:[%s3 + $0x8] sm:$0xff] %vm2001, %v1992
    %2004 = vst.msk [vmem:[%s3 + $0x10] sm:$0xff] %vm2001, %v1993
    %2005 = vst.msk [vmem:[%s3 + $0x18] sm:$0xff] %vm2001, %v1994
  $region21: #{bbb_alexnet_forward.10} parent=0 // pred_fallthru
    _
  // Predicated region
  $region22: #{bbb_alexnet_forward.10} parent=0 // pred_check
    _
  $region23: #{bbb_alexnet_forward.10} parent=0 // pred_check_branch
    %2007 = sbr.rel (0) target = $region25
  $region24: #{bbb_alexnet_forward.10} parent=0 // pred_region
    _
  $region25: #{bbb_alexnet_forward.10} parent=0 // pred_fallthru
    _
  // Predicated region
  $region26: #{bbb_alexnet_forward.10} parent=0 // pred_check
    _
  $region27: #{bbb_alexnet_forward.10} parent=0 // pred_check_branch
    %2009 = sbr.rel (0) target = $region29
  $region28: #{bbb_alexnet_forward.10} parent=0 // pred_region
    _
  $region29: #{bbb_alexnet_forward.10} parent=0 // pred_fallthru
    _

// kernel: bbb_alexnet_forward.11
$region0: #{bbb_alexnet_forward.11}
  #allocation0 [shape = 'u32[]', space=smem, size = 0x4, offset = 0x4, fixed_abs, tag = 'smem constant byte address 0x4 - core index']
  #allocation1 [shape = 'u32[144,128]{1,0:T(1,128)}', space=vmem, size = 0x12000, scoped, tag = 'internal scratch']
  %s0 = inlined_call_operand.vmem [shape: bf16[9,16,192], index: 0, kind: input, shape index: {}]
  %s1 = inlined_call_operand.vmem [shape: bf16[16,192], index: 1, kind: output, shape index: {}]
  %s2 = sld [smem:[#allocation0]]
  $region14: #{bbb_alexnet_forward.11} parent=0
    _
  %s4 = ssub.s32 1, %s2
  %s5 = scalar_select 0, %s4, %s2
  // Predicated region
  $region2: #{bbb_alexnet_forward.11} parent=0 // pred_check
    _
  $region3: #{bbb_alexnet_forward.11} parent=0 // pred_check_branch
    %7 = sbr.rel (0) target = $region5
  $region4: #{bbb_alexnet_forward.11} parent=0 // pred_region
    _
  $region5: #{bbb_alexnet_forward.11} parent=0 // pred_fallthru
    _
  %v8 = vld [vmem:[%s0] sm:$0xff]
  %v9 = vld [vmem:[%s0 + $0x8] sm:$0xff]
  %s10 = scalar_lea.vmem %s0, 16
  %v11 = vld [vmem:[%s10] sm:$0xff]
  %v12 = vld [vmem:[%s10 + $0x8] sm:$0xff]
  %v13 = vmax.bf16 %v8, %v11
  %v14 = vmax.bf16 %v9, %v12
  %s15 = scalar_lea.vmem %s0, 32
  %v16 = vld [vmem:[%s15] sm:$0xff]
  %v17 = vld [vmem:[%s15 + $0x8] sm:$0xff]
  %v18 = vmax.bf16 %v13, %v16
  %v19 = vmax.bf16 %v14, %v17
  %s20 = scalar_lea.vmem %s0, 48
  %v21 = vld [vmem:[%s20] sm:$0xff]
  %v22 = vld [vmem:[%s20 + $0x8] sm:$0xff]
  %v23 = vmax.bf16 %v18, %v21
  %v24 = vmax.bf16 %v19, %v22
  %s25 = scalar_lea.vmem %s0, 64
  %v26 = vld [vmem:[%s25] sm:$0xff]
  %v27 = vld [vmem:[%s25 + $0x8] sm:$0xff]
  %v28 = vmax.bf16 %v23, %v26
  %v29 = vmax.bf16 %v24, %v27
  %s30 = scalar_lea.vmem %s0, 80
  %v31 = vld [vmem:[%s30] sm:$0xff]
  %v32 = vld [vmem:[%s30 + $0x8] sm:$0xff]
  %v33 = vmax.bf16 %v28, %v31
  %v34 = vmax.bf16 %v29, %v32
  %s35 = scalar_lea.vmem %s0, 96
  %v36 = vld [vmem:[%s35] sm:$0xff]
  %v37 = vld [vmem:[%s35 + $0x8] sm:$0xff]
  %v38 = vmax.bf16 %v33, %v36
  %v39 = vmax.bf16 %v34, %v37
  %s40 = scalar_lea.vmem %s0, 112
  %v41 = vld [vmem:[%s40] sm:$0xff]
  %v42 = vld [vmem:[%s40 + $0x8] sm:$0xff]
  %v43 = vmax.bf16 %v38, %v41
  %v44 = vmax.bf16 %v39, %v42
  %s45 = scalar_lea.vmem %s0, 128
  %v46 = vld [vmem:[%s45] sm:$0xff]
  %v47 = vld [vmem:[%s45 + $0x8] sm:$0xff]
  %v48 = vmax.bf16 %v43, %v46
  %v49 = vmax.bf16 %v44, %v47
  %vm50 = vcmask 1043456
  %vm51 = vcmask 523268
  %vm52 = vmor %vm51, %vm50
  %53 = vst.msk [vmem:[%s1] sm:$0xff] %vm52, %v48
  %54 = vst.msk [vmem:[%s1 + $0x8] sm:$0xff] %vm52, %v49
  // Predicated region
  $region6: #{bbb_alexnet_forward.11} parent=0 // pred_check
    _
  $region7: #{bbb_alexnet_forward.11} parent=0 // pred_check_branch
    %56 = sbr.rel (0) target = $region9
  $region8: #{bbb_alexnet_forward.11} parent=0 // pred_region
    _
  $region9: #{bbb_alexnet_forward.11} parent=0 // pred_fallthru
    _
  // Predicated region
  $region10: #{bbb_alexnet_forward.11} parent=0 // pred_check
    _
  $region11: #{bbb_alexnet_forward.11} parent=0 // pred_check_branch
    %58 = sbr.rel (0) target = $region13
  $region12: #{bbb_alexnet_forward.11} parent=0 // pred_region
    _
  $region13: #{bbb_alexnet_forward.11} parent=0 // pred_fallthru
    _

// kernel: bbb_alexnet_forward.13
$region0: #{bbb_alexnet_forward.13}
  #allocation0 [shape = 'u32[]', space=smem, size = 0x4, offset = 0x4, fixed_abs, tag = 'smem constant byte address 0x4 - core index']
  #allocation1 [shape = 'u32[144,128]{1,0:T(1,128)}', space=vmem, size = 0x12000, scoped, tag = 'internal scratch']
  #allocation2 [shape = 'f32[16,256]{1,0:T(8,128)}', space=vmem, size = 0x4000, scoped, tag = 'scratch operand']
  %s0 = inlined_call_operand.vmem [shape: bf16[16,3456], index: 0, kind: input, shape index: {}]
  %s1 = inlined_call_operand.vmem [shape: bf16[3456,256], index: 1, kind: input, shape index: {}]
  %s2 = inlined_call_operand.vmem [shape: f32[1,256], index: 2, kind: input, shape index: {}]
  %s3 = inlined_call_operand.vmem [shape: bf16[16,256], index: 3, kind: output, shape index: {}]
  %s4 = sld [smem:[#allocation0]]
  $region79: #{bbb_alexnet_forward.13} parent=0
    _
  %s6 = ssub.s32 1, %s4
  %s7 = scalar_select 0, %s6, %s4
  $region1: #{bbb_alexnet_forward.13} parent=0
    #allocation3 [shape = 'u8[73728]{0}', space=vmem, size = 0x12000, scoped, tag = 'input window, operand 0']
    loop: start=0, step=1, limit=5
    $region2: #{bbb_alexnet_forward.13} parent=1 // loop_pre_header
      _
    $region3: #{bbb_alexnet_forward.13} parent=1 // loop_header
      %s9 = sphi 0, %s13
      %p10 = scmp.ge.s32.totalorder %s9, 5
      %s16 = sphi 0, %s35
      %s17 = sphi 0, %s31
      %s18 = sphi 0, %s27
      %s19 = sphi 0, %s16
      %s20 = sphi 0, %s17
      %s21 = sphi 0, %s18
      %s22 = sphi 0, %s19
      %s23 = sphi 0, %s20
      %s24 = sphi 0, %s21
      %s40 = sphi 0, %s42
      %s43 = sphi 0, %s40
      %s44 = sphi 0, %s43
      %s60 = sphi 0, %s44
      %s68 = sphi 0, %s70
      %s71 = sphi 0, %s68
      %s72 = sphi 0, %s71
      %s88 = sphi 0, %s72
      %s94 = sphi 0, %s96
      %s97 = sphi 0, %s94
      %s98 = sphi 0, %s97
      %s114 = sphi 0, %s98
      %s122 = sphi 0, %s124
      %s125 = sphi 0, %s122
      %s126 = sphi 0, %s125
      %s142 = sphi 0, %s126
    $region4: #{bbb_alexnet_forward.13} parent=1 // loop_header_branch
      %12 = sbr.rel (%p10) target = $region8
    $region5: #{bbb_alexnet_forward.13} parent=1 // loop_body
      %s14 = ssub.s32 %s9, 1
      %s15 = ssub.s32 %s9, 2
      %s25 = sadd.s32 1, %s18
      %p26 = scmp.ge.s32.totalorder %s25, 3
      %s27 = scalar_select %p26, 0, %s25
      %s28 = sadd.s32 1, %s17
      %s29 = scalar_select %p26, %s28, %s17
      %p30 = scmp.ge.s32.totalorder %s29, 1
      %s31 = scalar_select %p30, 0, %s29
      %s32 = sadd.s32 1, %s16
      %s33 = scalar_select %p30, %s32, %s16
      %p34 = scmp.ge.s32.totalorder %s33, 1
      %s35 = scalar_select %p34, 0, %s33
      %s36 = ssub.s32 %s16, %s35
      %s37 = ssub.s32 %s18, %s27
      %s38 = sor.u32 %s36, %s37
      %p39 = scmp.eq.s32.totalorder %s38, 0
      %s41 = sadd.s32 %s40, 1
      %s42 = scalar_select %p39, %s40, %s41
      %p45 = pneg %p39
      %p46 = scmp.eq.s32.totalorder %s9, 2
      %p47 = por %p45, %p46
      %p48 = scmp.ne.s32.totalorder %s40, %s43
      %p49 = scmp.eq.s32.totalorder %s9, 0
      %p50 = por %p48, %p49
      %p51 = scmp.ne.s32.totalorder %s40, %s43
      %p52 = scmp.eq.s32.totalorder %s14, 2
      %p53 = por %p51, %p52
      %p54 = scmp.ne.s32.totalorder %s43, %s44
      %p55 = scmp.eq.s32.totalorder %s14, 0
      %p56 = por %p54, %p55
      %p57 = scmp.ne.s32.totalorder %s43, %s44
      %p58 = scmp.eq.s32.totalorder %s15, 2
      %p59 = por %p57, %p58
      %p61 = scmp.ne.s32.totalorder %s44, %s60
      %p62 = scmp.eq.s32.totalorder %s15, 0
      %p63 = por %p61, %p62
      %s64 = ssub.s32 %s18, %s27
      %s65 = ssub.s32 %s17, %s31
      %s66 = sor.u32 %s64, %s65
      %p67 = scmp.eq.s32.totalorder %s66, 0
      %s69 = sadd.s32 %s68, 1
      %s70 = scalar_select %p67, %s68, %s69
      %p73 = pneg %p67
      %p74 = scmp.eq.s32.totalorder %s9, 2
      %p75 = por %p73, %p74
      %p76 = scmp.ne.s32.totalorder %s68, %s71
      %p77 = scmp.eq.s32.totalorder %s9, 0
      %p78 = por %p76, %p77
      %p79 = scmp.ne.s32.totalorder %s68, %s71
      %p80 = scmp.eq.s32.totalorder %s14, 2
      %p81 = por %p79, %p80
      %p82 = scmp.ne.s32.totalorder %s71, %s72
      %p83 = scmp.eq.s32.totalorder %s14, 0
      %p84 = por %p82, %p83
      %p85 = scmp.ne.s32.totalorder %s71, %s72
      %p86 = scmp.eq.s32.totalorder %s15, 2
      %p87 = por %p85, %p86
      %p89 = scmp.ne.s32.totalorder %s72, %s88
      %p90 = scmp.eq.s32.totalorder %s15, 0
      %p91 = por %p89, %p90
      %s92 = ssub.s32 %s17, %s31
      %p93 = scmp.eq.s32.totalorder %s92, 0
      %s95 = sadd.s32 %s94, 1
      %s96 = scalar_select %p93, %s94, %s95
      %p99 = pneg %p93
      %p100 = scmp.eq.s32.totalorder %s9, 2
      %p101 = por %p99, %p100
      %p102 = scmp.ne.s32.totalorder %s94, %s97
      %p103 = scmp.eq.s32.totalorder %s9, 0
      %p104 = por %p102, %p103
      %p105 = scmp.ne.s32.totalorder %s94, %s97
      %p106 = scmp.eq.s32.totalorder %s14, 2
      %p107 = por %p105, %p106
      %p108 = scmp.ne.s32.totalorder %s97, %s98
      %p109 = scmp.eq.s32.totalorder %s14, 0
      %p110 = por %p108, %p109
      %p111 = scmp.ne.s32.totalorder %s97, %s98
      %p112 = scmp.eq.s32.totalorder %s15, 2
      %p113 = por %p111, %p112
      %p115 = scmp.ne.s32.totalorder %s98, %s114
      %p116 = scmp.eq.s32.totalorder %s15, 0
      %p117 = por %p115, %p116
      %s118 = ssub.s32 %s16, %s35
      %s119 = ssub.s32 %s17, %s31
      %s120 = sor.u32 %s118, %s119
      %p121 = scmp.eq.s32.totalorder %s120, 0
      %s123 = sadd.s32 %s122, 1
      %s124 = scalar_select %p121, %s122, %s123
      %p127 = pneg %p121
      %p128 = scmp.eq.s32.totalorder %s9, 2
      %p129 = por %p127, %p128
      %p130 = scmp.ne.s32.totalorder %s122, %s125
      %p131 = scmp.eq.s32.totalorder %s9, 0
      %p132 = por %p130, %p131
      %p133 = scmp.ne.s32.totalorder %s122, %s125
      %p134 = scmp.eq.s32.totalorder %s14, 2
      %p135 = por %p133, %p134
      %p136 = scmp.ne.s32.totalorder %s125, %s126
      %p137 = scmp.eq.s32.totalorder %s14, 0
      %p138 = por %p136, %p137
      %p139 = scmp.ne.s32.totalorder %s125, %s126
      %p140 = scmp.eq.s32.totalorder %s15, 2
      %p141 = por %p139, %p140
      %p143 = scmp.ne.s32.totalorder %s126, %s142
      %p144 = scmp.eq.s32.totalorder %s15, 0
      %p145 = por %p143, %p144
      %p146 = scmp.le.s32.totalorder 1, %s9
      %p147 = scmp.lt.s32.totalorder %s9, 4
      %p148 = pnand %p146, %p147
      %p149 = pneg %p148
      // Predicated region
      $region9: #{bbb_alexnet_forward.13} parent=5 // pred_check
        _
      $region10: #{bbb_alexnet_forward.13} parent=5 // pred_check_branch
        %151 = sbr.rel (%p148) target = $region12
      $region11: #{bbb_alexnet_forward.13} parent=5 // pred_region
        %s152 = ssub.s32 %s9, 1
        // Predicated region
        $region13: #{bbb_alexnet_forward.13} parent=11 // pred_check
          %p153 = pneg %p110
        $region14: #{bbb_alexnet_forward.13} parent=11 // pred_check_branch
          %155 = sbr.rel (%p153) target = $region16
        $region15: #{bbb_alexnet_forward.13} parent=11 // pred_region
          %s156 = smul.u32 2, %s20
          %p157 = scmp.lt.s32.totalorder %s156, 1
          %s158 = scalar_select %p157, %s156, 1
          %s159 = scalar_lea.vmem %s2, %s158
          %s160 = smul.u32 2, %s20
        $region16: #{bbb_alexnet_forward.13} parent=11 // pred_fallthru
          _
      $region12: #{bbb_alexnet_forward.13} parent=5 // pred_fallthru
        _
      %p161 = scmp.lt.s32.totalorder %s9, 3
      // Predicated region
      $region17: #{bbb_alexnet_forward.13} parent=5 // pred_check
        %p162 = pneg %p161
      $region18: #{bbb_alexnet_forward.13} parent=5 // pred_check_branch
        %164 = sbr.rel (%p162) target = $region20
      $region19: #{bbb_alexnet_forward.13} parent=5 // pred_region
        // Predicated region
        $region21: #{bbb_alexnet_forward.13} parent=19 // pred_check
          %p165 = pneg %p50
        $region22: #{bbb_alexnet_forward.13} parent=19 // pred_check_branch
          %167 = sbr.rel (%p165) target = $region24
        $region23: #{bbb_alexnet_forward.13} parent=19 // pred_region
          %s168 = sand.u32 %s40, 1
          %s169 = sand.u32 %s40, 1
          %s170 = smul.addr %s169, 72
          %s171 = scalar_lea.vmem [#allocation3], %s170
          %s172 = smul.u32 2, %s16
          %s173 = smul.u32 9, %s18
          %s174 = smul.addr %s172, 27
          %s175 = sadd.s32 %s173, %s174
          %s176 = smul.addr %s175, 4
          %s177 = scalar_lea.vmem %s0, %s176
          // Predicated region
          $region25: #{bbb_alexnet_forward.13} parent=23 // pred_check
            _
          $region26: #{bbb_alexnet_forward.13} parent=23 // pred_check_branch
            %179 = sbr.rel (0) target = $region28
          $region27: #{bbb_alexnet_forward.13} parent=23 // pred_region
            // Predicated region
            $region29: #{bbb_alexnet_forward.13} parent=27 // pred_check
              _
            $region30: #{bbb_alexnet_forward.13} parent=27 // pred_check_branch
              %181 = sbr.rel (0) target = $region32
            $region31: #{bbb_alexnet_forward.13} parent=27 // pred_region
              %s182 = scalar_lea.vmem %s177, 32
              %s183 = scalar_lea.vmem %s171, 32 [#allocation3]
              loop: start=0, step=1, limit=1
              $region33: #{bbb_alexnet_forward.13} parent=31 // loop_pre_header
                _
              $region34: #{bbb_alexnet_forward.13} parent=31 // loop_header
                %s185 = sphi 0, %s189
                %p186 = scmp.ge.s32.totalorder %s185, 1
                %s190 = sphi %s177, %s177
                %s191 = sphi %s171, %s171
              $region35: #{bbb_alexnet_forward.13} parent=31 // loop_header_branch
                %188 = sbr.rel (%p186) target = $region39
              $region36: #{bbb_alexnet_forward.13} parent=31 // loop_body
                %v192 = vld [vmem:[%s190] sm:$0xff]
                %193 = vst [vmem:[%s191] sm:$0xff] %v192
                %v194 = vld [vmem:[%s190 + $0x8] sm:$0xff]
                %195 = vst [vmem:[%s191 + $0x8] sm:$0xff] %v194
                %v196 = vld [vmem:[%s190 + $0x10] sm:$0xff]
                %197 = vst [vmem:[%s191 + $0x10] sm:$0xff] %v196
                %v198 = vld [vmem:[%s190 + $0x18] sm:$0xff]
                %199 = vst [vmem:[%s191 + $0x18] sm:$0xff] %v198
                %v200 = vld [vmem:[%s190 + $0x6c] sm:$0xff]
                %201 = vst [vmem:[%s191 + $0x24] sm:$0xff] %v200
                %v202 = vld [vmem:[%s190 + $0x74] sm:$0xff]
                %203 = vst [vmem:[%s191 + $0x2c] sm:$0xff] %v202
                %v204 = vld [vmem:[%s190 + $0x7c] sm:$0xff]
                %205 = vst [vmem:[%s191 + $0x34] sm:$0xff] %v204
                %v206 = vld [vmem:[%s190 + $0x84] sm:$0xff]
                %207 = vst [vmem:[%s191 + $0x3c] sm:$0xff] %v206
              $region37: #{bbb_alexnet_forward.13} parent=31 // loop_footer
                %s189 = sadd.s32 1, %s185
              $region38: #{bbb_alexnet_forward.13} parent=31 // loop_footer_branch
                %184 = sbr.rel target = $region34
              $region39: #{bbb_alexnet_forward.13} parent=31 // loop_exit
                _
              %s209 = ssub.s32 16, 1
              loop: start=0, step=1, limit=1
              $region40: #{bbb_alexnet_forward.13} parent=31 // loop_pre_header
                _
              $region41: #{bbb_alexnet_forward.13} parent=31 // loop_header
                %s211 = sphi 0, %s215
                %p212 = scmp.ge.s32.totalorder %s211, 1
                %s216 = sphi %s182, %s182
                %s217 = sphi %s183, %s183
              $region42: #{bbb_alexnet_forward.13} parent=31 // loop_header_branch
                %214 = sbr.rel (%p212) target = $region46
              $region43: #{bbb_alexnet_forward.13} parent=31 // loop_body
                %v218 = vld [vmem:[%s216] sm:%s209]
                %219 = vst [vmem:[%s217] sm:%s209] %v218
                %v220 = vld [vmem:[%s216 + $0x6c] sm:%s209]
                %221 = vst [vmem:[%s217 + $0x24] sm:%s209] %v220
              $region44: #{bbb_alexnet_forward.13} parent=31 // loop_footer
                %s215 = sadd.s32 1, %s211
              $region45: #{bbb_alexnet_forward.13} parent=31 // loop_footer_branch
                %210 = sbr.rel target = $region41
              $region46: #{bbb_alexnet_forward.13} parent=31 // loop_exit
                _
            $region32: #{bbb_alexnet_forward.13} parent=27 // pred_fallthru
              _
          $region28: #{bbb_alexnet_forward.13} parent=23 // pred_fallthru
            _
          %222 = vnop
        $region24: #{bbb_alexnet_forward.13} parent=19 // pred_fallthru
          _
        // Predicated region
        $region47: #{bbb_alexnet_forward.13} parent=19 // pred_check
          %p223 = pneg %p78
        $region48: #{bbb_alexnet_forward.13} parent=19 // pred_check_branch
          %225 = sbr.rel (%p223) target = $region50
        $region49: #{bbb_alexnet_forward.13} parent=19 // pred_region
          %s226 = smul.u32 144, %s18
          %s227 = smul.u32 2, %s17
          %p228 = scmp.lt.s32.totalorder %s226, 431
          %s229 = scalar_select %p228, %s226, 431
          %p230 = scmp.lt.s32.totalorder %s227, 1
          %s231 = scalar_select %p230, %s227, 1
          %s232 = smul.addr %s229, 2
          %s233 = sadd.s32 %s231, %s232
          %s234 = smul.addr %s233, 4
          %s235 = scalar_lea.vmem %s1, %s234
          %s236 = smul.u32 144, %s18
          %s237 = smul.u32 2, %s17
        $region50: #{bbb_alexnet_forward.13} parent=19 // pred_fallthru
          _
      $region20: #{bbb_alexnet_forward.13} parent=5 // pred_fallthru
        _
      %p238 = scmp.le.s32.totalorder 1, %s9
      %p239 = scmp.lt.s32.totalorder %s9, 4
      %p240 = pnand %p238, %p239
      %p241 = pneg %p240
      // Predicated region
      $region51: #{bbb_alexnet_forward.13} parent=5 // pred_check
        _
      $region52: #{bbb_alexnet_forward.13} parent=5 // pred_check_branch
        %243 = sbr.rel (%p240) target = $region54
      $region53: #{bbb_alexnet_forward.13} parent=5 // pred_region
        %s244 = ssub.s32 %s9, 1
        %s245 = sand.u32 %s43, 1
        %s246 = sand.u32 %s43, 1
        %s247 = smul.addr %s246, 72
        %s248 = scalar_lea.vmem [#allocation3], %s247
        // Predicated region
        $region55: #{bbb_alexnet_forward.13} parent=53 // pred_check
          %p249 = pneg %p56
        $region56: #{bbb_alexnet_forward.13} parent=53 // pred_check_branch
          %251 = sbr.rel (%p249) target = $region58
        $region57: #{bbb_alexnet_forward.13} parent=53 // pred_region
          _
        $region58: #{bbb_alexnet_forward.13} parent=53 // pred_fallthru
          _
        %s252 = sand.u32 %s43, 1
        %s253 = sand.u32 %s43, 1
        %s254 = smul.addr %s253, 72
        %s255 = scalar_lea.vmem [#allocation3], %s254
        %p256 = pneg %p56
        %p257 = pneg %p53
        %s258 = smul.u32 144, %s21
        %s259 = smul.u32 2, %s20
        %p260 = scmp.lt.s32.totalorder %s258, 431
        %s261 = scalar_select %p260, %s258, 431
        %p262 = scmp.lt.s32.totalorder %s259, 1
        %s263 = scalar_select %p262, %s259, 1
        %s264 = smul.addr %s261, 2
        %s265 = sadd.s32 %s263, %s264
        %s266 = smul.addr %s265, 4
        %s267 = scalar_lea.vmem %s1, %s266
        %p268 = pneg %p84
        %p269 = pneg %p81
        %s270 = smul.u32 2, %s20
        %p271 = scmp.lt.s32.totalorder %s270, 1
        %s272 = scalar_select %p271, %s270, 1
        %s273 = scalar_lea.vmem %s2, %s272
        %p274 = pneg %p110
        %p275 = pneg %p107
        %p276 = pneg %p138
        %p277 = pneg %p135
        %s278 = smul.u32 2, %s19
        %s279 = smul.u32 2, %s20
        %p280 = scmp.lt.s32.totalorder %s278, 1
        %s281 = scalar_select %p280, %s278, 1
        %p282 = scmp.lt.s32.totalorder %s279, 1
        %s283 = scalar_select %p282, %s279, 1
        %s284 = smul.addr %s281, 2
        %s285 = sadd.s32 %s283, %s284
        %s286 = smul.addr %s285, 4
        %s287 = scalar_lea.vmem %s3, %s286
        %s288 = smul.u32 2, %s19
        %s289 = smul.u32 9, %s21
        %s290 = smul.u32 144, %s21
        %s291 = smul.u32 2, %s20
        %p292 = scmp.lt.s32.totalorder %s290, 431
        %s293 = scalar_select %p292, %s290, 431
        %p294 = scmp.lt.s32.totalorder %s291, 1
        %s295 = scalar_select %p294, %s291, 1
        %s296 = smul.addr %s293, 2
        %s297 = sadd.s32 %s295, %s296
        %s298 = smul.addr %s297, 4
        %s299 = scalar_lea.vmem %s1, %s298
        %s300 = smul.u32 144, %s21
        %s301 = smul.u32 2, %s20
        %s302 = smul.u32 2, %s20
        %p303 = scmp.lt.s32.totalorder %s302, 1
        %s304 = scalar_select %p303, %s302, 1
        %s305 = scalar_lea.vmem %s2, %s304
        %s306 = smul.u32 2, %s20
        %s307 = smul.u32 2, %s19
        %s308 = smul.u32 2, %s20
        %p309 = scmp.lt.s32.totalorder %s307, 1
        %s310 = scalar_select %p309, %s307, 1
        %p311 = scmp.lt.s32.totalorder %s308, 1
        %s312 = scalar_select %p311, %s308, 1
        %s313 = smul.addr %s310, 2
        %s314 = sadd.s32 %s312, %s313
        %s315 = smul.addr %s314, 4
        %s316 = scalar_lea.vmem %s3, %s315
        %s317 = smul.u32 2, %s19
        %s318 = smul.u32 2, %s20
        %p320 = scmp.eq.s32.totalorder %s21, 0
        // Predicated region
        $region59: #{bbb_alexnet_forward.13} parent=53 // pred_check
          %p321 = pneg %p320
        $region60: #{bbb_alexnet_forward.13} parent=53 // pred_check_branch
          %323 = sbr.rel (%p321) target = $region62
        $region61: #{bbb_alexnet_forward.13} parent=53 // pred_region
          %324 = vst [vmem:[#allocation2] sm:$0xff] 0.0
          %325 = vst [vmem:[#allocation2 + $0x8] sm:$0xff] 0.0
          %326 = vst [vmem:[#allocation2 + $0x10] sm:$0xff] 0.0
          %327 = vst [vmem:[#allocation2 + $0x18] sm:$0xff] 0.0
        $region62: #{bbb_alexnet_forward.13} parent=53 // pred_fallthru
          _
        %v328 = vld [vmem:[#allocation2] sm:$0xff]
        %v329 = vld [vmem:[#allocation2 + $0x8] sm:$0xff]
        %v330 = vld [vmem:[#allocation2 + $0x10] sm:$0xff]
        %v331 = vld [vmem:[#allocation2 + $0x18] sm:$0xff]
        %v332 = vld [vmem:[%s248] sm:$0xff]
        %v333 = vld [vmem:[%s248 + $0x8] sm:$0xff]
        %v334 = vld [vmem:[%s248 + $0x10] sm:$0xff]
        %v335 = vld [vmem:[%s248 + $0x18] sm:$0xff]
        %v336 = vld [vmem:[%s248 + $0x20] sm:$0xf]
        %v337 = vld [vmem:[%s248 + $0x24] sm:$0xff]
        %v338 = vld [vmem:[%s248 + $0x2c] sm:$0xff]
        %v339 = vld [vmem:[%s248 + $0x34] sm:$0xff]
        %v340 = vld [vmem:[%s248 + $0x3c] sm:$0xff]
        %v341 = vld [vmem:[%s248 + $0x44] sm:$0xf]
        %v342 = vld [vmem:[%s299] sm:$0xff]
        %v343 = vld [vmem:[%s299 + $0x8] sm:$0xff]
        %v344 = vld [vmem:[%s299 + $0x10] sm:$0xff]
        %v345 = vld [vmem:[%s299 + $0x18] sm:$0xff]
        %v346 = vld [vmem:[%s299 + $0x20] sm:$0xff]
        %v347 = vld [vmem:[%s299 + $0x28] sm:$0xff]
        %v348 = vld [vmem:[%s299 + $0x30] sm:$0xff]
        %v349 = vld [vmem:[%s299 + $0x38] sm:$0xff]
        %v350 = vld [vmem:[%s299 + $0x40] sm:$0xff]
        %v351 = vld [vmem:[%s299 + $0x48] sm:$0xff]
        %v352 = vld [vmem:[%s299 + $0x50] sm:$0xff]
        %v353 = vld [vmem:[%s299 + $0x58] sm:$0xff]
        %v354 = vld [vmem:[%s299 + $0x60] sm:$0xff]
        %v355 = vld [vmem:[%s299 + $0x68] sm:$0xff]
        %v356 = vld [vmem:[%s299 + $0x70] sm:$0xff]
        %v357 = vld [vmem:[%s299 + $0x78] sm:$0xff]
        %v358 = vld [vmem:[%s299 + $0x80] sm:$0xff]
        %v359 = vld [vmem:[%s299 + $0x88] sm:$0xff]
        %v360 = vld [vmem:[%s299 + $0x90] sm:$0xff]
        %v361 = vld [vmem:[%s299 + $0x98] sm:$0xff]
        %v362 = vld [vmem:[%s299 + $0xa0] sm:$0xff]
        %v363 = vld [vmem:[%s299 + $0xa8] sm:$0xff]
        %v364 = vld [vmem:[%s299 + $0xb0] sm:$0xff]
        %v365 = vld [vmem:[%s299 + $0xb8] sm:$0xff]
        %v366 = vld [vmem:[%s299 + $0xc0] sm:$0xff]
        %v367 = vld [vmem:[%s299 + $0xc8] sm:$0xff]
        %v368 = vld [vmem:[%s299 + $0xd0] sm:$0xff]
        %v369 = vld [vmem:[%s299 + $0xd8] sm:$0xff]
        %v370 = vld [vmem:[%s299 + $0xe0] sm:$0xff]
        %v371 = vld [vmem:[%s299 + $0xe8] sm:$0xff]
        %v372 = vld [vmem:[%s299 + $0xf0] sm:$0xff]
        %v373 = vld [vmem:[%s299 + $0xf8] sm:$0xff]
        %v374 = vld [vmem:[%s299 + $0x100] sm:$0xff]
        %v375 = vld [vmem:[%s299 + $0x108] sm:$0xff]
        %v376 = vld [vmem:[%s299 + $0x110] sm:$0xff]
        %v377 = vld [vmem:[%s299 + $0x118] sm:$0xff]
        %v378 = vld [vmem:[%s299 + $0x120] sm:$0xff]
        %v379 = vld [vmem:[%s299 + $0x128] sm:$0xff]
        %v380 = vld [vmem:[%s299 + $0x130] sm:$0xff]
        %v381 = vld [vmem:[%s299 + $0x138] sm:$0xff]
        %v382 = vld [vmem:[%s299 + $0x140] sm:$0xff]
        %v383 = vld [vmem:[%s299 + $0x148] sm:$0xff]
        %v384 = vld [vmem:[%s299 + $0x150] sm:$0xff]
        %v385 = vld [vmem:[%s299 + $0x158] sm:$0xff]
        %v386 = vld [vmem:[%s299 + $0x160] sm:$0xff]
        %v387 = vld [vmem:[%s299 + $0x168] sm:$0xff]
        %v388 = vld [vmem:[%s299 + $0x170] sm:$0xff]
        %v389 = vld [vmem:[%s299 + $0x178] sm:$0xff]
        %v390 = vld [vmem:[%s299 + $0x180] sm:$0xff]
        %v391 = vld [vmem:[%s299 + $0x188] sm:$0xff]
        %v392 = vld [vmem:[%s299 + $0x190] sm:$0xff]
        %v393 = vld [vmem:[%s299 + $0x198] sm:$0xff]
        %v394 = vld [vmem:[%s299 + $0x1a0] sm:$0xff]
        %v395 = vld [vmem:[%s299 + $0x1a8] sm:$0xff]
        %v396 = vld [vmem:[%s299 + $0x1b0] sm:$0xff]
        %v397 = vld [vmem:[%s299 + $0x1b8] sm:$0xff]
        %v398 = vld [vmem:[%s299 + $0x1c0] sm:$0xff]
        %v399 = vld [vmem:[%s299 + $0x1c8] sm:$0xff]
        %v400 = vld [vmem:[%s299 + $0x1d0] sm:$0xff]
        %v401 = vld [vmem:[%s299 + $0x1d8] sm:$0xff]
        %v402 = vld [vmem:[%s299 + $0x1e0] sm:$0xff]
        %v403 = vld [vmem:[%s299 + $0x1e8] sm:$0xff]
        %v404 = vld [vmem:[%s299 + $0x1f0] sm:$0xff]
        %v405 = vld [vmem:[%s299 + $0x1f8] sm:$0xff]
        %v406 = vld [vmem:[%s299 + $0x200] sm:$0xff]
        %v407 = vld [vmem:[%s299 + $0x208] sm:$0xff]
        %v408 = vld [vmem:[%s299 + $0x210] sm:$0xff]
        %v409 = vld [vmem:[%s299 + $0x218] sm:$0xff]
        %v410 = vld [vmem:[%s299 + $0x220] sm:$0xff]
        %v411 = vld [vmem:[%s299 + $0x228] sm:$0xff]
        %v412 = vld [vmem:[%s299 + $0x230] sm:$0xff]
        %v413 = vld [vmem:[%s299 + $0x238] sm:$0xff]
        %v414 = vld [vmem:[%s299 + $0x240] sm:$0xff]
        %v415 = vld [vmem:[%s299 + $0x248] sm:$0xff]
        %v416 = vld [vmem:[%s299 + $0x250] sm:$0xff]
        %v417 = vld [vmem:[%s299 + $0x258] sm:$0xff]
        %v418 = vld [vmem:[%s299 + $0x260] sm:$0xff]
        %v419 = vld [vmem:[%s299 + $0x268] sm:$0xff]
        %v420 = vld [vmem:[%s299 + $0x270] sm:$0xff]
        %v421 = vld [vmem:[%s299 + $0x278] sm:$0xff]
        %v422 = vld [vmem:[%s299 + $0x280] sm:$0xff]
        %v423 = vld [vmem:[%s299 + $0x288] sm:$0xff]
        %v424 = vld [vmem:[%s299 + $0x290] sm:$0xff]
        %v425 = vld [vmem:[%s299 + $0x298] sm:$0xff]
        %v426 = vld [vmem:[%s299 + $0x2a0] sm:$0xff]
        %v427 = vld [vmem:[%s299 + $0x2a8] sm:$0xff]
        %v428 = vld [vmem:[%s299 + $0x2b0] sm:$0xff]
        %v429 = vld [vmem:[%s299 + $0x2b8] sm:$0xff]
        %v430 = vld [vmem:[%s299 + $0x2c0] sm:$0xff]
        %v431 = vld [vmem:[%s299 + $0x2c8] sm:$0xff]
        %v432 = vld [vmem:[%s299 + $0x2d0] sm:$0xff]
        %v433 = vld [vmem:[%s299 + $0x2d8] sm:$0xff]
        %v434 = vld [vmem:[%s299 + $0x2e0] sm:$0xff]
        %v435 = vld [vmem:[%s299 + $0x2e8] sm:$0xff]
        %v436 = vld [vmem:[%s299 + $0x2f0] sm:$0xff]
        %v437 = vld [vmem:[%s299 + $0x2f8] sm:$0xff]
        %v438 = vld [vmem:[%s299 + $0x300] sm:$0xff]
        %v439 = vld [vmem:[%s299 + $0x308] sm:$0xff]
        %v440 = vld [vmem:[%s299 + $0x310] sm:$0xff]
        %v441 = vld [vmem:[%s299 + $0x318] sm:$0xff]
        %v442 = vld [vmem:[%s299 + $0x320] sm:$0xff]
        %v443 = vld [vmem:[%s299 + $0x328] sm:$0xff]
        %v444 = vld [vmem:[%s299 + $0x330] sm:$0xff]
        %v445 = vld [vmem:[%s299 + $0x338] sm:$0xff]
        %v446 = vld [vmem:[%s299 + $0x340] sm:$0xff]
        %v447 = vld [vmem:[%s299 + $0x348] sm:$0xff]
        %v448 = vld [vmem:[%s299 + $0x350] sm:$0xff]
        %v449 = vld [vmem:[%s299 + $0x358] sm:$0xff]
        %v450 = vld [vmem:[%s299 + $0x360] sm:$0xff]
        %v451 = vld [vmem:[%s299 + $0x368] sm:$0xff]
        %v452 = vld [vmem:[%s299 + $0x370] sm:$0xff]
        %v453 = vld [vmem:[%s299 + $0x378] sm:$0xff]
        %v454 = vld [vmem:[%s299 + $0x380] sm:$0xff]
        %v455 = vld [vmem:[%s299 + $0x388] sm:$0xff]
        %v456 = vld [vmem:[%s299 + $0x390] sm:$0xff]
        %v457 = vld [vmem:[%s299 + $0x398] sm:$0xff]
        %v458 = vld [vmem:[%s299 + $0x3a0] sm:$0xff]
        %v459 = vld [vmem:[%s299 + $0x3a8] sm:$0xff]
        %v460 = vld [vmem:[%s299 + $0x3b0] sm:$0xff]
        %v461 = vld [vmem:[%s299 + $0x3b8] sm:$0xff]
        %v462 = vld [vmem:[%s299 + $0x3c0] sm:$0xff]
        %v463 = vld [vmem:[%s299 + $0x3c8] sm:$0xff]
        %v464 = vld [vmem:[%s299 + $0x3d0] sm:$0xff]
        %v465 = vld [vmem:[%s299 + $0x3d8] sm:$0xff]
        %v466 = vld [vmem:[%s299 + $0x3e0] sm:$0xff]
        %v467 = vld [vmem:[%s299 + $0x3e8] sm:$0xff]
        %v468 = vld [vmem:[%s299 + $0x3f0] sm:$0xff]
        %v469 = vld [vmem:[%s299 + $0x3f8] sm:$0xff]
        %v470 = vld [vmem:[%s299 + $0x400] sm:$0xff]
        %v471 = vld [vmem:[%s299 + $0x408] sm:$0xff]
        %v472 = vld [vmem:[%s299 + $0x410] sm:$0xff]
        %v473 = vld [vmem:[%s299 + $0x418] sm:$0xff]
        %v474 = vld [vmem:[%s299 + $0x420] sm:$0xff]
        %v475 = vld [vmem:[%s299 + $0x428] sm:$0xff]
        %v476 = vld [vmem:[%s299 + $0x430] sm:$0xff]
        %v477 = vld [vmem:[%s299 + $0x438] sm:$0xff]
        %v478 = vld [vmem:[%s299 + $0x440] sm:$0xff]
        %v479 = vld [vmem:[%s299 + $0x448] sm:$0xff]
        %v480 = vld [vmem:[%s299 + $0x450] sm:$0xff]
        %v481 = vld [vmem:[%s299 + $0x458] sm:$0xff]
        %v482 = vld [vmem:[%s299 + $0x460] sm:$0xff]
        %v483 = vld [vmem:[%s299 + $0x468] sm:$0xff]
        %v484 = vld [vmem:[%s299 + $0x470] sm:$0xff]
        %v485 = vld [vmem:[%s299 + $0x478] sm:$0xff]
        %v496 = vunpack.c.l.b16 %v332
        %v497 = vunpack.c.h.b16 %v332
        %v498 = vunpack.c.l.b16 %v333
        %v499 = vunpack.c.h.b16 %v333
        %v500 = vunpack.c.l.b16 %v334
        %v501 = vunpack.c.h.b16 %v334
        %v502 = vunpack.c.l.b16 %v335
        %v503 = vunpack.c.h.b16 %v335
        %v504 = vunpack.c.l.b16 %v336
        %v505 = vunpack.c.l.b16 %v337
        %v506 = vunpack.c.h.b16 %v337
        %v507 = vunpack.c.l.b16 %v338
        %v508 = vunpack.c.h.b16 %v338
        %v509 = vunpack.c.l.b16 %v339
        %v510 = vunpack.c.h.b16 %v339
        %v511 = vunpack.c.l.b16 %v340
        %v512 = vunpack.c.h.b16 %v340
        %v513 = vunpack.c.l.b16 %v341
        %v514 = vpack.c.b16 %v505, %v496
        %v515 = vpack.c.b16 %v506, %v497
        %v516 = vpack.c.b16 %v507, %v498
        %v517 = vpack.c.b16 %v508, %v499
        %v518 = vpack.c.b16 %v509, %v500
        %v519 = vpack.c.b16 %v510, %v501
        %v520 = vpack.c.b16 %v511, %v502
        %v521 = vpack.c.b16 %v512, %v503
        %v522 = vpack.c.b16 %v513, %v504
        %v676 = vunpack.c.l.b16 %v342
        %v677 = vunpack.c.h.b16 %v342
        %v678 = vunpack.c.l.b16 %v343
        %v679 = vunpack.c.h.b16 %v343
        %v680 = vunpack.c.l.b16 %v344
        %v681 = vunpack.c.h.b16 %v344
        %v682 = vunpack.c.l.b16 %v345
        %v683 = vunpack.c.h.b16 %v345
        %v684 = vunpack.c.l.b16 %v346
        %v685 = vunpack.c.h.b16 %v346
        %v686 = vunpack.c.l.b16 %v347
        %v687 = vunpack.c.h.b16 %v347
        %v688 = vunpack.c.l.b16 %v348
        %v689 = vunpack.c.h.b16 %v348
        %v690 = vunpack.c.l.b16 %v349
        %v691 = vunpack.c.h.b16 %v349
        %v692 = vunpack.c.l.b16 %v350
        %v693 = vunpack.c.h.b16 %v350
        %v694 = vunpack.c.l.b16 %v351
        %v695 = vunpack.c.h.b16 %v351
        %v696 = vunpack.c.l.b16 %v352
        %v697 = vunpack.c.h.b16 %v352
        %v698 = vunpack.c.l.b16 %v353
        %v699 = vunpack.c.h.b16 %v353
        %v700 = vunpack.c.l.b16 %v354
        %v701 = vunpack.c.h.b16 %v354
        %v702 = vunpack.c.l.b16 %v355
        %v703 = vunpack.c.h.b16 %v355
        %v704 = vunpack.c.l.b16 %v356
        %v705 = vunpack.c.h.b16 %v356
        %v706 = vunpack.c.l.b16 %v357
        %v707 = vunpack.c.h.b16 %v357
        %v708 = vunpack.c.l.b16 %v358
        %v709 = vunpack.c.h.b16 %v358
        %v710 = vunpack.c.l.b16 %v359
        %v711 = vunpack.c.h.b16 %v359
        %v712 = vunpack.c.l.b16 %v360
        %v713 = vunpack.c.h.b16 %v360
        %v714 = vunpack.c.l.b16 %v361
        %v715 = vunpack.c.h.b16 %v361
        %v716 = vunpack.c.l.b16 %v362
        %v717 = vunpack.c.h.b16 %v362
        %v718 = vunpack.c.l.b16 %v363
        %v719 = vunpack.c.h.b16 %v363
        %v720 = vunpack.c.l.b16 %v364
        %v721 = vunpack.c.h.b16 %v364
        %v722 = vunpack.c.l.b16 %v365
        %v723 = vunpack.c.h.b16 %v365
        %v724 = vunpack.c.l.b16 %v366
        %v725 = vunpack.c.h.b16 %v366
        %v726 = vunpack.c.l.b16 %v367
        %v727 = vunpack.c.h.b16 %v367
        %v728 = vunpack.c.l.b16 %v368
        %v729 = vunpack.c.h.b16 %v368
        %v730 = vunpack.c.l.b16 %v369
        %v731 = vunpack.c.h.b16 %v369
        %v732 = vunpack.c.l.b16 %v370
        %v733 = vunpack.c.h.b16 %v370
        %v734 = vunpack.c.l.b16 %v371
        %v735 = vunpack.c.h.b16 %v371
        %v736 = vunpack.c.l.b16 %v372
        %v737 = vunpack.c.h.b16 %v372
        %v738 = vunpack.c.l.b16 %v373
        %v739 = vunpack.c.h.b16 %v373
        %v740 = vunpack.c.l.b16 %v374
        %v741 = vunpack.c.h.b16 %v374
        %v742 = vunpack.c.l.b16 %v375
        %v743 = vunpack.c.h.b16 %v375
        %v744 = vunpack.c.l.b16 %v376
        %v745 = vunpack.c.h.b16 %v376
        %v746 = vunpack.c.l.b16 %v377
        %v747 = vunpack.c.h.b16 %v377
        %v748 = vunpack.c.l.b16 %v378
        %v749 = vunpack.c.h.b16 %v378
        %v750 = vunpack.c.l.b16 %v379
        %v751 = vunpack.c.h.b16 %v379
        %v752 = vunpack.c.l.b16 %v380
        %v753 = vunpack.c.h.b16 %v380
        %v754 = vunpack.c.l.b16 %v381
        %v755 = vunpack.c.h.b16 %v381
        %v756 = vunpack.c.l.b16 %v382
        %v757 = vunpack.c.h.b16 %v382
        %v758 = vunpack.c.l.b16 %v383
        %v759 = vunpack.c.h.b16 %v383
        %v760 = vunpack.c.l.b16 %v384
        %v761 = vunpack.c.h.b16 %v384
        %v762 = vunpack.c.l.b16 %v385
        %v763 = vunpack.c.h.b16 %v385
        %v764 = vunpack.c.l.b16 %v386
        %v765 = vunpack.c.h.b16 %v386
        %v766 = vunpack.c.l.b16 %v387
        %v767 = vunpack.c.h.b16 %v387
        %v768 = vunpack.c.l.b16 %v388
        %v769 = vunpack.c.h.b16 %v388
        %v770 = vunpack.c.l.b16 %v389
        %v771 = vunpack.c.h.b16 %v389
        %v772 = vunpack.c.l.b16 %v390
        %v773 = vunpack.c.h.b16 %v390
        %v774 = vunpack.c.l.b16 %v391
        %v775 = vunpack.c.h.b16 %v391
        %v776 = vunpack.c.l.b16 %v392
        %v777 = vunpack.c.h.b16 %v392
        %v778 = vunpack.c.l.b16 %v393
        %v779 = vunpack.c.h.b16 %v393
        %v780 = vunpack.c.l.b16 %v394
        %v781 = vunpack.c.h.b16 %v394
        %v782 = vunpack.c.l.b16 %v395
        %v783 = vunpack.c.h.b16 %v395
        %v784 = vunpack.c.l.b16 %v396
        %v785 = vunpack.c.h.b16 %v396
        %v786 = vunpack.c.l.b16 %v397
        %v787 = vunpack.c.h.b16 %v397
        %v788 = vunpack.c.l.b16 %v398
        %v789 = vunpack.c.h.b16 %v398
        %v790 = vunpack.c.l.b16 %v399
        %v791 = vunpack.c.h.b16 %v399
        %v792 = vunpack.c.l.b16 %v400
        %v793 = vunpack.c.h.b16 %v400
        %v794 = vunpack.c.l.b16 %v401
        %v795 = vunpack.c.h.b16 %v401
        %v796 = vunpack.c.l.b16 %v402
        %v797 = vunpack.c.h.b16 %v402
        %v798 = vunpack.c.l.b16 %v403
        %v799 = vunpack.c.h.b16 %v403
        %v800 = vunpack.c.l.b16 %v404
        %v801 = vunpack.c.h.b16 %v404
        %v802 = vunpack.c.l.b16 %v405
        %v803 = vunpack.c.h.b16 %v405
        %v804 = vunpack.c.l.b16 %v406
        %v805 = vunpack.c.h.b16 %v406
        %v806 = vunpack.c.l.b16 %v407
        %v807 = vunpack.c.h.b16 %v407
        %v808 = vunpack.c.l.b16 %v408
        %v809 = vunpack.c.h.b16 %v408
        %v810 = vunpack.c.l.b16 %v409
        %v811 = vunpack.c.h.b16 %v409
        %v812 = vunpack.c.l.b16 %v410
        %v813 = vunpack.c.h.b16 %v410
        %v814 = vunpack.c.l.b16 %v411
        %v815 = vunpack.c.h.b16 %v411
        %v816 = vunpack.c.l.b16 %v412
        %v817 = vunpack.c.h.b16 %v412
        %v818 = vunpack.c.l.b16 %v413
        %v819 = vunpack.c.h.b16 %v413
        %v820 = vunpack.c.l.b16 %v414
        %v821 = vunpack.c.h.b16 %v414
        %v822 = vunpack.c.l.b16 %v415
        %v823 = vunpack.c.h.b16 %v415
        %v824 = vunpack.c.l.b16 %v416
        %v825 = vunpack.c.h.b16 %v416
        %v826 = vunpack.c.l.b16 %v417
        %v827 = vunpack.c.h.b16 %v417
        %v828 = vunpack.c.l.b16 %v418
        %v829 = vunpack.c.h.b16 %v418
        %v830 = vunpack.c.l.b16 %v419
        %v831 = vunpack.c.h.b16 %v419
        %v832 = vunpack.c.l.b16 %v420
        %v833 = vunpack.c.h.b16 %v420
        %v834 = vunpack.c.l.b16 %v421
        %v835 = vunpack.c.h.b16 %v421
        %v836 = vunpack.c.l.b16 %v422
        %v837 = vunpack.c.h.b16 %v422
        %v838 = vunpack.c.l.b16 %v423
        %v839 = vunpack.c.h.b16 %v423
        %v840 = vunpack.c.l.b16 %v424
        %v841 = vunpack.c.h.b16 %v424
        %v842 = vunpack.c.l.b16 %v425
        %v843 = vunpack.c.h.b16 %v425
        %v844 = vunpack.c.l.b16 %v426
        %v845 = vunpack.c.h.b16 %v426
        %v846 = vunpack.c.l.b16 %v427
        %v847 = vunpack.c.h.b16 %v427
        %v848 = vunpack.c.l.b16 %v428
        %v849 = vunpack.c.h.b16 %v428
        %v850 = vunpack.c.l.b16 %v429
        %v851 = vunpack.c.h.b16 %v429
        %v852 = vunpack.c.l.b16 %v430
        %v853 = vunpack.c.h.b16 %v430
        %v854 = vunpack.c.l.b16 %v431
        %v855 = vunpack.c.h.b16 %v431
        %v856 = vunpack.c.l.b16 %v432
        %v857 = vunpack.c.h.b16 %v432
        %v858 = vunpack.c.l.b16 %v433
        %v859 = vunpack.c.h.b16 %v433
        %v860 = vunpack.c.l.b16 %v434
        %v861 = vunpack.c.h.b16 %v434
        %v862 = vunpack.c.l.b16 %v435
        %v863 = vunpack.c.h.b16 %v435
        %v864 = vunpack.c.l.b16 %v436
        %v865 = vunpack.c.h.b16 %v436
        %v866 = vunpack.c.l.b16 %v437
        %v867 = vunpack.c.h.b16 %v437
        %v868 = vunpack.c.l.b16 %v438
        %v869 = vunpack.c.h.b16 %v438
        %v870 = vunpack.c.l.b16 %v439
        %v871 = vunpack.c.h.b16 %v439
        %v872 = vunpack.c.l.b16 %v440
        %v873 = vunpack.c.h.b16 %v440
        %v874 = vunpack.c.l.b16 %v441
        %v875 = vunpack.c.h.b16 %v441
        %v876 = vunpack.c.l.b16 %v442
        %v877 = vunpack.c.h.b16 %v442
        %v878 = vunpack.c.l.b16 %v443
        %v879 = vunpack.c.h.b16 %v443
        %v880 = vunpack.c.l.b16 %v444
        %v881 = vunpack.c.h.b16 %v444
        %v882 = vunpack.c.l.b16 %v445
        %v883 = vunpack.c.h.b16 %v445
        %v884 = vunpack.c.l.b16 %v446
        %v885 = vunpack.c.h.b16 %v446
        %v886 = vunpack.c.l.b16 %v447
        %v887 = vunpack.c.h.b16 %v447
        %v888 = vunpack.c.l.b16 %v448
        %v889 = vunpack.c.h.b16 %v448
        %v890 = vunpack.c.l.b16 %v449
        %v891 = vunpack.c.h.b16 %v449
        %v892 = vunpack.c.l.b16 %v450
        %v893 = vunpack.c.h.b16 %v450
        %v894 = vunpack.c.l.b16 %v451
        %v895 = vunpack.c.h.b16 %v451
        %v896 = vunpack.c.l.b16 %v452
        %v897 = vunpack.c.h.b16 %v452
        %v898 = vunpack.c.l.b16 %v453
        %v899 = vunpack.c.h.b16 %v453
        %v900 = vunpack.c.l.b16 %v454
        %v901 = vunpack.c.h.b16 %v454
        %v902 = vunpack.c.l.b16 %v455
        %v903 = vunpack.c.h.b16 %v455
        %v904 = vunpack.c.l.b16 %v456
        %v905 = vunpack.c.h.b16 %v456
        %v906 = vunpack.c.l.b16 %v457
        %v907 = vunpack.c.h.b16 %v457
        %v908 = vunpack.c.l.b16 %v458
        %v909 = vunpack.c.h.b16 %v458
        %v910 = vunpack.c.l.b16 %v459
        %v911 = vunpack.c.h.b16 %v459
        %v912 = vunpack.c.l.b16 %v460
        %v913 = vunpack.c.h.b16 %v460
        %v914 = vunpack.c.l.b16 %v461
        %v915 = vunpack.c.h.b16 %v461
        %v916 = vunpack.c.l.b16 %v462
        %v917 = vunpack.c.h.b16 %v462
        %v918 = vunpack.c.l.b16 %v463
        %v919 = vunpack.c.h.b16 %v463
        %v920 = vunpack.c.l.b16 %v464
        %v921 = vunpack.c.h.b16 %v464
        %v922 = vunpack.c.l.b16 %v465
        %v923 = vunpack.c.h.b16 %v465
        %v924 = vunpack.c.l.b16 %v466
        %v925 = vunpack.c.h.b16 %v466
        %v926 = vunpack.c.l.b16 %v467
        %v927 = vunpack.c.h.b16 %v467
        %v928 = vunpack.c.l.b16 %v468
        %v929 = vunpack.c.h.b16 %v468
        %v930 = vunpack.c.l.b16 %v469
        %v931 = vunpack.c.h.b16 %v469
        %v932 = vunpack.c.l.b16 %v470
        %v933 = vunpack.c.h.b16 %v470
        %v934 = vunpack.c.l.b16 %v471
        %v935 = vunpack.c.h.b16 %v471
        %v936 = vunpack.c.l.b16 %v472
        %v937 = vunpack.c.h.b16 %v472
        %v938 = vunpack.c.l.b16 %v473
        %v939 = vunpack.c.h.b16 %v473
        %v940 = vunpack.c.l.b16 %v474
        %v941 = vunpack.c.h.b16 %v474
        %v942 = vunpack.c.l.b16 %v475
        %v943 = vunpack.c.h.b16 %v475
        %v944 = vunpack.c.l.b16 %v476
        %v945 = vunpack.c.h.b16 %v476
        %v946 = vunpack.c.l.b16 %v477
        %v947 = vunpack.c.h.b16 %v477
        %v948 = vunpack.c.l.b16 %v478
        %v949 = vunpack.c.h.b16 %v478
        %v950 = vunpack.c.l.b16 %v479
        %v951 = vunpack.c.h.b16 %v479
        %v952 = vunpack.c.l.b16 %v480
        %v953 = vunpack.c.h.b16 %v480
        %v954 = vunpack.c.l.b16 %v481
        %v955 = vunpack.c.h.b16 %v481
        %v956 = vunpack.c.l.b16 %v482
        %v957 = vunpack.c.h.b16 %v482
        %v958 = vunpack.c.l.b16 %v483
        %v959 = vunpack.c.h.b16 %v483
        %v960 = vunpack.c.l.b16 %v484
        %v961 = vunpack.c.h.b16 %v484
        %v962 = vunpack.c.l.b16 %v485
        %v963 = vunpack.c.h.b16 %v485
        %v964 = vpack.c.b16 %v678, %v676
        %v965 = vpack.c.b16 %v679, %v677
        %v966 = vpack.c.b16 %v682, %v680
        %v967 = vpack.c.b16 %v683, %v681
        %v968 = vpack.c.b16 %v686, %v684
        %v969 = vpack.c.b16 %v687, %v685
        %v970 = vpack.c.b16 %v690, %v688
        %v971 = vpack.c.b16 %v691, %v689
        %v972 = vpack.c.b16 %v694, %v692
        %v973 = vpack.c.b16 %v695, %v693
        %v974 = vpack.c.b16 %v698, %v696
        %v975 = vpack.c.b16 %v699, %v697
        %v976 = vpack.c.b16 %v702, %v700
        %v977 = vpack.c.b16 %v703, %v701
        %v978 = vpack.c.b16 %v706, %v704
        %v979 = vpack.c.b16 %v707, %v705
        %v980 = vpack.c.b16 %v710, %v708
        %v981 = vpack.c.b16 %v711, %v709
        %v982 = vpack.c.b16 %v714, %v712
        %v983 = vpack.c.b16 %v715, %v713
        %v984 = vpack.c.b16 %v718, %v716
        %v985 = vpack.c.b16 %v719, %v717
        %v986 = vpack.c.b16 %v722, %v720
        %v987 = vpack.c.b16 %v723, %v721
        %v988 = vpack.c.b16 %v726, %v724
        %v989 = vpack.c.b16 %v727, %v725
        %v990 = vpack.c.b16 %v730, %v728
        %v991 = vpack.c.b16 %v731, %v729
        %v992 = vpack.c.b16 %v734, %v732
        %v993 = vpack.c.b16 %v735, %v733
        %v994 = vpack.c.b16 %v738, %v736
        %v995 = vpack.c.b16 %v739, %v737
        %v996 = vpack.c.b16 %v742, %v740
        %v997 = vpack.c.b16 %v743, %v741
        %v998 = vpack.c.b16 %v746, %v744
        %v999 = vpack.c.b16 %v747, %v745
        %v1000 = vpack.c.b16 %v750, %v748
        %v1001 = vpack.c.b16 %v751, %v749
        %v1002 = vpack.c.b16 %v754, %v752
        %v1003 = vpack.c.b16 %v755, %v753
        %v1004 = vpack.c.b16 %v758, %v756
        %v1005 = vpack.c.b16 %v759, %v757
        %v1006 = vpack.c.b16 %v762, %v760
        %v1007 = vpack.c.b16 %v763, %v761
        %v1008 = vpack.c.b16 %v766, %v764
        %v1009 = vpack.c.b16 %v767, %v765
        %v1010 = vpack.c.b16 %v770, %v768
        %v1011 = vpack.c.b16 %v771, %v769
        %v1012 = vpack.c.b16 %v774, %v772
        %v1013 = vpack.c.b16 %v775, %v773
        %v1014 = vpack.c.b16 %v778, %v776
        %v1015 = vpack.c.b16 %v779, %v777
        %v1016 = vpack.c.b16 %v782, %v780
        %v1017 = vpack.c.b16 %v783, %v781
        %v1018 = vpack.c.b16 %v786, %v784
        %v1019 = vpack.c.b16 %v787, %v785
        %v1020 = vpack.c.b16 %v790, %v788
        %v1021 = vpack.c.b16 %v791, %v789
        %v1022 = vpack.c.b16 %v794, %v792
        %v1023 = vpack.c.b16 %v795, %v793
        %v1024 = vpack.c.b16 %v798, %v796
        %v1025 = vpack.c.b16 %v799, %v797
        %v1026 = vpack.c.b16 %v802, %v800
        %v1027 = vpack.c.b16 %v803, %v801
        %v1028 = vpack.c.b16 %v806, %v804
        %v1029 = vpack.c.b16 %v807, %v805
        %v1030 = vpack.c.b16 %v810, %v808
        %v1031 = vpack.c.b16 %v811, %v809
        %v1032 = vpack.c.b16 %v814, %v812
        %v1033 = vpack.c.b16 %v815, %v813
        %v1034 = vpack.c.b16 %v818, %v816
        %v1035 = vpack.c.b16 %v819, %v817
        %v1036 = vpack.c.b16 %v822, %v820
        %v1037 = vpack.c.b16 %v823, %v821
        %v1038 = vpack.c.b16 %v826, %v824
        %v1039 = vpack.c.b16 %v827, %v825
        %v1040 = vpack.c.b16 %v830, %v828
        %v1041 = vpack.c.b16 %v831, %v829
        %v1042 = vpack.c.b16 %v834, %v832
        %v1043 = vpack.c.b16 %v835, %v833
        %v1044 = vpack.c.b16 %v838, %v836
        %v1045 = vpack.c.b16 %v839, %v837
        %v1046 = vpack.c.b16 %v842, %v840
        %v1047 = vpack.c.b16 %v843, %v841
        %v1048 = vpack.c.b16 %v846, %v844
        %v1049 = vpack.c.b16 %v847, %v845
        %v1050 = vpack.c.b16 %v850, %v848
        %v1051 = vpack.c.b16 %v851, %v849
        %v1052 = vpack.c.b16 %v854, %v852
        %v1053 = vpack.c.b16 %v855, %v853
        %v1054 = vpack.c.b16 %v858, %v856
        %v1055 = vpack.c.b16 %v859, %v857
        %v1056 = vpack.c.b16 %v862, %v860
        %v1057 = vpack.c.b16 %v863, %v861
        %v1058 = vpack.c.b16 %v866, %v864
        %v1059 = vpack.c.b16 %v867, %v865
        %v1060 = vpack.c.b16 %v870, %v868
        %v1061 = vpack.c.b16 %v871, %v869
        %v1062 = vpack.c.b16 %v874, %v872
        %v1063 = vpack.c.b16 %v875, %v873
        %v1064 = vpack.c.b16 %v878, %v876
        %v1065 = vpack.c.b16 %v879, %v877
        %v1066 = vpack.c.b16 %v882, %v880
        %v1067 = vpack.c.b16 %v883, %v881
        %v1068 = vpack.c.b16 %v886, %v884
        %v1069 = vpack.c.b16 %v887, %v885
        %v1070 = vpack.c.b16 %v890, %v888
        %v1071 = vpack.c.b16 %v891, %v889
        %v1072 = vpack.c.b16 %v894, %v892
        %v1073 = vpack.c.b16 %v895, %v893
        %v1074 = vpack.c.b16 %v898, %v896
        %v1075 = vpack.c.b16 %v899, %v897
        %v1076 = vpack.c.b16 %v902, %v900
        %v1077 = vpack.c.b16 %v903, %v901
        %v1078 = vpack.c.b16 %v906, %v904
        %v1079 = vpack.c.b16 %v907, %v905
        %v1080 = vpack.c.b16 %v910, %v908
        %v1081 = vpack.c.b16 %v911, %v909
        %v1082 = vpack.c.b16 %v914, %v912
        %v1083 = vpack.c.b16 %v915, %v913
        %v1084 = vpack.c.b16 %v918, %v916
        %v1085 = vpack.c.b16 %v919, %v917
        %v1086 = vpack.c.b16 %v922, %v920
        %v1087 = vpack.c.b16 %v923, %v921
        %v1088 = vpack.c.b16 %v926, %v924
        %v1089 = vpack.c.b16 %v927, %v925
        %v1090 = vpack.c.b16 %v930, %v928
        %v1091 = vpack.c.b16 %v931, %v929
        %v1092 = vpack.c.b16 %v934, %v932
        %v1093 = vpack.c.b16 %v935, %v933
        %v1094 = vpack.c.b16 %v938, %v936
        %v1095 = vpack.c.b16 %v939, %v937
        %v1096 = vpack.c.b16 %v942, %v940
        %v1097 = vpack.c.b16 %v943, %v941
        %v1098 = vpack.c.b16 %v946, %v944
        %v1099 = vpack.c.b16 %v947, %v945
        %v1100 = vpack.c.b16 %v950, %v948
        %v1101 = vpack.c.b16 %v951, %v949
        %v1102 = vpack.c.b16 %v954, %v952
        %v1103 = vpack.c.b16 %v955, %v953
        %v1104 = vpack.c.b16 %v958, %v956
        %v1105 = vpack.c.b16 %v959, %v957
        %v1106 = vpack.c.b16 %v962, %v960
        %v1107 = vpack.c.b16 %v963, %v961
        %1252 = vmatprep.subr.bf16.mxu0 %v979
        %1253 = vmatpush1.bf16.msra.mxu0 %v978
        %1254 = vmatprep.subr.bf16.mxu0 %v977
        %1255 = vmatpush1.bf16.msra.mxu0 %v976
        %1256 = vmatprep.subr.bf16.mxu0 %v975
        %1257 = vmatpush1.bf16.msra.mxu0 %v974
        %1258 = vmatprep.subr.bf16.mxu0 %v973
        %1259 = vmatpush1.bf16.msra.mxu0 %v972
        %1260 = vmatprep.subr.bf16.mxu0 %v971
        %1261 = vmatpush1.bf16.msra.mxu0 %v970
        %1262 = vmatprep.subr.bf16.mxu0 %v969
        %1263 = vmatpush1.bf16.msra.mxu0 %v968
        %1264 = vmatprep.subr.bf16.mxu0 %v967
        %1265 = vmatpush1.bf16.msra.mxu0 %v966
        %1266 = vmatprep.subr.bf16.mxu0 %v965
        %1267 = vmatpush1.bf16.msra.mxu0 %v964
        %1268 = vmatprep.subr.bf16.mxu0 %v995
        %1269 = vmatpush2.bf16.msra.mxu0 %v994
        %1270 = vmatprep.subr.bf16.mxu0 %v993
        %1271 = vmatpush2.bf16.msra.mxu0 %v992
        %1272 = vmatprep.subr.bf16.mxu0 %v991
        %1273 = vmatpush2.bf16.msra.mxu0 %v990
        %1274 = vmatprep.subr.bf16.mxu0 %v989
        %1275 = vmatpush2.bf16.msra.mxu0 %v988
        %1276 = vmatprep.subr.bf16.mxu0 %v987
        %1277 = vmatpush2.bf16.msra.mxu0 %v986
        %1278 = vmatprep.subr.bf16.mxu0 %v985
        %1279 = vmatpush2.bf16.msra.mxu0 %v984
        %1280 = vmatprep.subr.bf16.mxu0 %v983
        %1281 = vmatpush2.bf16.msra.mxu0 %v982
        %1282 = vmatprep.subr.bf16.mxu0 %v981
        %1283 = vmatpush2.bf16.msra.mxu0 %v980
        %1284 = vmatprep.mubr.bf16.mxu0 %v515
        %1285 = vmatmul.mubr.bf16.gmra.mxu0 %v514
        %v1286 = vpop.f32.mrf.mxu0
        %v1287 = vadd.f32 0.0, %v1286
        %v1288 = vpop.f32.mrf.mxu0
        %v1289 = vadd.f32 0.0, %v1288
        %v1290 = vpop.f32.mrf.mxu0
        %v1291 = vadd.f32 0.0, %v1290
        %v1292 = vpop.f32.mrf.mxu0
        %v1293 = vadd.f32 0.0, %v1292
        %1294 = vdwg.mxu0
        %1295 = vmatprep.subr.bf16.mxu0 %v1011
        %1296 = vmatpush1.bf16.msra.mxu0 %v1010
        %1297 = vmatprep.subr.bf16.mxu0 %v1009
        %1298 = vmatpush1.bf16.msra.mxu0 %v1008
        %1299 = vmatprep.subr.bf16.mxu0 %v1007
        %1300 = vmatpush1.bf16.msra.mxu0 %v1006
        %1301 = vmatprep.subr.bf16.mxu0 %v1005
        %1302 = vmatpush1.bf16.msra.mxu0 %v1004
        %1303 = vmatprep.subr.bf16.mxu0 %v1003
        %1304 = vmatpush1.bf16.msra.mxu0 %v1002
        %1305 = vmatprep.subr.bf16.mxu0 %v1001
        %1306 = vmatpush1.bf16.msra.mxu0 %v1000
        %1307 = vmatprep.subr.bf16.mxu0 %v999
        %1308 = vmatpush1.bf16.msra.mxu0 %v998
        %1309 = vmatprep.subr.bf16.mxu0 %v997
        %1310 = vmatpush1.bf16.msra.mxu0 %v996
        %1311 = vmatprep.subr.bf16.mxu0 %v1027
        %1312 = vmatpush2.bf16.msra.mxu0 %v1026
        %1313 = vmatprep.subr.bf16.mxu0 %v1025
        %1314 = vmatpush2.bf16.msra.mxu0 %v1024
        %1315 = vmatprep.subr.bf16.mxu0 %v1023
        %1316 = vmatpush2.bf16.msra.mxu0 %v1022
        %1317 = vmatprep.subr.bf16.mxu0 %v1021
        %1318 = vmatpush2.bf16.msra.mxu0 %v1020
        %1319 = vmatprep.subr.bf16.mxu0 %v1019
        %1320 = vmatpush2.bf16.msra.mxu0 %v1018
        %1321 = vmatprep.subr.bf16.mxu0 %v1017
        %1322 = vmatpush2.bf16.msra.mxu0 %v1016
        %1323 = vmatprep.subr.bf16.mxu0 %v1015
        %1324 = vmatpush2.bf16.msra.mxu0 %v1014
        %1325 = vmatprep.subr.bf16.mxu0 %v1013
        %1326 = vmatpush2.bf16.msra.mxu0 %v1012
        %1327 = vmatprep.mubr.bf16.mxu0 %v517
        %1328 = vmatmul.mubr.bf16.gmra.mxu0 %v516
        %v1329 = vpop.f32.mrf.mxu0
        %v1330 = vadd.f32 %v1287, %v1329
        %v1331 = vpop.f32.mrf.mxu0
        %v1332 = vadd.f32 %v1289, %v1331
        %v1333 = vpop.f32.mrf.mxu0
        %v1334 = vadd.f32 %v1291, %v1333
        %v1335 = vpop.f32.mrf.mxu0
        %v1336 = vadd.f32 %v1293, %v1335
        %1337 = vdwg.mxu0
        %1338 = vmatprep.subr.bf16.mxu0 %v1043
        %1339 = vmatpush1.bf16.msra.mxu0 %v1042
        %1340 = vmatprep.subr.bf16.mxu0 %v1041
        %1341 = vmatpush1.bf16.msra.mxu0 %v1040
        %1342 = vmatprep.subr.bf16.mxu0 %v1039
        %1343 = vmatpush1.bf16.msra.mxu0 %v1038
        %1344 = vmatprep.subr.bf16.mxu0 %v1037
        %1345 = vmatpush1.bf16.msra.mxu0 %v1036
        %1346 = vmatprep.subr.bf16.mxu0 %v1035
        %1347 = vmatpush1.bf16.msra.mxu0 %v1034
        %1348 = vmatprep.subr.bf16.mxu0 %v1033
        %1349 = vmatpush1.bf16.msra.mxu0 %v1032
        %1350 = vmatprep.subr.bf16.mxu0 %v1031
        %1351 = vmatpush1.bf16.msra.mxu0 %v1030
        %1352 = vmatprep.subr.bf16.mxu0 %v1029
        %1353 = vmatpush1.bf16.msra.mxu0 %v1028
        %1354 = vmatprep.subr.bf16.mxu0 %v1059
        %1355 = vmatpush2.bf16.msra.mxu0 %v1058
        %1356 = vmatprep.subr.bf16.mxu0 %v1057
        %1357 = vmatpush2.bf16.msra.mxu0 %v1056
        %1358 = vmatprep.subr.bf16.mxu0 %v1055
        %1359 = vmatpush2.bf16.msra.mxu0 %v1054
        %1360 = vmatprep.subr.bf16.mxu0 %v1053
        %1361 = vmatpush2.bf16.msra.mxu0 %v1052
        %1362 = vmatprep.subr.bf16.mxu0 %v1051
        %1363 = vmatpush2.bf16.msra.mxu0 %v1050
        %1364 = vmatprep.subr.bf16.mxu0 %v1049
        %1365 = vmatpush2.bf16.msra.mxu0 %v1048
        %1366 = vmatprep.subr.bf16.mxu0 %v1047
        %1367 = vmatpush2.bf16.msra.mxu0 %v1046
        %1368 = vmatprep.subr.bf16.mxu0 %v1045
        %1369 = vmatpush2.bf16.msra.mxu0 %v1044
        %1370 = vmatprep.mubr.bf16.mxu0 %v519
        %1371 = vmatmul.mubr.bf16.gmra.mxu0 %v518
        %v1372 = vpop.f32.mrf.mxu0
        %v1373 = vadd.f32 %v1330, %v1372
        %v1374 = vpop.f32.mrf.mxu0
        %v1375 = vadd.f32 %v1332, %v1374
        %v1376 = vpop.f32.mrf.mxu0
        %v1377 = vadd.f32 %v1334, %v1376
        %v1378 = vpop.f32.mrf.mxu0
        %v1379 = vadd.f32 %v1336, %v1378
        %1380 = vdwg.mxu0
        %1381 = vmatprep.subr.bf16.mxu0 %v1075
        %1382 = vmatpush1.bf16.msra.mxu0 %v1074
        %1383 = vmatprep.subr.bf16.mxu0 %v1073
        %1384 = vmatpush1.bf16.msra.mxu0 %v1072
        %1385 = vmatprep.subr.bf16.mxu0 %v1071
        %1386 = vmatpush1.bf16.msra.mxu0 %v1070
        %1387 = vmatprep.subr.bf16.mxu0 %v1069
        %1388 = vmatpush1.bf16.msra.mxu0 %v1068
        %1389 = vmatprep.subr.bf16.mxu0 %v1067
        %1390 = vmatpush1.bf16.msra.mxu0 %v1066
        %1391 = vmatprep.subr.bf16.mxu0 %v1065
        %1392 = vmatpush1.bf16.msra.mxu0 %v1064
        %1393 = vmatprep.subr.bf16.mxu0 %v1063
        %1394 = vmatpush1.bf16.msra.mxu0 %v1062
        %1395 = vmatprep.subr.bf16.mxu0 %v1061
        %1396 = vmatpush1.bf16.msra.mxu0 %v1060
        %1397 = vmatprep.subr.bf16.mxu0 %v1091
        %1398 = vmatpush2.bf16.msra.mxu0 %v1090
        %1399 = vmatprep.subr.bf16.mxu0 %v1089
        %1400 = vmatpush2.bf16.msra.mxu0 %v1088
        %1401 = vmatprep.subr.bf16.mxu0 %v1087
        %1402 = vmatpush2.bf16.msra.mxu0 %v1086
        %1403 = vmatprep.subr.bf16.mxu0 %v1085
        %1404 = vmatpush2.bf16.msra.mxu0 %v1084
        %1405 = vmatprep.subr.bf16.mxu0 %v1083
        %1406 = vmatpush2.bf16.msra.mxu0 %v1082
        %1407 = vmatprep.subr.bf16.mxu0 %v1081
        %1408 = vmatpush2.bf16.msra.mxu0 %v1080
        %1409 = vmatprep.subr.bf16.mxu0 %v1079
        %1410 = vmatpush2.bf16.msra.mxu0 %v1078
        %1411 = vmatprep.subr.bf16.mxu0 %v1077
        %1412 = vmatpush2.bf16.msra.mxu0 %v1076
        %1413 = vmatprep.mubr.bf16.mxu0 %v521
        %1414 = vmatmul.mubr.bf16.gmra.mxu0 %v520
        %v1415 = vpop.f32.mrf.mxu0
        %v1416 = vadd.f32 %v1373, %v1415
        %v1417 = vpop.f32.mrf.mxu0
        %v1418 = vadd.f32 %v1375, %v1417
        %v1419 = vpop.f32.mrf.mxu0
        %v1420 = vadd.f32 %v1377, %v1419
        %v1421 = vpop.f32.mrf.mxu0
        %v1422 = vadd.f32 %v1379, %v1421
        %1423 = vdwg.mxu0
        %1424 = vmatprep.subr.bf16.mxu0 %v1107
        %1425 = vmatpush1.bf16.msra.mxu0 %v1106
        %1426 = vmatprep.subr.bf16.mxu0 %v1105
        %1427 = vmatpush1.bf16.msra.mxu0 %v1104
        %1428 = vmatprep.subr.bf16.mxu0 %v1103
        %1429 = vmatpush1.bf16.msra.mxu0 %v1102
        %1430 = vmatprep.subr.bf16.mxu0 %v1101
        %1431 = vmatpush1.bf16.msra.mxu0 %v1100
        %1432 = vmatprep.subr.bf16.mxu0 %v1099
        %1433 = vmatpush1.bf16.msra.mxu0 %v1098
        %1434 = vmatprep.subr.bf16.mxu0 %v1097
        %1435 = vmatpush1.bf16.msra.mxu0 %v1096
        %1436 = vmatprep.subr.bf16.mxu0 %v1095
        %1437 = vmatpush1.bf16.msra.mxu0 %v1094
        %1438 = vmatprep.subr.bf16.mxu0 %v1093
        %1439 = vmatpush1.bf16.msra.mxu0 %v1092
        %1440 = vmatprep.subr.bf16.mxu0 0
        %1441 = vmatpush2.bf16.msra.mxu0 0
        %1442 = vmatprep.subr.bf16.mxu0 0
        %1443 = vmatpush2.bf16.msra.mxu0 0
        %1444 = vmatprep.subr.bf16.mxu0 0
        %1445 = vmatpush2.bf16.msra.mxu0 0
        %1446 = vmatprep.subr.bf16.mxu0 0
        %1447 = vmatpush2.bf16.msra.mxu0 0
        %1448 = vmatprep.subr.bf16.mxu0 0
        %1449 = vmatpush2.bf16.msra.mxu0 0
        %1450 = vmatprep.subr.bf16.mxu0 0
        %1451 = vmatpush2.bf16.msra.mxu0 0
        %1452 = vmatprep.subr.bf16.mxu0 0
        %1453 = vmatpush2.bf16.msra.mxu0 0
        %1454 = vmatprep.subr.bf16.mxu0 0
        %1455 = vmatpush2.bf16.msra.mxu0 0
        %1456 = vmatprep.mubr.bf16.mxu0 0
        %1457 = vmatmul.mubr.bf16.gmra.mxu0 %v522
        %v1458 = vpop.f32.mrf.mxu0
        %v1459 = vadd.f32 %v1416, %v1458
        %v1460 = vpop.f32.mrf.mxu0
        %v1461 = vadd.f32 %v1418, %v1460
        %v1462 = vpop.f32.mrf.mxu0
        %v1463 = vadd.f32 %v1420, %v1462
        %v1464 = vpop.f32.mrf.mxu0
        %v1465 = vadd.f32 %v1422, %v1464
        %1466 = vdwg.mxu0
        %v1467 = vadd.f32 %v328, %v1459
        %v1468 = vadd.f32 %v329, %v1461
        %v1469 = vadd.f32 %v330, %v1463
        %v1470 = vadd.f32 %v331, %v1465
        %1471 = vst [vmem:[#allocation2] sm:$0xff] %v1467
        %1472 = vst [vmem:[#allocation2 + $0x8] sm:$0xff] %v1468
        %1473 = vst [vmem:[#allocation2 + $0x10] sm:$0xff] %v1469
        %1474 = vst [vmem:[#allocation2 + $0x18] sm:$0xff] %v1470
        %p1475 = scmp.eq.s32.totalorder %s21, 2
        // Predicated region
        $region63: #{bbb_alexnet_forward.13} parent=53 // pred_check
          %p1476 = pneg %p1475
        $region64: #{bbb_alexnet_forward.13} parent=53 // pred_check_branch
          %1478 = sbr.rel (%p1476) target = $region66
        $region65: #{bbb_alexnet_forward.13} parent=53 // pred_region
          %v1479 = vld [vmem:[#allocation2] sm:$0xff]
          %v1480 = vld [vmem:[#allocation2 + $0x8] sm:$0xff]
          %v1481 = vld [vmem:[#allocation2 + $0x10] sm:$0xff]
          %v1482 = vld [vmem:[#allocation2 + $0x18] sm:$0xff]
          %v1483 = vld [vmem:[%s305] sm:$0x3]
          %v1485 = vlaneseq
          %v1486 = vshrl.u32 %v1485, 7
          %v1487 = vsub.s32 0, %v1486
          %v1488 = vrot.slane %v1483, %v1487
          %v1489 = vlaneseq
          %v1490 = vshrl.u32 %v1489, 7
          %v1491 = vsub.s32 1, %v1490
          %v1492 = vrot.slane %v1483, %v1491
          %v1495 = vadd.f32 %v1479, %v1488
          %v1496 = vadd.f32 %v1480, %v1492
          %v1497 = vadd.f32 %v1481, %v1488
          %v1498 = vadd.f32 %v1482, %v1492
          %vm1499 = vcmp.gt.f32.partialorder %v1495, 20.0
          %vm1500 = vcmp.gt.f32.partialorder %v1496, 20.0
          %vm1501 = vcmp.gt.f32.partialorder %v1497, 20.0
          %vm1502 = vcmp.gt.f32.partialorder %v1498, 20.0
          %v1503 = vmin.f32 %v1495, 20.0
          %v1504 = vmin.f32 %v1496, 20.0
          %v1505 = vmin.f32 %v1497, 20.0
          %v1506 = vmin.f32 %v1498, 20.0
          %v1507 = vmul.f32 %v1503, 1.442695
          %v1508 = vpow.pop %v1507
          %v1509 = vmul.f32 %v1504, 1.442695
          %v1510 = vpow.pop %v1509
          %v1511 = vmul.f32 %v1505, 1.442695
          %v1512 = vpow.pop %v1511
          %v1513 = vmul.f32 %v1506, 1.442695
          %v1514 = vpow.pop %v1513
          %v1515 = vadd.f32 %v1508, 1.0
          %v1516 = vlog2.pop %v1515
          %v1517 = vmul.f32 %v1516, 0.6931472
          %v1518 = vmul.f32 -0.5, %v1508
          %v1519 = vadd.f32 %v1518, 1.0
          %v1520 = vmul.f32 %v1519, %v1508
          %v1521 = vand.u32 2147483647, %v1508
          %vm1522 = vcmp.lt.f32.partialorder %v1521, 0.0004427343
          %v1523 = vsel %vm1522, %v1520, %v1517
          %v1524 = vadd.f32 %v1510, 1.0
          %v1525 = vlog2.pop %v1524
          %v1526 = vmul.f32 %v1525, 0.6931472
          %v1527 = vmul.f32 -0.5, %v1510
          %v1528 = vadd.f32 %v1527, 1.0
          %v1529 = vmul.f32 %v1528, %v1510
          %v1530 = vand.u32 2147483647, %v1510
          %vm1531 = vcmp.lt.f32.partialorder %v1530, 0.0004427343
          %v1532 = vsel %vm1531, %v1529, %v1526
          %v1533 = vadd.f32 %v1512, 1.0
          %v1534 = vlog2.pop %v1533
          %v1535 = vmul.f32 %v1534, 0.6931472
          %v1536 = vmul.f32 -0.5, %v1512
          %v1537 = vadd.f32 %v1536, 1.0
          %v1538 = vmul.f32 %v1537, %v1512
          %v1539 = vand.u32 2147483647, %v1512
          %vm1540 = vcmp.lt.f32.partialorder %v1539, 0.0004427343
          %v1541 = vsel %vm1540, %v1538, %v1535
          %v1542 = vadd.f32 %v1514, 1.0
          %v1543 = vlog2.pop %v1542
          %v1544 = vmul.f32 %v1543, 0.6931472
          %v1545 = vmul.f32 -0.5, %v1514
          %v1546 = vadd.f32 %v1545, 1.0
          %v1547 = vmul.f32 %v1546, %v1514
          %v1548 = vand.u32 2147483647, %v1514
          %vm1549 = vcmp.lt.f32.partialorder %v1548, 0.0004427343
          %v1550 = vsel %vm1549, %v1547, %v1544
          %v1551 = vsel %vm1499, %v1495, %v1523
          %v1552 = vsel %vm1500, %v1496, %v1532
          %v1553 = vsel %vm1501, %v1497, %v1541
          %v1554 = vsel %vm1502, %v1498, %v1550
          %v1555 = vpack.c.bf16 %v1553, %v1551
          %v1556 = vpack.c.bf16 %v1554, %v1552
          %v1559 = vunpack.c.l.b16 %v1555
          %v1560 = vunpack.c.l.b16 %v1556
          %v1561 = vunpack.c.h.b16 %v1555
          %v1562 = vunpack.c.h.b16 %v1556
          %v1563 = vpack.c.b16 %v1560, %v1559
          %v1564 = vpack.c.b16 %v1562, %v1561
          %1567 = vst [vmem:[%s316] sm:$0xff] %v1563
          %1568 = vst [vmem:[%s316 + $0x8] sm:$0xff] %v1564
        $region66: #{bbb_alexnet_forward.13} parent=53 // pred_fallthru
          _
        %s1569 = smul.u32 2, %s19
        %s1570 = smul.u32 2, %s20
        %p1571 = scmp.lt.s32.totalorder %s1569, 1
        %s1572 = scalar_select %p1571, %s1569, 1
        %p1573 = scmp.lt.s32.totalorder %s1570, 1
        %s1574 = scalar_select %p1573, %s1570, 1
        %s1575 = smul.addr %s1572, 2
        %s1576 = sadd.s32 %s1574, %s1575
        %s1577 = smul.addr %s1576, 4
        %s1578 = scalar_lea.vmem %s3, %s1577
        // Predicated region
        $region67: #{bbb_alexnet_forward.13} parent=53 // pred_check
          %p1579 = pneg %p135
        $region68: #{bbb_alexnet_forward.13} parent=53 // pred_check_branch
          %1581 = sbr.rel (%p1579) target = $region70
        $region69: #{bbb_alexnet_forward.13} parent=53 // pred_region
          %s1582 = smul.u32 2, %s19
          %s1583 = smul.u32 2, %s20
        $region70: #{bbb_alexnet_forward.13} parent=53 // pred_fallthru
          _
        // Predicated region
        $region71: #{bbb_alexnet_forward.13} parent=53 // pred_check
          %p1584 = pneg %p135
        $region72: #{bbb_alexnet_forward.13} parent=53 // pred_check_branch
          %1586 = sbr.rel (%p1584) target = $region74
        $region73: #{bbb_alexnet_forward.13} parent=53 // pred_region
          %s1587 = smul.u32 2, %s19
          %s1588 = smul.u32 2, %s20
          %p1589 = scmp.lt.s32.totalorder %s1587, 1
          %s1590 = scalar_select %p1589, %s1587, 1
          %p1591 = scmp.lt.s32.totalorder %s1588, 1
          %s1592 = scalar_select %p1591, %s1588, 1
          %s1593 = smul.addr %s1590, 2
          %s1594 = sadd.s32 %s1592, %s1593
          %s1595 = smul.addr %s1594, 4
          %s1596 = scalar_lea.vmem %s3, %s1595
        $region74: #{bbb_alexnet_forward.13} parent=53 // pred_fallthru
          _
      $region54: #{bbb_alexnet_forward.13} parent=5 // pred_fallthru
        _
      %p1597 = scmp.le.s32.totalorder 2, %s9
      // Predicated region
      $region75: #{bbb_alexnet_forward.13} parent=5 // pred_check
        %p1598 = pneg %p1597
      $region76: #{bbb_alexnet_forward.13} parent=5 // pred_check_branch
        %1600 = sbr.rel (%p1598) target = $region78
      $region77: #{bbb_alexnet_forward.13} parent=5 // pred_region
        %s1601 = ssub.s32 %s9, 2
      $region78: #{bbb_alexnet_forward.13} parent=5 // pred_fallthru
        _
    $region6: #{bbb_alexnet_forward.13} parent=1 // loop_footer
      %s13 = sadd.s32 1, %s9
    $region7: #{bbb_alexnet_forward.13} parent=1 // loop_footer_branch
      %8 = sbr.rel target = $region3
    $region8: #{bbb_alexnet_forward.13} parent=1 // loop_exit
      _

// kernel: bbb_alexnet_forward.14
$region0: #{bbb_alexnet_forward.14}
  #allocation0 [shape = 'u32[]', space=smem, size = 0x4, offset = 0x4, fixed_abs, tag = 'smem constant byte address 0x4 - core index']
  #allocation1 [shape = 'u32[144,128]{1,0:T(1,128)}', space=vmem, size = 0x12000, scoped, tag = 'internal scratch']
  #allocation2 [shape = 'f32[16,256]{1,0:T(8,128)}', space=vmem, size = 0x4000, scoped, tag = 'scratch operand']
  %s0 = inlined_call_operand.vmem [shape: bf16[16,2304], index: 0, kind: input, shape index: {}]
  %s1 = inlined_call_operand.vmem [shape: bf16[2304,256], index: 1, kind: input, shape index: {}]
  %s2 = inlined_call_operand.vmem [shape: f32[1,256], index: 2, kind: input, shape index: {}]
  %s3 = inlined_call_operand.vmem [shape: bf16[16,256], index: 3, kind: output, shape index: {}]
  %s4 = sld [smem:[#allocation0]]
  $region79: #{bbb_alexnet_forward.14} parent=0
    _
  %s6 = ssub.s32 1, %s4
  %s7 = scalar_select 0, %s6, %s4
  $region1: #{bbb_alexnet_forward.14} parent=0
    #allocation3 [shape = 'u8[73728]{0}', space=vmem, size = 0x12000, scoped, tag = 'input window, operand 0']
    loop: start=0, step=1, limit=4
    $region2: #{bbb_alexnet_forward.14} parent=1 // loop_pre_header
      _
    $region3: #{bbb_alexnet_forward.14} parent=1 // loop_header
      %s9 = sphi 0, %s13
      %p10 = scmp.ge.s32.totalorder %s9, 4
      %s16 = sphi 0, %s35
      %s17 = sphi 0, %s31
      %s18 = sphi 0, %s27
      %s19 = sphi 0, %s16
      %s20 = sphi 0, %s17
      %s21 = sphi 0, %s18
      %s22 = sphi 0, %s19
      %s23 = sphi 0, %s20
      %s24 = sphi 0, %s21
      %s40 = sphi 0, %s42
      %s43 = sphi 0, %s40
      %s44 = sphi 0, %s43
      %s60 = sphi 0, %s44
      %s68 = sphi 0, %s70
      %s71 = sphi 0, %s68
      %s72 = sphi 0, %s71
      %s88 = sphi 0, %s72
      %s94 = sphi 0, %s96
      %s97 = sphi 0, %s94
      %s98 = sphi 0, %s97
      %s114 = sphi 0, %s98
      %s122 = sphi 0, %s124
      %s125 = sphi 0, %s122
      %s126 = sphi 0, %s125
      %s142 = sphi 0, %s126
    $region4: #{bbb_alexnet_forward.14} parent=1 // loop_header_branch
      %12 = sbr.rel (%p10) target = $region8
    $region5: #{bbb_alexnet_forward.14} parent=1 // loop_body
      %s14 = ssub.s32 %s9, 1
      %s15 = ssub.s32 %s9, 2
      %s25 = sadd.s32 1, %s18
      %p26 = scmp.ge.s32.totalorder %s25, 2
      %s27 = scalar_select %p26, 0, %s25
      %s28 = sadd.s32 1, %s17
      %s29 = scalar_select %p26, %s28, %s17
      %p30 = scmp.ge.s32.totalorder %s29, 1
      %s31 = scalar_select %p30, 0, %s29
      %s32 = sadd.s32 1, %s16
      %s33 = scalar_select %p30, %s32, %s16
      %p34 = scmp.ge.s32.totalorder %s33, 1
      %s35 = scalar_select %p34, 0, %s33
      %s36 = ssub.s32 %s16, %s35
      %s37 = ssub.s32 %s18, %s27
      %s38 = sor.u32 %s36, %s37
      %p39 = scmp.eq.s32.totalorder %s38, 0
      %s41 = sadd.s32 %s40, 1
      %s42 = scalar_select %p39, %s40, %s41
      %p45 = pneg %p39
      %p46 = scmp.eq.s32.totalorder %s9, 1
      %p47 = por %p45, %p46
      %p48 = scmp.ne.s32.totalorder %s40, %s43
      %p49 = scmp.eq.s32.totalorder %s9, 0
      %p50 = por %p48, %p49
      %p51 = scmp.ne.s32.totalorder %s40, %s43
      %p52 = scmp.eq.s32.totalorder %s14, 1
      %p53 = por %p51, %p52
      %p54 = scmp.ne.s32.totalorder %s43, %s44
      %p55 = scmp.eq.s32.totalorder %s14, 0
      %p56 = por %p54, %p55
      %p57 = scmp.ne.s32.totalorder %s43, %s44
      %p58 = scmp.eq.s32.totalorder %s15, 1
      %p59 = por %p57, %p58
      %p61 = scmp.ne.s32.totalorder %s44, %s60
      %p62 = scmp.eq.s32.totalorder %s15, 0
      %p63 = por %p61, %p62
      %s64 = ssub.s32 %s18, %s27
      %s65 = ssub.s32 %s17, %s31
      %s66 = sor.u32 %s64, %s65
      %p67 = scmp.eq.s32.totalorder %s66, 0
      %s69 = sadd.s32 %s68, 1
      %s70 = scalar_select %p67, %s68, %s69
      %p73 = pneg %p67
      %p74 = scmp.eq.s32.totalorder %s9, 1
      %p75 = por %p73, %p74
      %p76 = scmp.ne.s32.totalorder %s68, %s71
      %p77 = scmp.eq.s32.totalorder %s9, 0
      %p78 = por %p76, %p77
      %p79 = scmp.ne.s32.totalorder %s68, %s71
      %p80 = scmp.eq.s32.totalorder %s14, 1
      %p81 = por %p79, %p80
      %p82 = scmp.ne.s32.totalorder %s71, %s72
      %p83 = scmp.eq.s32.totalorder %s14, 0
      %p84 = por %p82, %p83
      %p85 = scmp.ne.s32.totalorder %s71, %s72
      %p86 = scmp.eq.s32.totalorder %s15, 1
      %p87 = por %p85, %p86
      %p89 = scmp.ne.s32.totalorder %s72, %s88
      %p90 = scmp.eq.s32.totalorder %s15, 0
      %p91 = por %p89, %p90
      %s92 = ssub.s32 %s17, %s31
      %p93 = scmp.eq.s32.totalorder %s92, 0
      %s95 = sadd.s32 %s94, 1
      %s96 = scalar_select %p93, %s94, %s95
      %p99 = pneg %p93
      %p100 = scmp.eq.s32.totalorder %s9, 1
      %p101 = por %p99, %p100
      %p102 = scmp.ne.s32.totalorder %s94, %s97
      %p103 = scmp.eq.s32.totalorder %s9, 0
      %p104 = por %p102, %p103
      %p105 = scmp.ne.s32.totalorder %s94, %s97
      %p106 = scmp.eq.s32.totalorder %s14, 1
      %p107 = por %p105, %p106
      %p108 = scmp.ne.s32.totalorder %s97, %s98
      %p109 = scmp.eq.s32.totalorder %s14, 0
      %p110 = por %p108, %p109
      %p111 = scmp.ne.s32.totalorder %s97, %s98
      %p112 = scmp.eq.s32.totalorder %s15, 1
      %p113 = por %p111, %p112
      %p115 = scmp.ne.s32.totalorder %s98, %s114
      %p116 = scmp.eq.s32.totalorder %s15, 0
      %p117 = por %p115, %p116
      %s118 = ssub.s32 %s16, %s35
      %s119 = ssub.s32 %s17, %s31
      %s120 = sor.u32 %s118, %s119
      %p121 = scmp.eq.s32.totalorder %s120, 0
      %s123 = sadd.s32 %s122, 1
      %s124 = scalar_select %p121, %s122, %s123
      %p127 = pneg %p121
      %p128 = scmp.eq.s32.totalorder %s9, 1
      %p129 = por %p127, %p128
      %p130 = scmp.ne.s32.totalorder %s122, %s125
      %p131 = scmp.eq.s32.totalorder %s9, 0
      %p132 = por %p130, %p131
      %p133 = scmp.ne.s32.totalorder %s122, %s125
      %p134 = scmp.eq.s32.totalorder %s14, 1
      %p135 = por %p133, %p134
      %p136 = scmp.ne.s32.totalorder %s125, %s126
      %p137 = scmp.eq.s32.totalorder %s14, 0
      %p138 = por %p136, %p137
      %p139 = scmp.ne.s32.totalorder %s125, %s126
      %p140 = scmp.eq.s32.totalorder %s15, 1
      %p141 = por %p139, %p140
      %p143 = scmp.ne.s32.totalorder %s126, %s142
      %p144 = scmp.eq.s32.totalorder %s15, 0
      %p145 = por %p143, %p144
      %p146 = scmp.le.s32.totalorder 1, %s9
      %p147 = scmp.lt.s32.totalorder %s9, 3
      %p148 = pnand %p146, %p147
      %p149 = pneg %p148
      // Predicated region
      $region9: #{bbb_alexnet_forward.14} parent=5 // pred_check
        _
      $region10: #{bbb_alexnet_forward.14} parent=5 // pred_check_branch
        %151 = sbr.rel (%p148) target = $region12
      $region11: #{bbb_alexnet_forward.14} parent=5 // pred_region
        %s152 = ssub.s32 %s9, 1
        // Predicated region
        $region13: #{bbb_alexnet_forward.14} parent=11 // pred_check
          %p153 = pneg %p110
        $region14: #{bbb_alexnet_forward.14} parent=11 // pred_check_branch
          %155 = sbr.rel (%p153) target = $region16
        $region15: #{bbb_alexnet_forward.14} parent=11 // pred_region
          %s156 = smul.u32 2, %s20
          %p157 = scmp.lt.s32.totalorder %s156, 1
          %s158 = scalar_select %p157, %s156, 1
          %s159 = scalar_lea.vmem %s2, %s158
          %s160 = smul.u32 2, %s20
        $region16: #{bbb_alexnet_forward.14} parent=11 // pred_fallthru
          _
      $region12: #{bbb_alexnet_forward.14} parent=5 // pred_fallthru
        _
      %p161 = scmp.lt.s32.totalorder %s9, 2
      // Predicated region
      $region17: #{bbb_alexnet_forward.14} parent=5 // pred_check
        %p162 = pneg %p161
      $region18: #{bbb_alexnet_forward.14} parent=5 // pred_check_branch
        %164 = sbr.rel (%p162) target = $region20
      $region19: #{bbb_alexnet_forward.14} parent=5 // pred_region
        // Predicated region
        $region21: #{bbb_alexnet_forward.14} parent=19 // pred_check
          %p165 = pneg %p50
        $region22: #{bbb_alexnet_forward.14} parent=19 // pred_check_branch
          %167 = sbr.rel (%p165) target = $region24
        $region23: #{bbb_alexnet_forward.14} parent=19 // pred_region
          %s168 = sand.u32 %s40, 1
          %s169 = sand.u32 %s40, 1
          %s170 = smul.addr %s169, 72
          %s171 = scalar_lea.vmem [#allocation3], %s170
          %s172 = smul.u32 2, %s16
          %s173 = smul.u32 9, %s18
          %s174 = smul.addr %s172, 18
          %s175 = sadd.s32 %s173, %s174
          %s176 = smul.addr %s175, 4
          %s177 = scalar_lea.vmem %s0, %s176
          // Predicated region
          $region25: #{bbb_alexnet_forward.14} parent=23 // pred_check
            _
          $region26: #{bbb_alexnet_forward.14} parent=23 // pred_check_branch
            %179 = sbr.rel (0) target = $region28
          $region27: #{bbb_alexnet_forward.14} parent=23 // pred_region
            // Predicated region
            $region29: #{bbb_alexnet_forward.14} parent=27 // pred_check
              _
            $region30: #{bbb_alexnet_forward.14} parent=27 // pred_check_branch
              %181 = sbr.rel (0) target = $region32
            $region31: #{bbb_alexnet_forward.14} parent=27 // pred_region
              %s182 = scalar_lea.vmem %s177, 32
              %s183 = scalar_lea.vmem %s171, 32 [#allocation3]
              loop: start=0, step=1, limit=1
              $region33: #{bbb_alexnet_forward.14} parent=31 // loop_pre_header
                _
              $region34: #{bbb_alexnet_forward.14} parent=31 // loop_header
                %s185 = sphi 0, %s189
                %p186 = scmp.ge.s32.totalorder %s185, 1
                %s190 = sphi %s177, %s177
                %s191 = sphi %s171, %s171
              $region35: #{bbb_alexnet_forward.14} parent=31 // loop_header_branch
                %188 = sbr.rel (%p186) target = $region39
              $region36: #{bbb_alexnet_forward.14} parent=31 // loop_body
                %v192 = vld [vmem:[%s190] sm:$0xff]
                %193 = vst [vmem:[%s191] sm:$0xff] %v192
                %v194 = vld [vmem:[%s190 + $0x8] sm:$0xff]
                %195 = vst [vmem:[%s191 + $0x8] sm:$0xff] %v194
                %v196 = vld [vmem:[%s190 + $0x10] sm:$0xff]
                %197 = vst [vmem:[%s191 + $0x10] sm:$0xff] %v196
                %v198 = vld [vmem:[%s190 + $0x18] sm:$0xff]
                %199 = vst [vmem:[%s191 + $0x18] sm:$0xff] %v198
                %v200 = vld [vmem:[%s190 + $0x48] sm:$0xff]
                %201 = vst [vmem:[%s191 + $0x24] sm:$0xff] %v200
                %v202 = vld [vmem:[%s190 + $0x50] sm:$0xff]
                %203 = vst [vmem:[%s191 + $0x2c] sm:$0xff] %v202
                %v204 = vld [vmem:[%s190 + $0x58] sm:$0xff]
                %205 = vst [vmem:[%s191 + $0x34] sm:$0xff] %v204
                %v206 = vld [vmem:[%s190 + $0x60] sm:$0xff]
                %207 = vst [vmem:[%s191 + $0x3c] sm:$0xff] %v206
              $region37: #{bbb_alexnet_forward.14} parent=31 // loop_footer
                %s189 = sadd.s32 1, %s185
              $region38: #{bbb_alexnet_forward.14} parent=31 // loop_footer_branch
                %184 = sbr.rel target = $region34
              $region39: #{bbb_alexnet_forward.14} parent=31 // loop_exit
                _
              %s209 = ssub.s32 16, 1
              loop: start=0, step=1, limit=1
              $region40: #{bbb_alexnet_forward.14} parent=31 // loop_pre_header
                _
              $region41: #{bbb_alexnet_forward.14} parent=31 // loop_header
                %s211 = sphi 0, %s215
                %p212 = scmp.ge.s32.totalorder %s211, 1
                %s216 = sphi %s182, %s182
                %s217 = sphi %s183, %s183
              $region42: #{bbb_alexnet_forward.14} parent=31 // loop_header_branch
                %214 = sbr.rel (%p212) target = $region46
              $region43: #{bbb_alexnet_forward.14} parent=31 // loop_body
                %v218 = vld [vmem:[%s216] sm:%s209]
                %219 = vst [vmem:[%s217] sm:%s209] %v218
                %v220 = vld [vmem:[%s216 + $0x48] sm:%s209]
                %221 = vst [vmem:[%s217 + $0x24] sm:%s209] %v220
              $region44: #{bbb_alexnet_forward.14} parent=31 // loop_footer
                %s215 = sadd.s32 1, %s211
              $region45: #{bbb_alexnet_forward.14} parent=31 // loop_footer_branch
                %210 = sbr.rel target = $region41
              $region46: #{bbb_alexnet_forward.14} parent=31 // loop_exit
                _
            $region32: #{bbb_alexnet_forward.14} parent=27 // pred_fallthru
              _
          $region28: #{bbb_alexnet_forward.14} parent=23 // pred_fallthru
            _
          %222 = vnop
        $region24: #{bbb_alexnet_forward.14} parent=19 // pred_fallthru
          _
        // Predicated region
        $region47: #{bbb_alexnet_forward.14} parent=19 // pred_check
          %p223 = pneg %p78
        $region48: #{bbb_alexnet_forward.14} parent=19 // pred_check_branch
          %225 = sbr.rel (%p223) target = $region50
        $region49: #{bbb_alexnet_forward.14} parent=19 // pred_region
          %s226 = smul.u32 144, %s18
          %s227 = smul.u32 2, %s17
          %p228 = scmp.lt.s32.totalorder %s226, 287
          %s229 = scalar_select %p228, %s226, 287
          %p230 = scmp.lt.s32.totalorder %s227, 1
          %s231 = scalar_select %p230, %s227, 1
          %s232 = smul.addr %s229, 2
          %s233 = sadd.s32 %s231, %s232
          %s234 = smul.addr %s233, 4
          %s235 = scalar_lea.vmem %s1, %s234
          %s236 = smul.u32 144, %s18
          %s237 = smul.u32 2, %s17
        $region50: #{bbb_alexnet_forward.14} parent=19 // pred_fallthru
          _
      $region20: #{bbb_alexnet_forward.14} parent=5 // pred_fallthru
        _
      %p238 = scmp.le.s32.totalorder 1, %s9
      %p239 = scmp.lt.s32.totalorder %s9, 3
      %p240 = pnand %p238, %p239
      %p241 = pneg %p240
      // Predicated region
      $region51: #{bbb_alexnet_forward.14} parent=5 // pred_check
        _
      $region52: #{bbb_alexnet_forward.14} parent=5 // pred_check_branch
        %243 = sbr.rel (%p240) target = $region54
      $region53: #{bbb_alexnet_forward.14} parent=5 // pred_region
        %s244 = ssub.s32 %s9, 1
        %s245 = sand.u32 %s43, 1
        %s246 = sand.u32 %s43, 1
        %s247 = smul.addr %s246, 72
        %s248 = scalar_lea.vmem [#allocation3], %s247
        // Predicated region
        $region55: #{bbb_alexnet_forward.14} parent=53 // pred_check
          %p249 = pneg %p56
        $region56: #{bbb_alexnet_forward.14} parent=53 // pred_check_branch
          %251 = sbr.rel (%p249) target = $region58
        $region57: #{bbb_alexnet_forward.14} parent=53 // pred_region
          _
        $region58: #{bbb_alexnet_forward.14} parent=53 // pred_fallthru
          _
        %s252 = sand.u32 %s43, 1
        %s253 = sand.u32 %s43, 1
        %s254 = smul.addr %s253, 72
        %s255 = scalar_lea.vmem [#allocation3], %s254
        %p256 = pneg %p56
        %p257 = pneg %p53
        %s258 = smul.u32 144, %s21
        %s259 = smul.u32 2, %s20
        %p260 = scmp.lt.s32.totalorder %s258, 287
        %s261 = scalar_select %p260, %s258, 287
        %p262 = scmp.lt.s32.totalorder %s259, 1
        %s263 = scalar_select %p262, %s259, 1
        %s264 = smul.addr %s261, 2
        %s265 = sadd.s32 %s263, %s264
        %s266 = smul.addr %s265, 4
        %s267 = scalar_lea.vmem %s1, %s266
        %p268 = pneg %p84
        %p269 = pneg %p81
        %s270 = smul.u32 2, %s20
        %p271 = scmp.lt.s32.totalorder %s270, 1
        %s272 = scalar_select %p271, %s270, 1
        %s273 = scalar_lea.vmem %s2, %s272
        %p274 = pneg %p110
        %p275 = pneg %p107
        %p276 = pneg %p138
        %p277 = pneg %p135
        %s278 = smul.u32 2, %s19
        %s279 = smul.u32 2, %s20
        %p280 = scmp.lt.s32.totalorder %s278, 1
        %s281 = scalar_select %p280, %s278, 1
        %p282 = scmp.lt.s32.totalorder %s279, 1
        %s283 = scalar_select %p282, %s279, 1
        %s284 = smul.addr %s281, 2
        %s285 = sadd.s32 %s283, %s284
        %s286 = smul.addr %s285, 4
        %s287 = scalar_lea.vmem %s3, %s286
        %s288 = smul.u32 2, %s19
        %s289 = smul.u32 9, %s21
        %s290 = smul.u32 144, %s21
        %s291 = smul.u32 2, %s20
        %p292 = scmp.lt.s32.totalorder %s290, 287
        %s293 = scalar_select %p292, %s290, 287
        %p294 = scmp.lt.s32.totalorder %s291, 1
        %s295 = scalar_select %p294, %s291, 1
        %s296 = smul.addr %s293, 2
        %s297 = sadd.s32 %s295, %s296
        %s298 = smul.addr %s297, 4
        %s299 = scalar_lea.vmem %s1, %s298
        %s300 = smul.u32 144, %s21
        %s301 = smul.u32 2, %s20
        %s302 = smul.u32 2, %s20
        %p303 = scmp.lt.s32.totalorder %s302, 1
        %s304 = scalar_select %p303, %s302, 1
        %s305 = scalar_lea.vmem %s2, %s304
        %s306 = smul.u32 2, %s20
        %s307 = smul.u32 2, %s19
        %s308 = smul.u32 2, %s20
        %p309 = scmp.lt.s32.totalorder %s307, 1
        %s310 = scalar_select %p309, %s307, 1
        %p311 = scmp.lt.s32.totalorder %s308, 1
        %s312 = scalar_select %p311, %s308, 1
        %s313 = smul.addr %s310, 2
        %s314 = sadd.s32 %s312, %s313
        %s315 = smul.addr %s314, 4
        %s316 = scalar_lea.vmem %s3, %s315
        %s317 = smul.u32 2, %s19
        %s318 = smul.u32 2, %s20
        %p320 = scmp.eq.s32.totalorder %s21, 0
        // Predicated region
        $region59: #{bbb_alexnet_forward.14} parent=53 // pred_check
          %p321 = pneg %p320
        $region60: #{bbb_alexnet_forward.14} parent=53 // pred_check_branch
          %323 = sbr.rel (%p321) target = $region62
        $region61: #{bbb_alexnet_forward.14} parent=53 // pred_region
          %324 = vst [vmem:[#allocation2] sm:$0xff] 0.0
          %325 = vst [vmem:[#allocation2 + $0x8] sm:$0xff] 0.0
          %326 = vst [vmem:[#allocation2 + $0x10] sm:$0xff] 0.0
          %327 = vst [vmem:[#allocation2 + $0x18] sm:$0xff] 0.0
        $region62: #{bbb_alexnet_forward.14} parent=53 // pred_fallthru
          _
        %v328 = vld [vmem:[#allocation2] sm:$0xff]
        %v329 = vld [vmem:[#allocation2 + $0x8] sm:$0xff]
        %v330 = vld [vmem:[#allocation2 + $0x10] sm:$0xff]
        %v331 = vld [vmem:[#allocation2 + $0x18] sm:$0xff]
        %v332 = vld [vmem:[%s248] sm:$0xff]
        %v333 = vld [vmem:[%s248 + $0x8] sm:$0xff]
        %v334 = vld [vmem:[%s248 + $0x10] sm:$0xff]
        %v335 = vld [vmem:[%s248 + $0x18] sm:$0xff]
        %v336 = vld [vmem:[%s248 + $0x20] sm:$0xf]
        %v337 = vld [vmem:[%s248 + $0x24] sm:$0xff]
        %v338 = vld [vmem:[%s248 + $0x2c] sm:$0xff]
        %v339 = vld [vmem:[%s248 + $0x34] sm:$0xff]
        %v340 = vld [vmem:[%s248 + $0x3c] sm:$0xff]
        %v341 = vld [vmem:[%s248 + $0x44] sm:$0xf]
        %v342 = vld [vmem:[%s299] sm:$0xff]
        %v343 = vld [vmem:[%s299 + $0x8] sm:$0xff]
        %v344 = vld [vmem:[%s299 + $0x10] sm:$0xff]
        %v345 = vld [vmem:[%s299 + $0x18] sm:$0xff]
        %v346 = vld [vmem:[%s299 + $0x20] sm:$0xff]
        %v347 = vld [vmem:[%s299 + $0x28] sm:$0xff]
        %v348 = vld [vmem:[%s299 + $0x30] sm:$0xff]
        %v349 = vld [vmem:[%s299 + $0x38] sm:$0xff]
        %v350 = vld [vmem:[%s299 + $0x40] sm:$0xff]
        %v351 = vld [vmem:[%s299 + $0x48] sm:$0xff]
        %v352 = vld [vmem:[%s299 + $0x50] sm:$0xff]
        %v353 = vld [vmem:[%s299 + $0x58] sm:$0xff]
        %v354 = vld [vmem:[%s299 + $0x60] sm:$0xff]
        %v355 = vld [vmem:[%s299 + $0x68] sm:$0xff]
        %v356 = vld [vmem:[%s299 + $0x70] sm:$0xff]
        %v357 = vld [vmem:[%s299 + $0x78] sm:$0xff]
        %v358 = vld [vmem:[%s299 + $0x80] sm:$0xff]
        %v359 = vld [vmem:[%s299 + $0x88] sm:$0xff]
        %v360 = vld [vmem:[%s299 + $0x90] sm:$0xff]
        %v361 = vld [vmem:[%s299 + $0x98] sm:$0xff]
        %v362 = vld [vmem:[%s299 + $0xa0] sm:$0xff]
        %v363 = vld [vmem:[%s299 + $0xa8] sm:$0xff]
        %v364 = vld [vmem:[%s299 + $0xb0] sm:$0xff]
        %v365 = vld [vmem:[%s299 + $0xb8] sm:$0xff]
        %v366 = vld [vmem:[%s299 + $0xc0] sm:$0xff]
        %v367 = vld [vmem:[%s299 + $0xc8] sm:$0xff]
        %v368 = vld [vmem:[%s299 + $0xd0] sm:$0xff]
        %v369 = vld [vmem:[%s299 + $0xd8] sm:$0xff]
        %v370 = vld [vmem:[%s299 + $0xe0] sm:$0xff]
        %v371 = vld [vmem:[%s299 + $0xe8] sm:$0xff]
        %v372 = vld [vmem:[%s299 + $0xf0] sm:$0xff]
        %v373 = vld [vmem:[%s299 + $0xf8] sm:$0xff]
        %v374 = vld [vmem:[%s299 + $0x100] sm:$0xff]
        %v375 = vld [vmem:[%s299 + $0x108] sm:$0xff]
        %v376 = vld [vmem:[%s299 + $0x110] sm:$0xff]
        %v377 = vld [vmem:[%s299 + $0x118] sm:$0xff]
        %v378 = vld [vmem:[%s299 + $0x120] sm:$0xff]
        %v379 = vld [vmem:[%s299 + $0x128] sm:$0xff]
        %v380 = vld [vmem:[%s299 + $0x130] sm:$0xff]
        %v381 = vld [vmem:[%s299 + $0x138] sm:$0xff]
        %v382 = vld [vmem:[%s299 + $0x140] sm:$0xff]
        %v383 = vld [vmem:[%s299 + $0x148] sm:$0xff]
        %v384 = vld [vmem:[%s299 + $0x150] sm:$0xff]
        %v385 = vld [vmem:[%s299 + $0x158] sm:$0xff]
        %v386 = vld [vmem:[%s299 + $0x160] sm:$0xff]
        %v387 = vld [vmem:[%s299 + $0x168] sm:$0xff]
        %v388 = vld [vmem:[%s299 + $0x170] sm:$0xff]
        %v389 = vld [vmem:[%s299 + $0x178] sm:$0xff]
        %v390 = vld [vmem:[%s299 + $0x180] sm:$0xff]
        %v391 = vld [vmem:[%s299 + $0x188] sm:$0xff]
        %v392 = vld [vmem:[%s299 + $0x190] sm:$0xff]
        %v393 = vld [vmem:[%s299 + $0x198] sm:$0xff]
        %v394 = vld [vmem:[%s299 + $0x1a0] sm:$0xff]
        %v395 = vld [vmem:[%s299 + $0x1a8] sm:$0xff]
        %v396 = vld [vmem:[%s299 + $0x1b0] sm:$0xff]
        %v397 = vld [vmem:[%s299 + $0x1b8] sm:$0xff]
        %v398 = vld [vmem:[%s299 + $0x1c0] sm:$0xff]
        %v399 = vld [vmem:[%s299 + $0x1c8] sm:$0xff]
        %v400 = vld [vmem:[%s299 + $0x1d0] sm:$0xff]
        %v401 = vld [vmem:[%s299 + $0x1d8] sm:$0xff]
        %v402 = vld [vmem:[%s299 + $0x1e0] sm:$0xff]
        %v403 = vld [vmem:[%s299 + $0x1e8] sm:$0xff]
        %v404 = vld [vmem:[%s299 + $0x1f0] sm:$0xff]
        %v405 = vld [vmem:[%s299 + $0x1f8] sm:$0xff]
        %v406 = vld [vmem:[%s299 + $0x200] sm:$0xff]
        %v407 = vld [vmem:[%s299 + $0x208] sm:$0xff]
        %v408 = vld [vmem:[%s299 + $0x210] sm:$0xff]
        %v409 = vld [vmem:[%s299 + $0x218] sm:$0xff]
        %v410 = vld [vmem:[%s299 + $0x220] sm:$0xff]
        %v411 = vld [vmem:[%s299 + $0x228] sm:$0xff]
        %v412 = vld [vmem:[%s299 + $0x230] sm:$0xff]
        %v413 = vld [vmem:[%s299 + $0x238] sm:$0xff]
        %v414 = vld [vmem:[%s299 + $0x240] sm:$0xff]
        %v415 = vld [vmem:[%s299 + $0x248] sm:$0xff]
        %v416 = vld [vmem:[%s299 + $0x250] sm:$0xff]
        %v417 = vld [vmem:[%s299 + $0x258] sm:$0xff]
        %v418 = vld [vmem:[%s299 + $0x260] sm:$0xff]
        %v419 = vld [vmem:[%s299 + $0x268] sm:$0xff]
        %v420 = vld [vmem:[%s299 + $0x270] sm:$0xff]
        %v421 = vld [vmem:[%s299 + $0x278] sm:$0xff]
        %v422 = vld [vmem:[%s299 + $0x280] sm:$0xff]
        %v423 = vld [vmem:[%s299 + $0x288] sm:$0xff]
        %v424 = vld [vmem:[%s299 + $0x290] sm:$0xff]
        %v425 = vld [vmem:[%s299 + $0x298] sm:$0xff]
        %v426 = vld [vmem:[%s299 + $0x2a0] sm:$0xff]
        %v427 = vld [vmem:[%s299 + $0x2a8] sm:$0xff]
        %v428 = vld [vmem:[%s299 + $0x2b0] sm:$0xff]
        %v429 = vld [vmem:[%s299 + $0x2b8] sm:$0xff]
        %v430 = vld [vmem:[%s299 + $0x2c0] sm:$0xff]
        %v431 = vld [vmem:[%s299 + $0x2c8] sm:$0xff]
        %v432 = vld [vmem:[%s299 + $0x2d0] sm:$0xff]
        %v433 = vld [vmem:[%s299 + $0x2d8] sm:$0xff]
        %v434 = vld [vmem:[%s299 + $0x2e0] sm:$0xff]
        %v435 = vld [vmem:[%s299 + $0x2e8] sm:$0xff]
        %v436 = vld [vmem:[%s299 + $0x2f0] sm:$0xff]
        %v437 = vld [vmem:[%s299 + $0x2f8] sm:$0xff]
        %v438 = vld [vmem:[%s299 + $0x300] sm:$0xff]
        %v439 = vld [vmem:[%s299 + $0x308] sm:$0xff]
        %v440 = vld [vmem:[%s299 + $0x310] sm:$0xff]
        %v441 = vld [vmem:[%s299 + $0x318] sm:$0xff]
        %v442 = vld [vmem:[%s299 + $0x320] sm:$0xff]
        %v443 = vld [vmem:[%s299 + $0x328] sm:$0xff]
        %v444 = vld [vmem:[%s299 + $0x330] sm:$0xff]
        %v445 = vld [vmem:[%s299 + $0x338] sm:$0xff]
        %v446 = vld [vmem:[%s299 + $0x340] sm:$0xff]
        %v447 = vld [vmem:[%s299 + $0x348] sm:$0xff]
        %v448 = vld [vmem:[%s299 + $0x350] sm:$0xff]
        %v449 = vld [vmem:[%s299 + $0x358] sm:$0xff]
        %v450 = vld [vmem:[%s299 + $0x360] sm:$0xff]
        %v451 = vld [vmem:[%s299 + $0x368] sm:$0xff]
        %v452 = vld [vmem:[%s299 + $0x370] sm:$0xff]
        %v453 = vld [vmem:[%s299 + $0x378] sm:$0xff]
        %v454 = vld [vmem:[%s299 + $0x380] sm:$0xff]
        %v455 = vld [vmem:[%s299 + $0x388] sm:$0xff]
        %v456 = vld [vmem:[%s299 + $0x390] sm:$0xff]
        %v457 = vld [vmem:[%s299 + $0x398] sm:$0xff]
        %v458 = vld [vmem:[%s299 + $0x3a0] sm:$0xff]
        %v459 = vld [vmem:[%s299 + $0x3a8] sm:$0xff]
        %v460 = vld [vmem:[%s299 + $0x3b0] sm:$0xff]
        %v461 = vld [vmem:[%s299 + $0x3b8] sm:$0xff]
        %v462 = vld [vmem:[%s299 + $0x3c0] sm:$0xff]
        %v463 = vld [vmem:[%s299 + $0x3c8] sm:$0xff]
        %v464 = vld [vmem:[%s299 + $0x3d0] sm:$0xff]
        %v465 = vld [vmem:[%s299 + $0x3d8] sm:$0xff]
        %v466 = vld [vmem:[%s299 + $0x3e0] sm:$0xff]
        %v467 = vld [vmem:[%s299 + $0x3e8] sm:$0xff]
        %v468 = vld [vmem:[%s299 + $0x3f0] sm:$0xff]
        %v469 = vld [vmem:[%s299 + $0x3f8] sm:$0xff]
        %v470 = vld [vmem:[%s299 + $0x400] sm:$0xff]
        %v471 = vld [vmem:[%s299 + $0x408] sm:$0xff]
        %v472 = vld [vmem:[%s299 + $0x410] sm:$0xff]
        %v473 = vld [vmem:[%s299 + $0x418] sm:$0xff]
        %v474 = vld [vmem:[%s299 + $0x420] sm:$0xff]
        %v475 = vld [vmem:[%s299 + $0x428] sm:$0xff]
        %v476 = vld [vmem:[%s299 + $0x430] sm:$0xff]
        %v477 = vld [vmem:[%s299 + $0x438] sm:$0xff]
        %v478 = vld [vmem:[%s299 + $0x440] sm:$0xff]
        %v479 = vld [vmem:[%s299 + $0x448] sm:$0xff]
        %v480 = vld [vmem:[%s299 + $0x450] sm:$0xff]
        %v481 = vld [vmem:[%s299 + $0x458] sm:$0xff]
        %v482 = vld [vmem:[%s299 + $0x460] sm:$0xff]
        %v483 = vld [vmem:[%s299 + $0x468] sm:$0xff]
        %v484 = vld [vmem:[%s299 + $0x470] sm:$0xff]
        %v485 = vld [vmem:[%s299 + $0x478] sm:$0xff]
        %v496 = vunpack.c.l.b16 %v332
        %v497 = vunpack.c.h.b16 %v332
        %v498 = vunpack.c.l.b16 %v333
        %v499 = vunpack.c.h.b16 %v333
        %v500 = vunpack.c.l.b16 %v334
        %v501 = vunpack.c.h.b16 %v334
        %v502 = vunpack.c.l.b16 %v335
        %v503 = vunpack.c.h.b16 %v335
        %v504 = vunpack.c.l.b16 %v336
        %v505 = vunpack.c.l.b16 %v337
        %v506 = vunpack.c.h.b16 %v337
        %v507 = vunpack.c.l.b16 %v338
        %v508 = vunpack.c.h.b16 %v338
        %v509 = vunpack.c.l.b16 %v339
        %v510 = vunpack.c.h.b16 %v339
        %v511 = vunpack.c.l.b16 %v340
        %v512 = vunpack.c.h.b16 %v340
        %v513 = vunpack.c.l.b16 %v341
        %v514 = vpack.c.b16 %v505, %v496
        %v515 = vpack.c.b16 %v506, %v497
        %v516 = vpack.c.b16 %v507, %v498
        %v517 = vpack.c.b16 %v508, %v499
        %v518 = vpack.c.b16 %v509, %v500
        %v519 = vpack.c.b16 %v510, %v501
        %v520 = vpack.c.b16 %v511, %v502
        %v521 = vpack.c.b16 %v512, %v503
        %v522 = vpack.c.b16 %v513, %v504
        %v676 = vunpack.c.l.b16 %v342
        %v677 = vunpack.c.h.b16 %v342
        %v678 = vunpack.c.l.b16 %v343
        %v679 = vunpack.c.h.b16 %v343
        %v680 = vunpack.c.l.b16 %v344
        %v681 = vunpack.c.h.b16 %v344
        %v682 = vunpack.c.l.b16 %v345
        %v683 = vunpack.c.h.b16 %v345
        %v684 = vunpack.c.l.b16 %v346
        %v685 = vunpack.c.h.b16 %v346
        %v686 = vunpack.c.l.b16 %v347
        %v687 = vunpack.c.h.b16 %v347
        %v688 = vunpack.c.l.b16 %v348
        %v689 = vunpack.c.h.b16 %v348
        %v690 = vunpack.c.l.b16 %v349
        %v691 = vunpack.c.h.b16 %v349
        %v692 = vunpack.c.l.b16 %v350
        %v693 = vunpack.c.h.b16 %v350
        %v694 = vunpack.c.l.b16 %v351
        %v695 = vunpack.c.h.b16 %v351
        %v696 = vunpack.c.l.b16 %v352
        %v697 = vunpack.c.h.b16 %v352
        %v698 = vunpack.c.l.b16 %v353
        %v699 = vunpack.c.h.b16 %v353
        %v700 = vunpack.c.l.b16 %v354
        %v701 = vunpack.c.h.b16 %v354
        %v702 = vunpack.c.l.b16 %v355
        %v703 = vunpack.c.h.b16 %v355
        %v704 = vunpack.c.l.b16 %v356
        %v705 = vunpack.c.h.b16 %v356
        %v706 = vunpack.c.l.b16 %v357
        %v707 = vunpack.c.h.b16 %v357
        %v708 = vunpack.c.l.b16 %v358
        %v709 = vunpack.c.h.b16 %v358
        %v710 = vunpack.c.l.b16 %v359
        %v711 = vunpack.c.h.b16 %v359
        %v712 = vunpack.c.l.b16 %v360
        %v713 = vunpack.c.h.b16 %v360
        %v714 = vunpack.c.l.b16 %v361
        %v715 = vunpack.c.h.b16 %v361
        %v716 = vunpack.c.l.b16 %v362
        %v717 = vunpack.c.h.b16 %v362
        %v718 = vunpack.c.l.b16 %v363
        %v719 = vunpack.c.h.b16 %v363
        %v720 = vunpack.c.l.b16 %v364
        %v721 = vunpack.c.h.b16 %v364
        %v722 = vunpack.c.l.b16 %v365
        %v723 = vunpack.c.h.b16 %v365
        %v724 = vunpack.c.l.b16 %v366
        %v725 = vunpack.c.h.b16 %v366
        %v726 = vunpack.c.l.b16 %v367
        %v727 = vunpack.c.h.b16 %v367
        %v728 = vunpack.c.l.b16 %v368
        %v729 = vunpack.c.h.b16 %v368
        %v730 = vunpack.c.l.b16 %v369
        %v731 = vunpack.c.h.b16 %v369
        %v732 = vunpack.c.l.b16 %v370
        %v733 = vunpack.c.h.b16 %v370
        %v734 = vunpack.c.l.b16 %v371
        %v735 = vunpack.c.h.b16 %v371
        %v736 = vunpack.c.l.b16 %v372
        %v737 = vunpack.c.h.b16 %v372
        %v738 = vunpack.c.l.b16 %v373
        %v739 = vunpack.c.h.b16 %v373
        %v740 = vunpack.c.l.b16 %v374
        %v741 = vunpack.c.h.b16 %v374
        %v742 = vunpack.c.l.b16 %v375
        %v743 = vunpack.c.h.b16 %v375
        %v744 = vunpack.c.l.b16 %v376
        %v745 = vunpack.c.h.b16 %v376
        %v746 = vunpack.c.l.b16 %v377
        %v747 = vunpack.c.h.b16 %v377
        %v748 = vunpack.c.l.b16 %v378
        %v749 = vunpack.c.h.b16 %v378
        %v750 = vunpack.c.l.b16 %v379
        %v751 = vunpack.c.h.b16 %v379
        %v752 = vunpack.c.l.b16 %v380
        %v753 = vunpack.c.h.b16 %v380
        %v754 = vunpack.c.l.b16 %v381
        %v755 = vunpack.c.h.b16 %v381
        %v756 = vunpack.c.l.b16 %v382
        %v757 = vunpack.c.h.b16 %v382
        %v758 = vunpack.c.l.b16 %v383
        %v759 = vunpack.c.h.b16 %v383
        %v760 = vunpack.c.l.b16 %v384
        %v761 = vunpack.c.h.b16 %v384
        %v762 = vunpack.c.l.b16 %v385
        %v763 = vunpack.c.h.b16 %v385
        %v764 = vunpack.c.l.b16 %v386
        %v765 = vunpack.c.h.b16 %v386
        %v766 = vunpack.c.l.b16 %v387
        %v767 = vunpack.c.h.b16 %v387
        %v768 = vunpack.c.l.b16 %v388
        %v769 = vunpack.c.h.b16 %v388
        %v770 = vunpack.c.l.b16 %v389
        %v771 = vunpack.c.h.b16 %v389
        %v772 = vunpack.c.l.b16 %v390
        %v773 = vunpack.c.h.b16 %v390
        %v774 = vunpack.c.l.b16 %v391
        %v775 = vunpack.c.h.b16 %v391
        %v776 = vunpack.c.l.b16 %v392
        %v777 = vunpack.c.h.b16 %v392
        %v778 = vunpack.c.l.b16 %v393
        %v779 = vunpack.c.h.b16 %v393
        %v780 = vunpack.c.l.b16 %v394
        %v781 = vunpack.c.h.b16 %v394
        %v782 = vunpack.c.l.b16 %v395
        %v783 = vunpack.c.h.b16 %v395
        %v784 = vunpack.c.l.b16 %v396
        %v785 = vunpack.c.h.b16 %v396
        %v786 = vunpack.c.l.b16 %v397
        %v787 = vunpack.c.h.b16 %v397
        %v788 = vunpack.c.l.b16 %v398
        %v789 = vunpack.c.h.b16 %v398
        %v790 = vunpack.c.l.b16 %v399
        %v791 = vunpack.c.h.b16 %v399
        %v792 = vunpack.c.l.b16 %v400
        %v793 = vunpack.c.h.b16 %v400
        %v794 = vunpack.c.l.b16 %v401
        %v795 = vunpack.c.h.b16 %v401
        %v796 = vunpack.c.l.b16 %v402
        %v797 = vunpack.c.h.b16 %v402
        %v798 = vunpack.c.l.b16 %v403
        %v799 = vunpack.c.h.b16 %v403
        %v800 = vunpack.c.l.b16 %v404
        %v801 = vunpack.c.h.b16 %v404
        %v802 = vunpack.c.l.b16 %v405
        %v803 = vunpack.c.h.b16 %v405
        %v804 = vunpack.c.l.b16 %v406
        %v805 = vunpack.c.h.b16 %v406
        %v806 = vunpack.c.l.b16 %v407
        %v807 = vunpack.c.h.b16 %v407
        %v808 = vunpack.c.l.b16 %v408
        %v809 = vunpack.c.h.b16 %v408
        %v810 = vunpack.c.l.b16 %v409
        %v811 = vunpack.c.h.b16 %v409
        %v812 = vunpack.c.l.b16 %v410
        %v813 = vunpack.c.h.b16 %v410
        %v814 = vunpack.c.l.b16 %v411
        %v815 = vunpack.c.h.b16 %v411
        %v816 = vunpack.c.l.b16 %v412
        %v817 = vunpack.c.h.b16 %v412
        %v818 = vunpack.c.l.b16 %v413
        %v819 = vunpack.c.h.b16 %v413
        %v820 = vunpack.c.l.b16 %v414
        %v821 = vunpack.c.h.b16 %v414
        %v822 = vunpack.c.l.b16 %v415
        %v823 = vunpack.c.h.b16 %v415
        %v824 = vunpack.c.l.b16 %v416
        %v825 = vunpack.c.h.b16 %v416
        %v826 = vunpack.c.l.b16 %v417
        %v827 = vunpack.c.h.b16 %v417
        %v828 = vunpack.c.l.b16 %v418
        %v829 = vunpack.c.h.b16 %v418
        %v830 = vunpack.c.l.b16 %v419
        %v831 = vunpack.c.h.b16 %v419
        %v832 = vunpack.c.l.b16 %v420
        %v833 = vunpack.c.h.b16 %v420
        %v834 = vunpack.c.l.b16 %v421
        %v835 = vunpack.c.h.b16 %v421
        %v836 = vunpack.c.l.b16 %v422
        %v837 = vunpack.c.h.b16 %v422
        %v838 = vunpack.c.l.b16 %v423
        %v839 = vunpack.c.h.b16 %v423
        %v840 = vunpack.c.l.b16 %v424
        %v841 = vunpack.c.h.b16 %v424
        %v842 = vunpack.c.l.b16 %v425
        %v843 = vunpack.c.h.b16 %v425
        %v844 = vunpack.c.l.b16 %v426
        %v845 = vunpack.c.h.b16 %v426
        %v846 = vunpack.c.l.b16 %v427
        %v847 = vunpack.c.h.b16 %v427
        %v848 = vunpack.c.l.b16 %v428
        %v849 = vunpack.c.h.b16 %v428
        %v850 = vunpack.c.l.b16 %v429
        %v851 = vunpack.c.h.b16 %v429
        %v852 = vunpack.c.l.b16 %v430
        %v853 = vunpack.c.h.b16 %v430
        %v854 = vunpack.c.l.b16 %v431
        %v855 = vunpack.c.h.b16 %v431
        %v856 = vunpack.c.l.b16 %v432
        %v857 = vunpack.c.h.b16 %v432
        %v858 = vunpack.c.l.b16 %v433
        %v859 = vunpack.c.h.b16 %v433
        %v860 = vunpack.c.l.b16 %v434
        %v861 = vunpack.c.h.b16 %v434
        %v862 = vunpack.c.l.b16 %v435
        %v863 = vunpack.c.h.b16 %v435
        %v864 = vunpack.c.l.b16 %v436
        %v865 = vunpack.c.h.b16 %v436
        %v866 = vunpack.c.l.b16 %v437
        %v867 = vunpack.c.h.b16 %v437
        %v868 = vunpack.c.l.b16 %v438
        %v869 = vunpack.c.h.b16 %v438
        %v870 = vunpack.c.l.b16 %v439
        %v871 = vunpack.c.h.b16 %v439
        %v872 = vunpack.c.l.b16 %v440
        %v873 = vunpack.c.h.b16 %v440
        %v874 = vunpack.c.l.b16 %v441
        %v875 = vunpack.c.h.b16 %v441
        %v876 = vunpack.c.l.b16 %v442
        %v877 = vunpack.c.h.b16 %v442
        %v878 = vunpack.c.l.b16 %v443
        %v879 = vunpack.c.h.b16 %v443
        %v880 = vunpack.c.l.b16 %v444
        %v881 = vunpack.c.h.b16 %v444
        %v882 = vunpack.c.l.b16 %v445
        %v883 = vunpack.c.h.b16 %v445
        %v884 = vunpack.c.l.b16 %v446
        %v885 = vunpack.c.h.b16 %v446
        %v886 = vunpack.c.l.b16 %v447
        %v887 = vunpack.c.h.b16 %v447
        %v888 = vunpack.c.l.b16 %v448
        %v889 = vunpack.c.h.b16 %v448
        %v890 = vunpack.c.l.b16 %v449
        %v891 = vunpack.c.h.b16 %v449
        %v892 = vunpack.c.l.b16 %v450
        %v893 = vunpack.c.h.b16 %v450
        %v894 = vunpack.c.l.b16 %v451
        %v895 = vunpack.c.h.b16 %v451
        %v896 = vunpack.c.l.b16 %v452
        %v897 = vunpack.c.h.b16 %v452
        %v898 = vunpack.c.l.b16 %v453
        %v899 = vunpack.c.h.b16 %v453
        %v900 = vunpack.c.l.b16 %v454
        %v901 = vunpack.c.h.b16 %v454
        %v902 = vunpack.c.l.b16 %v455
        %v903 = vunpack.c.h.b16 %v455
        %v904 = vunpack.c.l.b16 %v456
        %v905 = vunpack.c.h.b16 %v456
        %v906 = vunpack.c.l.b16 %v457
        %v907 = vunpack.c.h.b16 %v457
        %v908 = vunpack.c.l.b16 %v458
        %v909 = vunpack.c.h.b16 %v458
        %v910 = vunpack.c.l.b16 %v459
        %v911 = vunpack.c.h.b16 %v459
        %v912 = vunpack.c.l.b16 %v460
        %v913 = vunpack.c.h.b16 %v460
        %v914 = vunpack.c.l.b16 %v461
        %v915 = vunpack.c.h.b16 %v461
        %v916 = vunpack.c.l.b16 %v462
        %v917 = vunpack.c.h.b16 %v462
        %v918 = vunpack.c.l.b16 %v463
        %v919 = vunpack.c.h.b16 %v463
        %v920 = vunpack.c.l.b16 %v464
        %v921 = vunpack.c.h.b16 %v464
        %v922 = vunpack.c.l.b16 %v465
        %v923 = vunpack.c.h.b16 %v465
        %v924 = vunpack.c.l.b16 %v466
        %v925 = vunpack.c.h.b16 %v466
        %v926 = vunpack.c.l.b16 %v467
        %v927 = vunpack.c.h.b16 %v467
        %v928 = vunpack.c.l.b16 %v468
        %v929 = vunpack.c.h.b16 %v468
        %v930 = vunpack.c.l.b16 %v469
        %v931 = vunpack.c.h.b16 %v469
        %v932 = vunpack.c.l.b16 %v470
        %v933 = vunpack.c.h.b16 %v470
        %v934 = vunpack.c.l.b16 %v471
        %v935 = vunpack.c.h.b16 %v471
        %v936 = vunpack.c.l.b16 %v472
        %v937 = vunpack.c.h.b16 %v472
        %v938 = vunpack.c.l.b16 %v473
        %v939 = vunpack.c.h.b16 %v473
        %v940 = vunpack.c.l.b16 %v474
        %v941 = vunpack.c.h.b16 %v474
        %v942 = vunpack.c.l.b16 %v475
        %v943 = vunpack.c.h.b16 %v475
        %v944 = vunpack.c.l.b16 %v476
        %v945 = vunpack.c.h.b16 %v476
        %v946 = vunpack.c.l.b16 %v477
        %v947 = vunpack.c.h.b16 %v477
        %v948 = vunpack.c.l.b16 %v478
        %v949 = vunpack.c.h.b16 %v478
        %v950 = vunpack.c.l.b16 %v479
        %v951 = vunpack.c.h.b16 %v479
        %v952 = vunpack.c.l.b16 %v480
        %v953 = vunpack.c.h.b16 %v480
        %v954 = vunpack.c.l.b16 %v481
        %v955 = vunpack.c.h.b16 %v481
        %v956 = vunpack.c.l.b16 %v482
        %v957 = vunpack.c.h.b16 %v482
        %v958 = vunpack.c.l.b16 %v483
        %v959 = vunpack.c.h.b16 %v483
        %v960 = vunpack.c.l.b16 %v484
        %v961 = vunpack.c.h.b16 %v484
        %v962 = vunpack.c.l.b16 %v485
        %v963 = vunpack.c.h.b16 %v485
        %v964 = vpack.c.b16 %v678, %v676
        %v965 = vpack.c.b16 %v679, %v677
        %v966 = vpack.c.b16 %v682, %v680
        %v967 = vpack.c.b16 %v683, %v681
        %v968 = vpack.c.b16 %v686, %v684
        %v969 = vpack.c.b16 %v687, %v685
        %v970 = vpack.c.b16 %v690, %v688
        %v971 = vpack.c.b16 %v691, %v689
        %v972 = vpack.c.b16 %v694, %v692
        %v973 = vpack.c.b16 %v695, %v693
        %v974 = vpack.c.b16 %v698, %v696
        %v975 = vpack.c.b16 %v699, %v697
        %v976 = vpack.c.b16 %v702, %v700
        %v977 = vpack.c.b16 %v703, %v701
        %v978 = vpack.c.b16 %v706, %v704
        %v979 = vpack.c.b16 %v707, %v705
        %v980 = vpack.c.b16 %v710, %v708
        %v981 = vpack.c.b16 %v711, %v709
        %v982 = vpack.c.b16 %v714, %v712
        %v983 = vpack.c.b16 %v715, %v713
        %v984 = vpack.c.b16 %v718, %v716
        %v985 = vpack.c.b16 %v719, %v717
        %v986 = vpack.c.b16 %v722, %v720
        %v987 = vpack.c.b16 %v723, %v721
        %v988 = vpack.c.b16 %v726, %v724
        %v989 = vpack.c.b16 %v727, %v725
        %v990 = vpack.c.b16 %v730, %v728
        %v991 = vpack.c.b16 %v731, %v729
        %v992 = vpack.c.b16 %v734, %v732
        %v993 = vpack.c.b16 %v735, %v733
        %v994 = vpack.c.b16 %v738, %v736
        %v995 = vpack.c.b16 %v739, %v737
        %v996 = vpack.c.b16 %v742, %v740
        %v997 = vpack.c.b16 %v743, %v741
        %v998 = vpack.c.b16 %v746, %v744
        %v999 = vpack.c.b16 %v747, %v745
        %v1000 = vpack.c.b16 %v750, %v748
        %v1001 = vpack.c.b16 %v751, %v749
        %v1002 = vpack.c.b16 %v754, %v752
        %v1003 = vpack.c.b16 %v755, %v753
        %v1004 = vpack.c.b16 %v758, %v756
        %v1005 = vpack.c.b16 %v759, %v757
        %v1006 = vpack.c.b16 %v762, %v760
        %v1007 = vpack.c.b16 %v763, %v761
        %v1008 = vpack.c.b16 %v766, %v764
        %v1009 = vpack.c.b16 %v767, %v765
        %v1010 = vpack.c.b16 %v770, %v768
        %v1011 = vpack.c.b16 %v771, %v769
        %v1012 = vpack.c.b16 %v774, %v772
        %v1013 = vpack.c.b16 %v775, %v773
        %v1014 = vpack.c.b16 %v778, %v776
        %v1015 = vpack.c.b16 %v779, %v777
        %v1016 = vpack.c.b16 %v782, %v780
        %v1017 = vpack.c.b16 %v783, %v781
        %v1018 = vpack.c.b16 %v786, %v784
        %v1019 = vpack.c.b16 %v787, %v785
        %v1020 = vpack.c.b16 %v790, %v788
        %v1021 = vpack.c.b16 %v791, %v789
        %v1022 = vpack.c.b16 %v794, %v792
        %v1023 = vpack.c.b16 %v795, %v793
        %v1024 = vpack.c.b16 %v798, %v796
        %v1025 = vpack.c.b16 %v799, %v797
        %v1026 = vpack.c.b16 %v802, %v800
        %v1027 = vpack.c.b16 %v803, %v801
        %v1028 = vpack.c.b16 %v806, %v804
        %v1029 = vpack.c.b16 %v807, %v805
        %v1030 = vpack.c.b16 %v810, %v808
        %v1031 = vpack.c.b16 %v811, %v809
        %v1032 = vpack.c.b16 %v814, %v812
        %v1033 = vpack.c.b16 %v815, %v813
        %v1034 = vpack.c.b16 %v818, %v816
        %v1035 = vpack.c.b16 %v819, %v817
        %v1036 = vpack.c.b16 %v822, %v820
        %v1037 = vpack.c.b16 %v823, %v821
        %v1038 = vpack.c.b16 %v826, %v824
        %v1039 = vpack.c.b16 %v827, %v825
        %v1040 = vpack.c.b16 %v830, %v828
        %v1041 = vpack.c.b16 %v831, %v829
        %v1042 = vpack.c.b16 %v834, %v832
        %v1043 = vpack.c.b16 %v835, %v833
        %v1044 = vpack.c.b16 %v838, %v836
        %v1045 = vpack.c.b16 %v839, %v837
        %v1046 = vpack.c.b16 %v842, %v840
        %v1047 = vpack.c.b16 %v843, %v841
        %v1048 = vpack.c.b16 %v846, %v844
        %v1049 = vpack.c.b16 %v847, %v845
        %v1050 = vpack.c.b16 %v850, %v848
        %v1051 = vpack.c.b16 %v851, %v849
        %v1052 = vpack.c.b16 %v854, %v852
        %v1053 = vpack.c.b16 %v855, %v853
        %v1054 = vpack.c.b16 %v858, %v856
        %v1055 = vpack.c.b16 %v859, %v857
        %v1056 = vpack.c.b16 %v862, %v860
        %v1057 = vpack.c.b16 %v863, %v861
        %v1058 = vpack.c.b16 %v866, %v864
        %v1059 = vpack.c.b16 %v867, %v865
        %v1060 = vpack.c.b16 %v870, %v868
        %v1061 = vpack.c.b16 %v871, %v869
        %v1062 = vpack.c.b16 %v874, %v872
        %v1063 = vpack.c.b16 %v875, %v873
        %v1064 = vpack.c.b16 %v878, %v876
        %v1065 = vpack.c.b16 %v879, %v877
        %v1066 = vpack.c.b16 %v882, %v880
        %v1067 = vpack.c.b16 %v883, %v881
        %v1068 = vpack.c.b16 %v886, %v884
        %v1069 = vpack.c.b16 %v887, %v885
        %v1070 = vpack.c.b16 %v890, %v888
        %v1071 = vpack.c.b16 %v891, %v889
        %v1072 = vpack.c.b16 %v894, %v892
        %v1073 = vpack.c.b16 %v895, %v893
        %v1074 = vpack.c.b16 %v898, %v896
        %v1075 = vpack.c.b16 %v899, %v897
        %v1076 = vpack.c.b16 %v902, %v900
        %v1077 = vpack.c.b16 %v903, %v901
        %v1078 = vpack.c.b16 %v906, %v904
        %v1079 = vpack.c.b16 %v907, %v905
        %v1080 = vpack.c.b16 %v910, %v908
        %v1081 = vpack.c.b16 %v911, %v909
        %v1082 = vpack.c.b16 %v914, %v912
        %v1083 = vpack.c.b16 %v915, %v913
        %v1084 = vpack.c.b16 %v918, %v916
        %v1085 = vpack.c.b16 %v919, %v917
        %v1086 = vpack.c.b16 %v922, %v920
        %v1087 = vpack.c.b16 %v923, %v921
        %v1088 = vpack.c.b16 %v926, %v924
        %v1089 = vpack.c.b16 %v927, %v925
        %v1090 = vpack.c.b16 %v930, %v928
        %v1091 = vpack.c.b16 %v931, %v929
        %v1092 = vpack.c.b16 %v934, %v932
        %v1093 = vpack.c.b16 %v935, %v933
        %v1094 = vpack.c.b16 %v938, %v936
        %v1095 = vpack.c.b16 %v939, %v937
        %v1096 = vpack.c.b16 %v942, %v940
        %v1097 = vpack.c.b16 %v943, %v941
        %v1098 = vpack.c.b16 %v946, %v944
        %v1099 = vpack.c.b16 %v947, %v945
        %v1100 = vpack.c.b16 %v950, %v948
        %v1101 = vpack.c.b16 %v951, %v949
        %v1102 = vpack.c.b16 %v954, %v952
        %v1103 = vpack.c.b16 %v955, %v953
        %v1104 = vpack.c.b16 %v958, %v956
        %v1105 = vpack.c.b16 %v959, %v957
        %v1106 = vpack.c.b16 %v962, %v960
        %v1107 = vpack.c.b16 %v963, %v961
        %1252 = vmatprep.subr.bf16.mxu0 %v979
        %1253 = vmatpush1.bf16.msra.mxu0 %v978
        %1254 = vmatprep.subr.bf16.mxu0 %v977
        %1255 = vmatpush1.bf16.msra.mxu0 %v976
        %1256 = vmatprep.subr.bf16.mxu0 %v975
        %1257 = vmatpush1.bf16.msra.mxu0 %v974
        %1258 = vmatprep.subr.bf16.mxu0 %v973
        %1259 = vmatpush1.bf16.msra.mxu0 %v972
        %1260 = vmatprep.subr.bf16.mxu0 %v971
        %1261 = vmatpush1.bf16.msra.mxu0 %v970
        %1262 = vmatprep.subr.bf16.mxu0 %v969
        %1263 = vmatpush1.bf16.msra.mxu0 %v968
        %1264 = vmatprep.subr.bf16.mxu0 %v967
        %1265 = vmatpush1.bf16.msra.mxu0 %v966
        %1266 = vmatprep.subr.bf16.mxu0 %v965
        %1267 = vmatpush1.bf16.msra.mxu0 %v964
        %1268 = vmatprep.subr.bf16.mxu0 %v995
        %1269 = vmatpush2.bf16.msra.mxu0 %v994
        %1270 = vmatprep.subr.bf16.mxu0 %v993
        %1271 = vmatpush2.bf16.msra.mxu0 %v992
        %1272 = vmatprep.subr.bf16.mxu0 %v991
        %1273 = vmatpush2.bf16.msra.mxu0 %v990
        %1274 = vmatprep.subr.bf16.mxu0 %v989
        %1275 = vmatpush2.bf16.msra.mxu0 %v988
        %1276 = vmatprep.subr.bf16.mxu0 %v987
        %1277 = vmatpush2.bf16.msra.mxu0 %v986
        %1278 = vmatprep.subr.bf16.mxu0 %v985
        %1279 = vmatpush2.bf16.msra.mxu0 %v984
        %1280 = vmatprep.subr.bf16.mxu0 %v983
        %1281 = vmatpush2.bf16.msra.mxu0 %v982
        %1282 = vmatprep.subr.bf16.mxu0 %v981
        %1283 = vmatpush2.bf16.msra.mxu0 %v980
        %1284 = vmatprep.mubr.bf16.mxu0 %v515
        %1285 = vmatmul.mubr.bf16.gmra.mxu0 %v514
        %v1286 = vpop.f32.mrf.mxu0
        %v1287 = vadd.f32 0.0, %v1286
        %v1288 = vpop.f32.mrf.mxu0
        %v1289 = vadd.f32 0.0, %v1288
        %v1290 = vpop.f32.mrf.mxu0
        %v1291 = vadd.f32 0.0, %v1290
        %v1292 = vpop.f32.mrf.mxu0
        %v1293 = vadd.f32 0.0, %v1292
        %1294 = vdwg.mxu0
        %1295 = vmatprep.subr.bf16.mxu0 %v1011
        %1296 = vmatpush1.bf16.msra.mxu0 %v1010
        %1297 = vmatprep.subr.bf16.mxu0 %v1009
        %1298 = vmatpush1.bf16.msra.mxu0 %v1008
        %1299 = vmatprep.subr.bf16.mxu0 %v1007
        %1300 = vmatpush1.bf16.msra.mxu0 %v1006
        %1301 = vmatprep.subr.bf16.mxu0 %v1005
        %1302 = vmatpush1.bf16.msra.mxu0 %v1004
        %1303 = vmatprep.subr.bf16.mxu0 %v1003
        %1304 = vmatpush1.bf16.msra.mxu0 %v1002
        %1305 = vmatprep.subr.bf16.mxu0 %v1001
        %1306 = vmatpush1.bf16.msra.mxu0 %v1000
        %1307 = vmatprep.subr.bf16.mxu0 %v999
        %1308 = vmatpush1.bf16.msra.mxu0 %v998
        %1309 = vmatprep.subr.bf16.mxu0 %v997
        %1310 = vmatpush1.bf16.msra.mxu0 %v996
        %1311 = vmatprep.subr.bf16.mxu0 %v1027
        %1312 = vmatpush2.bf16.msra.mxu0 %v1026
        %1313 = vmatprep.subr.bf16.mxu0 %v1025
        %1314 = vmatpush2.bf16.msra.mxu0 %v1024
        %1315 = vmatprep.subr.bf16.mxu0 %v1023
        %1316 = vmatpush2.bf16.msra.mxu0 %v1022
        %1317 = vmatprep.subr.bf16.mxu0 %v1021
        %1318 = vmatpush2.bf16.msra.mxu0 %v1020
        %1319 = vmatprep.subr.bf16.mxu0 %v1019
        %1320 = vmatpush2.bf16.msra.mxu0 %v1018
        %1321 = vmatprep.subr.bf16.mxu0 %v1017
        %1322 = vmatpush2.bf16.msra.mxu0 %v1016
        %1323 = vmatprep.subr.bf16.mxu0 %v1015
        %1324 = vmatpush2.bf16.msra.mxu0 %v1014
        %1325 = vmatprep.subr.bf16.mxu0 %v1013
        %1326 = vmatpush2.bf16.msra.mxu0 %v1012
        %1327 = vmatprep.mubr.bf16.mxu0 %v517
        %1328 = vmatmul.mubr.bf16.gmra.mxu0 %v516
        %v1329 = vpop.f32.mrf.mxu0
        %v1330 = vadd.f32 %v1287, %v1329
        %v1331 = vpop.f32.mrf.mxu0
        %v1332 = vadd.f32 %v1289, %v1331
        %v1333 = vpop.f32.mrf.mxu0
        %v1334 = vadd.f32 %v1291, %v1333
        %v1335 = vpop.f32.mrf.mxu0
        %v1336 = vadd.f32 %v1293, %v1335
        %1337 = vdwg.mxu0
        %1338 = vmatprep.subr.bf16.mxu0 %v1043
        %1339 = vmatpush1.bf16.msra.mxu0 %v1042
        %1340 = vmatprep.subr.bf16.mxu0 %v1041
        %1341 = vmatpush1.bf16.msra.mxu0 %v1040
        %1342 = vmatprep.subr.bf16.mxu0 %v1039
        %1343 = vmatpush1.bf16.msra.mxu0 %v1038
        %1344 = vmatprep.subr.bf16.mxu0 %v1037
        %1345 = vmatpush1.bf16.msra.mxu0 %v1036
        %1346 = vmatprep.subr.bf16.mxu0 %v1035
        %1347 = vmatpush1.bf16.msra.mxu0 %v1034
        %1348 = vmatprep.subr.bf16.mxu0 %v1033
        %1349 = vmatpush1.bf16.msra.mxu0 %v1032
        %1350 = vmatprep.subr.bf16.mxu0 %v1031
        %1351 = vmatpush1.bf16.msra.mxu0 %v1030
        %1352 = vmatprep.subr.bf16.mxu0 %v1029
        %1353 = vmatpush1.bf16.msra.mxu0 %v1028
        %1354 = vmatprep.subr.bf16.mxu0 %v1059
        %1355 = vmatpush2.bf16.msra.mxu0 %v1058
        %1356 = vmatprep.subr.bf16.mxu0 %v1057
        %1357 = vmatpush2.bf16.msra.mxu0 %v1056
        %1358 = vmatprep.subr.bf16.mxu0 %v1055
        %1359 = vmatpush2.bf16.msra.mxu0 %v1054
        %1360 = vmatprep.subr.bf16.mxu0 %v1053
        %1361 = vmatpush2.bf16.msra.mxu0 %v1052
        %1362 = vmatprep.subr.bf16.mxu0 %v1051
        %1363 = vmatpush2.bf16.msra.mxu0 %v1050
        %1364 = vmatprep.subr.bf16.mxu0 %v1049
        %1365 = vmatpush2.bf16.msra.mxu0 %v1048
        %1366 = vmatprep.subr.bf16.mxu0 %v1047
        %1367 = vmatpush2.bf16.msra.mxu0 %v1046
        %1368 = vmatprep.subr.bf16.mxu0 %v1045
        %1369 = vmatpush2.bf16.msra.mxu0 %v1044
        %1370 = vmatprep.mubr.bf16.mxu0 %v519
        %1371 = vmatmul.mubr.bf16.gmra.mxu0 %v518
        %v1372 = vpop.f32.mrf.mxu0
        %v1373 = vadd.f32 %v1330, %v1372
        %v1374 = vpop.f32.mrf.mxu0
        %v1375 = vadd.f32 %v1332, %v1374
        %v1376 = vpop.f32.mrf.mxu0
        %v1377 = vadd.f32 %v1334, %v1376
        %v1378 = vpop.f32.mrf.mxu0
        %v1379 = vadd.f32 %v1336, %v1378
        %1380 = vdwg.mxu0
        %1381 = vmatprep.subr.bf16.mxu0 %v1075
        %1382 = vmatpush1.bf16.msra.mxu0 %v1074
        %1383 = vmatprep.subr.bf16.mxu0 %v1073
        %1384 = vmatpush1.bf16.msra.mxu0 %v1072
        %1385 = vmatprep.subr.bf16.mxu0 %v1071
        %1386 = vmatpush1.bf16.msra.mxu0 %v1070
        %1387 = vmatprep.subr.bf16.mxu0 %v1069
        %1388 = vmatpush1.bf16.msra.mxu0 %v1068
        %1389 = vmatprep.subr.bf16.mxu0 %v1067
        %1390 = vmatpush1.bf16.msra.mxu0 %v1066
        %1391 = vmatprep.subr.bf16.mxu0 %v1065
        %1392 = vmatpush1.bf16.msra.mxu0 %v1064
        %1393 = vmatprep.subr.bf16.mxu0 %v1063
        %1394 = vmatpush1.bf16.msra.mxu0 %v1062
        %1395 = vmatprep.subr.bf16.mxu0 %v1061
        %1396 = vmatpush1.bf16.msra.mxu0 %v1060
        %1397 = vmatprep.subr.bf16.mxu0 %v1091
        %1398 = vmatpush2.bf16.msra.mxu0 %v1090
        %1399 = vmatprep.subr.bf16.mxu0 %v1089
        %1400 = vmatpush2.bf16.msra.mxu0 %v1088
        %1401 = vmatprep.subr.bf16.mxu0 %v1087
        %1402 = vmatpush2.bf16.msra.mxu0 %v1086
        %1403 = vmatprep.subr.bf16.mxu0 %v1085
        %1404 = vmatpush2.bf16.msra.mxu0 %v1084
        %1405 = vmatprep.subr.bf16.mxu0 %v1083
        %1406 = vmatpush2.bf16.msra.mxu0 %v1082
        %1407 = vmatprep.subr.bf16.mxu0 %v1081
        %1408 = vmatpush2.bf16.msra.mxu0 %v1080
        %1409 = vmatprep.subr.bf16.mxu0 %v1079
        %1410 = vmatpush2.bf16.msra.mxu0 %v1078
        %1411 = vmatprep.subr.bf16.mxu0 %v1077
        %1412 = vmatpush2.bf16.msra.mxu0 %v1076
        %1413 = vmatprep.mubr.bf16.mxu0 %v521
        %1414 = vmatmul.mubr.bf16.gmra.mxu0 %v520
        %v1415 = vpop.f32.mrf.mxu0
        %v1416 = vadd.f32 %v1373, %v1415
        %v1417 = vpop.f32.mrf.mxu0
        %v1418 = vadd.f32 %v1375, %v1417
        %v1419 = vpop.f32.mrf.mxu0
        %v1420 = vadd.f32 %v1377, %v1419
        %v1421 = vpop.f32.mrf.mxu0
        %v1422 = vadd.f32 %v1379, %v1421
        %1423 = vdwg.mxu0
        %1424 = vmatprep.subr.bf16.mxu0 %v1107
        %1425 = vmatpush1.bf16.msra.mxu0 %v1106
        %1426 = vmatprep.subr.bf16.mxu0 %v1105
        %1427 = vmatpush1.bf16.msra.mxu0 %v1104
        %1428 = vmatprep.subr.bf16.mxu0 %v1103
        %1429 = vmatpush1.bf16.msra.mxu0 %v1102
        %1430 = vmatprep.subr.bf16.mxu0 %v1101
        %1431 = vmatpush1.bf16.msra.mxu0 %v1100
        %1432 = vmatprep.subr.bf16.mxu0 %v1099
        %1433 = vmatpush1.bf16.msra.mxu0 %v1098
        %1434 = vmatprep.subr.bf16.mxu0 %v1097
        %1435 = vmatpush1.bf16.msra.mxu0 %v1096
        %1436 = vmatprep.subr.bf16.mxu0 %v1095
        %1437 = vmatpush1.bf16.msra.mxu0 %v1094
        %1438 = vmatprep.subr.bf16.mxu0 %v1093
        %1439 = vmatpush1.bf16.msra.mxu0 %v1092
        %1440 = vmatprep.subr.bf16.mxu0 0
        %1441 = vmatpush2.bf16.msra.mxu0 0
        %1442 = vmatprep.subr.bf16.mxu0 0
        %1443 = vmatpush2.bf16.msra.mxu0 0
        %1444 = vmatprep.subr.bf16.mxu0 0
        %1445 = vmatpush2.bf16.msra.mxu0 0
        %1446 = vmatprep.subr.bf16.mxu0 0
        %1447 = vmatpush2.bf16.msra.mxu0 0
        %1448 = vmatprep.subr.bf16.mxu0 0
        %1449 = vmatpush2.bf16.msra.mxu0 0
        %1450 = vmatprep.subr.bf16.mxu0 0
        %1451 = vmatpush2.bf16.msra.mxu0 0
        %1452 = vmatprep.subr.bf16.mxu0 0
        %1453 = vmatpush2.bf16.msra.mxu0 0
        %1454 = vmatprep.subr.bf16.mxu0 0
        %1455 = vmatpush2.bf16.msra.mxu0 0
        %1456 = vmatprep.mubr.bf16.mxu0 0
        %1457 = vmatmul.mubr.bf16.gmra.mxu0 %v522
        %v1458 = vpop.f32.mrf.mxu0
        %v1459 = vadd.f32 %v1416, %v1458
        %v1460 = vpop.f32.mrf.mxu0
        %v1461 = vadd.f32 %v1418, %v1460
        %v1462 = vpop.f32.mrf.mxu0
        %v1463 = vadd.f32 %v1420, %v1462
        %v1464 = vpop.f32.mrf.mxu0
        %v1465 = vadd.f32 %v1422, %v1464
        %1466 = vdwg.mxu0
        %v1467 = vadd.f32 %v328, %v1459
        %v1468 = vadd.f32 %v329, %v1461
        %v1469 = vadd.f32 %v330, %v1463
        %v1470 = vadd.f32 %v331, %v1465
        %1471 = vst [vmem:[#allocation2] sm:$0xff] %v1467
        %1472 = vst [vmem:[#allocation2 + $0x8] sm:$0xff] %v1468
        %1473 = vst [vmem:[#allocation2 + $0x10] sm:$0xff] %v1469
        %1474 = vst [vmem:[#allocation2 + $0x18] sm:$0xff] %v1470
        %p1475 = scmp.eq.s32.totalorder %s21, 1
        // Predicated region
        $region63: #{bbb_alexnet_forward.14} parent=53 // pred_check
          %p1476 = pneg %p1475
        $region64: #{bbb_alexnet_forward.14} parent=53 // pred_check_branch
          %1478 = sbr.rel (%p1476) target = $region66
        $region65: #{bbb_alexnet_forward.14} parent=53 // pred_region
          %v1479 = vld [vmem:[#allocation2] sm:$0xff]
          %v1480 = vld [vmem:[#allocation2 + $0x8] sm:$0xff]
          %v1481 = vld [vmem:[#allocation2 + $0x10] sm:$0xff]
          %v1482 = vld [vmem:[#allocation2 + $0x18] sm:$0xff]
          %v1483 = vld [vmem:[%s305] sm:$0x3]
          %v1485 = vlaneseq
          %v1486 = vshrl.u32 %v1485, 7
          %v1487 = vsub.s32 0, %v1486
          %v1488 = vrot.slane %v1483, %v1487
          %v1489 = vlaneseq
          %v1490 = vshrl.u32 %v1489, 7
          %v1491 = vsub.s32 1, %v1490
          %v1492 = vrot.slane %v1483, %v1491
          %v1495 = vadd.f32 %v1479, %v1488
          %v1496 = vadd.f32 %v1480, %v1492
          %v1497 = vadd.f32 %v1481, %v1488
          %v1498 = vadd.f32 %v1482, %v1492
          %vm1499 = vcmp.gt.f32.partialorder %v1495, 20.0
          %vm1500 = vcmp.gt.f32.partialorder %v1496, 20.0
          %vm1501 = vcmp.gt.f32.partialorder %v1497, 20.0
          %vm1502 = vcmp.gt.f32.partialorder %v1498, 20.0
          %v1503 = vmin.f32 %v1495, 20.0
          %v1504 = vmin.f32 %v1496, 20.0
          %v1505 = vmin.f32 %v1497, 20.0
          %v1506 = vmin.f32 %v1498, 20.0
          %v1507 = vmul.f32 %v1503, 1.442695
          %v1508 = vpow.pop %v1507
          %v1509 = vmul.f32 %v1504, 1.442695
          %v1510 = vpow.pop %v1509
          %v1511 = vmul.f32 %v1505, 1.442695
          %v1512 = vpow.pop %v1511
          %v1513 = vmul.f32 %v1506, 1.442695
          %v1514 = vpow.pop %v1513
          %v1515 = vadd.f32 %v1508, 1.0
          %v1516 = vlog2.pop %v1515
          %v1517 = vmul.f32 %v1516, 0.6931472
          %v1518 = vmul.f32 -0.5, %v1508
          %v1519 = vadd.f32 %v1518, 1.0
          %v1520 = vmul.f32 %v1519, %v1508
          %v1521 = vand.u32 2147483647, %v1508
          %vm1522 = vcmp.lt.f32.partialorder %v1521, 0.0004427343
          %v1523 = vsel %vm1522, %v1520, %v1517
          %v1524 = vadd.f32 %v1510, 1.0
          %v1525 = vlog2.pop %v1524
          %v1526 = vmul.f32 %v1525, 0.6931472
          %v1527 = vmul.f32 -0.5, %v1510
          %v1528 = vadd.f32 %v1527, 1.0
          %v1529 = vmul.f32 %v1528, %v1510
          %v1530 = vand.u32 2147483647, %v1510
          %vm1531 = vcmp.lt.f32.partialorder %v1530, 0.0004427343
          %v1532 = vsel %vm1531, %v1529, %v1526
          %v1533 = vadd.f32 %v1512, 1.0
          %v1534 = vlog2.pop %v1533
          %v1535 = vmul.f32 %v1534, 0.6931472
          %v1536 = vmul.f32 -0.5, %v1512
          %v1537 = vadd.f32 %v1536, 1.0
          %v1538 = vmul.f32 %v1537, %v1512
          %v1539 = vand.u32 2147483647, %v1512
          %vm1540 = vcmp.lt.f32.partialorder %v1539, 0.0004427343
          %v1541 = vsel %vm1540, %v1538, %v1535
          %v1542 = vadd.f32 %v1514, 1.0
          %v1543 = vlog2.pop %v1542
          %v1544 = vmul.f32 %v1543, 0.6931472
          %v1545 = vmul.f32 -0.5, %v1514
          %v1546 = vadd.f32 %v1545, 1.0
          %v1547 = vmul.f32 %v1546, %v1514
          %v1548 = vand.u32 2147483647, %v1514
          %vm1549 = vcmp.lt.f32.partialorder %v1548, 0.0004427343
          %v1550 = vsel %vm1549, %v1547, %v1544
          %v1551 = vsel %vm1499, %v1495, %v1523
          %v1552 = vsel %vm1500, %v1496, %v1532
          %v1553 = vsel %vm1501, %v1497, %v1541
          %v1554 = vsel %vm1502, %v1498, %v1550
          %v1555 = vpack.c.bf16 %v1553, %v1551
          %v1556 = vpack.c.bf16 %v1554, %v1552
          %v1559 = vunpack.c.l.b16 %v1555
          %v1560 = vunpack.c.l.b16 %v1556
          %v1561 = vunpack.c.h.b16 %v1555
          %v1562 = vunpack.c.h.b16 %v1556
          %v1563 = vpack.c.b16 %v1560, %v1559
          %v1564 = vpack.c.b16 %v1562, %v1561
          %1567 = vst [vmem:[%s316] sm:$0xff] %v1563
          %1568 = vst [vmem:[%s316 + $0x8] sm:$0xff] %v1564
        $region66: #{bbb_alexnet_forward.14} parent=53 // pred_fallthru
          _
        %s1569 = smul.u32 2, %s19
        %s1570 = smul.u32 2, %s20
        %p1571 = scmp.lt.s32.totalorder %s1569, 1
        %s1572 = scalar_select %p1571, %s1569, 1
        %p1573 = scmp.lt.s32.totalorder %s1570, 1
        %s1574 = scalar_select %p1573, %s1570, 1
        %s1575 = smul.addr %s1572, 2
        %s1576 = sadd.s32 %s1574, %s1575
        %s1577 = smul.addr %s1576, 4
        %s1578 = scalar_lea.vmem %s3, %s1577
        // Predicated region
        $region67: #{bbb_alexnet_forward.14} parent=53 // pred_check
          %p1579 = pneg %p135
        $region68: #{bbb_alexnet_forward.14} parent=53 // pred_check_branch
          %1581 = sbr.rel (%p1579) target = $region70
        $region69: #{bbb_alexnet_forward.14} parent=53 // pred_region
          %s1582 = smul.u32 2, %s19
          %s1583 = smul.u32 2, %s20
        $region70: #{bbb_alexnet_forward.14} parent=53 // pred_fallthru
          _
        // Predicated region
        $region71: #{bbb_alexnet_forward.14} parent=53 // pred_check
          %p1584 = pneg %p135
        $region72: #{bbb_alexnet_forward.14} parent=53 // pred_check_branch
          %1586 = sbr.rel (%p1584) target = $region74
        $region73: #{bbb_alexnet_forward.14} parent=53 // pred_region
          %s1587 = smul.u32 2, %s19
          %s1588 = smul.u32 2, %s20
          %p1589 = scmp.lt.s32.totalorder %s1587, 1
          %s1590 = scalar_select %p1589, %s1587, 1
          %p1591 = scmp.lt.s32.totalorder %s1588, 1
          %s1592 = scalar_select %p1591, %s1588, 1
          %s1593 = smul.addr %s1590, 2
          %s1594 = sadd.s32 %s1592, %s1593
          %s1595 = smul.addr %s1594, 4
          %s1596 = scalar_lea.vmem %s3, %s1595
        $region74: #{bbb_alexnet_forward.14} parent=53 // pred_fallthru
          _
      $region54: #{bbb_alexnet_forward.14} parent=5 // pred_fallthru
        _
      %p1597 = scmp.le.s32.totalorder 2, %s9
      // Predicated region
      $region75: #{bbb_alexnet_forward.14} parent=5 // pred_check
        %p1598 = pneg %p1597
      $region76: #{bbb_alexnet_forward.14} parent=5 // pred_check_branch
        %1600 = sbr.rel (%p1598) target = $region78
      $region77: #{bbb_alexnet_forward.14} parent=5 // pred_region
        %s1601 = ssub.s32 %s9, 2
      $region78: #{bbb_alexnet_forward.14} parent=5 // pred_fallthru
        _
    $region6: #{bbb_alexnet_forward.14} parent=1 // loop_footer
      %s13 = sadd.s32 1, %s9
    $region7: #{bbb_alexnet_forward.14} parent=1 // loop_footer_branch
      %8 = sbr.rel target = $region3
    $region8: #{bbb_alexnet_forward.14} parent=1 // loop_exit
      _

// kernel: bbb_alexnet_forward.12
$region0: #{bbb_alexnet_forward.12}
  #allocation0 [shape = 'u32[]', space=smem, size = 0x4, offset = 0x4, fixed_abs, tag = 'smem constant byte address 0x4 - core index']
  #allocation1 [shape = 'u32[144,128]{1,0:T(1,128)}', space=vmem, size = 0x12000, scoped, tag = 'internal scratch']
  #allocation2 [shape = 'f32[16,384]{1,0:T(8,128)}', space=vmem, size = 0x6000, scoped, tag = 'scratch operand']
  %s0 = inlined_call_operand.vmem [shape: bf16[16,1792], index: 0, kind: input, shape index: {}]
  %s1 = inlined_call_operand.vmem [shape: bf16[1792,384], index: 1, kind: input, shape index: {}]
  %s2 = inlined_call_operand.vmem [shape: f32[1,384], index: 2, kind: input, shape index: {}]
  %s3 = inlined_call_operand.vmem [shape: bf16[16,384], index: 3, kind: output, shape index: {}]
  %s4 = sld [smem:[#allocation0]]
  $region30: #{bbb_alexnet_forward.12} parent=0
    _
  %s6 = ssub.s32 1, %s4
  %s7 = scalar_select 0, %s6, %s4
  // Predicated region
  $region2: #{bbb_alexnet_forward.12} parent=0 // pred_check
    _
  $region3: #{bbb_alexnet_forward.12} parent=0 // pred_check_branch
    %9 = sbr.rel (0) target = $region5
  $region4: #{bbb_alexnet_forward.12} parent=0 // pred_region
    _
  $region5: #{bbb_alexnet_forward.12} parent=0 // pred_fallthru
    _
  // Predicated region
  $region6: #{bbb_alexnet_forward.12} parent=0 // pred_check
    _
  $region7: #{bbb_alexnet_forward.12} parent=0 // pred_check_branch
    %11 = sbr.rel (0) target = $region9
  $region8: #{bbb_alexnet_forward.12} parent=0 // pred_region
    _
  $region9: #{bbb_alexnet_forward.12} parent=0 // pred_fallthru
    _
  // Predicated region
  $region10: #{bbb_alexnet_forward.12} parent=0 // pred_check
    _
  $region11: #{bbb_alexnet_forward.12} parent=0 // pred_check_branch
    %13 = sbr.rel (0) target = $region13
  $region12: #{bbb_alexnet_forward.12} parent=0 // pred_region
    _
  $region13: #{bbb_alexnet_forward.12} parent=0 // pred_fallthru
    _
  %p15 = scmp.eq.s32.totalorder 0, 0
  // Predicated region
  $region14: #{bbb_alexnet_forward.12} parent=0 // pred_check
    %p16 = pneg %p15
  $region15: #{bbb_alexnet_forward.12} parent=0 // pred_check_branch
    %18 = sbr.rel (%p16) target = $region17
  $region16: #{bbb_alexnet_forward.12} parent=0 // pred_region
    %19 = vst [vmem:[#allocation2] sm:$0xff] 0.0
    %20 = vst [vmem:[#allocation2 + $0x8] sm:$0xff] 0.0
    %21 = vst [vmem:[#allocation2 + $0x10] sm:$0xff] 0.0
    %22 = vst [vmem:[#allocation2 + $0x18] sm:$0xff] 0.0
    %23 = vst [vmem:[#allocation2 + $0x20] sm:$0xff] 0.0
    %24 = vst [vmem:[#allocation2 + $0x28] sm:$0xff] 0.0
  $region17: #{bbb_alexnet_forward.12} parent=0 // pred_fallthru
    _
  %v25 = vld [vmem:[#allocation2] sm:$0xff]
  %v26 = vld [vmem:[#allocation2 + $0x8] sm:$0xff]
  %v27 = vld [vmem:[#allocation2 + $0x10] sm:$0xff]
  %v28 = vld [vmem:[#allocation2 + $0x18] sm:$0xff]
  %v29 = vld [vmem:[#allocation2 + $0x20] sm:$0xff]
  %v30 = vld [vmem:[#allocation2 + $0x28] sm:$0xff]
  %v31 = vld [vmem:[%s0] sm:$0xff]
  %v32 = vld [vmem:[%s0 + $0x8] sm:$0xff]
  %v33 = vld [vmem:[%s0 + $0x10] sm:$0xff]
  %v34 = vld [vmem:[%s0 + $0x18] sm:$0xff]
  %v35 = vld [vmem:[%s0 + $0x20] sm:$0xff]
  %v36 = vld [vmem:[%s0 + $0x28] sm:$0xff]
  %v37 = vld [vmem:[%s0 + $0x30] sm:$0xff]
  %v38 = vld [vmem:[%s0 + $0x38] sm:$0xff]
  %v39 = vld [vmem:[%s0 + $0x40] sm:$0xff]
  %v40 = vld [vmem:[%s0 + $0x48] sm:$0xff]
  %v41 = vld [vmem:[%s0 + $0x50] sm:$0xff]
  %v42 = vld [vmem:[%s0 + $0x58] sm:$0xff]
  %v43 = vld [vmem:[%s0 + $0x60] sm:$0xff]
  %v44 = vld [vmem:[%s0 + $0x68] sm:$0xff]
  %v45 = vld [vmem:[%s1] sm:$0xff]
  %v46 = vld [vmem:[%s1 + $0x8] sm:$0xf]
  %v47 = vld [vmem:[%s1 + $0xc] sm:$0xff]
  %v48 = vld [vmem:[%s1 + $0x14] sm:$0xf]
  %v49 = vld [vmem:[%s1 + $0x18] sm:$0xff]
  %v50 = vld [vmem:[%s1 + $0x20] sm:$0xf]
  %v51 = vld [vmem:[%s1 + $0x24] sm:$0xff]
  %v52 = vld [vmem:[%s1 + $0x2c] sm:$0xf]
  %v53 = vld [vmem:[%s1 + $0x30] sm:$0xff]
  %v54 = vld [vmem:[%s1 + $0x38] sm:$0xf]
  %v55 = vld [vmem:[%s1 + $0x3c] sm:$0xff]
  %v56 = vld [vmem:[%s1 + $0x44] sm:$0xf]
  %v57 = vld [vmem:[%s1 + $0x48] sm:$0xff]
  %v58 = vld [vmem:[%s1 + $0x50] sm:$0xf]
  %v59 = vld [vmem:[%s1 + $0x54] sm:$0xff]
  %v60 = vld [vmem:[%s1 + $0x5c] sm:$0xf]
  %v61 = vld [vmem:[%s1 + $0x60] sm:$0xff]
  %v62 = vld [vmem:[%s1 + $0x68] sm:$0xf]
  %v63 = vld [vmem:[%s1 + $0x6c] sm:$0xff]
  %v64 = vld [vmem:[%s1 + $0x74] sm:$0xf]
  %v65 = vld [vmem:[%s1 + $0x78] sm:$0xff]
  %v66 = vld [vmem:[%s1 + $0x80] sm:$0xf]
  %v67 = vld [vmem:[%s1 + $0x84] sm:$0xff]
  %v68 = vld [vmem:[%s1 + $0x8c] sm:$0xf]
  %v69 = vld [vmem:[%s1 + $0x90] sm:$0xff]
  %v70 = vld [vmem:[%s1 + $0x98] sm:$0xf]
  %v71 = vld [vmem:[%s1 + $0x9c] sm:$0xff]
  %v72 = vld [vmem:[%s1 + $0xa4] sm:$0xf]
  %v73 = vld [vmem:[%s1 + $0xa8] sm:$0xff]
  %v74 = vld [vmem:[%s1 + $0xb0] sm:$0xf]
  %v75 = vld [vmem:[%s1 + $0xb4] sm:$0xff]
  %v76 = vld [vmem:[%s1 + $0xbc] sm:$0xf]
  %v77 = vld [vmem:[%s1 + $0xc0] sm:$0xff]
  %v78 = vld [vmem:[%s1 + $0xc8] sm:$0xf]
  %v79 = vld [vmem:[%s1 + $0xcc] sm:$0xff]
  %v80 = vld [vmem:[%s1 + $0xd4] sm:$0xf]
  %v81 = vld [vmem:[%s1 + $0xd8] sm:$0xff]
  %v82 = vld [vmem:[%s1 + $0xe0] sm:$0xf]
  %v83 = vld [vmem:[%s1 + $0xe4] sm:$0xff]
  %v84 = vld [vmem:[%s1 + $0xec] sm:$0xf]
  %v85 = vld [vmem:[%s1 + $0xf0] sm:$0xff]
  %v86 = vld [vmem:[%s1 + $0xf8] sm:$0xf]
  %v87 = vld [vmem:[%s1 + $0xfc] sm:$0xff]
  %v88 = vld [vmem:[%s1 + $0x104] sm:$0xf]
  %v89 = vld [vmem:[%s1 + $0x108] sm:$0xff]
  %v90 = vld [vmem:[%s1 + $0x110] sm:$0xf]
  %v91 = vld [vmem:[%s1 + $0x114] sm:$0xff]
  %v92 = vld [vmem:[%s1 + $0x11c] sm:$0xf]
  %v93 = vld [vmem:[%s1 + $0x120] sm:$0xff]
  %v94 = vld [vmem:[%s1 + $0x128] sm:$0xf]
  %v95 = vld [vmem:[%s1 + $0x12c] sm:$0xff]
  %v96 = vld [vmem:[%s1 + $0x134] sm:$0xf]
  %v97 = vld [vmem:[%s1 + $0x138] sm:$0xff]
  %v98 = vld [vmem:[%s1 + $0x140] sm:$0xf]
  %v99 = vld [vmem:[%s1 + $0x144] sm:$0xff]
  %v100 = vld [vmem:[%s1 + $0x14c] sm:$0xf]
  %v101 = vld [vmem:[%s1 + $0x150] sm:$0xff]
  %v102 = vld [vmem:[%s1 + $0x158] sm:$0xf]
  %v103 = vld [vmem:[%s1 + $0x15c] sm:$0xff]
  %v104 = vld [vmem:[%s1 + $0x164] sm:$0xf]
  %v105 = vld [vmem:[%s1 + $0x168] sm:$0xff]
  %v106 = vld [vmem:[%s1 + $0x170] sm:$0xf]
  %v107 = vld [vmem:[%s1 + $0x174] sm:$0xff]
  %v108 = vld [vmem:[%s1 + $0x17c] sm:$0xf]
  %v109 = vld [vmem:[%s1 + $0x180] sm:$0xff]
  %v110 = vld [vmem:[%s1 + $0x188] sm:$0xf]
  %v111 = vld [vmem:[%s1 + $0x18c] sm:$0xff]
  %v112 = vld [vmem:[%s1 + $0x194] sm:$0xf]
  %v113 = vld [vmem:[%s1 + $0x198] sm:$0xff]
  %v114 = vld [vmem:[%s1 + $0x1a0] sm:$0xf]
  %v115 = vld [vmem:[%s1 + $0x1a4] sm:$0xff]
  %v116 = vld [vmem:[%s1 + $0x1ac] sm:$0xf]
  %v117 = vld [vmem:[%s1 + $0x1b0] sm:$0xff]
  %v118 = vld [vmem:[%s1 + $0x1b8] sm:$0xf]
  %v119 = vld [vmem:[%s1 + $0x1bc] sm:$0xff]
  %v120 = vld [vmem:[%s1 + $0x1c4] sm:$0xf]
  %v121 = vld [vmem:[%s1 + $0x1c8] sm:$0xff]
  %v122 = vld [vmem:[%s1 + $0x1d0] sm:$0xf]
  %v123 = vld [vmem:[%s1 + $0x1d4] sm:$0xff]
  %v124 = vld [vmem:[%s1 + $0x1dc] sm:$0xf]
  %v125 = vld [vmem:[%s1 + $0x1e0] sm:$0xff]
  %v126 = vld [vmem:[%s1 + $0x1e8] sm:$0xf]
  %v127 = vld [vmem:[%s1 + $0x1ec] sm:$0xff]
  %v128 = vld [vmem:[%s1 + $0x1f4] sm:$0xf]
  %v129 = vld [vmem:[%s1 + $0x1f8] sm:$0xff]
  %v130 = vld [vmem:[%s1 + $0x200] sm:$0xf]
  %v131 = vld [vmem:[%s1 + $0x204] sm:$0xff]
  %v132 = vld [vmem:[%s1 + $0x20c] sm:$0xf]
  %v133 = vld [vmem:[%s1 + $0x210] sm:$0xff]
  %v134 = vld [vmem:[%s1 + $0x218] sm:$0xf]
  %v135 = vld [vmem:[%s1 + $0x21c] sm:$0xff]
  %v136 = vld [vmem:[%s1 + $0x224] sm:$0xf]
  %v137 = vld [vmem:[%s1 + $0x228] sm:$0xff]
  %v138 = vld [vmem:[%s1 + $0x230] sm:$0xf]
  %v139 = vld [vmem:[%s1 + $0x234] sm:$0xff]
  %v140 = vld [vmem:[%s1 + $0x23c] sm:$0xf]
  %v141 = vld [vmem:[%s1 + $0x240] sm:$0xff]
  %v142 = vld [vmem:[%s1 + $0x248] sm:$0xf]
  %v143 = vld [vmem:[%s1 + $0x24c] sm:$0xff]
  %v144 = vld [vmem:[%s1 + $0x254] sm:$0xf]
  %v145 = vld [vmem:[%s1 + $0x258] sm:$0xff]
  %v146 = vld [vmem:[%s1 + $0x260] sm:$0xf]
  %v147 = vld [vmem:[%s1 + $0x264] sm:$0xff]
  %v148 = vld [vmem:[%s1 + $0x26c] sm:$0xf]
  %v149 = vld [vmem:[%s1 + $0x270] sm:$0xff]
  %v150 = vld [vmem:[%s1 + $0x278] sm:$0xf]
  %v151 = vld [vmem:[%s1 + $0x27c] sm:$0xff]
  %v152 = vld [vmem:[%s1 + $0x284] sm:$0xf]
  %v153 = vld [vmem:[%s1 + $0x288] sm:$0xff]
  %v154 = vld [vmem:[%s1 + $0x290] sm:$0xf]
  %v155 = vld [vmem:[%s1 + $0x294] sm:$0xff]
  %v156 = vld [vmem:[%s1 + $0x29c] sm:$0xf]
  %v157 = vld [vmem:[%s1 + $0x2a0] sm:$0xff]
  %v158 = vld [vmem:[%s1 + $0x2a8] sm:$0xf]
  %v159 = vld [vmem:[%s1 + $0x2ac] sm:$0xff]
  %v160 = vld [vmem:[%s1 + $0x2b4] sm:$0xf]
  %v161 = vld [vmem:[%s1 + $0x2b8] sm:$0xff]
  %v162 = vld [vmem:[%s1 + $0x2c0] sm:$0xf]
  %v163 = vld [vmem:[%s1 + $0x2c4] sm:$0xff]
  %v164 = vld [vmem:[%s1 + $0x2cc] sm:$0xf]
  %v165 = vld [vmem:[%s1 + $0x2d0] sm:$0xff]
  %v166 = vld [vmem:[%s1 + $0x2d8] sm:$0xf]
  %v167 = vld [vmem:[%s1 + $0x2dc] sm:$0xff]
  %v168 = vld [vmem:[%s1 + $0x2e4] sm:$0xf]
  %v169 = vld [vmem:[%s1 + $0x2e8] sm:$0xff]
  %v170 = vld [vmem:[%s1 + $0x2f0] sm:$0xf]
  %v171 = vld [vmem:[%s1 + $0x2f4] sm:$0xff]
  %v172 = vld [vmem:[%s1 + $0x2fc] sm:$0xf]
  %v173 = vld [vmem:[%s1 + $0x300] sm:$0xff]
  %v174 = vld [vmem:[%s1 + $0x308] sm:$0xf]
  %v175 = vld [vmem:[%s1 + $0x30c] sm:$0xff]
  %v176 = vld [vmem:[%s1 + $0x314] sm:$0xf]
  %v177 = vld [vmem:[%s1 + $0x318] sm:$0xff]
  %v178 = vld [vmem:[%s1 + $0x320] sm:$0xf]
  %v179 = vld [vmem:[%s1 + $0x324] sm:$0xff]
  %v180 = vld [vmem:[%s1 + $0x32c] sm:$0xf]
  %v181 = vld [vmem:[%s1 + $0x330] sm:$0xff]
  %v182 = vld [vmem:[%s1 + $0x338] sm:$0xf]
  %v183 = vld [vmem:[%s1 + $0x33c] sm:$0xff]
  %v184 = vld [vmem:[%s1 + $0x344] sm:$0xf]
  %v185 = vld [vmem:[%s1 + $0x348] sm:$0xff]
  %v186 = vld [vmem:[%s1 + $0x350] sm:$0xf]
  %v187 = vld [vmem:[%s1 + $0x354] sm:$0xff]
  %v188 = vld [vmem:[%s1 + $0x35c] sm:$0xf]
  %v189 = vld [vmem:[%s1 + $0x360] sm:$0xff]
  %v190 = vld [vmem:[%s1 + $0x368] sm:$0xf]
  %v191 = vld [vmem:[%s1 + $0x36c] sm:$0xff]
  %v192 = vld [vmem:[%s1 + $0x374] sm:$0xf]
  %v193 = vld [vmem:[%s1 + $0x378] sm:$0xff]
  %v194 = vld [vmem:[%s1 + $0x380] sm:$0xf]
  %v195 = vld [vmem:[%s1 + $0x384] sm:$0xff]
  %v196 = vld [vmem:[%s1 + $0x38c] sm:$0xf]
  %v197 = vld [vmem:[%s1 + $0x390] sm:$0xff]
  %v198 = vld [vmem:[%s1 + $0x398] sm:$0xf]
  %v199 = vld [vmem:[%s1 + $0x39c] sm:$0xff]
  %v200 = vld [vmem:[%s1 + $0x3a4] sm:$0xf]
  %v201 = vld [vmem:[%s1 + $0x3a8] sm:$0xff]
  %v202 = vld [vmem:[%s1 + $0x3b0] sm:$0xf]
  %v203 = vld [vmem:[%s1 + $0x3b4] sm:$0xff]
  %v204 = vld [vmem:[%s1 + $0x3bc] sm:$0xf]
  %v205 = vld [vmem:[%s1 + $0x3c0] sm:$0xff]
  %v206 = vld [vmem:[%s1 + $0x3c8] sm:$0xf]
  %v207 = vld [vmem:[%s1 + $0x3cc] sm:$0xff]
  %v208 = vld [vmem:[%s1 + $0x3d4] sm:$0xf]
  %v209 = vld [vmem:[%s1 + $0x3d8] sm:$0xff]
  %v210 = vld [vmem:[%s1 + $0x3e0] sm:$0xf]
  %v211 = vld [vmem:[%s1 + $0x3e4] sm:$0xff]
  %v212 = vld [vmem:[%s1 + $0x3ec] sm:$0xf]
  %v213 = vld [vmem:[%s1 + $0x3f0] sm:$0xff]
  %v214 = vld [vmem:[%s1 + $0x3f8] sm:$0xf]
  %v215 = vld [vmem:[%s1 + $0x3fc] sm:$0xff]
  %v216 = vld [vmem:[%s1 + $0x404] sm:$0xf]
  %v217 = vld [vmem:[%s1 + $0x408] sm:$0xff]
  %v218 = vld [vmem:[%s1 + $0x410] sm:$0xf]
  %v219 = vld [vmem:[%s1 + $0x414] sm:$0xff]
  %v220 = vld [vmem:[%s1 + $0x41c] sm:$0xf]
  %v221 = vld [vmem:[%s1 + $0x420] sm:$0xff]
  %v222 = vld [vmem:[%s1 + $0x428] sm:$0xf]
  %v223 = vld [vmem:[%s1 + $0x42c] sm:$0xff]
  %v224 = vld [vmem:[%s1 + $0x434] sm:$0xf]
  %v225 = vld [vmem:[%s1 + $0x438] sm:$0xff]
  %v226 = vld [vmem:[%s1 + $0x440] sm:$0xf]
  %v227 = vld [vmem:[%s1 + $0x444] sm:$0xff]
  %v228 = vld [vmem:[%s1 + $0x44c] sm:$0xf]
  %v229 = vld [vmem:[%s1 + $0x450] sm:$0xff]
  %v230 = vld [vmem:[%s1 + $0x458] sm:$0xf]
  %v231 = vld [vmem:[%s1 + $0x45c] sm:$0xff]
  %v232 = vld [vmem:[%s1 + $0x464] sm:$0xf]
  %v233 = vld [vmem:[%s1 + $0x468] sm:$0xff]
  %v234 = vld [vmem:[%s1 + $0x470] sm:$0xf]
  %v235 = vld [vmem:[%s1 + $0x474] sm:$0xff]
  %v236 = vld [vmem:[%s1 + $0x47c] sm:$0xf]
  %v237 = vld [vmem:[%s1 + $0x480] sm:$0xff]
  %v238 = vld [vmem:[%s1 + $0x488] sm:$0xf]
  %v239 = vld [vmem:[%s1 + $0x48c] sm:$0xff]
  %v240 = vld [vmem:[%s1 + $0x494] sm:$0xf]
  %v241 = vld [vmem:[%s1 + $0x498] sm:$0xff]
  %v242 = vld [vmem:[%s1 + $0x4a0] sm:$0xf]
  %v243 = vld [vmem:[%s1 + $0x4a4] sm:$0xff]
  %v244 = vld [vmem:[%s1 + $0x4ac] sm:$0xf]
  %v245 = vld [vmem:[%s1 + $0x4b0] sm:$0xff]
  %v246 = vld [vmem:[%s1 + $0x4b8] sm:$0xf]
  %v247 = vld [vmem:[%s1 + $0x4bc] sm:$0xff]
  %v248 = vld [vmem:[%s1 + $0x4c4] sm:$0xf]
  %v249 = vld [vmem:[%s1 + $0x4c8] sm:$0xff]
  %v250 = vld [vmem:[%s1 + $0x4d0] sm:$0xf]
  %v251 = vld [vmem:[%s1 + $0x4d4] sm:$0xff]
  %v252 = vld [vmem:[%s1 + $0x4dc] sm:$0xf]
  %v253 = vld [vmem:[%s1 + $0x4e0] sm:$0xff]
  %v254 = vld [vmem:[%s1 + $0x4e8] sm:$0xf]
  %v255 = vld [vmem:[%s1 + $0x4ec] sm:$0xff]
  %v256 = vld [vmem:[%s1 + $0x4f4] sm:$0xf]
  %v257 = vld [vmem:[%s1 + $0x4f8] sm:$0xff]
  %v258 = vld [vmem:[%s1 + $0x500] sm:$0xf]
  %v259 = vld [vmem:[%s1 + $0x504] sm:$0xff]
  %v260 = vld [vmem:[%s1 + $0x50c] sm:$0xf]
  %v261 = vld [vmem:[%s1 + $0x510] sm:$0xff]
  %v262 = vld [vmem:[%s1 + $0x518] sm:$0xf]
  %v263 = vld [vmem:[%s1 + $0x51c] sm:$0xff]
  %v264 = vld [vmem:[%s1 + $0x524] sm:$0xf]
  %v265 = vld [vmem:[%s1 + $0x528] sm:$0xff]
  %v266 = vld [vmem:[%s1 + $0x530] sm:$0xf]
  %v267 = vld [vmem:[%s1 + $0x534] sm:$0xff]
  %v268 = vld [vmem:[%s1 + $0x53c] sm:$0xf]
  %v269 = vld [vmem:[%s1 + $0x540] sm:$0xff]
  %v270 = vld [vmem:[%s1 + $0x548] sm:$0xf]
  %v271 = vld [vmem:[%s1 + $0x54c] sm:$0xff]
  %v272 = vld [vmem:[%s1 + $0x554] sm:$0xf]
  %v273 = vld [vmem:[%s1 + $0x558] sm:$0xff]
  %v274 = vld [vmem:[%s1 + $0x560] sm:$0xf]
  %v275 = vld [vmem:[%s1 + $0x564] sm:$0xff]
  %v276 = vld [vmem:[%s1 + $0x56c] sm:$0xf]
  %v277 = vld [vmem:[%s1 + $0x570] sm:$0xff]
  %v278 = vld [vmem:[%s1 + $0x578] sm:$0xf]
  %v279 = vld [vmem:[%s1 + $0x57c] sm:$0xff]
  %v280 = vld [vmem:[%s1 + $0x584] sm:$0xf]
  %v281 = vld [vmem:[%s1 + $0x588] sm:$0xff]
  %v282 = vld [vmem:[%s1 + $0x590] sm:$0xf]
  %v283 = vld [vmem:[%s1 + $0x594] sm:$0xff]
  %v284 = vld [vmem:[%s1 + $0x59c] sm:$0xf]
  %v285 = vld [vmem:[%s1 + $0x5a0] sm:$0xff]
  %v286 = vld [vmem:[%s1 + $0x5a8] sm:$0xf]
  %v287 = vld [vmem:[%s1 + $0x5ac] sm:$0xff]
  %v288 = vld [vmem:[%s1 + $0x5b4] sm:$0xf]
  %v289 = vld [vmem:[%s1 + $0x5b8] sm:$0xff]
  %v290 = vld [vmem:[%s1 + $0x5c0] sm:$0xf]
  %v291 = vld [vmem:[%s1 + $0x5c4] sm:$0xff]
  %v292 = vld [vmem:[%s1 + $0x5cc] sm:$0xf]
  %v293 = vld [vmem:[%s1 + $0x5d0] sm:$0xff]
  %v294 = vld [vmem:[%s1 + $0x5d8] sm:$0xf]
  %v295 = vld [vmem:[%s1 + $0x5dc] sm:$0xff]
  %v296 = vld [vmem:[%s1 + $0x5e4] sm:$0xf]
  %v297 = vld [vmem:[%s1 + $0x5e8] sm:$0xff]
  %v298 = vld [vmem:[%s1 + $0x5f0] sm:$0xf]
  %v299 = vld [vmem:[%s1 + $0x5f4] sm:$0xff]
  %v300 = vld [vmem:[%s1 + $0x5fc] sm:$0xf]
  %v301 = vld [vmem:[%s1 + $0x600] sm:$0xff]
  %v302 = vld [vmem:[%s1 + $0x608] sm:$0xf]
  %v303 = vld [vmem:[%s1 + $0x60c] sm:$0xff]
  %v304 = vld [vmem:[%s1 + $0x614] sm:$0xf]
  %v305 = vld [vmem:[%s1 + $0x618] sm:$0xff]
  %v306 = vld [vmem:[%s1 + $0x620] sm:$0xf]
  %v307 = vld [vmem:[%s1 + $0x624] sm:$0xff]
  %v308 = vld [vmem:[%s1 + $0x62c] sm:$0xf]
  %v309 = vld [vmem:[%s1 + $0x630] sm:$0xff]
  %v310 = vld [vmem:[%s1 + $0x638] sm:$0xf]
  %v311 = vld [vmem:[%s1 + $0x63c] sm:$0xff]
  %v312 = vld [vmem:[%s1 + $0x644] sm:$0xf]
  %v313 = vld [vmem:[%s1 + $0x648] sm:$0xff]
  %v314 = vld [vmem:[%s1 + $0x650] sm:$0xf]
  %v315 = vld [vmem:[%s1 + $0x654] sm:$0xff]
  %v316 = vld [vmem:[%s1 + $0x65c] sm:$0xf]
  %v317 = vld [vmem:[%s1 + $0x660] sm:$0xff]
  %v318 = vld [vmem:[%s1 + $0x668] sm:$0xf]
  %v319 = vld [vmem:[%s1 + $0x66c] sm:$0xff]
  %v320 = vld [vmem:[%s1 + $0x674] sm:$0xf]
  %v321 = vld [vmem:[%s1 + $0x678] sm:$0xff]
  %v322 = vld [vmem:[%s1 + $0x680] sm:$0xf]
  %v323 = vld [vmem:[%s1 + $0x684] sm:$0xff]
  %v324 = vld [vmem:[%s1 + $0x68c] sm:$0xf]
  %v325 = vld [vmem:[%s1 + $0x690] sm:$0xff]
  %v326 = vld [vmem:[%s1 + $0x698] sm:$0xf]
  %v327 = vld [vmem:[%s1 + $0x69c] sm:$0xff]
  %v328 = vld [vmem:[%s1 + $0x6a4] sm:$0xf]
  %v329 = vld [vmem:[%s1 + $0x6a8] sm:$0xff]
  %v330 = vld [vmem:[%s1 + $0x6b0] sm:$0xf]
  %v331 = vld [vmem:[%s1 + $0x6b4] sm:$0xff]
  %v332 = vld [vmem:[%s1 + $0x6bc] sm:$0xf]
  %v333 = vld [vmem:[%s1 + $0x6c0] sm:$0xff]
  %v334 = vld [vmem:[%s1 + $0x6c8] sm:$0xf]
  %v335 = vld [vmem:[%s1 + $0x6cc] sm:$0xff]
  %v336 = vld [vmem:[%s1 + $0x6d4] sm:$0xf]
  %v337 = vld [vmem:[%s1 + $0x6d8] sm:$0xff]
  %v338 = vld [vmem:[%s1 + $0x6e0] sm:$0xf]
  %v339 = vld [vmem:[%s1 + $0x6e4] sm:$0xff]
  %v340 = vld [vmem:[%s1 + $0x6ec] sm:$0xf]
  %v341 = vld [vmem:[%s1 + $0x6f0] sm:$0xff]
  %v342 = vld [vmem:[%s1 + $0x6f8] sm:$0xf]
  %v343 = vld [vmem:[%s1 + $0x6fc] sm:$0xff]
  %v344 = vld [vmem:[%s1 + $0x704] sm:$0xf]
  %v345 = vld [vmem:[%s1 + $0x708] sm:$0xff]
  %v346 = vld [vmem:[%s1 + $0x710] sm:$0xf]
  %v347 = vld [vmem:[%s1 + $0x714] sm:$0xff]
  %v348 = vld [vmem:[%s1 + $0x71c] sm:$0xf]
  %v349 = vld [vmem:[%s1 + $0x720] sm:$0xff]
  %v350 = vld [vmem:[%s1 + $0x728] sm:$0xf]
  %v351 = vld [vmem:[%s1 + $0x72c] sm:$0xff]
  %v352 = vld [vmem:[%s1 + $0x734] sm:$0xf]
  %v353 = vld [vmem:[%s1 + $0x738] sm:$0xff]
  %v354 = vld [vmem:[%s1 + $0x740] sm:$0xf]
  %v355 = vld [vmem:[%s1 + $0x744] sm:$0xff]
  %v356 = vld [vmem:[%s1 + $0x74c] sm:$0xf]
  %v357 = vld [vmem:[%s1 + $0x750] sm:$0xff]
  %v358 = vld [vmem:[%s1 + $0x758] sm:$0xf]
  %v359 = vld [vmem:[%s1 + $0x75c] sm:$0xff]
  %v360 = vld [vmem:[%s1 + $0x764] sm:$0xf]
  %v361 = vld [vmem:[%s1 + $0x768] sm:$0xff]
  %v362 = vld [vmem:[%s1 + $0x770] sm:$0xf]
  %v363 = vld [vmem:[%s1 + $0x774] sm:$0xff]
  %v364 = vld [vmem:[%s1 + $0x77c] sm:$0xf]
  %v365 = vld [vmem:[%s1 + $0x780] sm:$0xff]
  %v366 = vld [vmem:[%s1 + $0x788] sm:$0xf]
  %v367 = vld [vmem:[%s1 + $0x78c] sm:$0xff]
  %v368 = vld [vmem:[%s1 + $0x794] sm:$0xf]
  %v369 = vld [vmem:[%s1 + $0x798] sm:$0xff]
  %v370 = vld [vmem:[%s1 + $0x7a0] sm:$0xf]
  %v371 = vld [vmem:[%s1 + $0x7a4] sm:$0xff]
  %v372 = vld [vmem:[%s1 + $0x7ac] sm:$0xf]
  %v373 = vld [vmem:[%s1 + $0x7b0] sm:$0xff]
  %v374 = vld [vmem:[%s1 + $0x7b8] sm:$0xf]
  %v375 = vld [vmem:[%s1 + $0x7bc] sm:$0xff]
  %v376 = vld [vmem:[%s1 + $0x7c4] sm:$0xf]
  %v377 = vld [vmem:[%s1 + $0x7c8] sm:$0xff]
  %v378 = vld [vmem:[%s1 + $0x7d0] sm:$0xf]
  %v379 = vld [vmem:[%s1 + $0x7d4] sm:$0xff]
  %v380 = vld [vmem:[%s1 + $0x7dc] sm:$0xf]
  %v381 = vld [vmem:[%s1 + $0x7e0] sm:$0xff]
  %v382 = vld [vmem:[%s1 + $0x7e8] sm:$0xf]
  %v383 = vld [vmem:[%s1 + $0x7ec] sm:$0xff]
  %v384 = vld [vmem:[%s1 + $0x7f4] sm:$0xf]
  %v385 = vld [vmem:[%s1 + $0x7f8] sm:$0xff]
  %v386 = vld [vmem:[%s1 + $0x800] sm:$0xf]
  %v387 = vld [vmem:[%s1 + $0x804] sm:$0xff]
  %v388 = vld [vmem:[%s1 + $0x80c] sm:$0xf]
  %v389 = vld [vmem:[%s1 + $0x810] sm:$0xff]
  %v390 = vld [vmem:[%s1 + $0x818] sm:$0xf]
  %v391 = vld [vmem:[%s1 + $0x81c] sm:$0xff]
  %v392 = vld [vmem:[%s1 + $0x824] sm:$0xf]
  %v393 = vld [vmem:[%s1 + $0x828] sm:$0xff]
  %v394 = vld [vmem:[%s1 + $0x830] sm:$0xf]
  %v395 = vld [vmem:[%s1 + $0x834] sm:$0xff]
  %v396 = vld [vmem:[%s1 + $0x83c] sm:$0xf]
  %v397 = vld [vmem:[%s1 + $0x840] sm:$0xff]
  %v398 = vld [vmem:[%s1 + $0x848] sm:$0xf]
  %v399 = vld [vmem:[%s1 + $0x84c] sm:$0xff]
  %v400 = vld [vmem:[%s1 + $0x854] sm:$0xf]
  %v401 = vld [vmem:[%s1 + $0x858] sm:$0xff]
  %v402 = vld [vmem:[%s1 + $0x860] sm:$0xf]
  %v403 = vld [vmem:[%s1 + $0x864] sm:$0xff]
  %v404 = vld [vmem:[%s1 + $0x86c] sm:$0xf]
  %v405 = vld [vmem:[%s1 + $0x870] sm:$0xff]
  %v406 = vld [vmem:[%s1 + $0x878] sm:$0xf]
  %v407 = vld [vmem:[%s1 + $0x87c] sm:$0xff]
  %v408 = vld [vmem:[%s1 + $0x884] sm:$0xf]
  %v409 = vld [vmem:[%s1 + $0x888] sm:$0xff]
  %v410 = vld [vmem:[%s1 + $0x890] sm:$0xf]
  %v411 = vld [vmem:[%s1 + $0x894] sm:$0xff]
  %v412 = vld [vmem:[%s1 + $0x89c] sm:$0xf]
  %v413 = vld [vmem:[%s1 + $0x8a0] sm:$0xff]
  %v414 = vld [vmem:[%s1 + $0x8a8] sm:$0xf]
  %v415 = vld [vmem:[%s1 + $0x8ac] sm:$0xff]
  %v416 = vld [vmem:[%s1 + $0x8b4] sm:$0xf]
  %v417 = vld [vmem:[%s1 + $0x8b8] sm:$0xff]
  %v418 = vld [vmem:[%s1 + $0x8c0] sm:$0xf]
  %v419 = vld [vmem:[%s1 + $0x8c4] sm:$0xff]
  %v420 = vld [vmem:[%s1 + $0x8cc] sm:$0xf]
  %v421 = vld [vmem:[%s1 + $0x8d0] sm:$0xff]
  %v422 = vld [vmem:[%s1 + $0x8d8] sm:$0xf]
  %v423 = vld [vmem:[%s1 + $0x8dc] sm:$0xff]
  %v424 = vld [vmem:[%s1 + $0x8e4] sm:$0xf]
  %v425 = vld [vmem:[%s1 + $0x8e8] sm:$0xff]
  %v426 = vld [vmem:[%s1 + $0x8f0] sm:$0xf]
  %v427 = vld [vmem:[%s1 + $0x8f4] sm:$0xff]
  %v428 = vld [vmem:[%s1 + $0x8fc] sm:$0xf]
  %v429 = vld [vmem:[%s1 + $0x900] sm:$0xff]
  %v430 = vld [vmem:[%s1 + $0x908] sm:$0xf]
  %v431 = vld [vmem:[%s1 + $0x90c] sm:$0xff]
  %v432 = vld [vmem:[%s1 + $0x914] sm:$0xf]
  %v433 = vld [vmem:[%s1 + $0x918] sm:$0xff]
  %v434 = vld [vmem:[%s1 + $0x920] sm:$0xf]
  %v435 = vld [vmem:[%s1 + $0x924] sm:$0xff]
  %v436 = vld [vmem:[%s1 + $0x92c] sm:$0xf]
  %v437 = vld [vmem:[%s1 + $0x930] sm:$0xff]
  %v438 = vld [vmem:[%s1 + $0x938] sm:$0xf]
  %v439 = vld [vmem:[%s1 + $0x93c] sm:$0xff]
  %v440 = vld [vmem:[%s1 + $0x944] sm:$0xf]
  %v441 = vld [vmem:[%s1 + $0x948] sm:$0xff]
  %v442 = vld [vmem:[%s1 + $0x950] sm:$0xf]
  %v443 = vld [vmem:[%s1 + $0x954] sm:$0xff]
  %v444 = vld [vmem:[%s1 + $0x95c] sm:$0xf]
  %v445 = vld [vmem:[%s1 + $0x960] sm:$0xff]
  %v446 = vld [vmem:[%s1 + $0x968] sm:$0xf]
  %v447 = vld [vmem:[%s1 + $0x96c] sm:$0xff]
  %v448 = vld [vmem:[%s1 + $0x974] sm:$0xf]
  %v449 = vld [vmem:[%s1 + $0x978] sm:$0xff]
  %v450 = vld [vmem:[%s1 + $0x980] sm:$0xf]
  %v451 = vld [vmem:[%s1 + $0x984] sm:$0xff]
  %v452 = vld [vmem:[%s1 + $0x98c] sm:$0xf]
  %v453 = vld [vmem:[%s1 + $0x990] sm:$0xff]
  %v454 = vld [vmem:[%s1 + $0x998] sm:$0xf]
  %v455 = vld [vmem:[%s1 + $0x99c] sm:$0xff]
  %v456 = vld [vmem:[%s1 + $0x9a4] sm:$0xf]
  %v457 = vld [vmem:[%s1 + $0x9a8] sm:$0xff]
  %v458 = vld [vmem:[%s1 + $0x9b0] sm:$0xf]
  %v459 = vld [vmem:[%s1 + $0x9b4] sm:$0xff]
  %v460 = vld [vmem:[%s1 + $0x9bc] sm:$0xf]
  %v461 = vld [vmem:[%s1 + $0x9c0] sm:$0xff]
  %v462 = vld [vmem:[%s1 + $0x9c8] sm:$0xf]
  %v463 = vld [vmem:[%s1 + $0x9cc] sm:$0xff]
  %v464 = vld [vmem:[%s1 + $0x9d4] sm:$0xf]
  %v465 = vld [vmem:[%s1 + $0x9d8] sm:$0xff]
  %v466 = vld [vmem:[%s1 + $0x9e0] sm:$0xf]
  %v467 = vld [vmem:[%s1 + $0x9e4] sm:$0xff]
  %v468 = vld [vmem:[%s1 + $0x9ec] sm:$0xf]
  %v469 = vld [vmem:[%s1 + $0x9f0] sm:$0xff]
  %v470 = vld [vmem:[%s1 + $0x9f8] sm:$0xf]
  %v471 = vld [vmem:[%s1 + $0x9fc] sm:$0xff]
  %v472 = vld [vmem:[%s1 + $0xa04] sm:$0xf]
  %v473 = vld [vmem:[%s1 + $0xa08] sm:$0xff]
  %v474 = vld [vmem:[%s1 + $0xa10] sm:$0xf]
  %v475 = vld [vmem:[%s1 + $0xa14] sm:$0xff]
  %v476 = vld [vmem:[%s1 + $0xa1c] sm:$0xf]
  %v477 = vld [vmem:[%s1 + $0xa20] sm:$0xff]
  %v478 = vld [vmem:[%s1 + $0xa28] sm:$0xf]
  %v479 = vld [vmem:[%s1 + $0xa2c] sm:$0xff]
  %v480 = vld [vmem:[%s1 + $0xa34] sm:$0xf]
  %v481 = vld [vmem:[%s1 + $0xa38] sm:$0xff]
  %v482 = vld [vmem:[%s1 + $0xa40] sm:$0xf]
  %v483 = vld [vmem:[%s1 + $0xa44] sm:$0xff]
  %v484 = vld [vmem:[%s1 + $0xa4c] sm:$0xf]
  %v485 = vld [vmem:[%s1 + $0xa50] sm:$0xff]
  %v486 = vld [vmem:[%s1 + $0xa58] sm:$0xf]
  %v487 = vld [vmem:[%s1 + $0xa5c] sm:$0xff]
  %v488 = vld [vmem:[%s1 + $0xa64] sm:$0xf]
  %v489 = vld [vmem:[%s1 + $0xa68] sm:$0xff]
  %v490 = vld [vmem:[%s1 + $0xa70] sm:$0xf]
  %v491 = vld [vmem:[%s1 + $0xa74] sm:$0xff]
  %v492 = vld [vmem:[%s1 + $0xa7c] sm:$0xf]
  %v507 = vunpack.c.l.b16 %v31
  %v508 = vunpack.c.h.b16 %v31
  %v509 = vunpack.c.l.b16 %v32
  %v510 = vunpack.c.h.b16 %v32
  %v511 = vunpack.c.l.b16 %v33
  %v512 = vunpack.c.h.b16 %v33
  %v513 = vunpack.c.l.b16 %v34
  %v514 = vunpack.c.h.b16 %v34
  %v515 = vunpack.c.l.b16 %v35
  %v516 = vunpack.c.h.b16 %v35
  %v517 = vunpack.c.l.b16 %v36
  %v518 = vunpack.c.h.b16 %v36
  %v519 = vunpack.c.l.b16 %v37
  %v520 = vunpack.c.h.b16 %v37
  %v521 = vunpack.c.l.b16 %v38
  %v522 = vunpack.c.h.b16 %v38
  %v523 = vunpack.c.l.b16 %v39
  %v524 = vunpack.c.h.b16 %v39
  %v525 = vunpack.c.l.b16 %v40
  %v526 = vunpack.c.h.b16 %v40
  %v527 = vunpack.c.l.b16 %v41
  %v528 = vunpack.c.h.b16 %v41
  %v529 = vunpack.c.l.b16 %v42
  %v530 = vunpack.c.h.b16 %v42
  %v531 = vunpack.c.l.b16 %v43
  %v532 = vunpack.c.h.b16 %v43
  %v533 = vunpack.c.l.b16 %v44
  %v534 = vunpack.c.h.b16 %v44
  %v535 = vpack.c.b16 %v521, %v507
  %v536 = vpack.c.b16 %v522, %v508
  %v537 = vpack.c.b16 %v523, %v509
  %v538 = vpack.c.b16 %v524, %v510
  %v539 = vpack.c.b16 %v525, %v511
  %v540 = vpack.c.b16 %v526, %v512
  %v541 = vpack.c.b16 %v527, %v513
  %v542 = vpack.c.b16 %v528, %v514
  %v543 = vpack.c.b16 %v529, %v515
  %v544 = vpack.c.b16 %v530, %v516
  %v545 = vpack.c.b16 %v531, %v517
  %v546 = vpack.c.b16 %v532, %v518
  %v547 = vpack.c.b16 %v533, %v519
  %v548 = vpack.c.b16 %v534, %v520
  %v1011 = vunpack.c.l.b16 %v45
  %v1012 = vunpack.c.h.b16 %v45
  %v1013 = vunpack.c.l.b16 %v46
  %v1014 = vunpack.c.l.b16 %v47
  %v1015 = vunpack.c.h.b16 %v47
  %v1016 = vunpack.c.l.b16 %v48
  %v1017 = vunpack.c.l.b16 %v49
  %v1018 = vunpack.c.h.b16 %v49
  %v1019 = vunpack.c.l.b16 %v50
  %v1020 = vunpack.c.l.b16 %v51
  %v1021 = vunpack.c.h.b16 %v51
  %v1022 = vunpack.c.l.b16 %v52
  %v1023 = vunpack.c.l.b16 %v53
  %v1024 = vunpack.c.h.b16 %v53
  %v1025 = vunpack.c.l.b16 %v54
  %v1026 = vunpack.c.l.b16 %v55
  %v1027 = vunpack.c.h.b16 %v55
  %v1028 = vunpack.c.l.b16 %v56
  %v1029 = vunpack.c.l.b16 %v57
  %v1030 = vunpack.c.h.b16 %v57
  %v1031 = vunpack.c.l.b16 %v58
  %v1032 = vunpack.c.l.b16 %v59
  %v1033 = vunpack.c.h.b16 %v59
  %v1034 = vunpack.c.l.b16 %v60
  %v1035 = vunpack.c.l.b16 %v61
  %v1036 = vunpack.c.h.b16 %v61
  %v1037 = vunpack.c.l.b16 %v62
  %v1038 = vunpack.c.l.b16 %v63
  %v1039 = vunpack.c.h.b16 %v63
  %v1040 = vunpack.c.l.b16 %v64
  %v1041 = vunpack.c.l.b16 %v65
  %v1042 = vunpack.c.h.b16 %v65
  %v1043 = vunpack.c.l.b16 %v66
  %v1044 = vunpack.c.l.b16 %v67
  %v1045 = vunpack.c.h.b16 %v67
  %v1046 = vunpack.c.l.b16 %v68
  %v1047 = vunpack.c.l.b16 %v69
  %v1048 = vunpack.c.h.b16 %v69
  %v1049 = vunpack.c.l.b16 %v70
  %v1050 = vunpack.c.l.b16 %v71
  %v1051 = vunpack.c.h.b16 %v71
  %v1052 = vunpack.c.l.b16 %v72
  %v1053 = vunpack.c.l.b16 %v73
  %v1054 = vunpack.c.h.b16 %v73
  %v1055 = vunpack.c.l.b16 %v74
  %v1056 = vunpack.c.l.b16 %v75
  %v1057 = vunpack.c.h.b16 %v75
  %v1058 = vunpack.c.l.b16 %v76
  %v1059 = vunpack.c.l.b16 %v77
  %v1060 = vunpack.c.h.b16 %v77
  %v1061 = vunpack.c.l.b16 %v78
  %v1062 = vunpack.c.l.b16 %v79
  %v1063 = vunpack.c.h.b16 %v79
  %v1064 = vunpack.c.l.b16 %v80
  %v1065 = vunpack.c.l.b16 %v81
  %v1066 = vunpack.c.h.b16 %v81
  %v1067 = vunpack.c.l.b16 %v82
  %v1068 = vunpack.c.l.b16 %v83
  %v1069 = vunpack.c.h.b16 %v83
  %v1070 = vunpack.c.l.b16 %v84
  %v1071 = vunpack.c.l.b16 %v85
  %v1072 = vunpack.c.h.b16 %v85
  %v1073 = vunpack.c.l.b16 %v86
  %v1074 = vunpack.c.l.b16 %v87
  %v1075 = vunpack.c.h.b16 %v87
  %v1076 = vunpack.c.l.b16 %v88
  %v1077 = vunpack.c.l.b16 %v89
  %v1078 = vunpack.c.h.b16 %v89
  %v1079 = vunpack.c.l.b16 %v90
  %v1080 = vunpack.c.l.b16 %v91
  %v1081 = vunpack.c.h.b16 %v91
  %v1082 = vunpack.c.l.b16 %v92
  %v1083 = vunpack.c.l.b16 %v93
  %v1084 = vunpack.c.h.b16 %v93
  %v1085 = vunpack.c.l.b16 %v94
  %v1086 = vunpack.c.l.b16 %v95
  %v1087 = vunpack.c.h.b16 %v95
  %v1088 = vunpack.c.l.b16 %v96
  %v1089 = vunpack.c.l.b16 %v97
  %v1090 = vunpack.c.h.b16 %v97
  %v1091 = vunpack.c.l.b16 %v98
  %v1092 = vunpack.c.l.b16 %v99
  %v1093 = vunpack.c.h.b16 %v99
  %v1094 = vunpack.c.l.b16 %v100
  %v1095 = vunpack.c.l.b16 %v101
  %v1096 = vunpack.c.h.b16 %v101
  %v1097 = vunpack.c.l.b16 %v102
  %v1098 = vunpack.c.l.b16 %v103
  %v1099 = vunpack.c.h.b16 %v103
  %v1100 = vunpack.c.l.b16 %v104
  %v1101 = vunpack.c.l.b16 %v105
  %v1102 = vunpack.c.h.b16 %v105
  %v1103 = vunpack.c.l.b16 %v106
  %v1104 = vunpack.c.l.b16 %v107
  %v1105 = vunpack.c.h.b16 %v107
  %v1106 = vunpack.c.l.b16 %v108
  %v1107 = vunpack.c.l.b16 %v109
  %v1108 = vunpack.c.h.b16 %v109
  %v1109 = vunpack.c.l.b16 %v110
  %v1110 = vunpack.c.l.b16 %v111
  %v1111 = vunpack.c.h.b16 %v111
  %v1112 = vunpack.c.l.b16 %v112
  %v1113 = vunpack.c.l.b16 %v113
  %v1114 = vunpack.c.h.b16 %v113
  %v1115 = vunpack.c.l.b16 %v114
  %v1116 = vunpack.c.l.b16 %v115
  %v1117 = vunpack.c.h.b16 %v115
  %v1118 = vunpack.c.l.b16 %v116
  %v1119 = vunpack.c.l.b16 %v117
  %v1120 = vunpack.c.h.b16 %v117
  %v1121 = vunpack.c.l.b16 %v118
  %v1122 = vunpack.c.l.b16 %v119
  %v1123 = vunpack.c.h.b16 %v119
  %v1124 = vunpack.c.l.b16 %v120
  %v1125 = vunpack.c.l.b16 %v121
  %v1126 = vunpack.c.h.b16 %v121
  %v1127 = vunpack.c.l.b16 %v122
  %v1128 = vunpack.c.l.b16 %v123
  %v1129 = vunpack.c.h.b16 %v123
  %v1130 = vunpack.c.l.b16 %v124
  %v1131 = vunpack.c.l.b16 %v125
  %v1132 = vunpack.c.h.b16 %v125
  %v1133 = vunpack.c.l.b16 %v126
  %v1134 = vunpack.c.l.b16 %v127
  %v1135 = vunpack.c.h.b16 %v127
  %v1136 = vunpack.c.l.b16 %v128
  %v1137 = vunpack.c.l.b16 %v129
  %v1138 = vunpack.c.h.b16 %v129
  %v1139 = vunpack.c.l.b16 %v130
  %v1140 = vunpack.c.l.b16 %v131
  %v1141 = vunpack.c.h.b16 %v131
  %v1142 = vunpack.c.l.b16 %v132
  %v1143 = vunpack.c.l.b16 %v133
  %v1144 = vunpack.c.h.b16 %v133
  %v1145 = vunpack.c.l.b16 %v134
  %v1146 = vunpack.c.l.b16 %v135
  %v1147 = vunpack.c.h.b16 %v135
  %v1148 = vunpack.c.l.b16 %v136
  %v1149 = vunpack.c.l.b16 %v137
  %v1150 = vunpack.c.h.b16 %v137
  %v1151 = vunpack.c.l.b16 %v138
  %v1152 = vunpack.c.l.b16 %v139
  %v1153 = vunpack.c.h.b16 %v139
  %v1154 = vunpack.c.l.b16 %v140
  %v1155 = vunpack.c.l.b16 %v141
  %v1156 = vunpack.c.h.b16 %v141
  %v1157 = vunpack.c.l.b16 %v142
  %v1158 = vunpack.c.l.b16 %v143
  %v1159 = vunpack.c.h.b16 %v143
  %v1160 = vunpack.c.l.b16 %v144
  %v1161 = vunpack.c.l.b16 %v145
  %v1162 = vunpack.c.h.b16 %v145
  %v1163 = vunpack.c.l.b16 %v146
  %v1164 = vunpack.c.l.b16 %v147
  %v1165 = vunpack.c.h.b16 %v147
  %v1166 = vunpack.c.l.b16 %v148
  %v1167 = vunpack.c.l.b16 %v149
  %v1168 = vunpack.c.h.b16 %v149
  %v1169 = vunpack.c.l.b16 %v150
  %v1170 = vunpack.c.l.b16 %v151
  %v1171 = vunpack.c.h.b16 %v151
  %v1172 = vunpack.c.l.b16 %v152
  %v1173 = vunpack.c.l.b16 %v153
  %v1174 = vunpack.c.h.b16 %v153
  %v1175 = vunpack.c.l.b16 %v154
  %v1176 = vunpack.c.l.b16 %v155
  %v1177 = vunpack.c.h.b16 %v155
  %v1178 = vunpack.c.l.b16 %v156
  %v1179 = vunpack.c.l.b16 %v157
  %v1180 = vunpack.c.h.b16 %v157
  %v1181 = vunpack.c.l.b16 %v158
  %v1182 = vunpack.c.l.b16 %v159
  %v1183 = vunpack.c.h.b16 %v159
  %v1184 = vunpack.c.l.b16 %v160
  %v1185 = vunpack.c.l.b16 %v161
  %v1186 = vunpack.c.h.b16 %v161
  %v1187 = vunpack.c.l.b16 %v162
  %v1188 = vunpack.c.l.b16 %v163
  %v1189 = vunpack.c.h.b16 %v163
  %v1190 = vunpack.c.l.b16 %v164
  %v1191 = vunpack.c.l.b16 %v165
  %v1192 = vunpack.c.h.b16 %v165
  %v1193 = vunpack.c.l.b16 %v166
  %v1194 = vunpack.c.l.b16 %v167
  %v1195 = vunpack.c.h.b16 %v167
  %v1196 = vunpack.c.l.b16 %v168
  %v1197 = vunpack.c.l.b16 %v169
  %v1198 = vunpack.c.h.b16 %v169
  %v1199 = vunpack.c.l.b16 %v170
  %v1200 = vunpack.c.l.b16 %v171
  %v1201 = vunpack.c.h.b16 %v171
  %v1202 = vunpack.c.l.b16 %v172
  %v1203 = vunpack.c.l.b16 %v173
  %v1204 = vunpack.c.h.b16 %v173
  %v1205 = vunpack.c.l.b16 %v174
  %v1206 = vunpack.c.l.b16 %v175
  %v1207 = vunpack.c.h.b16 %v175
  %v1208 = vunpack.c.l.b16 %v176
  %v1209 = vunpack.c.l.b16 %v177
  %v1210 = vunpack.c.h.b16 %v177
  %v1211 = vunpack.c.l.b16 %v178
  %v1212 = vunpack.c.l.b16 %v179
  %v1213 = vunpack.c.h.b16 %v179
  %v1214 = vunpack.c.l.b16 %v180
  %v1215 = vunpack.c.l.b16 %v181
  %v1216 = vunpack.c.h.b16 %v181
  %v1217 = vunpack.c.l.b16 %v182
  %v1218 = vunpack.c.l.b16 %v183
  %v1219 = vunpack.c.h.b16 %v183
  %v1220 = vunpack.c.l.b16 %v184
  %v1221 = vunpack.c.l.b16 %v185
  %v1222 = vunpack.c.h.b16 %v185
  %v1223 = vunpack.c.l.b16 %v186
  %v1224 = vunpack.c.l.b16 %v187
  %v1225 = vunpack.c.h.b16 %v187
  %v1226 = vunpack.c.l.b16 %v188
  %v1227 = vunpack.c.l.b16 %v189
  %v1228 = vunpack.c.h.b16 %v189
  %v1229 = vunpack.c.l.b16 %v190
  %v1230 = vunpack.c.l.b16 %v191
  %v1231 = vunpack.c.h.b16 %v191
  %v1232 = vunpack.c.l.b16 %v192
  %v1233 = vunpack.c.l.b16 %v193
  %v1234 = vunpack.c.h.b16 %v193
  %v1235 = vunpack.c.l.b16 %v194
  %v1236 = vunpack.c.l.b16 %v195
  %v1237 = vunpack.c.h.b16 %v195
  %v1238 = vunpack.c.l.b16 %v196
  %v1239 = vunpack.c.l.b16 %v197
  %v1240 = vunpack.c.h.b16 %v197
  %v1241 = vunpack.c.l.b16 %v198
  %v1242 = vunpack.c.l.b16 %v199
  %v1243 = vunpack.c.h.b16 %v199
  %v1244 = vunpack.c.l.b16 %v200
  %v1245 = vunpack.c.l.b16 %v201
  %v1246 = vunpack.c.h.b16 %v201
  %v1247 = vunpack.c.l.b16 %v202
  %v1248 = vunpack.c.l.b16 %v203
  %v1249 = vunpack.c.h.b16 %v203
  %v1250 = vunpack.c.l.b16 %v204
  %v1251 = vunpack.c.l.b16 %v205
  %v1252 = vunpack.c.h.b16 %v205
  %v1253 = vunpack.c.l.b16 %v206
  %v1254 = vunpack.c.l.b16 %v207
  %v1255 = vunpack.c.h.b16 %v207
  %v1256 = vunpack.c.l.b16 %v208
  %v1257 = vunpack.c.l.b16 %v209
  %v1258 = vunpack.c.h.b16 %v209
  %v1259 = vunpack.c.l.b16 %v210
  %v1260 = vunpack.c.l.b16 %v211
  %v1261 = vunpack.c.h.b16 %v211
  %v1262 = vunpack.c.l.b16 %v212
  %v1263 = vunpack.c.l.b16 %v213
  %v1264 = vunpack.c.h.b16 %v213
  %v1265 = vunpack.c.l.b16 %v214
  %v1266 = vunpack.c.l.b16 %v215
  %v1267 = vunpack.c.h.b16 %v215
  %v1268 = vunpack.c.l.b16 %v216
  %v1269 = vunpack.c.l.b16 %v217
  %v1270 = vunpack.c.h.b16 %v217
  %v1271 = vunpack.c.l.b16 %v218
  %v1272 = vunpack.c.l.b16 %v219
  %v1273 = vunpack.c.h.b16 %v219
  %v1274 = vunpack.c.l.b16 %v220
  %v1275 = vunpack.c.l.b16 %v221
  %v1276 = vunpack.c.h.b16 %v221
  %v1277 = vunpack.c.l.b16 %v222
  %v1278 = vunpack.c.l.b16 %v223
  %v1279 = vunpack.c.h.b16 %v223
  %v1280 = vunpack.c.l.b16 %v224
  %v1281 = vunpack.c.l.b16 %v225
  %v1282 = vunpack.c.h.b16 %v225
  %v1283 = vunpack.c.l.b16 %v226
  %v1284 = vunpack.c.l.b16 %v227
  %v1285 = vunpack.c.h.b16 %v227
  %v1286 = vunpack.c.l.b16 %v228
  %v1287 = vunpack.c.l.b16 %v229
  %v1288 = vunpack.c.h.b16 %v229
  %v1289 = vunpack.c.l.b16 %v230
  %v1290 = vunpack.c.l.b16 %v231
  %v1291 = vunpack.c.h.b16 %v231
  %v1292 = vunpack.c.l.b16 %v232
  %v1293 = vunpack.c.l.b16 %v233
  %v1294 = vunpack.c.h.b16 %v233
  %v1295 = vunpack.c.l.b16 %v234
  %v1296 = vunpack.c.l.b16 %v235
  %v1297 = vunpack.c.h.b16 %v235
  %v1298 = vunpack.c.l.b16 %v236
  %v1299 = vunpack.c.l.b16 %v237
  %v1300 = vunpack.c.h.b16 %v237
  %v1301 = vunpack.c.l.b16 %v238
  %v1302 = vunpack.c.l.b16 %v239
  %v1303 = vunpack.c.h.b16 %v239
  %v1304 = vunpack.c.l.b16 %v240
  %v1305 = vunpack.c.l.b16 %v241
  %v1306 = vunpack.c.h.b16 %v241
  %v1307 = vunpack.c.l.b16 %v242
  %v1308 = vunpack.c.l.b16 %v243
  %v1309 = vunpack.c.h.b16 %v243
  %v1310 = vunpack.c.l.b16 %v244
  %v1311 = vunpack.c.l.b16 %v245
  %v1312 = vunpack.c.h.b16 %v245
  %v1313 = vunpack.c.l.b16 %v246
  %v1314 = vunpack.c.l.b16 %v247
  %v1315 = vunpack.c.h.b16 %v247
  %v1316 = vunpack.c.l.b16 %v248
  %v1317 = vunpack.c.l.b16 %v249
  %v1318 = vunpack.c.h.b16 %v249
  %v1319 = vunpack.c.l.b16 %v250
  %v1320 = vunpack.c.l.b16 %v251
  %v1321 = vunpack.c.h.b16 %v251
  %v1322 = vunpack.c.l.b16 %v252
  %v1323 = vunpack.c.l.b16 %v253
  %v1324 = vunpack.c.h.b16 %v253
  %v1325 = vunpack.c.l.b16 %v254
  %v1326 = vunpack.c.l.b16 %v255
  %v1327 = vunpack.c.h.b16 %v255
  %v1328 = vunpack.c.l.b16 %v256
  %v1329 = vunpack.c.l.b16 %v257
  %v1330 = vunpack.c.h.b16 %v257
  %v1331 = vunpack.c.l.b16 %v258
  %v1332 = vunpack.c.l.b16 %v259
  %v1333 = vunpack.c.h.b16 %v259
  %v1334 = vunpack.c.l.b16 %v260
  %v1335 = vunpack.c.l.b16 %v261
  %v1336 = vunpack.c.h.b16 %v261
  %v1337 = vunpack.c.l.b16 %v262
  %v1338 = vunpack.c.l.b16 %v263
  %v1339 = vunpack.c.h.b16 %v263
  %v1340 = vunpack.c.l.b16 %v264
  %v1341 = vunpack.c.l.b16 %v265
  %v1342 = vunpack.c.h.b16 %v265
  %v1343 = vunpack.c.l.b16 %v266
  %v1344 = vunpack.c.l.b16 %v267
  %v1345 = vunpack.c.h.b16 %v267
  %v1346 = vunpack.c.l.b16 %v268
  %v1347 = vunpack.c.l.b16 %v269
  %v1348 = vunpack.c.h.b16 %v269
  %v1349 = vunpack.c.l.b16 %v270
  %v1350 = vunpack.c.l.b16 %v271
  %v1351 = vunpack.c.h.b16 %v271
  %v1352 = vunpack.c.l.b16 %v272
  %v1353 = vunpack.c.l.b16 %v273
  %v1354 = vunpack.c.h.b16 %v273
  %v1355 = vunpack.c.l.b16 %v274
  %v1356 = vunpack.c.l.b16 %v275
  %v1357 = vunpack.c.h.b16 %v275
  %v1358 = vunpack.c.l.b16 %v276
  %v1359 = vunpack.c.l.b16 %v277
  %v1360 = vunpack.c.h.b16 %v277
  %v1361 = vunpack.c.l.b16 %v278
  %v1362 = vunpack.c.l.b16 %v279
  %v1363 = vunpack.c.h.b16 %v279
  %v1364 = vunpack.c.l.b16 %v280
  %v1365 = vunpack.c.l.b16 %v281
  %v1366 = vunpack.c.h.b16 %v281
  %v1367 = vunpack.c.l.b16 %v282
  %v1368 = vunpack.c.l.b16 %v283
  %v1369 = vunpack.c.h.b16 %v283
  %v1370 = vunpack.c.l.b16 %v284
  %v1371 = vunpack.c.l.b16 %v285
  %v1372 = vunpack.c.h.b16 %v285
  %v1373 = vunpack.c.l.b16 %v286
  %v1374 = vunpack.c.l.b16 %v287
  %v1375 = vunpack.c.h.b16 %v287
  %v1376 = vunpack.c.l.b16 %v288
  %v1377 = vunpack.c.l.b16 %v289
  %v1378 = vunpack.c.h.b16 %v289
  %v1379 = vunpack.c.l.b16 %v290
  %v1380 = vunpack.c.l.b16 %v291
  %v1381 = vunpack.c.h.b16 %v291
  %v1382 = vunpack.c.l.b16 %v292
  %v1383 = vunpack.c.l.b16 %v293
  %v1384 = vunpack.c.h.b16 %v293
  %v1385 = vunpack.c.l.b16 %v294
  %v1386 = vunpack.c.l.b16 %v295
  %v1387 = vunpack.c.h.b16 %v295
  %v1388 = vunpack.c.l.b16 %v296
  %v1389 = vunpack.c.l.b16 %v297
  %v1390 = vunpack.c.h.b16 %v297
  %v1391 = vunpack.c.l.b16 %v298
  %v1392 = vunpack.c.l.b16 %v299
  %v1393 = vunpack.c.h.b16 %v299
  %v1394 = vunpack.c.l.b16 %v300
  %v1395 = vunpack.c.l.b16 %v301
  %v1396 = vunpack.c.h.b16 %v301
  %v1397 = vunpack.c.l.b16 %v302
  %v1398 = vunpack.c.l.b16 %v303
  %v1399 = vunpack.c.h.b16 %v303
  %v1400 = vunpack.c.l.b16 %v304
  %v1401 = vunpack.c.l.b16 %v305
  %v1402 = vunpack.c.h.b16 %v305
  %v1403 = vunpack.c.l.b16 %v306
  %v1404 = vunpack.c.l.b16 %v307
  %v1405 = vunpack.c.h.b16 %v307
  %v1406 = vunpack.c.l.b16 %v308
  %v1407 = vunpack.c.l.b16 %v309
  %v1408 = vunpack.c.h.b16 %v309
  %v1409 = vunpack.c.l.b16 %v310
  %v1410 = vunpack.c.l.b16 %v311
  %v1411 = vunpack.c.h.b16 %v311
  %v1412 = vunpack.c.l.b16 %v312
  %v1413 = vunpack.c.l.b16 %v313
  %v1414 = vunpack.c.h.b16 %v313
  %v1415 = vunpack.c.l.b16 %v314
  %v1416 = vunpack.c.l.b16 %v315
  %v1417 = vunpack.c.h.b16 %v315
  %v1418 = vunpack.c.l.b16 %v316
  %v1419 = vunpack.c.l.b16 %v317
  %v1420 = vunpack.c.h.b16 %v317
  %v1421 = vunpack.c.l.b16 %v318
  %v1422 = vunpack.c.l.b16 %v319
  %v1423 = vunpack.c.h.b16 %v319
  %v1424 = vunpack.c.l.b16 %v320
  %v1425 = vunpack.c.l.b16 %v321
  %v1426 = vunpack.c.h.b16 %v321
  %v1427 = vunpack.c.l.b16 %v322
  %v1428 = vunpack.c.l.b16 %v323
  %v1429 = vunpack.c.h.b16 %v323
  %v1430 = vunpack.c.l.b16 %v324
  %v1431 = vunpack.c.l.b16 %v325
  %v1432 = vunpack.c.h.b16 %v325
  %v1433 = vunpack.c.l.b16 %v326
  %v1434 = vunpack.c.l.b16 %v327
  %v1435 = vunpack.c.h.b16 %v327
  %v1436 = vunpack.c.l.b16 %v328
  %v1437 = vunpack.c.l.b16 %v329
  %v1438 = vunpack.c.h.b16 %v329
  %v1439 = vunpack.c.l.b16 %v330
  %v1440 = vunpack.c.l.b16 %v331
  %v1441 = vunpack.c.h.b16 %v331
  %v1442 = vunpack.c.l.b16 %v332
  %v1443 = vunpack.c.l.b16 %v333
  %v1444 = vunpack.c.h.b16 %v333
  %v1445 = vunpack.c.l.b16 %v334
  %v1446 = vunpack.c.l.b16 %v335
  %v1447 = vunpack.c.h.b16 %v335
  %v1448 = vunpack.c.l.b16 %v336
  %v1449 = vunpack.c.l.b16 %v337
  %v1450 = vunpack.c.h.b16 %v337
  %v1451 = vunpack.c.l.b16 %v338
  %v1452 = vunpack.c.l.b16 %v339
  %v1453 = vunpack.c.h.b16 %v339
  %v1454 = vunpack.c.l.b16 %v340
  %v1455 = vunpack.c.l.b16 %v341
  %v1456 = vunpack.c.h.b16 %v341
  %v1457 = vunpack.c.l.b16 %v342
  %v1458 = vunpack.c.l.b16 %v343
  %v1459 = vunpack.c.h.b16 %v343
  %v1460 = vunpack.c.l.b16 %v344
  %v1461 = vunpack.c.l.b16 %v345
  %v1462 = vunpack.c.h.b16 %v345
  %v1463 = vunpack.c.l.b16 %v346
  %v1464 = vunpack.c.l.b16 %v347
  %v1465 = vunpack.c.h.b16 %v347
  %v1466 = vunpack.c.l.b16 %v348
  %v1467 = vunpack.c.l.b16 %v349
  %v1468 = vunpack.c.h.b16 %v349
  %v1469 = vunpack.c.l.b16 %v350
  %v1470 = vunpack.c.l.b16 %v351
  %v1471 = vunpack.c.h.b16 %v351
  %v1472 = vunpack.c.l.b16 %v352
  %v1473 = vunpack.c.l.b16 %v353
  %v1474 = vunpack.c.h.b16 %v353
  %v1475 = vunpack.c.l.b16 %v354
  %v1476 = vunpack.c.l.b16 %v355
  %v1477 = vunpack.c.h.b16 %v355
  %v1478 = vunpack.c.l.b16 %v356
  %v1479 = vunpack.c.l.b16 %v357
  %v1480 = vunpack.c.h.b16 %v357
  %v1481 = vunpack.c.l.b16 %v358
  %v1482 = vunpack.c.l.b16 %v359
  %v1483 = vunpack.c.h.b16 %v359
  %v1484 = vunpack.c.l.b16 %v360
  %v1485 = vunpack.c.l.b16 %v361
  %v1486 = vunpack.c.h.b16 %v361
  %v1487 = vunpack.c.l.b16 %v362
  %v1488 = vunpack.c.l.b16 %v363
  %v1489 = vunpack.c.h.b16 %v363
  %v1490 = vunpack.c.l.b16 %v364
  %v1491 = vunpack.c.l.b16 %v365
  %v1492 = vunpack.c.h.b16 %v365
  %v1493 = vunpack.c.l.b16 %v366
  %v1494 = vunpack.c.l.b16 %v367
  %v1495 = vunpack.c.h.b16 %v367
  %v1496 = vunpack.c.l.b16 %v368
  %v1497 = vunpack.c.l.b16 %v369
  %v1498 = vunpack.c.h.b16 %v369
  %v1499 = vunpack.c.l.b16 %v370
  %v1500 = vunpack.c.l.b16 %v371
  %v1501 = vunpack.c.h.b16 %v371
  %v1502 = vunpack.c.l.b16 %v372
  %v1503 = vunpack.c.l.b16 %v373
  %v1504 = vunpack.c.h.b16 %v373
  %v1505 = vunpack.c.l.b16 %v374
  %v1506 = vunpack.c.l.b16 %v375
  %v1507 = vunpack.c.h.b16 %v375
  %v1508 = vunpack.c.l.b16 %v376
  %v1509 = vunpack.c.l.b16 %v377
  %v1510 = vunpack.c.h.b16 %v377
  %v1511 = vunpack.c.l.b16 %v378
  %v1512 = vunpack.c.l.b16 %v379
  %v1513 = vunpack.c.h.b16 %v379
  %v1514 = vunpack.c.l.b16 %v380
  %v1515 = vunpack.c.l.b16 %v381
  %v1516 = vunpack.c.h.b16 %v381
  %v1517 = vunpack.c.l.b16 %v382
  %v1518 = vunpack.c.l.b16 %v383
  %v1519 = vunpack.c.h.b16 %v383
  %v1520 = vunpack.c.l.b16 %v384
  %v1521 = vunpack.c.l.b16 %v385
  %v1522 = vunpack.c.h.b16 %v385
  %v1523 = vunpack.c.l.b16 %v386
  %v1524 = vunpack.c.l.b16 %v387
  %v1525 = vunpack.c.h.b16 %v387
  %v1526 = vunpack.c.l.b16 %v388
  %v1527 = vunpack.c.l.b16 %v389
  %v1528 = vunpack.c.h.b16 %v389
  %v1529 = vunpack.c.l.b16 %v390
  %v1530 = vunpack.c.l.b16 %v391
  %v1531 = vunpack.c.h.b16 %v391
  %v1532 = vunpack.c.l.b16 %v392
  %v1533 = vunpack.c.l.b16 %v393
  %v1534 = vunpack.c.h.b16 %v393
  %v1535 = vunpack.c.l.b16 %v394
  %v1536 = vunpack.c.l.b16 %v395
  %v1537 = vunpack.c.h.b16 %v395
  %v1538 = vunpack.c.l.b16 %v396
  %v1539 = vunpack.c.l.b16 %v397
  %v1540 = vunpack.c.h.b16 %v397
  %v1541 = vunpack.c.l.b16 %v398
  %v1542 = vunpack.c.l.b16 %v399
  %v1543 = vunpack.c.h.b16 %v399
  %v1544 = vunpack.c.l.b16 %v400
  %v1545 = vunpack.c.l.b16 %v401
  %v1546 = vunpack.c.h.b16 %v401
  %v1547 = vunpack.c.l.b16 %v402
  %v1548 = vunpack.c.l.b16 %v403
  %v1549 = vunpack.c.h.b16 %v403
  %v1550 = vunpack.c.l.b16 %v404
  %v1551 = vunpack.c.l.b16 %v405
  %v1552 = vunpack.c.h.b16 %v405
  %v1553 = vunpack.c.l.b16 %v406
  %v1554 = vunpack.c.l.b16 %v407
  %v1555 = vunpack.c.h.b16 %v407
  %v1556 = vunpack.c.l.b16 %v408
  %v1557 = vunpack.c.l.b16 %v409
  %v1558 = vunpack.c.h.b16 %v409
  %v1559 = vunpack.c.l.b16 %v410
  %v1560 = vunpack.c.l.b16 %v411
  %v1561 = vunpack.c.h.b16 %v411
  %v1562 = vunpack.c.l.b16 %v412
  %v1563 = vunpack.c.l.b16 %v413
  %v1564 = vunpack.c.h.b16 %v413
  %v1565 = vunpack.c.l.b16 %v414
  %v1566 = vunpack.c.l.b16 %v415
  %v1567 = vunpack.c.h.b16 %v415
  %v1568 = vunpack.c.l.b16 %v416
  %v1569 = vunpack.c.l.b16 %v417
  %v1570 = vunpack.c.h.b16 %v417
  %v1571 = vunpack.c.l.b16 %v418
  %v1572 = vunpack.c.l.b16 %v419
  %v1573 = vunpack.c.h.b16 %v419
  %v1574 = vunpack.c.l.b16 %v420
  %v1575 = vunpack.c.l.b16 %v421
  %v1576 = vunpack.c.h.b16 %v421
  %v1577 = vunpack.c.l.b16 %v422
  %v1578 = vunpack.c.l.b16 %v423
  %v1579 = vunpack.c.h.b16 %v423
  %v1580 = vunpack.c.l.b16 %v424
  %v1581 = vunpack.c.l.b16 %v425
  %v1582 = vunpack.c.h.b16 %v425
  %v1583 = vunpack.c.l.b16 %v426
  %v1584 = vunpack.c.l.b16 %v427
  %v1585 = vunpack.c.h.b16 %v427
  %v1586 = vunpack.c.l.b16 %v428
  %v1587 = vunpack.c.l.b16 %v429
  %v1588 = vunpack.c.h.b16 %v429
  %v1589 = vunpack.c.l.b16 %v430
  %v1590 = vunpack.c.l.b16 %v431
  %v1591 = vunpack.c.h.b16 %v431
  %v1592 = vunpack.c.l.b16 %v432
  %v1593 = vunpack.c.l.b16 %v433
  %v1594 = vunpack.c.h.b16 %v433
  %v1595 = vunpack.c.l.b16 %v434
  %v1596 = vunpack.c.l.b16 %v435
  %v1597 = vunpack.c.h.b16 %v435
  %v1598 = vunpack.c.l.b16 %v436
  %v1599 = vunpack.c.l.b16 %v437
  %v1600 = vunpack.c.h.b16 %v437
  %v1601 = vunpack.c.l.b16 %v438
  %v1602 = vunpack.c.l.b16 %v439
  %v1603 = vunpack.c.h.b16 %v439
  %v1604 = vunpack.c.l.b16 %v440
  %v1605 = vunpack.c.l.b16 %v441
  %v1606 = vunpack.c.h.b16 %v441
  %v1607 = vunpack.c.l.b16 %v442
  %v1608 = vunpack.c.l.b16 %v443
  %v1609 = vunpack.c.h.b16 %v443
  %v1610 = vunpack.c.l.b16 %v444
  %v1611 = vunpack.c.l.b16 %v445
  %v1612 = vunpack.c.h.b16 %v445
  %v1613 = vunpack.c.l.b16 %v446
  %v1614 = vunpack.c.l.b16 %v447
  %v1615 = vunpack.c.h.b16 %v447
  %v1616 = vunpack.c.l.b16 %v448
  %v1617 = vunpack.c.l.b16 %v449
  %v1618 = vunpack.c.h.b16 %v449
  %v1619 = vunpack.c.l.b16 %v450
  %v1620 = vunpack.c.l.b16 %v451
  %v1621 = vunpack.c.h.b16 %v451
  %v1622 = vunpack.c.l.b16 %v452
  %v1623 = vunpack.c.l.b16 %v453
  %v1624 = vunpack.c.h.b16 %v453
  %v1625 = vunpack.c.l.b16 %v454
  %v1626 = vunpack.c.l.b16 %v455
  %v1627 = vunpack.c.h.b16 %v455
  %v1628 = vunpack.c.l.b16 %v456
  %v1629 = vunpack.c.l.b16 %v457
  %v1630 = vunpack.c.h.b16 %v457
  %v1631 = vunpack.c.l.b16 %v458
  %v1632 = vunpack.c.l.b16 %v459
  %v1633 = vunpack.c.h.b16 %v459
  %v1634 = vunpack.c.l.b16 %v460
  %v1635 = vunpack.c.l.b16 %v461
  %v1636 = vunpack.c.h.b16 %v461
  %v1637 = vunpack.c.l.b16 %v462
  %v1638 = vunpack.c.l.b16 %v463
  %v1639 = vunpack.c.h.b16 %v463
  %v1640 = vunpack.c.l.b16 %v464
  %v1641 = vunpack.c.l.b16 %v465
  %v1642 = vunpack.c.h.b16 %v465
  %v1643 = vunpack.c.l.b16 %v466
  %v1644 = vunpack.c.l.b16 %v467
  %v1645 = vunpack.c.h.b16 %v467
  %v1646 = vunpack.c.l.b16 %v468
  %v1647 = vunpack.c.l.b16 %v469
  %v1648 = vunpack.c.h.b16 %v469
  %v1649 = vunpack.c.l.b16 %v470
  %v1650 = vunpack.c.l.b16 %v471
  %v1651 = vunpack.c.h.b16 %v471
  %v1652 = vunpack.c.l.b16 %v472
  %v1653 = vunpack.c.l.b16 %v473
  %v1654 = vunpack.c.h.b16 %v473
  %v1655 = vunpack.c.l.b16 %v474
  %v1656 = vunpack.c.l.b16 %v475
  %v1657 = vunpack.c.h.b16 %v475
  %v1658 = vunpack.c.l.b16 %v476
  %v1659 = vunpack.c.l.b16 %v477
  %v1660 = vunpack.c.h.b16 %v477
  %v1661 = vunpack.c.l.b16 %v478
  %v1662 = vunpack.c.l.b16 %v479
  %v1663 = vunpack.c.h.b16 %v479
  %v1664 = vunpack.c.l.b16 %v480
  %v1665 = vunpack.c.l.b16 %v481
  %v1666 = vunpack.c.h.b16 %v481
  %v1667 = vunpack.c.l.b16 %v482
  %v1668 = vunpack.c.l.b16 %v483
  %v1669 = vunpack.c.h.b16 %v483
  %v1670 = vunpack.c.l.b16 %v484
  %v1671 = vunpack.c.l.b16 %v485
  %v1672 = vunpack.c.h.b16 %v485
  %v1673 = vunpack.c.l.b16 %v486
  %v1674 = vunpack.c.l.b16 %v487
  %v1675 = vunpack.c.h.b16 %v487
  %v1676 = vunpack.c.l.b16 %v488
  %v1677 = vunpack.c.l.b16 %v489
  %v1678 = vunpack.c.h.b16 %v489
  %v1679 = vunpack.c.l.b16 %v490
  %v1680 = vunpack.c.l.b16 %v491
  %v1681 = vunpack.c.h.b16 %v491
  %v1682 = vunpack.c.l.b16 %v492
  %v1683 = vpack.c.b16 %v1014, %v1011
  %v1684 = vpack.c.b16 %v1015, %v1012
  %v1685 = vpack.c.b16 %v1016, %v1013
  %v1686 = vpack.c.b16 %v1020, %v1017
  %v1687 = vpack.c.b16 %v1021, %v1018
  %v1688 = vpack.c.b16 %v1022, %v1019
  %v1689 = vpack.c.b16 %v1026, %v1023
  %v1690 = vpack.c.b16 %v1027, %v1024
  %v1691 = vpack.c.b16 %v1028, %v1025
  %v1692 = vpack.c.b16 %v1032, %v1029
  %v1693 = vpack.c.b16 %v1033, %v1030
  %v1694 = vpack.c.b16 %v1034, %v1031
  %v1695 = vpack.c.b16 %v1038, %v1035
  %v1696 = vpack.c.b16 %v1039, %v1036
  %v1697 = vpack.c.b16 %v1040, %v1037
  %v1698 = vpack.c.b16 %v1044, %v1041
  %v1699 = vpack.c.b16 %v1045, %v1042
  %v1700 = vpack.c.b16 %v1046, %v1043
  %v1701 = vpack.c.b16 %v1050, %v1047
  %v1702 = vpack.c.b16 %v1051, %v1048
  %v1703 = vpack.c.b16 %v1052, %v1049
  %v1704 = vpack.c.b16 %v1056, %v1053
  %v1705 = vpack.c.b16 %v1057, %v1054
  %v1706 = vpack.c.b16 %v1058, %v1055
  %v1707 = vpack.c.b16 %v1062, %v1059
  %v1708 = vpack.c.b16 %v1063, %v1060
  %v1709 = vpack.c.b16 %v1064, %v1061
  %v1710 = vpack.c.b16 %v1068, %v1065
  %v1711 = vpack.c.b16 %v1069, %v1066
  %v1712 = vpack.c.b16 %v1070, %v1067
  %v1713 = vpack.c.b16 %v1074, %v1071
  %v1714 = vpack.c.b16 %v1075, %v1072
  %v1715 = vpack.c.b16 %v1076, %v1073
  %v1716 = vpack.c.b16 %v1080, %v1077
  %v1717 = vpack.c.b16 %v1081, %v1078
  %v1718 = vpack.c.b16 %v1082, %v1079
  %v1719 = vpack.c.b16 %v1086, %v1083
  %v1720 = vpack.c.b16 %v1087, %v1084
  %v1721 = vpack.c.b16 %v1088, %v1085
  %v1722 = vpack.c.b16 %v1092, %v1089
  %v1723 = vpack.c.b16 %v1093, %v1090
  %v1724 = vpack.c.b16 %v1094, %v1091
  %v1725 = vpack.c.b16 %v1098, %v1095
  %v1726 = vpack.c.b16 %v1099, %v1096
  %v1727 = vpack.c.b16 %v1100, %v1097
  %v1728 = vpack.c.b16 %v1104, %v1101
  %v1729 = vpack.c.b16 %v1105, %v1102
  %v1730 = vpack.c.b16 %v1106, %v1103
  %v1731 = vpack.c.b16 %v1110, %v1107
  %v1732 = vpack.c.b16 %v1111, %v1108
  %v1733 = vpack.c.b16 %v1112, %v1109
  %v1734 = vpack.c.b16 %v1116, %v1113
  %v1735 = vpack.c.b16 %v1117, %v1114
  %v1736 = vpack.c.b16 %v1118, %v1115
  %v1737 = vpack.c.b16 %v1122, %v1119
  %v1738 = vpack.c.b16 %v1123, %v1120
  %v1739 = vpack.c.b16 %v1124, %v1121
  %v1740 = vpack.c.b16 %v1128, %v1125
  %v1741 = vpack.c.b16 %v1129, %v1126
  %v1742 = vpack.c.b16 %v1130, %v1127
  %v1743 = vpack.c.b16 %v1134, %v1131
  %v1744 = vpack.c.b16 %v1135, %v1132
  %v1745 = vpack.c.b16 %v1136, %v1133
  %v1746 = vpack.c.b16 %v1140, %v1137
  %v1747 = vpack.c.b16 %v1141, %v1138
  %v1748 = vpack.c.b16 %v1142, %v1139
  %v1749 = vpack.c.b16 %v1146, %v1143
  %v1750 = vpack.c.b16 %v1147, %v1144
  %v1751 = vpack.c.b16 %v1148, %v1145
  %v1752 = vpack.c.b16 %v1152, %v1149
  %v1753 = vpack.c.b16 %v1153, %v1150
  %v1754 = vpack.c.b16 %v1154, %v1151
  %v1755 = vpack.c.b16 %v1158, %v1155
  %v1756 = vpack.c.b16 %v1159, %v1156
  %v1757 = vpack.c.b16 %v1160, %v1157
  %v1758 = vpack.c.b16 %v1164, %v1161
  %v1759 = vpack.c.b16 %v1165, %v1162
  %v1760 = vpack.c.b16 %v1166, %v1163
  %v1761 = vpack.c.b16 %v1170, %v1167
  %v1762 = vpack.c.b16 %v1171, %v1168
  %v1763 = vpack.c.b16 %v1172, %v1169
  %v1764 = vpack.c.b16 %v1176, %v1173
  %v1765 = vpack.c.b16 %v1177, %v1174
  %v1766 = vpack.c.b16 %v1178, %v1175
  %v1767 = vpack.c.b16 %v1182, %v1179
  %v1768 = vpack.c.b16 %v1183, %v1180
  %v1769 = vpack.c.b16 %v1184, %v1181
  %v1770 = vpack.c.b16 %v1188, %v1185
  %v1771 = vpack.c.b16 %v1189, %v1186
  %v1772 = vpack.c.b16 %v1190, %v1187
  %v1773 = vpack.c.b16 %v1194, %v1191
  %v1774 = vpack.c.b16 %v1195, %v1192
  %v1775 = vpack.c.b16 %v1196, %v1193
  %v1776 = vpack.c.b16 %v1200, %v1197
  %v1777 = vpack.c.b16 %v1201, %v1198
  %v1778 = vpack.c.b16 %v1202, %v1199
  %v1779 = vpack.c.b16 %v1206, %v1203
  %v1780 = vpack.c.b16 %v1207, %v1204
  %v1781 = vpack.c.b16 %v1208, %v1205
  %v1782 = vpack.c.b16 %v1212, %v1209
  %v1783 = vpack.c.b16 %v1213, %v1210
  %v1784 = vpack.c.b16 %v1214, %v1211
  %v1785 = vpack.c.b16 %v1218, %v1215
  %v1786 = vpack.c.b16 %v1219, %v1216
  %v1787 = vpack.c.b16 %v1220, %v1217
  %v1788 = vpack.c.b16 %v1224, %v1221
  %v1789 = vpack.c.b16 %v1225, %v1222
  %v1790 = vpack.c.b16 %v1226, %v1223
  %v1791 = vpack.c.b16 %v1230, %v1227
  %v1792 = vpack.c.b16 %v1231, %v1228
  %v1793 = vpack.c.b16 %v1232, %v1229
  %v1794 = vpack.c.b16 %v1236, %v1233
  %v1795 = vpack.c.b16 %v1237, %v1234
  %v1796 = vpack.c.b16 %v1238, %v1235
  %v1797 = vpack.c.b16 %v1242, %v1239
  %v1798 = vpack.c.b16 %v1243, %v1240
  %v1799 = vpack.c.b16 %v1244, %v1241
  %v1800 = vpack.c.b16 %v1248, %v1245
  %v1801 = vpack.c.b16 %v1249, %v1246
  %v1802 = vpack.c.b16 %v1250, %v1247
  %v1803 = vpack.c.b16 %v1254, %v1251
  %v1804 = vpack.c.b16 %v1255, %v1252
  %v1805 = vpack.c.b16 %v1256, %v1253
  %v1806 = vpack.c.b16 %v1260, %v1257
  %v1807 = vpack.c.b16 %v1261, %v1258
  %v1808 = vpack.c.b16 %v1262, %v1259
  %v1809 = vpack.c.b16 %v1266, %v1263
  %v1810 = vpack.c.b16 %v1267, %v1264
  %v1811 = vpack.c.b16 %v1268, %v1265
  %v1812 = vpack.c.b16 %v1272, %v1269
  %v1813 = vpack.c.b16 %v1273, %v1270
  %v1814 = vpack.c.b16 %v1274, %v1271
  %v1815 = vpack.c.b16 %v1278, %v1275
  %v1816 = vpack.c.b16 %v1279, %v1276
  %v1817 = vpack.c.b16 %v1280, %v1277
  %v1818 = vpack.c.b16 %v1284, %v1281
  %v1819 = vpack.c.b16 %v1285, %v1282
  %v1820 = vpack.c.b16 %v1286, %v1283
  %v1821 = vpack.c.b16 %v1290, %v1287
  %v1822 = vpack.c.b16 %v1291, %v1288
  %v1823 = vpack.c.b16 %v1292, %v1289
  %v1824 = vpack.c.b16 %v1296, %v1293
  %v1825 = vpack.c.b16 %v1297, %v1294
  %v1826 = vpack.c.b16 %v1298, %v1295
  %v1827 = vpack.c.b16 %v1302, %v1299
  %v1828 = vpack.c.b16 %v1303, %v1300
  %v1829 = vpack.c.b16 %v1304, %v1301
  %v1830 = vpack.c.b16 %v1308, %v1305
  %v1831 = vpack.c.b16 %v1309, %v1306
  %v1832 = vpack.c.b16 %v1310, %v1307
  %v1833 = vpack.c.b16 %v1314, %v1311
  %v1834 = vpack.c.b16 %v1315, %v1312
  %v1835 = vpack.c.b16 %v1316, %v1313
  %v1836 = vpack.c.b16 %v1320, %v1317
  %v1837 = vpack.c.b16 %v1321, %v1318
  %v1838 = vpack.c.b16 %v1322, %v1319
  %v1839 = vpack.c.b16 %v1326, %v1323
  %v1840 = vpack.c.b16 %v1327, %v1324
  %v1841 = vpack.c.b16 %v1328, %v1325
  %v1842 = vpack.c.b16 %v1332, %v1329
  %v1843 = vpack.c.b16 %v1333, %v1330
  %v1844 = vpack.c.b16 %v1334, %v1331
  %v1845 = vpack.c.b16 %v1338, %v1335
  %v1846 = vpack.c.b16 %v1339, %v1336
  %v1847 = vpack.c.b16 %v1340, %v1337
  %v1848 = vpack.c.b16 %v1344, %v1341
  %v1849 = vpack.c.b16 %v1345, %v1342
  %v1850 = vpack.c.b16 %v1346, %v1343
  %v1851 = vpack.c.b16 %v1350, %v1347
  %v1852 = vpack.c.b16 %v1351, %v1348
  %v1853 = vpack.c.b16 %v1352, %v1349
  %v1854 = vpack.c.b16 %v1356, %v1353
  %v1855 = vpack.c.b16 %v1357, %v1354
  %v1856 = vpack.c.b16 %v1358, %v1355
  %v1857 = vpack.c.b16 %v1362, %v1359
  %v1858 = vpack.c.b16 %v1363, %v1360
  %v1859 = vpack.c.b16 %v1364, %v1361
  %v1860 = vpack.c.b16 %v1368, %v1365
  %v1861 = vpack.c.b16 %v1369, %v1366
  %v1862 = vpack.c.b16 %v1370, %v1367
  %v1863 = vpack.c.b16 %v1374, %v1371
  %v1864 = vpack.c.b16 %v1375, %v1372
  %v1865 = vpack.c.b16 %v1376, %v1373
  %v1866 = vpack.c.b16 %v1380, %v1377
  %v1867 = vpack.c.b16 %v1381, %v1378
  %v1868 = vpack.c.b16 %v1382, %v1379
  %v1869 = vpack.c.b16 %v1386, %v1383
  %v1870 = vpack.c.b16 %v1387, %v1384
  %v1871 = vpack.c.b16 %v1388, %v1385
  %v1872 = vpack.c.b16 %v1392, %v1389
  %v1873 = vpack.c.b16 %v1393, %v1390
  %v1874 = vpack.c.b16 %v1394, %v1391
  %v1875 = vpack.c.b16 %v1398, %v1395
  %v1876 = vpack.c.b16 %v1399, %v1396
  %v1877 = vpack.c.b16 %v1400, %v1397
  %v1878 = vpack.c.b16 %v1404, %v1401
  %v1879 = vpack.c.b16 %v1405, %v1402
  %v1880 = vpack.c.b16 %v1406, %v1403
  %v1881 = vpack.c.b16 %v1410, %v1407
  %v1882 = vpack.c.b16 %v1411, %v1408
  %v1883 = vpack.c.b16 %v1412, %v1409
  %v1884 = vpack.c.b16 %v1416, %v1413
  %v1885 = vpack.c.b16 %v1417, %v1414
  %v1886 = vpack.c.b16 %v1418, %v1415
  %v1887 = vpack.c.b16 %v1422, %v1419
  %v1888 = vpack.c.b16 %v1423, %v1420
  %v1889 = vpack.c.b16 %v1424, %v1421
  %v1890 = vpack.c.b16 %v1428, %v1425
  %v1891 = vpack.c.b16 %v1429, %v1426
  %v1892 = vpack.c.b16 %v1430, %v1427
  %v1893 = vpack.c.b16 %v1434, %v1431
  %v1894 = vpack.c.b16 %v1435, %v1432
  %v1895 = vpack.c.b16 %v1436, %v1433
  %v1896 = vpack.c.b16 %v1440, %v1437
  %v1897 = vpack.c.b16 %v1441, %v1438
  %v1898 = vpack.c.b16 %v1442, %v1439
  %v1899 = vpack.c.b16 %v1446, %v1443
  %v1900 = vpack.c.b16 %v1447, %v1444
  %v1901 = vpack.c.b16 %v1448, %v1445
  %v1902 = vpack.c.b16 %v1452, %v1449
  %v1903 = vpack.c.b16 %v1453, %v1450
  %v1904 = vpack.c.b16 %v1454, %v1451
  %v1905 = vpack.c.b16 %v1458, %v1455
  %v1906 = vpack.c.b16 %v1459, %v1456
  %v1907 = vpack.c.b16 %v1460, %v1457
  %v1908 = vpack.c.b16 %v1464, %v1461
  %v1909 = vpack.c.b16 %v1465, %v1462
  %v1910 = vpack.c.b16 %v1466, %v1463
  %v1911 = vpack.c.b16 %v1470, %v1467
  %v1912 = vpack.c.b16 %v1471, %v1468
  %v1913 = vpack.c.b16 %v1472, %v1469
  %v1914 = vpack.c.b16 %v1476, %v1473
  %v1915 = vpack.c.b16 %v1477, %v1474
  %v1916 = vpack.c.b16 %v1478, %v1475
  %v1917 = vpack.c.b16 %v1482, %v1479
  %v1918 = vpack.c.b16 %v1483, %v1480
  %v1919 = vpack.c.b16 %v1484, %v1481
  %v1920 = vpack.c.b16 %v1488, %v1485
  %v1921 = vpack.c.b16 %v1489, %v1486
  %v1922 = vpack.c.b16 %v1490, %v1487
  %v1923 = vpack.c.b16 %v1494, %v1491
  %v1924 = vpack.c.b16 %v1495, %v1492
  %v1925 = vpack.c.b16 %v1496, %v1493
  %v1926 = vpack.c.b16 %v1500, %v1497
  %v1927 = vpack.c.b16 %v1501, %v1498
  %v1928 = vpack.c.b16 %v1502, %v1499
  %v1929 = vpack.c.b16 %v1506, %v1503
  %v1930 = vpack.c.b16 %v1507, %v1504
  %v1931 = vpack.c.b16 %v1508, %v1505
  %v1932 = vpack.c.b16 %v1512, %v1509
  %v1933 = vpack.c.b16 %v1513, %v1510
  %v1934 = vpack.c.b16 %v1514, %v1511
  %v1935 = vpack.c.b16 %v1518, %v1515
  %v1936 = vpack.c.b16 %v1519, %v1516
  %v1937 = vpack.c.b16 %v1520, %v1517
  %v1938 = vpack.c.b16 %v1524, %v1521
  %v1939 = vpack.c.b16 %v1525, %v1522
  %v1940 = vpack.c.b16 %v1526, %v1523
  %v1941 = vpack.c.b16 %v1530, %v1527
  %v1942 = vpack.c.b16 %v1531, %v1528
  %v1943 = vpack.c.b16 %v1532, %v1529
  %v1944 = vpack.c.b16 %v1536, %v1533
  %v1945 = vpack.c.b16 %v1537, %v1534
  %v1946 = vpack.c.b16 %v1538, %v1535
  %v1947 = vpack.c.b16 %v1542, %v1539
  %v1948 = vpack.c.b16 %v1543, %v1540
  %v1949 = vpack.c.b16 %v1544, %v1541
  %v1950 = vpack.c.b16 %v1548, %v1545
  %v1951 = vpack.c.b16 %v1549, %v1546
  %v1952 = vpack.c.b16 %v1550, %v1547
  %v1953 = vpack.c.b16 %v1554, %v1551
  %v1954 = vpack.c.b16 %v1555, %v1552
  %v1955 = vpack.c.b16 %v1556, %v1553
  %v1956 = vpack.c.b16 %v1560, %v1557
  %v1957 = vpack.c.b16 %v1561, %v1558
  %v1958 = vpack.c.b16 %v1562, %v1559
  %v1959 = vpack.c.b16 %v1566, %v1563
  %v1960 = vpack.c.b16 %v1567, %v1564
  %v1961 = vpack.c.b16 %v1568, %v1565
  %v1962 = vpack.c.b16 %v1572, %v1569
  %v1963 = vpack.c.b16 %v1573, %v1570
  %v1964 = vpack.c.b16 %v1574, %v1571
  %v1965 = vpack.c.b16 %v1578, %v1575
  %v1966 = vpack.c.b16 %v1579, %v1576
  %v1967 = vpack.c.b16 %v1580, %v1577
  %v1968 = vpack.c.b16 %v1584, %v1581
  %v1969 = vpack.c.b16 %v1585, %v1582
  %v1970 = vpack.c.b16 %v1586, %v1583
  %v1971 = vpack.c.b16 %v1590, %v1587
  %v1972 = vpack.c.b16 %v1591, %v1588
  %v1973 = vpack.c.b16 %v1592, %v1589
  %v1974 = vpack.c.b16 %v1596, %v1593
  %v1975 = vpack.c.b16 %v1597, %v1594
  %v1976 = vpack.c.b16 %v1598, %v1595
  %v1977 = vpack.c.b16 %v1602, %v1599
  %v1978 = vpack.c.b16 %v1603, %v1600
  %v1979 = vpack.c.b16 %v1604, %v1601
  %v1980 = vpack.c.b16 %v1608, %v1605
  %v1981 = vpack.c.b16 %v1609, %v1606
  %v1982 = vpack.c.b16 %v1610, %v1607
  %v1983 = vpack.c.b16 %v1614, %v1611
  %v1984 = vpack.c.b16 %v1615, %v1612
  %v1985 = vpack.c.b16 %v1616, %v1613
  %v1986 = vpack.c.b16 %v1620, %v1617
  %v1987 = vpack.c.b16 %v1621, %v1618
  %v1988 = vpack.c.b16 %v1622, %v1619
  %v1989 = vpack.c.b16 %v1626, %v1623
  %v1990 = vpack.c.b16 %v1627, %v1624
  %v1991 = vpack.c.b16 %v1628, %v1625
  %v1992 = vpack.c.b16 %v1632, %v1629
  %v1993 = vpack.c.b16 %v1633, %v1630
  %v1994 = vpack.c.b16 %v1634, %v1631
  %v1995 = vpack.c.b16 %v1638, %v1635
  %v1996 = vpack.c.b16 %v1639, %v1636
  %v1997 = vpack.c.b16 %v1640, %v1637
  %v1998 = vpack.c.b16 %v1644, %v1641
  %v1999 = vpack.c.b16 %v1645, %v1642
  %v2000 = vpack.c.b16 %v1646, %v1643
  %v2001 = vpack.c.b16 %v1650, %v1647
  %v2002 = vpack.c.b16 %v1651, %v1648
  %v2003 = vpack.c.b16 %v1652, %v1649
  %v2004 = vpack.c.b16 %v1656, %v1653
  %v2005 = vpack.c.b16 %v1657, %v1654
  %v2006 = vpack.c.b16 %v1658, %v1655
  %v2007 = vpack.c.b16 %v1662, %v1659
  %v2008 = vpack.c.b16 %v1663, %v1660
  %v2009 = vpack.c.b16 %v1664, %v1661
  %v2010 = vpack.c.b16 %v1668, %v1665
  %v2011 = vpack.c.b16 %v1669, %v1666
  %v2012 = vpack.c.b16 %v1670, %v1667
  %v2013 = vpack.c.b16 %v1674, %v1671
  %v2014 = vpack.c.b16 %v1675, %v1672
  %v2015 = vpack.c.b16 %v1676, %v1673
  %v2016 = vpack.c.b16 %v1680, %v1677
  %v2017 = vpack.c.b16 %v1681, %v1678
  %v2018 = vpack.c.b16 %v1682, %v1679
  %2355 = vmatprep.subr.bf16.mxu0 %v1705
  %2356 = vmatpush1.bf16.msra.mxu0 %v1704
  %2357 = vmatprep.subr.bf16.mxu0 %v1702
  %2358 = vmatpush1.bf16.msra.mxu0 %v1701
  %2359 = vmatprep.subr.bf16.mxu0 %v1699
  %2360 = vmatpush1.bf16.msra.mxu0 %v1698
  %2361 = vmatprep.subr.bf16.mxu0 %v1696
  %2362 = vmatpush1.bf16.msra.mxu0 %v1695
  %2363 = vmatprep.subr.bf16.mxu0 %v1693
  %2364 = vmatpush1.bf16.msra.mxu0 %v1692
  %2365 = vmatprep.subr.bf16.mxu0 %v1690
  %2366 = vmatpush1.bf16.msra.mxu0 %v1689
  %2367 = vmatprep.subr.bf16.mxu0 %v1687
  %2368 = vmatpush1.bf16.msra.mxu0 %v1686
  %2369 = vmatprep.subr.bf16.mxu0 %v1684
  %2370 = vmatpush1.bf16.msra.mxu0 %v1683
  %2371 = vmatprep.subr.bf16.mxu0 %v1729
  %2372 = vmatpush2.bf16.msra.mxu0 %v1728
  %2373 = vmatprep.subr.bf16.mxu0 %v1726
  %2374 = vmatpush2.bf16.msra.mxu0 %v1725
  %2375 = vmatprep.subr.bf16.mxu0 %v1723
  %2376 = vmatpush2.bf16.msra.mxu0 %v1722
  %2377 = vmatprep.subr.bf16.mxu0 %v1720
  %2378 = vmatpush2.bf16.msra.mxu0 %v1719
  %2379 = vmatprep.subr.bf16.mxu0 %v1717
  %2380 = vmatpush2.bf16.msra.mxu0 %v1716
  %2381 = vmatprep.subr.bf16.mxu0 %v1714
  %2382 = vmatpush2.bf16.msra.mxu0 %v1713
  %2383 = vmatprep.subr.bf16.mxu0 %v1711
  %2384 = vmatpush2.bf16.msra.mxu0 %v1710
  %2385 = vmatprep.subr.bf16.mxu0 %v1708
  %2386 = vmatpush2.bf16.msra.mxu0 %v1707
  %2387 = vmatprep.mubr.bf16.mxu0 %v536
  %2388 = vmatmul.mubr.bf16.gmra.mxu0 %v535
  %v2389 = vpop.f32.mrf.mxu0
  %v2390 = vadd.f32 0.0, %v2389
  %v2391 = vpop.f32.mrf.mxu0
  %v2392 = vadd.f32 0.0, %v2391
  %v2393 = vpop.f32.mrf.mxu0
  %v2394 = vadd.f32 0.0, %v2393
  %v2395 = vpop.f32.mrf.mxu0
  %v2396 = vadd.f32 0.0, %v2395
  %2397 = vdwg.mxu0
  %2398 = vmatprep.subr.bf16.mxu0 %v1753
  %2399 = vmatpush1.bf16.msra.mxu0 %v1752
  %2400 = vmatprep.subr.bf16.mxu0 %v1750
  %2401 = vmatpush1.bf16.msra.mxu0 %v1749
  %2402 = vmatprep.subr.bf16.mxu0 %v1747
  %2403 = vmatpush1.bf16.msra.mxu0 %v1746
  %2404 = vmatprep.subr.bf16.mxu0 %v1744
  %2405 = vmatpush1.bf16.msra.mxu0 %v1743
  %2406 = vmatprep.subr.bf16.mxu0 %v1741
  %2407 = vmatpush1.bf16.msra.mxu0 %v1740
  %2408 = vmatprep.subr.bf16.mxu0 %v1738
  %2409 = vmatpush1.bf16.msra.mxu0 %v1737
  %2410 = vmatprep.subr.bf16.mxu0 %v1735
  %2411 = vmatpush1.bf16.msra.mxu0 %v1734
  %2412 = vmatprep.subr.bf16.mxu0 %v1732
  %2413 = vmatpush1.bf16.msra.mxu0 %v1731
  %2414 = vmatprep.subr.bf16.mxu0 %v1777
  %2415 = vmatpush2.bf16.msra.mxu0 %v1776
  %2416 = vmatprep.subr.bf16.mxu0 %v1774
  %2417 = vmatpush2.bf16.msra.mxu0 %v1773
  %2418 = vmatprep.subr.bf16.mxu0 %v1771
  %2419 = vmatpush2.bf16.msra.mxu0 %v1770
  %2420 = vmatprep.subr.bf16.mxu0 %v1768
  %2421 = vmatpush2.bf16.msra.mxu0 %v1767
  %2422 = vmatprep.subr.bf16.mxu0 %v1765
  %2423 = vmatpush2.bf16.msra.mxu0 %v1764
  %2424 = vmatprep.subr.bf16.mxu0 %v1762
  %2425 = vmatpush2.bf16.msra.mxu0 %v1761
  %2426 = vmatprep.subr.bf16.mxu0 %v1759
  %2427 = vmatpush2.bf16.msra.mxu0 %v1758
  %2428 = vmatprep.subr.bf16.mxu0 %v1756
  %2429 = vmatpush2.bf16.msra.mxu0 %v1755
  %2430 = vmatprep.mubr.bf16.mxu0 %v538
  %2431 = vmatmul.mubr.bf16.gmra.mxu0 %v537
  %v2432 = vpop.f32.mrf.mxu0
  %v2433 = vadd.f32 %v2390, %v2432
  %v2434 = vpop.f32.mrf.mxu0
  %v2435 = vadd.f32 %v2392, %v2434
  %v2436 = vpop.f32.mrf.mxu0
  %v2437 = vadd.f32 %v2394, %v2436
  %v2438 = vpop.f32.mrf.mxu0
  %v2439 = vadd.f32 %v2396, %v2438
  %2440 = vdwg.mxu0
  %2441 = vmatprep.subr.bf16.mxu0 %v1801
  %2442 = vmatpush1.bf16.msra.mxu0 %v1800
  %2443 = vmatprep.subr.bf16.mxu0 %v1798
  %2444 = vmatpush1.bf16.msra.mxu0 %v1797
  %2445 = vmatprep.subr.bf16.mxu0 %v1795
  %2446 = vmatpush1.bf16.msra.mxu0 %v1794
  %2447 = vmatprep.subr.bf16.mxu0 %v1792
  %2448 = vmatpush1.bf16.msra.mxu0 %v1791
  %2449 = vmatprep.subr.bf16.mxu0 %v1789
  %2450 = vmatpush1.bf16.msra.mxu0 %v1788
  %2451 = vmatprep.subr.bf16.mxu0 %v1786
  %2452 = vmatpush1.bf16.msra.mxu0 %v1785
  %2453 = vmatprep.subr.bf16.mxu0 %v1783
  %2454 = vmatpush1.bf16.msra.mxu0 %v1782
  %2455 = vmatprep.subr.bf16.mxu0 %v1780
  %2456 = vmatpush1.bf16.msra.mxu0 %v1779
  %2457 = vmatprep.subr.bf16.mxu0 %v1825
  %2458 = vmatpush2.bf16.msra.mxu0 %v1824
  %2459 = vmatprep.subr.bf16.mxu0 %v1822
  %2460 = vmatpush2.bf16.msra.mxu0 %v1821
  %2461 = vmatprep.subr.bf16.mxu0 %v1819
  %2462 = vmatpush2.bf16.msra.mxu0 %v1818
  %2463 = vmatprep.subr.bf16.mxu0 %v1816
  %2464 = vmatpush2.bf16.msra.mxu0 %v1815
  %2465 = vmatprep.subr.bf16.mxu0 %v1813
  %2466 = vmatpush2.bf16.msra.mxu0 %v1812
  %2467 = vmatprep.subr.bf16.mxu0 %v1810
  %2468 = vmatpush2.bf16.msra.mxu0 %v1809
  %2469 = vmatprep.subr.bf16.mxu0 %v1807
  %2470 = vmatpush2.bf16.msra.mxu0 %v1806
  %2471 = vmatprep.subr.bf16.mxu0 %v1804
  %2472 = vmatpush2.bf16.msra.mxu0 %v1803
  %2473 = vmatprep.mubr.bf16.mxu0 %v540
  %2474 = vmatmul.mubr.bf16.gmra.mxu0 %v539
  %v2475 = vpop.f32.mrf.mxu0
  %v2476 = vadd.f32 %v2433, %v2475
  %v2477 = vpop.f32.mrf.mxu0
  %v2478 = vadd.f32 %v2435, %v2477
  %v2479 = vpop.f32.mrf.mxu0
  %v2480 = vadd.f32 %v2437, %v2479
  %v2481 = vpop.f32.mrf.mxu0
  %v2482 = vadd.f32 %v2439, %v2481
  %2483 = vdwg.mxu0
  %2484 = vmatprep.subr.bf16.mxu0 %v1849
  %2485 = vmatpush1.bf16.msra.mxu0 %v1848
  %2486 = vmatprep.subr.bf16.mxu0 %v1846
  %2487 = vmatpush1.bf16.msra.mxu0 %v1845
  %2488 = vmatprep.subr.bf16.mxu0 %v1843
  %2489 = vmatpush1.bf16.msra.mxu0 %v1842
  %2490 = vmatprep.subr.bf16.mxu0 %v1840
  %2491 = vmatpush1.bf16.msra.mxu0 %v1839
  %2492 = vmatprep.subr.bf16.mxu0 %v1837
  %2493 = vmatpush1.bf16.msra.mxu0 %v1836
  %2494 = vmatprep.subr.bf16.mxu0 %v1834
  %2495 = vmatpush1.bf16.msra.mxu0 %v1833
  %2496 = vmatprep.subr.bf16.mxu0 %v1831
  %2497 = vmatpush1.bf16.msra.mxu0 %v1830
  %2498 = vmatprep.subr.bf16.mxu0 %v1828
  %2499 = vmatpush1.bf16.msra.mxu0 %v1827
  %2500 = vmatprep.subr.bf16.mxu0 %v1873
  %2501 = vmatpush2.bf16.msra.mxu0 %v1872
  %2502 = vmatprep.subr.bf16.mxu0 %v1870
  %2503 = vmatpush2.bf16.msra.mxu0 %v1869
  %2504 = vmatprep.subr.bf16.mxu0 %v1867
  %2505 = vmatpush2.bf16.msra.mxu0 %v1866
  %2506 = vmatprep.subr.bf16.mxu0 %v1864
  %2507 = vmatpush2.bf16.msra.mxu0 %v1863
  %2508 = vmatprep.subr.bf16.mxu0 %v1861
  %2509 = vmatpush2.bf16.msra.mxu0 %v1860
  %2510 = vmatprep.subr.bf16.mxu0 %v1858
  %2511 = vmatpush2.bf16.msra.mxu0 %v1857
  %2512 = vmatprep.subr.bf16.mxu0 %v1855
  %2513 = vmatpush2.bf16.msra.mxu0 %v1854
  %2514 = vmatprep.subr.bf16.mxu0 %v1852
  %2515 = vmatpush2.bf16.msra.mxu0 %v1851
  %2516 = vmatprep.mubr.bf16.mxu0 %v542
  %2517 = vmatmul.mubr.bf16.gmra.mxu0 %v541
  %v2518 = vpop.f32.mrf.mxu0
  %v2519 = vadd.f32 %v2476, %v2518
  %v2520 = vpop.f32.mrf.mxu0
  %v2521 = vadd.f32 %v2478, %v2520
  %v2522 = vpop.f32.mrf.mxu0
  %v2523 = vadd.f32 %v2480, %v2522
  %v2524 = vpop.f32.mrf.mxu0
  %v2525 = vadd.f32 %v2482, %v2524
  %2526 = vdwg.mxu0
  %2527 = vmatprep.subr.bf16.mxu0 %v1897
  %2528 = vmatpush1.bf16.msra.mxu0 %v1896
  %2529 = vmatprep.subr.bf16.mxu0 %v1894
  %2530 = vmatpush1.bf16.msra.mxu0 %v1893
  %2531 = vmatprep.subr.bf16.mxu0 %v1891
  %2532 = vmatpush1.bf16.msra.mxu0 %v1890
  %2533 = vmatprep.subr.bf16.mxu0 %v1888
  %2534 = vmatpush1.bf16.msra.mxu0 %v1887
  %2535 = vmatprep.subr.bf16.mxu0 %v1885
  %2536 = vmatpush1.bf16.msra.mxu0 %v1884
  %2537 = vmatprep.subr.bf16.mxu0 %v1882
  %2538 = vmatpush1.bf16.msra.mxu0 %v1881
  %2539 = vmatprep.subr.bf16.mxu0 %v1879
  %2540 = vmatpush1.bf16.msra.mxu0 %v1878
  %2541 = vmatprep.subr.bf16.mxu0 %v1876
  %2542 = vmatpush1.bf16.msra.mxu0 %v1875
  %2543 = vmatprep.subr.bf16.mxu0 %v1921
  %2544 = vmatpush2.bf16.msra.mxu0 %v1920
  %2545 = vmatprep.subr.bf16.mxu0 %v1918
  %2546 = vmatpush2.bf16.msra.mxu0 %v1917
  %2547 = vmatprep.subr.bf16.mxu0 %v1915
  %2548 = vmatpush2.bf16.msra.mxu0 %v1914
  %2549 = vmatprep.subr.bf16.mxu0 %v1912
  %2550 = vmatpush2.bf16.msra.mxu0 %v1911
  %2551 = vmatprep.subr.bf16.mxu0 %v1909
  %2552 = vmatpush2.bf16.msra.mxu0 %v1908
  %2553 = vmatprep.subr.bf16.mxu0 %v1906
  %2554 = vmatpush2.bf16.msra.mxu0 %v1905
  %2555 = vmatprep.subr.bf16.mxu0 %v1903
  %2556 = vmatpush2.bf16.msra.mxu0 %v1902
  %2557 = vmatprep.subr.bf16.mxu0 %v1900
  %2558 = vmatpush2.bf16.msra.mxu0 %v1899
  %2559 = vmatprep.mubr.bf16.mxu0 %v544
  %2560 = vmatmul.mubr.bf16.gmra.mxu0 %v543
  %v2561 = vpop.f32.mrf.mxu0
  %v2562 = vadd.f32 %v2519, %v2561
  %v2563 = vpop.f32.mrf.mxu0
  %v2564 = vadd.f32 %v2521, %v2563
  %v2565 = vpop.f32.mrf.mxu0
  %v2566 = vadd.f32 %v2523, %v2565
  %v2567 = vpop.f32.mrf.mxu0
  %v2568 = vadd.f32 %v2525, %v2567
  %2569 = vdwg.mxu0
  %2570 = vmatprep.subr.bf16.mxu0 %v1945
  %2571 = vmatpush1.bf16.msra.mxu0 %v1944
  %2572 = vmatprep.subr.bf16.mxu0 %v1942
  %2573 = vmatpush1.bf16.msra.mxu0 %v1941
  %2574 = vmatprep.subr.bf16.mxu0 %v1939
  %2575 = vmatpush1.bf16.msra.mxu0 %v1938
  %2576 = vmatprep.subr.bf16.mxu0 %v1936
  %2577 = vmatpush1.bf16.msra.mxu0 %v1935
  %2578 = vmatprep.subr.bf16.mxu0 %v1933
  %2579 = vmatpush1.bf16.msra.mxu0 %v1932
  %2580 = vmatprep.subr.bf16.mxu0 %v1930
  %2581 = vmatpush1.bf16.msra.mxu0 %v1929
  %2582 = vmatprep.subr.bf16.mxu0 %v1927
  %2583 = vmatpush1.bf16.msra.mxu0 %v1926
  %2584 = vmatprep.subr.bf16.mxu0 %v1924
  %2585 = vmatpush1.bf16.msra.mxu0 %v1923
  %2586 = vmatprep.subr.bf16.mxu0 %v1969
  %2587 = vmatpush2.bf16.msra.mxu0 %v1968
  %2588 = vmatprep.subr.bf16.mxu0 %v1966
  %2589 = vmatpush2.bf16.msra.mxu0 %v1965
  %2590 = vmatprep.subr.bf16.mxu0 %v1963
  %2591 = vmatpush2.bf16.msra.mxu0 %v1962
  %2592 = vmatprep.subr.bf16.mxu0 %v1960
  %2593 = vmatpush2.bf16.msra.mxu0 %v1959
  %2594 = vmatprep.subr.bf16.mxu0 %v1957
  %2595 = vmatpush2.bf16.msra.mxu0 %v1956
  %2596 = vmatprep.subr.bf16.mxu0 %v1954
  %2597 = vmatpush2.bf16.msra.mxu0 %v1953
  %2598 = vmatprep.subr.bf16.mxu0 %v1951
  %2599 = vmatpush2.bf16.msra.mxu0 %v1950
  %2600 = vmatprep.subr.bf16.mxu0 %v1948
  %2601 = vmatpush2.bf16.msra.mxu0 %v1947
  %2602 = vmatprep.mubr.bf16.mxu0 %v546
  %2603 = vmatmul.mubr.bf16.gmra.mxu0 %v545
  %v2604 = vpop.f32.mrf.mxu0
  %v2605 = vadd.f32 %v2562, %v2604
  %v2606 = vpop.f32.mrf.mxu0
  %v2607 = vadd.f32 %v2564, %v2606
  %v2608 = vpop.f32.mrf.mxu0
  %v2609 = vadd.f32 %v2566, %v2608
  %v2610 = vpop.f32.mrf.mxu0
  %v2611 = vadd.f32 %v2568, %v2610
  %2612 = vdwg.mxu0
  %2613 = vmatprep.subr.bf16.mxu0 %v1993
  %2614 = vmatpush1.bf16.msra.mxu0 %v1992
  %2615 = vmatprep.subr.bf16.mxu0 %v1990
  %2616 = vmatpush1.bf16.msra.mxu0 %v1989
  %2617 = vmatprep.subr.bf16.mxu0 %v1987
  %2618 = vmatpush1.bf16.msra.mxu0 %v1986
  %2619 = vmatprep.subr.bf16.mxu0 %v1984
  %2620 = vmatpush1.bf16.msra.mxu0 %v1983
  %2621 = vmatprep.subr.bf16.mxu0 %v1981
  %2622 = vmatpush1.bf16.msra.mxu0 %v1980
  %2623 = vmatprep.subr.bf16.mxu0 %v1978
  %2624 = vmatpush1.bf16.msra.mxu0 %v1977
  %2625 = vmatprep.subr.bf16.mxu0 %v1975
  %2626 = vmatpush1.bf16.msra.mxu0 %v1974
  %2627 = vmatprep.subr.bf16.mxu0 %v1972
  %2628 = vmatpush1.bf16.msra.mxu0 %v1971
  %2629 = vmatprep.subr.bf16.mxu0 %v2017
  %2630 = vmatpush2.bf16.msra.mxu0 %v2016
  %2631 = vmatprep.subr.bf16.mxu0 %v2014
  %2632 = vmatpush2.bf16.msra.mxu0 %v2013
  %2633 = vmatprep.subr.bf16.mxu0 %v2011
  %2634 = vmatpush2.bf16.msra.mxu0 %v2010
  %2635 = vmatprep.subr.bf16.mxu0 %v2008
  %2636 = vmatpush2.bf16.msra.mxu0 %v2007
  %2637 = vmatprep.subr.bf16.mxu0 %v2005
  %2638 = vmatpush2.bf16.msra.mxu0 %v2004
  %2639 = vmatprep.subr.bf16.mxu0 %v2002
  %2640 = vmatpush2.bf16.msra.mxu0 %v2001
  %2641 = vmatprep.subr.bf16.mxu0 %v1999
  %2642 = vmatpush2.bf16.msra.mxu0 %v1998
  %2643 = vmatprep.subr.bf16.mxu0 %v1996
  %2644 = vmatpush2.bf16.msra.mxu0 %v1995
  %2645 = vmatprep.mubr.bf16.mxu0 %v548
  %2646 = vmatmul.mubr.bf16.gmra.mxu0 %v547
  %v2647 = vpop.f32.mrf.mxu0
  %v2648 = vadd.f32 %v2605, %v2647
  %v2649 = vpop.f32.mrf.mxu0
  %v2650 = vadd.f32 %v2607, %v2649
  %v2651 = vpop.f32.mrf.mxu0
  %v2652 = vadd.f32 %v2609, %v2651
  %v2653 = vpop.f32.mrf.mxu0
  %v2654 = vadd.f32 %v2611, %v2653
  %2655 = vdwg.mxu0
  %2656 = vmatprep.subr.bf16.mxu0 0
  %2657 = vmatpush1.bf16.msra.mxu0 %v1706
  %2658 = vmatprep.subr.bf16.mxu0 0
  %2659 = vmatpush1.bf16.msra.mxu0 %v1703
  %2660 = vmatprep.subr.bf16.mxu0 0
  %2661 = vmatpush1.bf16.msra.mxu0 %v1700
  %2662 = vmatprep.subr.bf16.mxu0 0
  %2663 = vmatpush1.bf16.msra.mxu0 %v1697
  %2664 = vmatprep.subr.bf16.mxu0 0
  %2665 = vmatpush1.bf16.msra.mxu0 %v1694
  %2666 = vmatprep.subr.bf16.mxu0 0
  %2667 = vmatpush1.bf16.msra.mxu0 %v1691
  %2668 = vmatprep.subr.bf16.mxu0 0
  %2669 = vmatpush1.bf16.msra.mxu0 %v1688
  %2670 = vmatprep.subr.bf16.mxu0 0
  %2671 = vmatpush1.bf16.msra.mxu0 %v1685
  %2672 = vmatprep.subr.bf16.mxu0 0
  %2673 = vmatpush2.bf16.msra.mxu0 %v1730
  %2674 = vmatprep.subr.bf16.mxu0 0
  %2675 = vmatpush2.bf16.msra.mxu0 %v1727
  %2676 = vmatprep.subr.bf16.mxu0 0
  %2677 = vmatpush2.bf16.msra.mxu0 %v1724
  %2678 = vmatprep.subr.bf16.mxu0 0
  %2679 = vmatpush2.bf16.msra.mxu0 %v1721
  %2680 = vmatprep.subr.bf16.mxu0 0
  %2681 = vmatpush2.bf16.msra.mxu0 %v1718
  %2682 = vmatprep.subr.bf16.mxu0 0
  %2683 = vmatpush2.bf16.msra.mxu0 %v1715
  %2684 = vmatprep.subr.bf16.mxu0 0
  %2685 = vmatpush2.bf16.msra.mxu0 %v1712
  %2686 = vmatprep.subr.bf16.mxu0 0
  %2687 = vmatpush2.bf16.msra.mxu0 %v1709
  %2688 = vmatprep.mubr.bf16.mxu0 %v536
  %2689 = vmatmul.mubr.bf16.gmra.mxu0 %v535
  %v2690 = vpop.f32.mrf.mxu0
  %v2691 = vadd.f32 0.0, %v2690
  %v2692 = vpop.f32.mrf.mxu0
  %v2693 = vpop.f32.mrf.mxu0
  %v2694 = vadd.f32 0.0, %v2693
  %v2695 = vpop.f32.mrf.mxu0
  %2696 = vdwg.mxu0
  %2697 = vmatprep.subr.bf16.mxu0 0
  %2698 = vmatpush1.bf16.msra.mxu0 %v1754
  %2699 = vmatprep.subr.bf16.mxu0 0
  %2700 = vmatpush1.bf16.msra.mxu0 %v1751
  %2701 = vmatprep.subr.bf16.mxu0 0
  %2702 = vmatpush1.bf16.msra.mxu0 %v1748
  %2703 = vmatprep.subr.bf16.mxu0 0
  %2704 = vmatpush1.bf16.msra.mxu0 %v1745
  %2705 = vmatprep.subr.bf16.mxu0 0
  %2706 = vmatpush1.bf16.msra.mxu0 %v1742
  %2707 = vmatprep.subr.bf16.mxu0 0
  %2708 = vmatpush1.bf16.msra.mxu0 %v1739
  %2709 = vmatprep.subr.bf16.mxu0 0
  %2710 = vmatpush1.bf16.msra.mxu0 %v1736
  %2711 = vmatprep.subr.bf16.mxu0 0
  %2712 = vmatpush1.bf16.msra.mxu0 %v1733
  %2713 = vmatprep.subr.bf16.mxu0 0
  %2714 = vmatpush2.bf16.msra.mxu0 %v1778
  %2715 = vmatprep.subr.bf16.mxu0 0
  %2716 = vmatpush2.bf16.msra.mxu0 %v1775
  %2717 = vmatprep.subr.bf16.mxu0 0
  %2718 = vmatpush2.bf16.msra.mxu0 %v1772
  %2719 = vmatprep.subr.bf16.mxu0 0
  %2720 = vmatpush2.bf16.msra.mxu0 %v1769
  %2721 = vmatprep.subr.bf16.mxu0 0
  %2722 = vmatpush2.bf16.msra.mxu0 %v1766
  %2723 = vmatprep.subr.bf16.mxu0 0
  %2724 = vmatpush2.bf16.msra.mxu0 %v1763
  %2725 = vmatprep.subr.bf16.mxu0 0
  %2726 = vmatpush2.bf16.msra.mxu0 %v1760
  %2727 = vmatprep.subr.bf16.mxu0 0
  %2728 = vmatpush2.bf16.msra.mxu0 %v1757
  %2729 = vmatprep.mubr.bf16.mxu0 %v538
  %2730 = vmatmul.mubr.bf16.gmra.mxu0 %v537
  %v2731 = vpop.f32.mrf.mxu0
  %v2732 = vadd.f32 %v2691, %v2731
  %v2733 = vpop.f32.mrf.mxu0
  %v2734 = vpop.f32.mrf.mxu0
  %v2735 = vadd.f32 %v2694, %v2734
  %v2736 = vpop.f32.mrf.mxu0
  %2737 = vdwg.mxu0
  %2738 = vmatprep.subr.bf16.mxu0 0
  %2739 = vmatpush1.bf16.msra.mxu0 %v1802
  %2740 = vmatprep.subr.bf16.mxu0 0
  %2741 = vmatpush1.bf16.msra.mxu0 %v1799
  %2742 = vmatprep.subr.bf16.mxu0 0
  %2743 = vmatpush1.bf16.msra.mxu0 %v1796
  %2744 = vmatprep.subr.bf16.mxu0 0
  %2745 = vmatpush1.bf16.msra.mxu0 %v1793
  %2746 = vmatprep.subr.bf16.mxu0 0
  %2747 = vmatpush1.bf16.msra.mxu0 %v1790
  %2748 = vmatprep.subr.bf16.mxu0 0
  %2749 = vmatpush1.bf16.msra.mxu0 %v1787
  %2750 = vmatprep.subr.bf16.mxu0 0
  %2751 = vmatpush1.bf16.msra.mxu0 %v1784
  %2752 = vmatprep.subr.bf16.mxu0 0
  %2753 = vmatpush1.bf16.msra.mxu0 %v1781
  %2754 = vmatprep.subr.bf16.mxu0 0
  %2755 = vmatpush2.bf16.msra.mxu0 %v1826
  %2756 = vmatprep.subr.bf16.mxu0 0
  %2757 = vmatpush2.bf16.msra.mxu0 %v1823
  %2758 = vmatprep.subr.bf16.mxu0 0
  %2759 = vmatpush2.bf16.msra.mxu0 %v1820
  %2760 = vmatprep.subr.bf16.mxu0 0
  %2761 = vmatpush2.bf16.msra.mxu0 %v1817
  %2762 = vmatprep.subr.bf16.mxu0 0
  %2763 = vmatpush2.bf16.msra.mxu0 %v1814
  %2764 = vmatprep.subr.bf16.mxu0 0
  %2765 = vmatpush2.bf16.msra.mxu0 %v1811
  %2766 = vmatprep.subr.bf16.mxu0 0
  %2767 = vmatpush2.bf16.msra.mxu0 %v1808
  %2768 = vmatprep.subr.bf16.mxu0 0
  %2769 = vmatpush2.bf16.msra.mxu0 %v1805
  %2770 = vmatprep.mubr.bf16.mxu0 %v540
  %2771 = vmatmul.mubr.bf16.gmra.mxu0 %v539
  %v2772 = vpop.f32.mrf.mxu0
  %v2773 = vadd.f32 %v2732, %v2772
  %v2774 = vpop.f32.mrf.mxu0
  %v2775 = vpop.f32.mrf.mxu0
  %v2776 = vadd.f32 %v2735, %v2775
  %v2777 = vpop.f32.mrf.mxu0
  %2778 = vdwg.mxu0
  %2779 = vmatprep.subr.bf16.mxu0 0
  %2780 = vmatpush1.bf16.msra.mxu0 %v1850
  %2781 = vmatprep.subr.bf16.mxu0 0
  %2782 = vmatpush1.bf16.msra.mxu0 %v1847
  %2783 = vmatprep.subr.bf16.mxu0 0
  %2784 = vmatpush1.bf16.msra.mxu0 %v1844
  %2785 = vmatprep.subr.bf16.mxu0 0
  %2786 = vmatpush1.bf16.msra.mxu0 %v1841
  %2787 = vmatprep.subr.bf16.mxu0 0
  %2788 = vmatpush1.bf16.msra.mxu0 %v1838
  %2789 = vmatprep.subr.bf16.mxu0 0
  %2790 = vmatpush1.bf16.msra.mxu0 %v1835
  %2791 = vmatprep.subr.bf16.mxu0 0
  %2792 = vmatpush1.bf16.msra.mxu0 %v1832
  %2793 = vmatprep.subr.bf16.mxu0 0
  %2794 = vmatpush1.bf16.msra.mxu0 %v1829
  %2795 = vmatprep.subr.bf16.mxu0 0
  %2796 = vmatpush2.bf16.msra.mxu0 %v1874
  %2797 = vmatprep.subr.bf16.mxu0 0
  %2798 = vmatpush2.bf16.msra.mxu0 %v1871
  %2799 = vmatprep.subr.bf16.mxu0 0
  %2800 = vmatpush2.bf16.msra.mxu0 %v1868
  %2801 = vmatprep.subr.bf16.mxu0 0
  %2802 = vmatpush2.bf16.msra.mxu0 %v1865
  %2803 = vmatprep.subr.bf16.mxu0 0
  %2804 = vmatpush2.bf16.msra.mxu0 %v1862
  %2805 = vmatprep.subr.bf16.mxu0 0
  %2806 = vmatpush2.bf16.msra.mxu0 %v1859
  %2807 = vmatprep.subr.bf16.mxu0 0
  %2808 = vmatpush2.bf16.msra.mxu0 %v1856
  %2809 = vmatprep.subr.bf16.mxu0 0
  %2810 = vmatpush2.bf16.msra.mxu0 %v1853
  %2811 = vmatprep.mubr.bf16.mxu0 %v542
  %2812 = vmatmul.mubr.bf16.gmra.mxu0 %v541
  %v2813 = vpop.f32.mrf.mxu0
  %v2814 = vadd.f32 %v2773, %v2813
  %v2815 = vpop.f32.mrf.mxu0
  %v2816 = vpop.f32.mrf.mxu0
  %v2817 = vadd.f32 %v2776, %v2816
  %v2818 = vpop.f32.mrf.mxu0
  %2819 = vdwg.mxu0
  %2820 = vmatprep.subr.bf16.mxu0 0
  %2821 = vmatpush1.bf16.msra.mxu0 %v1898
  %2822 = vmatprep.subr.bf16.mxu0 0
  %2823 = vmatpush1.bf16.msra.mxu0 %v1895
  %2824 = vmatprep.subr.bf16.mxu0 0
  %2825 = vmatpush1.bf16.msra.mxu0 %v1892
  %2826 = vmatprep.subr.bf16.mxu0 0
  %2827 = vmatpush1.bf16.msra.mxu0 %v1889
  %2828 = vmatprep.subr.bf16.mxu0 0
  %2829 = vmatpush1.bf16.msra.mxu0 %v1886
  %2830 = vmatprep.subr.bf16.mxu0 0
  %2831 = vmatpush1.bf16.msra.mxu0 %v1883
  %2832 = vmatprep.subr.bf16.mxu0 0
  %2833 = vmatpush1.bf16.msra.mxu0 %v1880
  %2834 = vmatprep.subr.bf16.mxu0 0
  %2835 = vmatpush1.bf16.msra.mxu0 %v1877
  %2836 = vmatprep.subr.bf16.mxu0 0
  %2837 = vmatpush2.bf16.msra.mxu0 %v1922
  %2838 = vmatprep.subr.bf16.mxu0 0
  %2839 = vmatpush2.bf16.msra.mxu0 %v1919
  %2840 = vmatprep.subr.bf16.mxu0 0
  %2841 = vmatpush2.bf16.msra.mxu0 %v1916
  %2842 = vmatprep.subr.bf16.mxu0 0
  %2843 = vmatpush2.bf16.msra.mxu0 %v1913
  %2844 = vmatprep.subr.bf16.mxu0 0
  %2845 = vmatpush2.bf16.msra.mxu0 %v1910
  %2846 = vmatprep.subr.bf16.mxu0 0
  %2847 = vmatpush2.bf16.msra.mxu0 %v1907
  %2848 = vmatprep.subr.bf16.mxu0 0
  %2849 = vmatpush2.bf16.msra.mxu0 %v1904
  %2850 = vmatprep.subr.bf16.mxu0 0
  %2851 = vmatpush2.bf16.msra.mxu0 %v1901
  %2852 = vmatprep.mubr.bf16.mxu0 %v544
  %2853 = vmatmul.mubr.bf16.gmra.mxu0 %v543
  %v2854 = vpop.f32.mrf.mxu0
  %v2855 = vadd.f32 %v2814, %v2854
  %v2856 = vpop.f32.mrf.mxu0
  %v2857 = vpop.f32.mrf.mxu0
  %v2858 = vadd.f32 %v2817, %v2857
  %v2859 = vpop.f32.mrf.mxu0
  %2860 = vdwg.mxu0
  %2861 = vmatprep.subr.bf16.mxu0 0
  %2862 = vmatpush1.bf16.msra.mxu0 %v1946
  %2863 = vmatprep.subr.bf16.mxu0 0
  %2864 = vmatpush1.bf16.msra.mxu0 %v1943
  %2865 = vmatprep.subr.bf16.mxu0 0
  %2866 = vmatpush1.bf16.msra.mxu0 %v1940
  %2867 = vmatprep.subr.bf16.mxu0 0
  %2868 = vmatpush1.bf16.msra.mxu0 %v1937
  %2869 = vmatprep.subr.bf16.mxu0 0
  %2870 = vmatpush1.bf16.msra.mxu0 %v1934
  %2871 = vmatprep.subr.bf16.mxu0 0
  %2872 = vmatpush1.bf16.msra.mxu0 %v1931
  %2873 = vmatprep.subr.bf16.mxu0 0
  %2874 = vmatpush1.bf16.msra.mxu0 %v1928
  %2875 = vmatprep.subr.bf16.mxu0 0
  %2876 = vmatpush1.bf16.msra.mxu0 %v1925
  %2877 = vmatprep.subr.bf16.mxu0 0
  %2878 = vmatpush2.bf16.msra.mxu0 %v1970
  %2879 = vmatprep.subr.bf16.mxu0 0
  %2880 = vmatpush2.bf16.msra.mxu0 %v1967
  %2881 = vmatprep.subr.bf16.mxu0 0
  %2882 = vmatpush2.bf16.msra.mxu0 %v1964
  %2883 = vmatprep.subr.bf16.mxu0 0
  %2884 = vmatpush2.bf16.msra.mxu0 %v1961
  %2885 = vmatprep.subr.bf16.mxu0 0
  %2886 = vmatpush2.bf16.msra.mxu0 %v1958
  %2887 = vmatprep.subr.bf16.mxu0 0
  %2888 = vmatpush2.bf16.msra.mxu0 %v1955
  %2889 = vmatprep.subr.bf16.mxu0 0
  %2890 = vmatpush2.bf16.msra.mxu0 %v1952
  %2891 = vmatprep.subr.bf16.mxu0 0
  %2892 = vmatpush2.bf16.msra.mxu0 %v1949
  %2893 = vmatprep.mubr.bf16.mxu0 %v546
  %2894 = vmatmul.mubr.bf16.gmra.mxu0 %v545
  %v2895 = vpop.f32.mrf.mxu0
  %v2896 = vadd.f32 %v2855, %v2895
  %v2897 = vpop.f32.mrf.mxu0
  %v2898 = vpop.f32.mrf.mxu0
  %v2899 = vadd.f32 %v2858, %v2898
  %v2900 = vpop.f32.mrf.mxu0
  %2901 = vdwg.mxu0
  %2902 = vmatprep.subr.bf16.mxu0 0
  %2903 = vmatpush1.bf16.msra.mxu0 %v1994
  %2904 = vmatprep.subr.bf16.mxu0 0
  %2905 = vmatpush1.bf16.msra.mxu0 %v1991
  %2906 = vmatprep.subr.bf16.mxu0 0
  %2907 = vmatpush1.bf16.msra.mxu0 %v1988
  %2908 = vmatprep.subr.bf16.mxu0 0
  %2909 = vmatpush1.bf16.msra.mxu0 %v1985
  %2910 = vmatprep.subr.bf16.mxu0 0
  %2911 = vmatpush1.bf16.msra.mxu0 %v1982
  %2912 = vmatprep.subr.bf16.mxu0 0
  %2913 = vmatpush1.bf16.msra.mxu0 %v1979
  %2914 = vmatprep.subr.bf16.mxu0 0
  %2915 = vmatpush1.bf16.msra.mxu0 %v1976
  %2916 = vmatprep.subr.bf16.mxu0 0
  %2917 = vmatpush1.bf16.msra.mxu0 %v1973
  %2918 = vmatprep.subr.bf16.mxu0 0
  %2919 = vmatpush2.bf16.msra.mxu0 %v2018
  %2920 = vmatprep.subr.bf16.mxu0 0
  %2921 = vmatpush2.bf16.msra.mxu0 %v2015
  %2922 = vmatprep.subr.bf16.mxu0 0
  %2923 = vmatpush2.bf16.msra.mxu0 %v2012
  %2924 = vmatprep.subr.bf16.mxu0 0
  %2925 = vmatpush2.bf16.msra.mxu0 %v2009
  %2926 = vmatprep.subr.bf16.mxu0 0
  %2927 = vmatpush2.bf16.msra.mxu0 %v2006
  %2928 = vmatprep.subr.bf16.mxu0 0
  %2929 = vmatpush2.bf16.msra.mxu0 %v2003
  %2930 = vmatprep.subr.bf16.mxu0 0
  %2931 = vmatpush2.bf16.msra.mxu0 %v2000
  %2932 = vmatprep.subr.bf16.mxu0 0
  %2933 = vmatpush2.bf16.msra.mxu0 %v1997
  %2934 = vmatprep.mubr.bf16.mxu0 %v548
  %2935 = vmatmul.mubr.bf16.gmra.mxu0 %v547
  %v2936 = vpop.f32.mrf.mxu0
  %v2937 = vadd.f32 %v2896, %v2936
  %v2938 = vpop.f32.mrf.mxu0
  %v2939 = vpop.f32.mrf.mxu0
  %v2940 = vadd.f32 %v2899, %v2939
  %v2941 = vpop.f32.mrf.mxu0
  %2942 = vdwg.mxu0
  %v2943 = vadd.f32 %v25, %v2648
  %v2944 = vadd.f32 %v26, %v2650
  %v2945 = vadd.f32 %v27, %v2937
  %v2946 = vadd.f32 %v28, %v2652
  %v2947 = vadd.f32 %v29, %v2654
  %v2948 = vadd.f32 %v30, %v2940
  %2949 = vst [vmem:[#allocation2] sm:$0xff] %v2943
  %2950 = vst [vmem:[#allocation2 + $0x8] sm:$0xff] %v2944
  %2951 = vst [vmem:[#allocation2 + $0x10] sm:$0xff] %v2945
  %2952 = vst [vmem:[#allocation2 + $0x18] sm:$0xff] %v2946
  %2953 = vst [vmem:[#allocation2 + $0x20] sm:$0xff] %v2947
  %2954 = vst [vmem:[#allocation2 + $0x28] sm:$0xff] %v2948
  // Predicated region
  $region18: #{bbb_alexnet_forward.12} parent=0 // pred_check
    %p2955 = pneg %p15
  $region19: #{bbb_alexnet_forward.12} parent=0 // pred_check_branch
    %2957 = sbr.rel (%p2955) target = $region21
  $region20: #{bbb_alexnet_forward.12} parent=0 // pred_region
    %v2958 = vld [vmem:[#allocation2] sm:$0xff]
    %v2959 = vld [vmem:[#allocation2 + $0x8] sm:$0xff]
    %v2960 = vld [vmem:[#allocation2 + $0x10] sm:$0xff]
    %v2961 = vld [vmem:[#allocation2 + $0x18] sm:$0xff]
    %v2962 = vld [vmem:[#allocation2 + $0x20] sm:$0xff]
    %v2963 = vld [vmem:[#allocation2 + $0x28] sm:$0xff]
    %v2964 = vld [vmem:[%s2] sm:$0x7]
    %v2966 = vlaneseq
    %v2967 = vshrl.u32 %v2966, 7
    %v2968 = vsub.s32 0, %v2967
    %v2969 = vrot.slane %v2964, %v2968
    %v2970 = vlaneseq
    %v2971 = vshrl.u32 %v2970, 7
    %v2972 = vsub.s32 1, %v2971
    %v2973 = vrot.slane %v2964, %v2972
    %v2974 = vlaneseq
    %v2975 = vshrl.u32 %v2974, 7
    %v2976 = vsub.s32 2, %v2975
    %v2977 = vrot.slane %v2964, %v2976
    %v2981 = vadd.f32 %v2958, %v2969
    %v2982 = vadd.f32 %v2959, %v2973
    %v2983 = vadd.f32 %v2960, %v2977
    %v2984 = vadd.f32 %v2961, %v2969
    %v2985 = vadd.f32 %v2962, %v2973
    %v2986 = vadd.f32 %v2963, %v2977
    %vm2987 = vcmp.gt.f32.partialorder %v2981, 20.0
    %vm2988 = vcmp.gt.f32.partialorder %v2982, 20.0
    %vm2989 = vcmp.gt.f32.partialorder %v2983, 20.0
    %vm2990 = vcmp.gt.f32.partialorder %v2984, 20.0
    %vm2991 = vcmp.gt.f32.partialorder %v2985, 20.0
    %vm2992 = vcmp.gt.f32.partialorder %v2986, 20.0
    %v2993 = vmin.f32 %v2981, 20.0
    %v2994 = vmin.f32 %v2982, 20.0
    %v2995 = vmin.f32 %v2983, 20.0
    %v2996 = vmin.f32 %v2984, 20.0
    %v2997 = vmin.f32 %v2985, 20.0
    %v2998 = vmin.f32 %v2986, 20.0
    %v2999 = vmul.f32 %v2993, 1.442695
    %v3000 = vpow.pop %v2999
    %v3001 = vmul.f32 %v2994, 1.442695
    %v3002 = vpow.pop %v3001
    %v3003 = vmul.f32 %v2995, 1.442695
    %v3004 = vpow.pop %v3003
    %v3005 = vmul.f32 %v2996, 1.442695
    %v3006 = vpow.pop %v3005
    %v3007 = vmul.f32 %v2997, 1.442695
    %v3008 = vpow.pop %v3007
    %v3009 = vmul.f32 %v2998, 1.442695
    %v3010 = vpow.pop %v3009
    %v3011 = vadd.f32 %v3000, 1.0
    %v3012 = vlog2.pop %v3011
    %v3013 = vmul.f32 %v3012, 0.6931472
    %v3014 = vmul.f32 -0.5, %v3000
    %v3015 = vadd.f32 %v3014, 1.0
    %v3016 = vmul.f32 %v3015, %v3000
    %v3017 = vand.u32 2147483647, %v3000
    %vm3018 = vcmp.lt.f32.partialorder %v3017, 0.0004427343
    %v3019 = vsel %vm3018, %v3016, %v3013
    %v3020 = vadd.f32 %v3002, 1.0
    %v3021 = vlog2.pop %v3020
    %v3022 = vmul.f32 %v3021, 0.6931472
    %v3023 = vmul.f32 -0.5, %v3002
    %v3024 = vadd.f32 %v3023, 1.0
    %v3025 = vmul.f32 %v3024, %v3002
    %v3026 = vand.u32 2147483647, %v3002
    %vm3027 = vcmp.lt.f32.partialorder %v3026, 0.0004427343
    %v3028 = vsel %vm3027, %v3025, %v3022
    %v3029 = vadd.f32 %v3004, 1.0
    %v3030 = vlog2.pop %v3029
    %v3031 = vmul.f32 %v3030, 0.6931472
    %v3032 = vmul.f32 -0.5, %v3004
    %v3033 = vadd.f32 %v3032, 1.0
    %v3034 = vmul.f32 %v3033, %v3004
    %v3035 = vand.u32 2147483647, %v3004
    %vm3036 = vcmp.lt.f32.partialorder %v3035, 0.0004427343
    %v3037 = vsel %vm3036, %v3034, %v3031
    %v3038 = vadd.f32 %v3006, 1.0
    %v3039 = vlog2.pop %v3038
    %v3040 = vmul.f32 %v3039, 0.6931472
    %v3041 = vmul.f32 -0.5, %v3006
    %v3042 = vadd.f32 %v3041, 1.0
    %v3043 = vmul.f32 %v3042, %v3006
    %v3044 = vand.u32 2147483647, %v3006
    %vm3045 = vcmp.lt.f32.partialorder %v3044, 0.0004427343
    %v3046 = vsel %vm3045, %v3043, %v3040
    %v3047 = vadd.f32 %v3008, 1.0
    %v3048 = vlog2.pop %v3047
    %v3049 = vmul.f32 %v3048, 0.6931472
    %v3050 = vmul.f32 -0.5, %v3008
    %v3051 = vadd.f32 %v3050, 1.0
    %v3052 = vmul.f32 %v3051, %v3008
    %v3053 = vand.u32 2147483647, %v3008
    %vm3054 = vcmp.lt.f32.partialorder %v3053, 0.0004427343
    %v3055 = vsel %vm3054, %v3052, %v3049
    %v3056 = vadd.f32 %v3010, 1.0
    %v3057 = vlog2.pop %v3056
    %v3058 = vmul.f32 %v3057, 0.6931472
    %v3059 = vmul.f32 -0.5, %v3010
    %v3060 = vadd.f32 %v3059, 1.0
    %v3061 = vmul.f32 %v3060, %v3010
    %v3062 = vand.u32 2147483647, %v3010
    %vm3063 = vcmp.lt.f32.partialorder %v3062, 0.0004427343
    %v3064 = vsel %vm3063, %v3061, %v3058
    %v3065 = vsel %vm2987, %v2981, %v3019
    %v3066 = vsel %vm2988, %v2982, %v3028
    %v3067 = vsel %vm2989, %v2983, %v3037
    %v3068 = vsel %vm2990, %v2984, %v3046
    %v3069 = vsel %vm2991, %v2985, %v3055
    %v3070 = vsel %vm2992, %v2986, %v3064
    %v3071 = vpack.c.bf16 %v3068, %v3065
    %v3072 = vpack.c.bf16 %v3069, %v3066
    %v3073 = vpack.c.bf16 %v3070, %v3067
    %v3077 = vunpack.c.l.b16 %v3071
    %v3078 = vunpack.c.l.b16 %v3072
    %v3079 = vunpack.c.l.b16 %v3073
    %v3080 = vunpack.c.h.b16 %v3071
    %v3081 = vunpack.c.h.b16 %v3072
    %v3082 = vunpack.c.h.b16 %v3073
    %v3083 = vpack.c.b16 %v3078, %v3077
    %v3084 = vpack.c.b16 %v3079, %v3079
    %v3085 = vpack.c.b16 %v3081, %v3080
    %v3086 = vpack.c.b16 %v3082, %v3082
    %3091 = vst [vmem:[%s3] sm:$0xff] %v3083
    %3092 = vst [vmem:[%s3 + $0x8] sm:$0xf] %v3084
    %3093 = vst [vmem:[%s3 + $0xc] sm:$0xff] %v3085
    %3094 = vst [vmem:[%s3 + $0x14] sm:$0xf] %v3086
  $region21: #{bbb_alexnet_forward.12} parent=0 // pred_fallthru
    _
  // Predicated region
  $region22: #{bbb_alexnet_forward.12} parent=0 // pred_check
    _
  $region23: #{bbb_alexnet_forward.12} parent=0 // pred_check_branch
    %3096 = sbr.rel (0) target = $region25
  $region24: #{bbb_alexnet_forward.12} parent=0 // pred_region
    _
  $region25: #{bbb_alexnet_forward.12} parent=0 // pred_fallthru
    _
  // Predicated region
  $region26: #{bbb_alexnet_forward.12} parent=0 // pred_check
    _
  $region27: #{bbb_alexnet_forward.12} parent=0 // pred_check_branch
    %3098 = sbr.rel (0) target = $region29
  $region28: #{bbb_alexnet_forward.12} parent=0 // pred_region
    _
  $region29: #{bbb_alexnet_forward.12} parent=0 // pred_fallthru
    _

// kernel: bbb_alexnet_forward.15
$region0: #{bbb_alexnet_forward.15}
  #allocation0 [shape = 'u32[]', space=smem, size = 0x4, offset = 0x4, fixed_abs, tag = 'smem constant byte address 0x4 - core index']
  #allocation1 [shape = 'u32[144,128]{1,0:T(1,128)}', space=vmem, size = 0x12000, scoped, tag = 'internal scratch']
  %s0 = inlined_call_operand.vmem [shape: bf16[16,256], index: 0, kind: input, shape index: {}]
  %s1 = inlined_call_operand.vmem [shape: f32[256,16], index: 1, kind: input, shape index: {}]
  %s2 = inlined_call_operand.vmem [shape: f32[1,16], index: 2, kind: input, shape index: {}]
  %s3 = inlined_call_operand.vmem [shape: f32[16,10], index: 3, kind: input, shape index: {}]
  %s4 = inlined_call_operand.vmem [shape: f32[1,10], index: 4, kind: input, shape index: {}]
  %s5 = inlined_call_operand.hbm [shape: f32[16,16], index: 5, kind: output, shape index: {0}]
  %s6 = inlined_call_operand.vmem [shape: f32[16,10], index: 6, kind: output, shape index: {1}]
  %7 = xla_tuple %s5, %s6
  %s8 = sld [smem:[#allocation0]]
  $region38: #{bbb_alexnet_forward.15} parent=0
    _
  %s10 = ssub.s32 1, %s8
  %s11 = scalar_select 0, %s10, %s8
  $region1: #{bbb_alexnet_forward.15} parent=0
    #allocation2 [shape = 'u8[8192]{0}', space=vmem, size = 0x2000, scoped, tag = 'output window, operand 0, single buffered']
    #allocation3 [shape = 's32[1]{0}', space=sflag, size = 0x4, scoped, tag = 'scoped memory for bbb_alexnet_forward.15']
    %12 = vsyncpa [#allocation3], 0
    // Predicated region
    $region2: #{bbb_alexnet_forward.15} parent=1 // pred_check
      _
    $region3: #{bbb_alexnet_forward.15} parent=1 // pred_check_branch
      %14 = sbr.rel (0) target = $region5
    $region4: #{bbb_alexnet_forward.15} parent=1 // pred_region
      _
    $region5: #{bbb_alexnet_forward.15} parent=1 // pred_fallthru
      _
    // Predicated region
    $region6: #{bbb_alexnet_forward.15} parent=1 // pred_check
      _
    $region7: #{bbb_alexnet_forward.15} parent=1 // pred_check_branch
      %16 = sbr.rel (0) target = $region9
    $region8: #{bbb_alexnet_forward.15} parent=1 // pred_region
      _
    $region9: #{bbb_alexnet_forward.15} parent=1 // pred_fallthru
      _
    // Predicated region
    $region10: #{bbb_alexnet_forward.15} parent=1 // pred_check
      _
    $region11: #{bbb_alexnet_forward.15} parent=1 // pred_check_branch
      %18 = sbr.rel (0) target = $region13
    $region12: #{bbb_alexnet_forward.15} parent=1 // pred_region
      _
    $region13: #{bbb_alexnet_forward.15} parent=1 // pred_fallthru
      _
    // Predicated region
    $region14: #{bbb_alexnet_forward.15} parent=1 // pred_check
      _
    $region15: #{bbb_alexnet_forward.15} parent=1 // pred_check_branch
      %20 = sbr.rel (0) target = $region17
    $region16: #{bbb_alexnet_forward.15} parent=1 // pred_region
      _
    $region17: #{bbb_alexnet_forward.15} parent=1 // pred_fallthru
      _
    // Predicated region
    $region18: #{bbb_alexnet_forward.15} parent=1 // pred_check
      _
    $region19: #{bbb_alexnet_forward.15} parent=1 // pred_check_branch
      %22 = sbr.rel (0) target = $region21
    $region20: #{bbb_alexnet_forward.15} parent=1 // pred_region
      _
    $region21: #{bbb_alexnet_forward.15} parent=1 // pred_fallthru
      _
    %v23 = vld [vmem:[%s0] sm:$0xff]
    %v24 = vld [vmem:[%s0 + $0x8] sm:$0xff]
    %v25 = vunpack.c.l.bf16 %v23
    %v26 = vunpack.c.h.bf16 %v23
    %v27 = vunpack.c.l.bf16 %v24
    %v28 = vunpack.c.h.bf16 %v24
    %v29 = vld [vmem:[%s1] sm:$0xff]
    %v30 = vld [vmem:[%s1 + $0x8] sm:$0xff]
    %v31 = vld [vmem:[%s1 + $0x10] sm:$0xff]
    %v32 = vld [vmem:[%s1 + $0x18] sm:$0xff]
    %v33 = vld [vmem:[%s1 + $0x20] sm:$0xff]
    %v34 = vld [vmem:[%s1 + $0x28] sm:$0xff]
    %v35 = vld [vmem:[%s1 + $0x30] sm:$0xff]
    %v36 = vld [vmem:[%s1 + $0x38] sm:$0xff]
    %v37 = vld [vmem:[%s1 + $0x40] sm:$0xff]
    %v38 = vld [vmem:[%s1 + $0x48] sm:$0xff]
    %v39 = vld [vmem:[%s1 + $0x50] sm:$0xff]
    %v40 = vld [vmem:[%s1 + $0x58] sm:$0xff]
    %v41 = vld [vmem:[%s1 + $0x60] sm:$0xff]
    %v42 = vld [vmem:[%s1 + $0x68] sm:$0xff]
    %v43 = vld [vmem:[%s1 + $0x70] sm:$0xff]
    %v44 = vld [vmem:[%s1 + $0x78] sm:$0xff]
    %v45 = vld [vmem:[%s1 + $0x80] sm:$0xff]
    %v46 = vld [vmem:[%s1 + $0x88] sm:$0xff]
    %v47 = vld [vmem:[%s1 + $0x90] sm:$0xff]
    %v48 = vld [vmem:[%s1 + $0x98] sm:$0xff]
    %v49 = vld [vmem:[%s1 + $0xa0] sm:$0xff]
    %v50 = vld [vmem:[%s1 + $0xa8] sm:$0xff]
    %v51 = vld [vmem:[%s1 + $0xb0] sm:$0xff]
    %v52 = vld [vmem:[%s1 + $0xb8] sm:$0xff]
    %v53 = vld [vmem:[%s1 + $0xc0] sm:$0xff]
    %v54 = vld [vmem:[%s1 + $0xc8] sm:$0xff]
    %v55 = vld [vmem:[%s1 + $0xd0] sm:$0xff]
    %v56 = vld [vmem:[%s1 + $0xd8] sm:$0xff]
    %v57 = vld [vmem:[%s1 + $0xe0] sm:$0xff]
    %v58 = vld [vmem:[%s1 + $0xe8] sm:$0xff]
    %v59 = vld [vmem:[%s1 + $0xf0] sm:$0xff]
    %v60 = vld [vmem:[%s1 + $0xf8] sm:$0xff]
    %v61 = vld [vmem:[%s2] sm:$0x1]
    %v63 = vlaneseq
    %v64 = vshrl.u32 %v63, 7
    %v65 = vsub.s32 0, %v64
    %v66 = vrot.slane %v61, %v65
    %68 = vmatprep.subr.mxu0 0.0
    %69 = vmatpush1.msra.mxu0 %v44
    %70 = vmatprep.subr.mxu0 0.0
    %71 = vmatpush1.msra.mxu0 %v43
    %72 = vmatprep.subr.mxu0 0.0
    %73 = vmatpush1.msra.mxu0 %v42
    %74 = vmatprep.subr.mxu0 0.0
    %75 = vmatpush1.msra.mxu0 %v41
    %76 = vmatprep.subr.mxu0 0.0
    %77 = vmatpush1.msra.mxu0 %v40
    %78 = vmatprep.subr.mxu0 0.0
    %79 = vmatpush1.msra.mxu0 %v39
    %80 = vmatprep.subr.mxu0 0.0
    %81 = vmatpush1.msra.mxu0 %v38
    %82 = vmatprep.subr.mxu0 0.0
    %83 = vmatpush1.msra.mxu0 %v37
    %84 = vmatprep.subr.mxu0 0.0
    %85 = vmatpush1.msra.mxu0 %v36
    %86 = vmatprep.subr.mxu0 0.0
    %87 = vmatpush1.msra.mxu0 %v35
    %88 = vmatprep.subr.mxu0 0.0
    %89 = vmatpush1.msra.mxu0 %v34
    %90 = vmatprep.subr.mxu0 0.0
    %91 = vmatpush1.msra.mxu0 %v33
    %92 = vmatprep.subr.mxu0 0.0
    %93 = vmatpush1.msra.mxu0 %v32
    %94 = vmatprep.subr.mxu0 0.0
    %95 = vmatpush1.msra.mxu0 %v31
    %96 = vmatprep.subr.mxu0 0.0
    %97 = vmatpush1.msra.mxu0 %v30
    %98 = vmatprep.subr.mxu0 0.0
    %99 = vmatpush1.msra.mxu0 %v29
    %100 = vmatprep.subr.mxu0 0.0
    %101 = vmatpush2.msra.mxu0 %v60
    %102 = vmatprep.subr.mxu0 0.0
    %103 = vmatpush2.msra.mxu0 %v59
    %104 = vmatprep.subr.mxu0 0.0
    %105 = vmatpush2.msra.mxu0 %v58
    %106 = vmatprep.subr.mxu0 0.0
    %107 = vmatpush2.msra.mxu0 %v57
    %108 = vmatprep.subr.mxu0 0.0
    %109 = vmatpush2.msra.mxu0 %v56
    %110 = vmatprep.subr.mxu0 0.0
    %111 = vmatpush2.msra.mxu0 %v55
    %112 = vmatprep.subr.mxu0 0.0
    %113 = vmatpush2.msra.mxu0 %v54
    %114 = vmatprep.subr.mxu0 0.0
    %115 = vmatpush2.msra.mxu0 %v53
    %116 = vmatprep.subr.mxu0 0.0
    %117 = vmatpush2.msra.mxu0 %v52
    %118 = vmatprep.subr.mxu0 0.0
    %119 = vmatpush2.msra.mxu0 %v51
    %120 = vmatprep.subr.mxu0 0.0
    %121 = vmatpush2.msra.mxu0 %v50
    %122 = vmatprep.subr.mxu0 0.0
    %123 = vmatpush2.msra.mxu0 %v49
    %124 = vmatprep.subr.mxu0 0.0
    %125 = vmatpush2.msra.mxu0 %v48
    %126 = vmatprep.subr.mxu0 0.0
    %127 = vmatpush2.msra.mxu0 %v47
    %128 = vmatprep.subr.mxu0 0.0
    %129 = vmatpush2.msra.mxu0 %v46
    %130 = vmatprep.subr.mxu0 0.0
    %131 = vmatpush2.msra.mxu0 %v45
    %132 = vmatprep.mubr.f32.mxu0 %v26
    %133 = vmatmul.mubr.f32.gmra.mxu0 %v25
    %v134 = vpop.f32.mrf.mxu0
    %v135 = vadd.f32 %v66, %v134
    %v136 = vpop.f32.mrf.mxu0
    %137 = vmatprep.mubr.f32.mxu0 %v28
    %138 = vmatmul.mubr.f32.gmra.mxu0 %v27
    %v139 = vpop.f32.mrf.mxu0
    %v140 = vadd.f32 %v66, %v139
    %v141 = vpop.f32.mrf.mxu0
    %142 = vdwg.mxu0
    %vm143 = vcmask 130048
    %144 = vst.msk [vmem:[#allocation2] sm:$0xff] %vm143, %v135
    %145 = vst.msk [vmem:[#allocation2 + $0x8] sm:$0xff] %vm143, %v140
    %v146 = vld [vmem:[%s3] sm:$0xff]
    %v147 = vld [vmem:[%s3 + $0x8] sm:$0xff]
    %v148 = vld [vmem:[%s4] sm:$0x1]
    %v150 = vlaneseq
    %v151 = vshrl.u32 %v150, 7
    %v152 = vsub.s32 0, %v151
    %v153 = vrot.slane %v148, %v152
    %v156 = vsel %vm143, %v135, 0
    %v159 = vsel %vm143, %v140, 0
    %161 = vmatprep.subr.mxu0 0.0
    %162 = vmatpush1.msra.mxu0 0.0
    %163 = vmatprep.subr.mxu0 0.0
    %164 = vmatpush1.msra.mxu0 0.0
    %165 = vmatprep.subr.mxu0 0.0
    %166 = vmatpush1.msra.mxu0 0.0
    %167 = vmatprep.subr.mxu0 0.0
    %168 = vmatpush1.msra.mxu0 0.0
    %169 = vmatprep.subr.mxu0 0.0
    %170 = vmatpush1.msra.mxu0 0.0
    %171 = vmatprep.subr.mxu0 0.0
    %172 = vmatpush1.msra.mxu0 0.0
    %173 = vmatprep.subr.mxu0 0.0
    %174 = vmatpush1.msra.mxu0 0.0
    %175 = vmatprep.subr.mxu0 0.0
    %176 = vmatpush1.msra.mxu0 0.0
    %177 = vmatprep.subr.mxu0 0.0
    %178 = vmatpush1.msra.mxu0 0.0
    %179 = vmatprep.subr.mxu0 0.0
    %180 = vmatpush1.msra.mxu0 0.0
    %181 = vmatprep.subr.mxu0 0.0
    %182 = vmatpush1.msra.mxu0 0.0
    %183 = vmatprep.subr.mxu0 0.0
    %184 = vmatpush1.msra.mxu0 0.0
    %185 = vmatprep.subr.mxu0 0.0
    %186 = vmatpush1.msra.mxu0 0.0
    %187 = vmatprep.subr.mxu0 0.0
    %188 = vmatpush1.msra.mxu0 0.0
    %189 = vmatprep.subr.mxu0 0.0
    %190 = vmatpush1.msra.mxu0 %v147
    %191 = vmatprep.subr.mxu0 0.0
    %192 = vmatpush1.msra.mxu0 %v146
    %193 = vmatprep.subr.mxu0 0.0
    %194 = vmatpush2.msra.mxu0 0.0
    %195 = vmatprep.subr.mxu0 0.0
    %196 = vmatpush2.msra.mxu0 0.0
    %197 = vmatprep.subr.mxu0 0.0
    %198 = vmatpush2.msra.mxu0 0.0
    %199 = vmatprep.subr.mxu0 0.0
    %200 = vmatpush2.msra.mxu0 0.0
    %201 = vmatprep.subr.mxu0 0.0
    %202 = vmatpush2.msra.mxu0 0.0
    %203 = vmatprep.subr.mxu0 0.0
    %204 = vmatpush2.msra.mxu0 0.0
    %205 = vmatprep.subr.mxu0 0.0
    %206 = vmatpush2.msra.mxu0 0.0
    %207 = vmatprep.subr.mxu0 0.0
    %208 = vmatpush2.msra.mxu0 0.0
    %209 = vmatprep.subr.mxu0 0.0
    %210 = vmatpush2.msra.mxu0 0.0
    %211 = vmatprep.subr.mxu0 0.0
    %212 = vmatpush2.msra.mxu0 0.0
    %213 = vmatprep.subr.mxu0 0.0
    %214 = vmatpush2.msra.mxu0 0.0
    %215 = vmatprep.subr.mxu0 0.0
    %216 = vmatpush2.msra.mxu0 0.0
    %217 = vmatprep.subr.mxu0 0.0
    %218 = vmatpush2.msra.mxu0 0.0
    %219 = vmatprep.subr.mxu0 0.0
    %220 = vmatpush2.msra.mxu0 0.0
    %221 = vmatprep.subr.mxu0 0.0
    %222 = vmatpush2.msra.mxu0 0.0
    %223 = vmatprep.subr.mxu0 0.0
    %224 = vmatpush2.msra.mxu0 0.0
    %225 = vmatprep.mubr.f32.mxu0 0.0
    %226 = vmatmul.mubr.f32.gmra.mxu0 %v156
    %v227 = vpop.f32.mrf.mxu0
    %v228 = vadd.f32 %v153, %v227
    %v229 = vpop.f32.mrf.mxu0
    %230 = vmatprep.mubr.f32.mxu0 0.0
    %231 = vmatmul.mubr.f32.gmra.mxu0 %v159
    %v232 = vpop.f32.mrf.mxu0
    %v233 = vadd.f32 %v153, %v232
    %v234 = vpop.f32.mrf.mxu0
    %235 = vdwg.mxu0
    %vm236 = vcmask 80896
    %237 = vst.msk [vmem:[%s6] sm:$0xff] %vm236, %v228
    %238 = vst.msk [vmem:[%s6 + $0x8] sm:$0xff] %vm236, %v233
    // Predicated region
    $region22: #{bbb_alexnet_forward.15} parent=1 // pred_check
      _
    $region23: #{bbb_alexnet_forward.15} parent=1 // pred_check_branch
      %240 = sbr.rel (0) target = $region25
    $region24: #{bbb_alexnet_forward.15} parent=1 // pred_region
      %s242 = ssub.s32 256, 256
      %243 = vsyncadd [#allocation3], %s242
      %s244 = sshll.u32 [#allocation2], 4
      %s245 = int_to_ptr.vmem [resolvable:$true] %s244
      %250 = dma.vmem_to_hbm [thread:$0]  %s245, 256, %s5, [#allocation3], 128, 128, 8
    $region25: #{bbb_alexnet_forward.15} parent=1 // pred_fallthru
      _
    // Predicated region
    $region26: #{bbb_alexnet_forward.15} parent=1 // pred_check
      _
    $region27: #{bbb_alexnet_forward.15} parent=1 // pred_check_branch
      %252 = sbr.rel (0) target = $region29
    $region28: #{bbb_alexnet_forward.15} parent=1 // pred_region
      _
    $region29: #{bbb_alexnet_forward.15} parent=1 // pred_fallthru
      _
    // Predicated region
    $region30: #{bbb_alexnet_forward.15} parent=1 // pred_check
      _
    $region31: #{bbb_alexnet_forward.15} parent=1 // pred_check_branch
      %254 = sbr.rel (0) target = $region33
    $region32: #{bbb_alexnet_forward.15} parent=1 // pred_region
      %255 = dma.done [#allocation3], 256
    $region33: #{bbb_alexnet_forward.15} parent=1 // pred_fallthru
      _
    // Predicated region
    $region34: #{bbb_alexnet_forward.15} parent=1 // pred_check
      _
    $region35: #{bbb_alexnet_forward.15} parent=1 // pred_check_branch
      %257 = sbr.rel (0) target = $region37
    $region36: #{bbb_alexnet_forward.15} parent=1 // pred_region
      _
    $region37: #{bbb_alexnet_forward.15} parent=1 // pred_fallthru
      _
    %258 = vsyncpa [#allocation3], 1

</llo_original>
